<compile_context>
chip_gen: v6e
topology: v6e:2x2x1
jax: 0.10.0
libtpu: 0.0.40
codegen_flags: <defaults>
</compile_context>

<pallas_src>
import math

import jax
import jax.numpy as jnp
import numpy as np
from jax.experimental import pallas as pl
from jax.experimental.pallas import tpu as pltpu

# ----------------------------- model dims (small) -----------------------------
B, S = 2, 8          # batch, src_seq_len
F_IN, F_OUT = 4, 3   # input_size, output_size
H, NH = 128, 8       # hidden_dim, num_heads
HD = H // NH         # head dim
FF = 256             # dim_feedforward (scaled down from 2048)
L = 2                # num encoder layers (scaled down from 6)
EPS = 1e-5           # LayerNorm eps (PyTorch default)
N = B * S            # folded (batch * seq) rows
OUT_PAD = 128        # lane-dense padded output width


def _layernorm(x, gamma, beta):
    mu = jnp.mean(x, axis=-1, keepdims=True)
    var = jnp.mean((x - mu) ** 2, axis=-1, keepdims=True)
    return (x - mu) * jax.lax.rsqrt(var + EPS) * gamma + beta


# --------------------------------- the kernel ---------------------------------
def transformer_kernel(
    x_ref, addpe_ref, mask_ref, pool_ref, win_ref,
    wqkv_t_ref, bqkv_t_ref, wo_h_ref, bo_ref,
    g1_ref, be1_ref, w1_ref, b1_ref, w2_ref, b2_ref, g2_ref, be2_ref,
    wout_ref, bout_ref,
    out_ref,
):
    # input embedding (* sqrt(H) folded into win/addpe) + positional encoding
    h = jnp.dot(x_ref[...], win_ref[...],
                preferred_element_type=jnp.float32) + addpe_ref[...]   # (N, H)

    mask = mask_ref[...]          # (N, N) additive block-diag mask (0 same batch)

    for l in range(L):            # static unroll over encoder layers
        # ------- packed QKV projection, feature-major (transposed) layout -------
        hT = h.T                                                        # (H, N)
        qkvT = jnp.dot(wqkv_t_ref[l], hT,
                       preferred_element_type=jnp.float32) + bqkv_t_ref[l]  # (3H, N)

        # per-head views via sublane-aligned slices (no lane shuffles / concat)
        q_heads = jnp.stack(
            [qkvT[i * HD:(i + 1) * HD, :].T for i in range(NH)], axis=0)      # (NH, N, HD)
        kT_heads = jnp.stack(
            [qkvT[H + i * HD:H + (i + 1) * HD, :] for i in range(NH)], axis=0)  # (NH, HD, N)
        vT_heads = jnp.stack(
            [qkvT[2 * H + i * HD:2 * H + (i + 1) * HD, :] for i in range(NH)],
            axis=0)                                                             # (NH, HD, N)

        # ------------------- head-batched attention (1/sqrt(HD) folded) -------------------
        scores = jnp.einsum('hnd,hdm->hnm', q_heads, kT_heads,
                            preferred_element_type=jnp.float32)        # (NH, N, N)
        scores = scores + mask
        m = jnp.max(scores, axis=-1, keepdims=True)
        p = jnp.exp(scores - m)
        denom = jnp.sum(p, axis=-1, keepdims=True)
        p = p * pl.reciprocal(denom, approx=True)
        ctx = jnp.einsum('hnm,hdm->hnd', p, vT_heads,
                         preferred_element_type=jnp.float32)           # (NH, N, HD)
        attn = jnp.einsum('hnd,hdk->hnk', ctx, wo_h_ref[l * NH:(l + 1) * NH],
                          preferred_element_type=jnp.float32)          # (NH, N, H)
        attn = jnp.sum(attn, axis=0) + bo_ref[l]                       # (N, H)

        h = _layernorm(h + attn, g1_ref[l], be1_ref[l])

        # ------------------------------ feed-forward ------------------------------
        ff = jnp.dot(h, w1_ref[l], preferred_element_type=jnp.float32) + b1_ref[l]
        ff = jnp.maximum(ff, 0.0)  # ReLU (PyTorch default activation)
        ff = jnp.dot(ff, w2_ref[l], preferred_element_type=jnp.float32) + b2_ref[l]

        h = _layernorm(h + ff, g2_ref[l], be2_ref[l])

    # mean over sequence as an MXU pooling matmul (1/S folded into pool),
    # then lane-dense padded output projection
    mem = jnp.dot(pool_ref[...], h, preferred_element_type=jnp.float32)    # (B, H)
    out = jnp.dot(mem, wout_ref[...],
                  preferred_element_type=jnp.float32) + bout_ref[...]      # (B, OUT_PAD)
    out_ref[...] = out


# ------------------------------ param packing ---------------------------------
def pack_params(params, pe):
    """Wrapper-side one-time packing: fused/transposed weights, folded scales."""
    sqrt_h = math.sqrt(H)
    inv_sqrt_hd = 1.0 / math.sqrt(HD)

    win_s = params["win"] * sqrt_h                                    # (F_IN, H)
    addpe = jnp.tile(pe, (B, 1)) + params["bin"] * sqrt_h             # (N, H)

    # additive block-diagonal mask: 0 within a batch element, -1e30 across
    bid = np.arange(N) // S
    mask = np.where(bid[:, None] == bid[None, :], 0.0, -1e30).astype(np.float32)

    # mean-pool matrix with 1/S folded in
    pool = np.zeros((B, N), np.float32)
    for b in range(B):
        pool[b, b * S:(b + 1) * S] = 1.0 / S

    wqkv_t, bqkv_t, wo_h = [], [], []
    for l in range(L):
        wq = params["wq"][l] * inv_sqrt_hd                            # fold score scale
        bq = params["bq"][l][0] * inv_sqrt_hd
        wqkv = jnp.concatenate([wq, params["wk"][l], params["wv"][l]], axis=1)  # (H, 3H)
        bqkv = jnp.concatenate([bq, params["bk"][l][0], params["bv"][l][0]])    # (3H,)
        wqkv_t.append(wqkv.T)                                                   # (3H, H)
        bqkv_t.append(jnp.tile(bqkv[:, None], (1, N)))                          # (3H, N)
        wo_h.append(params["wo"][l].reshape(NH, HD, H))                         # (NH, HD, H)

    return {
        "win": win_s, "addpe": addpe,
        "mask": jnp.asarray(mask), "pool": jnp.asarray(pool),
        "wqkv_t": jnp.stack(wqkv_t),                                  # (L, 3H, H)
        "bqkv_t": jnp.stack(bqkv_t),                                  # (L, 3H, N)
        "wo_h": jnp.stack(wo_h).reshape(L * NH, HD, H),               # (L*NH, HD, H)
        "bo": params["bo"],
        "g1": params["g1"], "be1": params["be1"],
        "w1": params["w1"], "b1": params["b1"],
        "w2": params["w2"], "b2": params["b2"],
        "g2": params["g2"], "be2": params["be2"],
        "wout": jnp.pad(params["wout"], ((0, 0), (0, OUT_PAD - F_OUT))),   # (H, 128)
        "bout": jnp.pad(params["bout"], ((0, 0), (0, OUT_PAD - F_OUT))),   # (1, 128)
    }


# --------------------------------- wrapper ------------------------------------
@jax.jit
def transformer_forward(src, pk):
    x2 = src.reshape(N, F_IN)
    args = (
        x2, pk["addpe"], pk["mask"], pk["pool"], pk["win"],
        pk["wqkv_t"], pk["bqkv_t"], pk["wo_h"], pk["bo"],
        pk["g1"], pk["be1"], pk["w1"], pk["b1"],
        pk["w2"], pk["b2"], pk["g2"], pk["be2"],
        pk["wout"], pk["bout"],
    )
    vmem = pl.BlockSpec(memory_space=pltpu.MemorySpace.VMEM)
    out = pl.pallas_call(
        transformer_kernel,
        out_shape=jax.ShapeDtypeStruct((B, OUT_PAD), jnp.float32),
        in_specs=[vmem] * len(args),
        out_specs=vmem,
    )(*args)
    return out[:, :F_OUT]     # (B, F_OUT)


# ------------------------------ params / pe / ref ------------------------------
def make_positional_encoding(seq_len, d_model):
    pos = jnp.arange(seq_len, dtype=jnp.float32)[:, None]
    div = jnp.exp(jnp.arange(0, d_model, 2, dtype=jnp.float32)
                  * (-math.log(10000.0) / d_model))
    pe = jnp.zeros((seq_len, d_model), jnp.float32)
    pe = pe.at[:, 0::2].set(jnp.sin(pos * div))
    pe = pe.at[:, 1::2].set(jnp.cos(pos * div))
    return pe


def init_params(key):
    keys = iter(jax.random.split(key, 16))
    u = lambda shape, scale=0.1: jax.random.uniform(
        next(keys), shape, jnp.float32, -scale, scale)
    return {
        "win": u((F_IN, H)), "bin": u((1, H)),
        "wq": u((L, H, H)), "bq": u((L, 1, H)),
        "wk": u((L, H, H)), "bk": u((L, 1, H)),
        "wv": u((L, H, H)), "bv": u((L, 1, H)),
        "wo": u((L, H, H)), "bo": u((L, 1, H)),
        "g1": jnp.ones((L, 1, H), jnp.float32), "be1": jnp.zeros((L, 1, H), jnp.float32),
        "w1": u((L, H, FF)), "b1": u((L, 1, FF)),
        "w2": u((L, FF, H)), "b2": u((L, 1, H)),
        "g2": jnp.ones((L, 1, H), jnp.float32), "be2": jnp.zeros((L, 1, H), jnp.float32),
        "wout": u((H, F_OUT)), "bout": jnp.zeros((1, F_OUT), jnp.float32),
    }


def reference_single(x, pe, p):
    """Pure-JAX reference for one example, x: (S, F_IN)."""
    h = x @ p["win"] + p["bin"][0]
    h = h * math.sqrt(H) + pe
    for l in range(L):
        q = h @ p["wq"][l] + p["bq"][l][0]
        k = h @ p["wk"][l] + p["bk"][l][0]
        v = h @ p["wv"][l] + p["bv"][l][0]
        heads = []
        for hh in range(NH):
            lo, hi = hh * HD, (hh + 1) * HD
            s = (q[:, lo:hi] @ k[:, lo:hi].T) / math.sqrt(HD)
            heads.append(jax.nn.softmax(s, axis=-1) @ v[:, lo:hi])
        attn = jnp.concatenate(heads, -1) @ p["wo"][l] + p["bo"][l][0]
        h = _layernorm(h + attn, p["g1"][l][0], p["be1"][l][0])
        ff = jax.nn.relu(h @ p["w1"][l] + p["b1"][l][0]) @ p["w2"][l] + p["b2"][l][0]
        h = _layernorm(h + ff, p["g2"][l][0], p["be2"][l][0])
    mem = h.mean(axis=0)
    return mem @ p["wout"] + p["bout"][0]


if __name__ == "__main__":
    key = jax.random.PRNGKey(0)
    k_src, k_par = jax.random.split(key)
    src = jax.random.normal(k_src, (B, S, F_IN), jnp.float32)  # (batch, seq, input_size)
    params = init_params(k_par)
    pe = make_positional_encoding(S, H)
    packed = pack_params(params, pe)

    out = transformer_forward(src, packed)
    out = jax.block_until_ready(out)
    assert out.shape == (B, F_OUT), out.shape

    ref = jax.vmap(reference_single, in_axes=(0, None, None))(src, pe, params)
    ref = jax.block_until_ready(ref)
    np.testing.assert_allclose(np.asarray(out), np.asarray(ref), rtol=5e-2, atol=5e-2)

    print("KERNEL_OK")
</pallas_src>

<mosaic_0001>
module attributes {stable_mosaic.version = 11 : i64} {
  func.func @transformer_kernel(%arg0: memref<16x4xf32, #tpu.memory_space<vmem>>, %arg1: memref<16x128xf32, #tpu.memory_space<vmem>>, %arg2: memref<16x16xf32, #tpu.memory_space<vmem>>, %arg3: memref<2x16xf32, #tpu.memory_space<vmem>>, %arg4: memref<4x128xf32, #tpu.memory_space<vmem>>, %arg5: memref<2x384x128xf32, #tpu.memory_space<vmem>>, %arg6: memref<2x384x16xf32, #tpu.memory_space<vmem>>, %arg7: memref<16x16x128xf32, #tpu.memory_space<vmem>>, %arg8: memref<2x1x128xf32, #tpu.memory_space<vmem>>, %arg9: memref<2x1x128xf32, #tpu.memory_space<vmem>>, %arg10: memref<2x1x128xf32, #tpu.memory_space<vmem>>, %arg11: memref<2x128x256xf32, #tpu.memory_space<vmem>>, %arg12: memref<2x1x256xf32, #tpu.memory_space<vmem>>, %arg13: memref<2x256x128xf32, #tpu.memory_space<vmem>>, %arg14: memref<2x1x128xf32, #tpu.memory_space<vmem>>, %arg15: memref<2x1x128xf32, #tpu.memory_space<vmem>>, %arg16: memref<2x1x128xf32, #tpu.memory_space<vmem>>, %arg17: memref<128x128xf32, #tpu.memory_space<vmem>>, %arg18: memref<1x128xf32, #tpu.memory_space<vmem>>, %arg19: memref<2x128xf32, #tpu.memory_space<vmem>>) attributes {dimension_semantics = [], scalar_prefetch = 0 : i64, scratch_operands = 0 : i64, tpu.core_type = #tpu.core_type<tc>} {
    %c0 = arith.constant 0 : index
    %c0_0 = arith.constant 0 : index
    %0 = vector.load %arg0[%c0, %c0_0] : memref<16x4xf32, #tpu.memory_space<vmem>>, vector<16x4xf32>
    %c0_1 = arith.constant 0 : index
    %c0_2 = arith.constant 0 : index
    %1 = vector.load %arg4[%c0_1, %c0_2] : memref<4x128xf32, #tpu.memory_space<vmem>>, vector<4x128xf32>
    %cst = arith.constant dense<0.000000e+00> : vector<16x128xf32>
    %2 = tpu.matmul %0, %1, %cst {dimension_numbers = #tpu.dot_dimension_numbers<[1], [0], [0], [1], [0, 0, 1, 1], [], []>} : vector<16x4xf32>, vector<4x128xf32>, vector<16x128xf32> -> vector<16x128xf32>
    %c0_3 = arith.constant 0 : index
    %c0_4 = arith.constant 0 : index
    %3 = vector.load %arg1[%c0_3, %c0_4] : memref<16x128xf32, #tpu.memory_space<vmem>>, vector<16x128xf32>
    %4 = arith.addf %2, %3 : vector<16x128xf32>
    %c0_5 = arith.constant 0 : index
    %c0_6 = arith.constant 0 : index
    %5 = vector.load %arg2[%c0_5, %c0_6] : memref<16x16xf32, #tpu.memory_space<vmem>>, vector<16x16xf32>
    %6 = tpu.transpose %4, [1, 0] : vector<16x128xf32> -> vector<128x16xf32>
    %c0_7 = arith.constant 0 : index
    %c0_8 = arith.constant 0 : index
    %c0_9 = arith.constant 0 : index
    %7 = vector.load %arg5[%c0_7, %c0_8, %c0_9] : memref<2x384x128xf32, #tpu.memory_space<vmem>>, vector<1x384x128xf32>
    %8 = vector.shape_cast %7 : vector<1x384x128xf32> to vector<384x128xf32>
    %cst_10 = arith.constant dense<0.000000e+00> : vector<384x16xf32>
    %9 = tpu.matmul %8, %6, %cst_10 {dimension_numbers = #tpu.dot_dimension_numbers<[1], [0], [0], [1], [0, 0, 1, 1], [], []>} : vector<384x128xf32>, vector<128x16xf32>, vector<384x16xf32> -> vector<384x16xf32>
    %c0_11 = arith.constant 0 : index
    %c0_12 = arith.constant 0 : index
    %c0_13 = arith.constant 0 : index
    %10 = vector.load %arg6[%c0_11, %c0_12, %c0_13] : memref<2x384x16xf32, #tpu.memory_space<vmem>>, vector<1x384x16xf32>
    %11 = vector.shape_cast %10 : vector<1x384x16xf32> to vector<384x16xf32>
    %12 = arith.addf %9, %11 : vector<384x16xf32>
    %13 = vector.extract_strided_slice %12 {offsets = [0, 0], sizes = [16, 16], strides = [1, 1]} : vector<384x16xf32> to vector<16x16xf32>
    %14 = tpu.transpose %13, [1, 0] : vector<16x16xf32> -> vector<16x16xf32>
    %15 = vector.extract_strided_slice %12 {offsets = [16, 0], sizes = [16, 16], strides = [1, 1]} : vector<384x16xf32> to vector<16x16xf32>
    %16 = tpu.transpose %15, [1, 0] : vector<16x16xf32> -> vector<16x16xf32>
    %17 = vector.extract_strided_slice %12 {offsets = [32, 0], sizes = [16, 16], strides = [1, 1]} : vector<384x16xf32> to vector<16x16xf32>
    %18 = tpu.transpose %17, [1, 0] : vector<16x16xf32> -> vector<16x16xf32>
    %19 = vector.extract_strided_slice %12 {offsets = [48, 0], sizes = [16, 16], strides = [1, 1]} : vector<384x16xf32> to vector<16x16xf32>
    %20 = tpu.transpose %19, [1, 0] : vector<16x16xf32> -> vector<16x16xf32>
    %21 = vector.extract_strided_slice %12 {offsets = [64, 0], sizes = [16, 16], strides = [1, 1]} : vector<384x16xf32> to vector<16x16xf32>
    %22 = tpu.transpose %21, [1, 0] : vector<16x16xf32> -> vector<16x16xf32>
    %23 = vector.extract_strided_slice %12 {offsets = [80, 0], sizes = [16, 16], strides = [1, 1]} : vector<384x16xf32> to vector<16x16xf32>
    %24 = tpu.transpose %23, [1, 0] : vector<16x16xf32> -> vector<16x16xf32>
    %25 = vector.extract_strided_slice %12 {offsets = [96, 0], sizes = [16, 16], strides = [1, 1]} : vector<384x16xf32> to vector<16x16xf32>
    %26 = tpu.transpose %25, [1, 0] : vector<16x16xf32> -> vector<16x16xf32>
    %27 = vector.extract_strided_slice %12 {offsets = [112, 0], sizes = [16, 16], strides = [1, 1]} : vector<384x16xf32> to vector<16x16xf32>
    %28 = tpu.transpose %27, [1, 0] : vector<16x16xf32> -> vector<16x16xf32>
    %29 = vector.shape_cast %14 : vector<16x16xf32> to vector<1x16x16xf32>
    %30 = vector.shape_cast %16 : vector<16x16xf32> to vector<1x16x16xf32>
    %31 = vector.shape_cast %18 : vector<16x16xf32> to vector<1x16x16xf32>
    %32 = vector.shape_cast %20 : vector<16x16xf32> to vector<1x16x16xf32>
    %33 = vector.shape_cast %22 : vector<16x16xf32> to vector<1x16x16xf32>
    %34 = vector.shape_cast %24 : vector<16x16xf32> to vector<1x16x16xf32>
    %35 = vector.shape_cast %26 : vector<16x16xf32> to vector<1x16x16xf32>
    %36 = vector.shape_cast %28 : vector<16x16xf32> to vector<1x16x16xf32>
    %37 = tpu.concatenate %29, %30, %31, %32, %33, %34, %35, %36 in 0 : vector<1x16x16xf32>, vector<1x16x16xf32>, vector<1x16x16xf32>, vector<1x16x16xf32>, vector<1x16x16xf32>, vector<1x16x16xf32>, vector<1x16x16xf32>, vector<1x16x16xf32> -> vector<8x16x16xf32>
    %38 = vector.extract_strided_slice %12 {offsets = [128, 0], sizes = [16, 16], strides = [1, 1]} : vector<384x16xf32> to vector<16x16xf32>
    %39 = vector.extract_strided_slice %12 {offsets = [144, 0], sizes = [16, 16], strides = [1, 1]} : vector<384x16xf32> to vector<16x16xf32>
    %40 = vector.extract_strided_slice %12 {offsets = [160, 0], sizes = [16, 16], strides = [1, 1]} : vector<384x16xf32> to vector<16x16xf32>
    %41 = vector.extract_strided_slice %12 {offsets = [176, 0], sizes = [16, 16], strides = [1, 1]} : vector<384x16xf32> to vector<16x16xf32>
    %42 = vector.extract_strided_slice %12 {offsets = [192, 0], sizes = [16, 16], strides = [1, 1]} : vector<384x16xf32> to vector<16x16xf32>
    %43 = vector.extract_strided_slice %12 {offsets = [208, 0], sizes = [16, 16], strides = [1, 1]} : vector<384x16xf32> to vector<16x16xf32>
    %44 = vector.extract_strided_slice %12 {offsets = [224, 0], sizes = [16, 16], strides = [1, 1]} : vector<384x16xf32> to vector<16x16xf32>
    %45 = vector.extract_strided_slice %12 {offsets = [240, 0], sizes = [16, 16], strides = [1, 1]} : vector<384x16xf32> to vector<16x16xf32>
    %46 = vector.shape_cast %38 : vector<16x16xf32> to vector<1x16x16xf32>
    %47 = vector.shape_cast %39 : vector<16x16xf32> to vector<1x16x16xf32>
    %48 = vector.shape_cast %40 : vector<16x16xf32> to vector<1x16x16xf32>
    %49 = vector.shape_cast %41 : vector<16x16xf32> to vector<1x16x16xf32>
    %50 = vector.shape_cast %42 : vector<16x16xf32> to vector<1x16x16xf32>
    %51 = vector.shape_cast %43 : vector<16x16xf32> to vector<1x16x16xf32>
    %52 = vector.shape_cast %44 : vector<16x16xf32> to vector<1x16x16xf32>
    %53 = vector.shape_cast %45 : vector<16x16xf32> to vector<1x16x16xf32>
    %54 = tpu.concatenate %46, %47, %48, %49, %50, %51, %52, %53 in 0 : vector<1x16x16xf32>, vector<1x16x16xf32>, vector<1x16x16xf32>, vector<1x16x16xf32>, vector<1x16x16xf32>, vector<1x16x16xf32>, vector<1x16x16xf32>, vector<1x16x16xf32> -> vector<8x16x16xf32>
    %55 = vector.extract_strided_slice %12 {offsets = [256, 0], sizes = [16, 16], strides = [1, 1]} : vector<384x16xf32> to vector<16x16xf32>
    %56 = vector.extract_strided_slice %12 {offsets = [272, 0], sizes = [16, 16], strides = [1, 1]} : vector<384x16xf32> to vector<16x16xf32>
    %57 = vector.extract_strided_slice %12 {offsets = [288, 0], sizes = [16, 16], strides = [1, 1]} : vector<384x16xf32> to vector<16x16xf32>
    %58 = vector.extract_strided_slice %12 {offsets = [304, 0], sizes = [16, 16], strides = [1, 1]} : vector<384x16xf32> to vector<16x16xf32>
    %59 = vector.extract_strided_slice %12 {offsets = [320, 0], sizes = [16, 16], strides = [1, 1]} : vector<384x16xf32> to vector<16x16xf32>
    %60 = vector.extract_strided_slice %12 {offsets = [336, 0], sizes = [16, 16], strides = [1, 1]} : vector<384x16xf32> to vector<16x16xf32>
    %61 = vector.extract_strided_slice %12 {offsets = [352, 0], sizes = [16, 16], strides = [1, 1]} : vector<384x16xf32> to vector<16x16xf32>
    %62 = vector.extract_strided_slice %12 {offsets = [368, 0], sizes = [16, 16], strides = [1, 1]} : vector<384x16xf32> to vector<16x16xf32>
    %63 = vector.shape_cast %55 : vector<16x16xf32> to vector<1x16x16xf32>
    %64 = vector.shape_cast %56 : vector<16x16xf32> to vector<1x16x16xf32>
    %65 = vector.shape_cast %57 : vector<16x16xf32> to vector<1x16x16xf32>
    %66 = vector.shape_cast %58 : vector<16x16xf32> to vector<1x16x16xf32>
    %67 = vector.shape_cast %59 : vector<16x16xf32> to vector<1x16x16xf32>
    %68 = vector.shape_cast %60 : vector<16x16xf32> to vector<1x16x16xf32>
    %69 = vector.shape_cast %61 : vector<16x16xf32> to vector<1x16x16xf32>
    %70 = vector.shape_cast %62 : vector<16x16xf32> to vector<1x16x16xf32>
    %71 = tpu.concatenate %63, %64, %65, %66, %67, %68, %69, %70 in 0 : vector<1x16x16xf32>, vector<1x16x16xf32>, vector<1x16x16xf32>, vector<1x16x16xf32>, vector<1x16x16xf32>, vector<1x16x16xf32>, vector<1x16x16xf32>, vector<1x16x16xf32> -> vector<8x16x16xf32>
    "tpu.trace_start"() <{level = 10 : i32, message = "hnd,hdm->hnm"}> : () -> ()
    %cst_14 = arith.constant dense<0.000000e+00> : vector<8x16x16xf32>
    %72 = tpu.matmul %37, %54, %cst_14 {dimension_numbers = #tpu.dot_dimension_numbers<[2], [1], [1], [2], [0, 0, 0, 1, 1, 2], [0], [0]>} : vector<8x16x16xf32>, vector<8x16x16xf32>, vector<8x16x16xf32> -> vector<8x16x16xf32>
    "tpu.trace_stop"() : () -> ()
    %73 = vector.shape_cast %5 : vector<16x16xf32> to vector<1x16x16xf32>
    %74 = vector.broadcast %73 : vector<1x16x16xf32> to vector<8x16x16xf32>
    %75 = arith.addf %72, %74 : vector<8x16x16xf32>
    %cst_15 = arith.constant dense<0xFF800000> : vector<8x16xf32>
    %76 = vector.multi_reduction <maximumf>, %75, %cst_15 [2] : vector<8x16x16xf32> to vector<8x16xf32>
    %77 = vector.shape_cast %76 : vector<8x16xf32> to vector<8x16x1xf32>
    %78 = vector.broadcast %77 : vector<8x16x1xf32> to vector<8x16x16xf32>
    %79 = arith.subf %75, %78 : vector<8x16x16xf32>
    %80 = math.exp %79 : vector<8x16x16xf32>
    %cst_16 = arith.constant dense<0.000000e+00> : vector<8x16xf32>
    %81 = vector.multi_reduction <add>, %80, %cst_16 [2] : vector<8x16x16xf32> to vector<8x16xf32>
    %82 = vector.shape_cast %81 : vector<8x16xf32> to vector<8x16x1xf32>
    %83 = tpu.reciprocal %82 {approx = true} : vector<8x16x1xf32> -> vector<8x16x1xf32>
    %84 = vector.broadcast %83 : vector<8x16x1xf32> to vector<8x16x16xf32>
    %85 = arith.mulf %80, %84 : vector<8x16x16xf32>
    "tpu.trace_start"() <{level = 10 : i32, message = "hnm,hdm->hnd"}> : () -> ()
    %cst_17 = arith.constant dense<0.000000e+00> : vector<8x16x16xf32>
    %86 = tpu.matmul %85, %71, %cst_17 {dimension_numbers = #tpu.dot_dimension_numbers<[2], [2], [1], [1], [0, 0, 0, 1, 1, 1], [0], [0]>} : vector<8x16x16xf32>, vector<8x16x16xf32>, vector<8x16x16xf32> -> vector<8x16x16xf32>
    "tpu.trace_stop"() : () -> ()
    %c0_18 = arith.constant 0 : index
    %c0_19 = arith.constant 0 : index
    %c0_20 = arith.constant 0 : index
    %87 = vector.load %arg7[%c0_18, %c0_19, %c0_20] : memref<16x16x128xf32, #tpu.memory_space<vmem>>, vector<8x16x128xf32>
    "tpu.trace_start"() <{level = 10 : i32, message = "hnd,hdk->hnk"}> : () -> ()
    %cst_21 = arith.constant dense<0.000000e+00> : vector<8x16x128xf32>
    %88 = tpu.matmul %86, %87, %cst_21 {dimension_numbers = #tpu.dot_dimension_numbers<[2], [1], [1], [2], [0, 0, 0, 1, 1, 2], [0], [0]>} : vector<8x16x16xf32>, vector<8x16x128xf32>, vector<8x16x128xf32> -> vector<8x16x128xf32>
    "tpu.trace_stop"() : () -> ()
    %cst_22 = arith.constant dense<0.000000e+00> : vector<16x128xf32>
    %89 = vector.multi_reduction <add>, %88, %cst_22 [0] : vector<8x16x128xf32> to vector<16x128xf32>
    %c0_23 = arith.constant 0 : index
    %c0_24 = arith.constant 0 : index
    %c0_25 = arith.constant 0 : index
    %90 = vector.load %arg8[%c0_23, %c0_24, %c0_25] : memref<2x1x128xf32, #tpu.memory_space<vmem>>, vector<1x1x128xf32>
    %91 = vector.shape_cast %90 : vector<1x1x128xf32> to vector<1x128xf32>
    %92 = vector.broadcast %91 : vector<1x128xf32> to vector<16x128xf32>
    %93 = arith.addf %89, %92 : vector<16x128xf32>
    %94 = arith.addf %4, %93 : vector<16x128xf32>
    %c0_26 = arith.constant 0 : index
    %c0_27 = arith.constant 0 : index
    %c0_28 = arith.constant 0 : index
    %95 = vector.load %arg9[%c0_26, %c0_27, %c0_28] : memref<2x1x128xf32, #tpu.memory_space<vmem>>, vector<1x1x128xf32>
    %96 = vector.shape_cast %95 : vector<1x1x128xf32> to vector<1x128xf32>
    %c0_29 = arith.constant 0 : index
    %c0_30 = arith.constant 0 : index
    %c0_31 = arith.constant 0 : index
    %97 = vector.load %arg10[%c0_29, %c0_30, %c0_31] : memref<2x1x128xf32, #tpu.memory_space<vmem>>, vector<1x1x128xf32>
    %98 = vector.shape_cast %97 : vector<1x1x128xf32> to vector<1x128xf32>
    %cst_32 = arith.constant dense<0.000000e+00> : vector<16xf32>
    %99 = vector.multi_reduction <add>, %94, %cst_32 [1] : vector<16x128xf32> to vector<16xf32>
    %100 = vector.shape_cast %99 : vector<16xf32> to vector<16x1xf32>
    %cst_33 = arith.constant 1.280000e+02 : f32
    %101 = vector.broadcast %cst_33 : f32 to vector<16x1xf32>
    %102 = arith.divf %100, %101 : vector<16x1xf32>
    %103 = vector.broadcast %102 : vector<16x1xf32> to vector<16x128xf32>
    %104 = arith.subf %94, %103 : vector<16x128xf32>
    %105 = arith.mulf %104, %104 : vector<16x128xf32>
    %cst_34 = arith.constant dense<0.000000e+00> : vector<16xf32>
    %106 = vector.multi_reduction <add>, %105, %cst_34 [1] : vector<16x128xf32> to vector<16xf32>
    %107 = vector.shape_cast %106 : vector<16xf32> to vector<16x1xf32>
    %cst_35 = arith.constant 1.280000e+02 : f32
    %108 = vector.broadcast %cst_35 : f32 to vector<16x1xf32>
    %109 = arith.divf %107, %108 : vector<16x1xf32>
    %110 = vector.broadcast %102 : vector<16x1xf32> to vector<16x128xf32>
    %111 = arith.subf %94, %110 : vector<16x128xf32>
    %cst_36 = arith.constant 9.99999974E-6 : f32
    %112 = vector.broadcast %cst_36 : f32 to vector<16x1xf32>
    %113 = arith.addf %109, %112 : vector<16x1xf32>
    %114 = math.rsqrt %113 : vector<16x1xf32>
    %115 = vector.broadcast %114 : vector<16x1xf32> to vector<16x128xf32>
    %116 = arith.mulf %111, %115 : vector<16x128xf32>
    %117 = vector.broadcast %96 : vector<1x128xf32> to vector<16x128xf32>
    %118 = arith.mulf %116, %117 : vector<16x128xf32>
    %119 = vector.broadcast %98 : vector<1x128xf32> to vector<16x128xf32>
    %120 = arith.addf %118, %119 : vector<16x128xf32>
    %c0_37 = arith.constant 0 : index
    %c0_38 = arith.constant 0 : index
    %c0_39 = arith.constant 0 : index
    %121 = vector.load %arg11[%c0_37, %c0_38, %c0_39] : memref<2x128x256xf32, #tpu.memory_space<vmem>>, vector<1x128x256xf32>
    %122 = vector.shape_cast %121 : vector<1x128x256xf32> to vector<128x256xf32>
    %cst_40 = arith.constant dense<0.000000e+00> : vector<16x256xf32>
    %123 = tpu.matmul %120, %122, %cst_40 {dimension_numbers = #tpu.dot_dimension_numbers<[1], [0], [0], [1], [0, 0, 1, 1], [], []>} : vector<16x128xf32>, vector<128x256xf32>, vector<16x256xf32> -> vector<16x256xf32>
    %c0_41 = arith.constant 0 : index
    %c0_42 = arith.constant 0 : index
    %c0_43 = arith.constant 0 : index
    %124 = vector.load %arg12[%c0_41, %c0_42, %c0_43] : memref<2x1x256xf32, #tpu.memory_space<vmem>>, vector<1x1x256xf32>
    %125 = vector.shape_cast %124 : vector<1x1x256xf32> to vector<1x256xf32>
    %126 = vector.broadcast %125 : vector<1x256xf32> to vector<16x256xf32>
    %127 = arith.addf %123, %126 : vector<16x256xf32>
    %cst_44 = arith.constant 0.000000e+00 : f32
    %128 = vector.broadcast %cst_44 : f32 to vector<16x256xf32>
    %129 = arith.maximumf %127, %128 : vector<16x256xf32>
    %c0_45 = arith.constant 0 : index
    %c0_46 = arith.constant 0 : index
    %c0_47 = arith.constant 0 : index
    %130 = vector.load %arg13[%c0_45, %c0_46, %c0_47] : memref<2x256x128xf32, #tpu.memory_space<vmem>>, vector<1x256x128xf32>
    %131 = vector.shape_cast %130 : vector<1x256x128xf32> to vector<256x128xf32>
    %cst_48 = arith.constant dense<0.000000e+00> : vector<16x128xf32>
    %132 = tpu.matmul %129, %131, %cst_48 {dimension_numbers = #tpu.dot_dimension_numbers<[1], [0], [0], [1], [0, 0, 1, 1], [], []>} : vector<16x256xf32>, vector<256x128xf32>, vector<16x128xf32> -> vector<16x128xf32>
    %c0_49 = arith.constant 0 : index
    %c0_50 = arith.constant 0 : index
    %c0_51 = arith.constant 0 : index
    %133 = vector.load %arg14[%c0_49, %c0_50, %c0_51] : memref<2x1x128xf32, #tpu.memory_space<vmem>>, vector<1x1x128xf32>
    %134 = vector.shape_cast %133 : vector<1x1x128xf32> to vector<1x128xf32>
    %135 = vector.broadcast %134 : vector<1x128xf32> to vector<16x128xf32>
    %136 = arith.addf %132, %135 : vector<16x128xf32>
    %137 = arith.addf %120, %136 : vector<16x128xf32>
    %c0_52 = arith.constant 0 : index
    %c0_53 = arith.constant 0 : index
    %c0_54 = arith.constant 0 : index
    %138 = vector.load %arg15[%c0_52, %c0_53, %c0_54] : memref<2x1x128xf32, #tpu.memory_space<vmem>>, vector<1x1x128xf32>
    %139 = vector.shape_cast %138 : vector<1x1x128xf32> to vector<1x128xf32>
    %c0_55 = arith.constant 0 : index
    %c0_56 = arith.constant 0 : index
    %c0_57 = arith.constant 0 : index
    %140 = vector.load %arg16[%c0_55, %c0_56, %c0_57] : memref<2x1x128xf32, #tpu.memory_space<vmem>>, vector<1x1x128xf32>
    %141 = vector.shape_cast %140 : vector<1x1x128xf32> to vector<1x128xf32>
    %cst_58 = arith.constant dense<0.000000e+00> : vector<16xf32>
    %142 = vector.multi_reduction <add>, %137, %cst_58 [1] : vector<16x128xf32> to vector<16xf32>
    %143 = vector.shape_cast %142 : vector<16xf32> to vector<16x1xf32>
    %cst_59 = arith.constant 1.280000e+02 : f32
    %144 = vector.broadcast %cst_59 : f32 to vector<16x1xf32>
    %145 = arith.divf %143, %144 : vector<16x1xf32>
    %146 = vector.broadcast %145 : vector<16x1xf32> to vector<16x128xf32>
    %147 = arith.subf %137, %146 : vector<16x128xf32>
    %148 = arith.mulf %147, %147 : vector<16x128xf32>
    %cst_60 = arith.constant dense<0.000000e+00> : vector<16xf32>
    %149 = vector.multi_reduction <add>, %148, %cst_60 [1] : vector<16x128xf32> to vector<16xf32>
    %150 = vector.shape_cast %149 : vector<16xf32> to vector<16x1xf32>
    %cst_61 = arith.constant 1.280000e+02 : f32
    %151 = vector.broadcast %cst_61 : f32 to vector<16x1xf32>
    %152 = arith.divf %150, %151 : vector<16x1xf32>
    %153 = vector.broadcast %145 : vector<16x1xf32> to vector<16x128xf32>
    %154 = arith.subf %137, %153 : vector<16x128xf32>
    %cst_62 = arith.constant 9.99999974E-6 : f32
    %155 = vector.broadcast %cst_62 : f32 to vector<16x1xf32>
    %156 = arith.addf %152, %155 : vector<16x1xf32>
    %157 = math.rsqrt %156 : vector<16x1xf32>
    %158 = vector.broadcast %157 : vector<16x1xf32> to vector<16x128xf32>
    %159 = arith.mulf %154, %158 : vector<16x128xf32>
    %160 = vector.broadcast %139 : vector<1x128xf32> to vector<16x128xf32>
    %161 = arith.mulf %159, %160 : vector<16x128xf32>
    %162 = vector.broadcast %141 : vector<1x128xf32> to vector<16x128xf32>
    %163 = arith.addf %161, %162 : vector<16x128xf32>
    %164 = tpu.transpose %163, [1, 0] : vector<16x128xf32> -> vector<128x16xf32>
    %c1 = arith.constant 1 : index
    %c0_63 = arith.constant 0 : index
    %c0_64 = arith.constant 0 : index
    %165 = vector.load %arg5[%c1, %c0_63, %c0_64] : memref<2x384x128xf32, #tpu.memory_space<vmem>>, vector<1x384x128xf32>
    %166 = vector.shape_cast %165 : vector<1x384x128xf32> to vector<384x128xf32>
    %cst_65 = arith.constant dense<0.000000e+00> : vector<384x16xf32>
    %167 = tpu.matmul %166, %164, %cst_65 {dimension_numbers = #tpu.dot_dimension_numbers<[1], [0], [0], [1], [0, 0, 1, 1], [], []>} : vector<384x128xf32>, vector<128x16xf32>, vector<384x16xf32> -> vector<384x16xf32>
    %c1_66 = arith.constant 1 : index
    %c0_67 = arith.constant 0 : index
    %c0_68 = arith.constant 0 : index
    %168 = vector.load %arg6[%c1_66, %c0_67, %c0_68] : memref<2x384x16xf32, #tpu.memory_space<vmem>>, vector<1x384x16xf32>
    %169 = vector.shape_cast %168 : vector<1x384x16xf32> to vector<384x16xf32>
    %170 = arith.addf %167, %169 : vector<384x16xf32>
    %171 = vector.extract_strided_slice %170 {offsets = [0, 0], sizes = [16, 16], strides = [1, 1]} : vector<384x16xf32> to vector<16x16xf32>
    %172 = tpu.transpose %171, [1, 0] : vector<16x16xf32> -> vector<16x16xf32>
    %173 = vector.extract_strided_slice %170 {offsets = [16, 0], sizes = [16, 16], strides = [1, 1]} : vector<384x16xf32> to vector<16x16xf32>
    %174 = tpu.transpose %173, [1, 0] : vector<16x16xf32> -> vector<16x16xf32>
    %175 = vector.extract_strided_slice %170 {offsets = [32, 0], sizes = [16, 16], strides = [1, 1]} : vector<384x16xf32> to vector<16x16xf32>
    %176 = tpu.transpose %175, [1, 0] : vector<16x16xf32> -> vector<16x16xf32>
    %177 = vector.extract_strided_slice %170 {offsets = [48, 0], sizes = [16, 16], strides = [1, 1]} : vector<384x16xf32> to vector<16x16xf32>
    %178 = tpu.transpose %177, [1, 0] : vector<16x16xf32> -> vector<16x16xf32>
    %179 = vector.extract_strided_slice %170 {offsets = [64, 0], sizes = [16, 16], strides = [1, 1]} : vector<384x16xf32> to vector<16x16xf32>
    %180 = tpu.transpose %179, [1, 0] : vector<16x16xf32> -> vector<16x16xf32>
    %181 = vector.extract_strided_slice %170 {offsets = [80, 0], sizes = [16, 16], strides = [1, 1]} : vector<384x16xf32> to vector<16x16xf32>
    %182 = tpu.transpose %181, [1, 0] : vector<16x16xf32> -> vector<16x16xf32>
    %183 = vector.extract_strided_slice %170 {offsets = [96, 0], sizes = [16, 16], strides = [1, 1]} : vector<384x16xf32> to vector<16x16xf32>
    %184 = tpu.transpose %183, [1, 0] : vector<16x16xf32> -> vector<16x16xf32>
    %185 = vector.extract_strided_slice %170 {offsets = [112, 0], sizes = [16, 16], strides = [1, 1]} : vector<384x16xf32> to vector<16x16xf32>
    %186 = tpu.transpose %185, [1, 0] : vector<16x16xf32> -> vector<16x16xf32>
    %187 = vector.shape_cast %172 : vector<16x16xf32> to vector<1x16x16xf32>
    %188 = vector.shape_cast %174 : vector<16x16xf32> to vector<1x16x16xf32>
    %189 = vector.shape_cast %176 : vector<16x16xf32> to vector<1x16x16xf32>
    %190 = vector.shape_cast %178 : vector<16x16xf32> to vector<1x16x16xf32>
    %191 = vector.shape_cast %180 : vector<16x16xf32> to vector<1x16x16xf32>
    %192 = vector.shape_cast %182 : vector<16x16xf32> to vector<1x16x16xf32>
    %193 = vector.shape_cast %184 : vector<16x16xf32> to vector<1x16x16xf32>
    %194 = vector.shape_cast %186 : vector<16x16xf32> to vector<1x16x16xf32>
    %195 = tpu.concatenate %187, %188, %189, %190, %191, %192, %193, %194 in 0 : vector<1x16x16xf32>, vector<1x16x16xf32>, vector<1x16x16xf32>, vector<1x16x16xf32>, vector<1x16x16xf32>, vector<1x16x16xf32>, vector<1x16x16xf32>, vector<1x16x16xf32> -> vector<8x16x16xf32>
    %196 = vector.extract_strided_slice %170 {offsets = [128, 0], sizes = [16, 16], strides = [1, 1]} : vector<384x16xf32> to vector<16x16xf32>
    %197 = vector.extract_strided_slice %170 {offsets = [144, 0], sizes = [16, 16], strides = [1, 1]} : vector<384x16xf32> to vector<16x16xf32>
    %198 = vector.extract_strided_slice %170 {offsets = [160, 0], sizes = [16, 16], strides = [1, 1]} : vector<384x16xf32> to vector<16x16xf32>
    %199 = vector.extract_strided_slice %170 {offsets = [176, 0], sizes = [16, 16], strides = [1, 1]} : vector<384x16xf32> to vector<16x16xf32>
    %200 = vector.extract_strided_slice %170 {offsets = [192, 0], sizes = [16, 16], strides = [1, 1]} : vector<384x16xf32> to vector<16x16xf32>
    %201 = vector.extract_strided_slice %170 {offsets = [208, 0], sizes = [16, 16], strides = [1, 1]} : vector<384x16xf32> to vector<16x16xf32>
    %202 = vector.extract_strided_slice %170 {offsets = [224, 0], sizes = [16, 16], strides = [1, 1]} : vector<384x16xf32> to vector<16x16xf32>
    %203 = vector.extract_strided_slice %170 {offsets = [240, 0], sizes = [16, 16], strides = [1, 1]} : vector<384x16xf32> to vector<16x16xf32>
    %204 = vector.shape_cast %196 : vector<16x16xf32> to vector<1x16x16xf32>
    %205 = vector.shape_cast %197 : vector<16x16xf32> to vector<1x16x16xf32>
    %206 = vector.shape_cast %198 : vector<16x16xf32> to vector<1x16x16xf32>
    %207 = vector.shape_cast %199 : vector<16x16xf32> to vector<1x16x16xf32>
    %208 = vector.shape_cast %200 : vector<16x16xf32> to vector<1x16x16xf32>
    %209 = vector.shape_cast %201 : vector<16x16xf32> to vector<1x16x16xf32>
    %210 = vector.shape_cast %202 : vector<16x16xf32> to vector<1x16x16xf32>
    %211 = vector.shape_cast %203 : vector<16x16xf32> to vector<1x16x16xf32>
    %212 = tpu.concatenate %204, %205, %206, %207, %208, %209, %210, %211 in 0 : vector<1x16x16xf32>, vector<1x16x16xf32>, vector<1x16x16xf32>, vector<1x16x16xf32>, vector<1x16x16xf32>, vector<1x16x16xf32>, vector<1x16x16xf32>, vector<1x16x16xf32> -> vector<8x16x16xf32>
    %213 = vector.extract_strided_slice %170 {offsets = [256, 0], sizes = [16, 16], strides = [1, 1]} : vector<384x16xf32> to vector<16x16xf32>
    %214 = vector.extract_strided_slice %170 {offsets = [272, 0], sizes = [16, 16], strides = [1, 1]} : vector<384x16xf32> to vector<16x16xf32>
    %215 = vector.extract_strided_slice %170 {offsets = [288, 0], sizes = [16, 16], strides = [1, 1]} : vector<384x16xf32> to vector<16x16xf32>
    %216 = vector.extract_strided_slice %170 {offsets = [304, 0], sizes = [16, 16], strides = [1, 1]} : vector<384x16xf32> to vector<16x16xf32>
    %217 = vector.extract_strided_slice %170 {offsets = [320, 0], sizes = [16, 16], strides = [1, 1]} : vector<384x16xf32> to vector<16x16xf32>
    %218 = vector.extract_strided_slice %170 {offsets = [336, 0], sizes = [16, 16], strides = [1, 1]} : vector<384x16xf32> to vector<16x16xf32>
    %219 = vector.extract_strided_slice %170 {offsets = [352, 0], sizes = [16, 16], strides = [1, 1]} : vector<384x16xf32> to vector<16x16xf32>
    %220 = vector.extract_strided_slice %170 {offsets = [368, 0], sizes = [16, 16], strides = [1, 1]} : vector<384x16xf32> to vector<16x16xf32>
    %221 = vector.shape_cast %213 : vector<16x16xf32> to vector<1x16x16xf32>
    %222 = vector.shape_cast %214 : vector<16x16xf32> to vector<1x16x16xf32>
    %223 = vector.shape_cast %215 : vector<16x16xf32> to vector<1x16x16xf32>
    %224 = vector.shape_cast %216 : vector<16x16xf32> to vector<1x16x16xf32>
    %225 = vector.shape_cast %217 : vector<16x16xf32> to vector<1x16x16xf32>
    %226 = vector.shape_cast %218 : vector<16x16xf32> to vector<1x16x16xf32>
    %227 = vector.shape_cast %219 : vector<16x16xf32> to vector<1x16x16xf32>
    %228 = vector.shape_cast %220 : vector<16x16xf32> to vector<1x16x16xf32>
    %229 = tpu.concatenate %221, %222, %223, %224, %225, %226, %227, %228 in 0 : vector<1x16x16xf32>, vector<1x16x16xf32>, vector<1x16x16xf32>, vector<1x16x16xf32>, vector<1x16x16xf32>, vector<1x16x16xf32>, vector<1x16x16xf32>, vector<1x16x16xf32> -> vector<8x16x16xf32>
    "tpu.trace_start"() <{level = 10 : i32, message = "hnd,hdm->hnm"}> : () -> ()
    %cst_69 = arith.constant dense<0.000000e+00> : vector<8x16x16xf32>
    %230 = tpu.matmul %195, %212, %cst_69 {dimension_numbers = #tpu.dot_dimension_numbers<[2], [1], [1], [2], [0, 0, 0, 1, 1, 2], [0], [0]>} : vector<8x16x16xf32>, vector<8x16x16xf32>, vector<8x16x16xf32> -> vector<8x16x16xf32>
    "tpu.trace_stop"() : () -> ()
    %231 = vector.shape_cast %5 : vector<16x16xf32> to vector<1x16x16xf32>
    %232 = vector.broadcast %231 : vector<1x16x16xf32> to vector<8x16x16xf32>
    %233 = arith.addf %230, %232 : vector<8x16x16xf32>
    %cst_70 = arith.constant dense<0xFF800000> : vector<8x16xf32>
    %234 = vector.multi_reduction <maximumf>, %233, %cst_70 [2] : vector<8x16x16xf32> to vector<8x16xf32>
    %235 = vector.shape_cast %234 : vector<8x16xf32> to vector<8x16x1xf32>
    %236 = vector.broadcast %235 : vector<8x16x1xf32> to vector<8x16x16xf32>
    %237 = arith.subf %233, %236 : vector<8x16x16xf32>
    %238 = math.exp %237 : vector<8x16x16xf32>
    %cst_71 = arith.constant dense<0.000000e+00> : vector<8x16xf32>
    %239 = vector.multi_reduction <add>, %238, %cst_71 [2] : vector<8x16x16xf32> to vector<8x16xf32>
    %240 = vector.shape_cast %239 : vector<8x16xf32> to vector<8x16x1xf32>
    %241 = tpu.reciprocal %240 {approx = true} : vector<8x16x1xf32> -> vector<8x16x1xf32>
    %242 = vector.broadcast %241 : vector<8x16x1xf32> to vector<8x16x16xf32>
    %243 = arith.mulf %238, %242 : vector<8x16x16xf32>
    "tpu.trace_start"() <{level = 10 : i32, message = "hnm,hdm->hnd"}> : () -> ()
    %cst_72 = arith.constant dense<0.000000e+00> : vector<8x16x16xf32>
    %244 = tpu.matmul %243, %229, %cst_72 {dimension_numbers = #tpu.dot_dimension_numbers<[2], [2], [1], [1], [0, 0, 0, 1, 1, 1], [0], [0]>} : vector<8x16x16xf32>, vector<8x16x16xf32>, vector<8x16x16xf32> -> vector<8x16x16xf32>
    "tpu.trace_stop"() : () -> ()
    %c8 = arith.constant 8 : index
    %c0_73 = arith.constant 0 : index
    %c0_74 = arith.constant 0 : index
    %245 = vector.load %arg7[%c8, %c0_73, %c0_74] : memref<16x16x128xf32, #tpu.memory_space<vmem>>, vector<8x16x128xf32>
    "tpu.trace_start"() <{level = 10 : i32, message = "hnd,hdk->hnk"}> : () -> ()
    %cst_75 = arith.constant dense<0.000000e+00> : vector<8x16x128xf32>
    %246 = tpu.matmul %244, %245, %cst_75 {dimension_numbers = #tpu.dot_dimension_numbers<[2], [1], [1], [2], [0, 0, 0, 1, 1, 2], [0], [0]>} : vector<8x16x16xf32>, vector<8x16x128xf32>, vector<8x16x128xf32> -> vector<8x16x128xf32>
    "tpu.trace_stop"() : () -> ()
    %cst_76 = arith.constant dense<0.000000e+00> : vector<16x128xf32>
    %247 = vector.multi_reduction <add>, %246, %cst_76 [0] : vector<8x16x128xf32> to vector<16x128xf32>
    %c1_77 = arith.constant 1 : index
    %c0_78 = arith.constant 0 : index
    %c0_79 = arith.constant 0 : index
    %248 = vector.load %arg8[%c1_77, %c0_78, %c0_79] : memref<2x1x128xf32, #tpu.memory_space<vmem>>, vector<1x1x128xf32>
    %249 = vector.shape_cast %248 : vector<1x1x128xf32> to vector<1x128xf32>
    %250 = vector.broadcast %249 : vector<1x128xf32> to vector<16x128xf32>
    %251 = arith.addf %247, %250 : vector<16x128xf32>
    %252 = arith.addf %163, %251 : vector<16x128xf32>
    %c1_80 = arith.constant 1 : index
    %c0_81 = arith.constant 0 : index
    %c0_82 = arith.constant 0 : index
    %253 = vector.load %arg9[%c1_80, %c0_81, %c0_82] : memref<2x1x128xf32, #tpu.memory_space<vmem>>, vector<1x1x128xf32>
    %254 = vector.shape_cast %253 : vector<1x1x128xf32> to vector<1x128xf32>
    %c1_83 = arith.constant 1 : index
    %c0_84 = arith.constant 0 : index
    %c0_85 = arith.constant 0 : index
    %255 = vector.load %arg10[%c1_83, %c0_84, %c0_85] : memref<2x1x128xf32, #tpu.memory_space<vmem>>, vector<1x1x128xf32>
    %256 = vector.shape_cast %255 : vector<1x1x128xf32> to vector<1x128xf32>
    %cst_86 = arith.constant dense<0.000000e+00> : vector<16xf32>
    %257 = vector.multi_reduction <add>, %252, %cst_86 [1] : vector<16x128xf32> to vector<16xf32>
    %258 = vector.shape_cast %257 : vector<16xf32> to vector<16x1xf32>
    %cst_87 = arith.constant 1.280000e+02 : f32
    %259 = vector.broadcast %cst_87 : f32 to vector<16x1xf32>
    %260 = arith.divf %258, %259 : vector<16x1xf32>
    %261 = vector.broadcast %260 : vector<16x1xf32> to vector<16x128xf32>
    %262 = arith.subf %252, %261 : vector<16x128xf32>
    %263 = arith.mulf %262, %262 : vector<16x128xf32>
    %cst_88 = arith.constant dense<0.000000e+00> : vector<16xf32>
    %264 = vector.multi_reduction <add>, %263, %cst_88 [1] : vector<16x128xf32> to vector<16xf32>
    %265 = vector.shape_cast %264 : vector<16xf32> to vector<16x1xf32>
    %cst_89 = arith.constant 1.280000e+02 : f32
    %266 = vector.broadcast %cst_89 : f32 to vector<16x1xf32>
    %267 = arith.divf %265, %266 : vector<16x1xf32>
    %268 = vector.broadcast %260 : vector<16x1xf32> to vector<16x128xf32>
    %269 = arith.subf %252, %268 : vector<16x128xf32>
    %cst_90 = arith.constant 9.99999974E-6 : f32
    %270 = vector.broadcast %cst_90 : f32 to vector<16x1xf32>
    %271 = arith.addf %267, %270 : vector<16x1xf32>
    %272 = math.rsqrt %271 : vector<16x1xf32>
    %273 = vector.broadcast %272 : vector<16x1xf32> to vector<16x128xf32>
    %274 = arith.mulf %269, %273 : vector<16x128xf32>
    %275 = vector.broadcast %254 : vector<1x128xf32> to vector<16x128xf32>
    %276 = arith.mulf %274, %275 : vector<16x128xf32>
    %277 = vector.broadcast %256 : vector<1x128xf32> to vector<16x128xf32>
    %278 = arith.addf %276, %277 : vector<16x128xf32>
    %c1_91 = arith.constant 1 : index
    %c0_92 = arith.constant 0 : index
    %c0_93 = arith.constant 0 : index
    %279 = vector.load %arg11[%c1_91, %c0_92, %c0_93] : memref<2x128x256xf32, #tpu.memory_space<vmem>>, vector<1x128x256xf32>
    %280 = vector.shape_cast %279 : vector<1x128x256xf32> to vector<128x256xf32>
    %cst_94 = arith.constant dense<0.000000e+00> : vector<16x256xf32>
    %281 = tpu.matmul %278, %280, %cst_94 {dimension_numbers = #tpu.dot_dimension_numbers<[1], [0], [0], [1], [0, 0, 1, 1], [], []>} : vector<16x128xf32>, vector<128x256xf32>, vector<16x256xf32> -> vector<16x256xf32>
    %c1_95 = arith.constant 1 : index
    %c0_96 = arith.constant 0 : index
    %c0_97 = arith.constant 0 : index
    %282 = vector.load %arg12[%c1_95, %c0_96, %c0_97] : memref<2x1x256xf32, #tpu.memory_space<vmem>>, vector<1x1x256xf32>
    %283 = vector.shape_cast %282 : vector<1x1x256xf32> to vector<1x256xf32>
    %284 = vector.broadcast %283 : vector<1x256xf32> to vector<16x256xf32>
    %285 = arith.addf %281, %284 : vector<16x256xf32>
    %cst_98 = arith.constant 0.000000e+00 : f32
    %286 = vector.broadcast %cst_98 : f32 to vector<16x256xf32>
    %287 = arith.maximumf %285, %286 : vector<16x256xf32>
    %c1_99 = arith.constant 1 : index
    %c0_100 = arith.constant 0 : index
    %c0_101 = arith.constant 0 : index
    %288 = vector.load %arg13[%c1_99, %c0_100, %c0_101] : memref<2x256x128xf32, #tpu.memory_space<vmem>>, vector<1x256x128xf32>
    %289 = vector.shape_cast %288 : vector<1x256x128xf32> to vector<256x128xf32>
    %cst_102 = arith.constant dense<0.000000e+00> : vector<16x128xf32>
    %290 = tpu.matmul %287, %289, %cst_102 {dimension_numbers = #tpu.dot_dimension_numbers<[1], [0], [0], [1], [0, 0, 1, 1], [], []>} : vector<16x256xf32>, vector<256x128xf32>, vector<16x128xf32> -> vector<16x128xf32>
    %c1_103 = arith.constant 1 : index
    %c0_104 = arith.constant 0 : index
    %c0_105 = arith.constant 0 : index
    %291 = vector.load %arg14[%c1_103, %c0_104, %c0_105] : memref<2x1x128xf32, #tpu.memory_space<vmem>>, vector<1x1x128xf32>
    %292 = vector.shape_cast %291 : vector<1x1x128xf32> to vector<1x128xf32>
    %293 = vector.broadcast %292 : vector<1x128xf32> to vector<16x128xf32>
    %294 = arith.addf %290, %293 : vector<16x128xf32>
    %295 = arith.addf %278, %294 : vector<16x128xf32>
    %c1_106 = arith.constant 1 : index
    %c0_107 = arith.constant 0 : index
    %c0_108 = arith.constant 0 : index
    %296 = vector.load %arg15[%c1_106, %c0_107, %c0_108] : memref<2x1x128xf32, #tpu.memory_space<vmem>>, vector<1x1x128xf32>
    %297 = vector.shape_cast %296 : vector<1x1x128xf32> to vector<1x128xf32>
    %c1_109 = arith.constant 1 : index
    %c0_110 = arith.constant 0 : index
    %c0_111 = arith.constant 0 : index
    %298 = vector.load %arg16[%c1_109, %c0_110, %c0_111] : memref<2x1x128xf32, #tpu.memory_space<vmem>>, vector<1x1x128xf32>
    %299 = vector.shape_cast %298 : vector<1x1x128xf32> to vector<1x128xf32>
    %cst_112 = arith.constant dense<0.000000e+00> : vector<16xf32>
    %300 = vector.multi_reduction <add>, %295, %cst_112 [1] : vector<16x128xf32> to vector<16xf32>
    %301 = vector.shape_cast %300 : vector<16xf32> to vector<16x1xf32>
    %cst_113 = arith.constant 1.280000e+02 : f32
    %302 = vector.broadcast %cst_113 : f32 to vector<16x1xf32>
    %303 = arith.divf %301, %302 : vector<16x1xf32>
    %304 = vector.broadcast %303 : vector<16x1xf32> to vector<16x128xf32>
    %305 = arith.subf %295, %304 : vector<16x128xf32>
    %306 = arith.mulf %305, %305 : vector<16x128xf32>
    %cst_114 = arith.constant dense<0.000000e+00> : vector<16xf32>
    %307 = vector.multi_reduction <add>, %306, %cst_114 [1] : vector<16x128xf32> to vector<16xf32>
    %308 = vector.shape_cast %307 : vector<16xf32> to vector<16x1xf32>
    %cst_115 = arith.constant 1.280000e+02 : f32
    %309 = vector.broadcast %cst_115 : f32 to vector<16x1xf32>
    %310 = arith.divf %308, %309 : vector<16x1xf32>
    %311 = vector.broadcast %303 : vector<16x1xf32> to vector<16x128xf32>
    %312 = arith.subf %295, %311 : vector<16x128xf32>
    %cst_116 = arith.constant 9.99999974E-6 : f32
    %313 = vector.broadcast %cst_116 : f32 to vector<16x1xf32>
    %314 = arith.addf %310, %313 : vector<16x1xf32>
    %315 = math.rsqrt %314 : vector<16x1xf32>
    %316 = vector.broadcast %315 : vector<16x1xf32> to vector<16x128xf32>
    %317 = arith.mulf %312, %316 : vector<16x128xf32>
    %318 = vector.broadcast %297 : vector<1x128xf32> to vector<16x128xf32>
    %319 = arith.mulf %317, %318 : vector<16x128xf32>
    %320 = vector.broadcast %299 : vector<1x128xf32> to vector<16x128xf32>
    %321 = arith.addf %319, %320 : vector<16x128xf32>
    %c0_117 = arith.constant 0 : index
    %c0_118 = arith.constant 0 : index
    %322 = vector.load %arg3[%c0_117, %c0_118] : memref<2x16xf32, #tpu.memory_space<vmem>>, vector<2x16xf32>
    %cst_119 = arith.constant dense<0.000000e+00> : vector<2x128xf32>
    %323 = tpu.matmul %322, %321, %cst_119 {dimension_numbers = #tpu.dot_dimension_numbers<[1], [0], [0], [1], [0, 0, 1, 1], [], []>} : vector<2x16xf32>, vector<16x128xf32>, vector<2x128xf32> -> vector<2x128xf32>
    %c0_120 = arith.constant 0 : index
    %c0_121 = arith.constant 0 : index
    %324 = vector.load %arg17[%c0_120, %c0_121] : memref<128x128xf32, #tpu.memory_space<vmem>>, vector<128x128xf32>
    %cst_122 = arith.constant dense<0.000000e+00> : vector<2x128xf32>
    %325 = tpu.matmul %323, %324, %cst_122 {dimension_numbers = #tpu.dot_dimension_numbers<[1], [0], [0], [1], [0, 0, 1, 1], [], []>} : vector<2x128xf32>, vector<128x128xf32>, vector<2x128xf32> -> vector<2x128xf32>
    %c0_123 = arith.constant 0 : index
    %c0_124 = arith.constant 0 : index
    %326 = vector.load %arg18[%c0_123, %c0_124] : memref<1x128xf32, #tpu.memory_space<vmem>>, vector<1x128xf32>
    %327 = vector.broadcast %326 : vector<1x128xf32> to vector<2x128xf32>
    %328 = arith.addf %325, %327 : vector<2x128xf32>
    %c0_125 = arith.constant 0 : index
    %c0_126 = arith.constant 0 : index
    %329 = vector.load %arg19[%c0_125, %c0_126] : memref<2x128xf32, #tpu.memory_space<vmem>>, vector<2x128xf32>
    tpu.vector_store %arg19[%c0_125, %c0_126], %328 {strides = array<i32>} : memref<2x128xf32, #tpu.memory_space<vmem>>, vector<2x128xf32>,
    return
  }
}

</mosaic_0001>

<llo_original>
// kernel: transformer_forward.1
$region0: #{transformer_forward.1}
  #allocation0 [shape = 'u32[]', space=smem, size = 0x4, offset = 0x4, fixed_abs, tag = 'smem constant byte address 0x4 - core index']
  #allocation1 [shape = 'u32[144,128]{1,0:T(1,128)}', space=vmem, size = 0x12000, scoped, tag = 'internal scratch']
  %s0 = inlined_call_operand.vmem [shape: f32[16,4], index: 0, kind: input, shape index: {}]
  %s1 = inlined_call_operand.vmem [shape: f32[16,128], index: 1, kind: input, shape index: {}]
  %s2 = inlined_call_operand.hbm [shape: f32[16,16], index: 2, kind: input, shape index: {}]
  %s3 = inlined_call_operand.vmem [shape: f32[2,16], index: 3, kind: input, shape index: {}]
  %s4 = inlined_call_operand.vmem [shape: f32[4,128], index: 4, kind: input, shape index: {}]
  %s5 = inlined_call_operand.vmem [shape: f32[2,384,128], index: 5, kind: input, shape index: {}]
  %s6 = inlined_call_operand.vmem [shape: f32[2,384,16], index: 6, kind: input, shape index: {}]
  %s7 = inlined_call_operand.hbm [shape: f32[16,16,128], index: 7, kind: input, shape index: {}]
  %s8 = inlined_call_operand.hbm [shape: f32[2,1,128], index: 8, kind: input, shape index: {}]
  %s9 = inlined_call_operand.hbm [shape: f32[2,1,128], index: 9, kind: input, shape index: {}]
  %s10 = inlined_call_operand.hbm [shape: f32[2,1,128], index: 10, kind: input, shape index: {}]
  %s11 = inlined_call_operand.hbm [shape: f32[2,128,256], index: 11, kind: input, shape index: {}]
  %s12 = inlined_call_operand.vmem [shape: f32[2,1,256], index: 12, kind: input, shape index: {}]
  %s13 = inlined_call_operand.hbm [shape: f32[2,256,128], index: 13, kind: input, shape index: {}]
  %s14 = inlined_call_operand.hbm [shape: f32[2,1,128], index: 14, kind: input, shape index: {}]
  %s15 = inlined_call_operand.hbm [shape: f32[2,1,128], index: 15, kind: input, shape index: {}]
  %s16 = inlined_call_operand.hbm [shape: f32[2,1,128], index: 16, kind: input, shape index: {}]
  %s17 = inlined_call_operand.vmem [shape: f32[128,128], index: 17, kind: input, shape index: {}]
  %s18 = inlined_call_operand.hbm [shape: f32[1,128], index: 18, kind: input, shape index: {}]
  %s19 = inlined_call_operand.hbm [shape: f32[2,128], index: 19, kind: output, shape index: {}]
  %s20 = sld [smem:[#allocation0]]
  $region130: #{transformer_forward.1} parent=0
    _
  %s22 = ssub.s32 1, %s20
  %s23 = scalar_select 0, %s22, %s20
  $region1: #{transformer_forward.1} parent=0
    #allocation2 [shape = 'u8[8192]{0}', space=vmem, size = 0x2000, scoped, tag = 'input window, operand 2, single buffered']
    #allocation3 [shape = 's32[1]{0}', space=sflag, size = 0x4, scoped, tag = 'scoped memory for transformer_forward.1']
    #allocation4 [shape = 's32[1]{0}', space=sflag, size = 0x4, scoped, tag = 'scoped memory for transformer_forward.1']
    #allocation5 [shape = 'u8[131072]{0}', space=vmem, size = 0x20000, scoped, tag = 'input window, operand 7, single buffered']
    #allocation6 [shape = 's32[1]{0}', space=sflag, size = 0x4, scoped, tag = 'scoped memory for transformer_forward.1']
    #allocation7 [shape = 'u8[1024]{0}', space=vmem, size = 0x400, scoped, tag = 'input window, operand 8, single buffered']
    #allocation8 [shape = 'u8[1024]{0}', space=vmem, size = 0x400, scoped, tag = 'input window, operand 9, single buffered']
    #allocation9 [shape = 's32[1]{0}', space=sflag, size = 0x4, scoped, tag = 'scoped memory for transformer_forward.1']
    #allocation10 [shape = 'u8[1024]{0}', space=vmem, size = 0x400, scoped, tag = 'input window, operand 10, single buffered']
    #allocation11 [shape = 'u8[262144]{0}', space=vmem, size = 0x40000, scoped, tag = 'input window, operand 11, single buffered']
    #allocation12 [shape = 's32[1]{0}', space=sflag, size = 0x4, scoped, tag = 'scoped memory for transformer_forward.1']
    #allocation13 [shape = 'u8[262144]{0}', space=vmem, size = 0x40000, scoped, tag = 'input window, operand 13, single buffered']
    #allocation14 [shape = 'u8[1024]{0}', space=vmem, size = 0x400, scoped, tag = 'input window, operand 14, single buffered']
    #allocation15 [shape = 's32[1]{0}', space=sflag, size = 0x4, scoped, tag = 'scoped memory for transformer_forward.1']
    #allocation16 [shape = 'u8[1024]{0}', space=vmem, size = 0x400, scoped, tag = 'input window, operand 15, single buffered']
    #allocation17 [shape = 'u8[1024]{0}', space=vmem, size = 0x400, scoped, tag = 'input window, operand 16, single buffered']
    #allocation18 [shape = 's32[1]{0}', space=sflag, size = 0x4, scoped, tag = 'scoped memory for transformer_forward.1']
    #allocation19 [shape = 'u8[512]{0}', space=vmem, size = 0x400, scoped, tag = 'input window, operand 18, single buffered']
    #allocation20 [shape = 'u8[1024]{0}', space=vmem, size = 0x400, scoped, tag = 'output window, operand 0, single buffered']
    %24 = vsyncpa [#allocation3], 0
    %25 = vsyncpa [#allocation6], 0
    %26 = vsyncpa [#allocation9], 0
    %27 = vsyncpa [#allocation12], 0
    %28 = vsyncpa [#allocation15], 0
    %29 = vsyncpa [#allocation18], 0
    %30 = vsyncpa [#allocation4], 0
    // Predicated region
    $region2: #{transformer_forward.1} parent=1 // pred_check
      _
    $region3: #{transformer_forward.1} parent=1 // pred_check_branch
      %32 = sbr.rel (0) target = $region5
    $region4: #{transformer_forward.1} parent=1 // pred_region
      _
    $region5: #{transformer_forward.1} parent=1 // pred_fallthru
      _
    // Predicated region
    $region6: #{transformer_forward.1} parent=1 // pred_check
      _
    $region7: #{transformer_forward.1} parent=1 // pred_check_branch
      %34 = sbr.rel (0) target = $region9
    $region8: #{transformer_forward.1} parent=1 // pred_region
      _
    $region9: #{transformer_forward.1} parent=1 // pred_fallthru
      _
    // Predicated region
    $region10: #{transformer_forward.1} parent=1 // pred_check
      _
    $region11: #{transformer_forward.1} parent=1 // pred_check_branch
      %36 = sbr.rel (0) target = $region13
    $region12: #{transformer_forward.1} parent=1 // pred_region
      %s38 = ssub.s32 256, 256
      %39 = vsyncadd [#allocation3], %s38
      %s40 = sshll.u32 [#allocation2], 4
      %s41 = int_to_ptr.vmem [resolvable:$true] %s40
      %46 = dma.hbm_to_vmem [thread:$0]  %s2, 256, %s41, [#allocation3], 128, 128, 8
    $region13: #{transformer_forward.1} parent=1 // pred_fallthru
      _
    // Predicated region
    $region14: #{transformer_forward.1} parent=1 // pred_check
      _
    $region15: #{transformer_forward.1} parent=1 // pred_check_branch
      %48 = sbr.rel (0) target = $region17
    $region16: #{transformer_forward.1} parent=1 // pred_region
      _
    $region17: #{transformer_forward.1} parent=1 // pred_fallthru
      _
    // Predicated region
    $region18: #{transformer_forward.1} parent=1 // pred_check
      _
    $region19: #{transformer_forward.1} parent=1 // pred_check_branch
      %50 = sbr.rel (0) target = $region21
    $region20: #{transformer_forward.1} parent=1 // pred_region
      _
    $region21: #{transformer_forward.1} parent=1 // pred_fallthru
      _
    // Predicated region
    $region22: #{transformer_forward.1} parent=1 // pred_check
      _
    $region23: #{transformer_forward.1} parent=1 // pred_check_branch
      %52 = sbr.rel (0) target = $region25
    $region24: #{transformer_forward.1} parent=1 // pred_region
      _
    $region25: #{transformer_forward.1} parent=1 // pred_fallthru
      _
    // Predicated region
    $region26: #{transformer_forward.1} parent=1 // pred_check
      _
    $region27: #{transformer_forward.1} parent=1 // pred_check_branch
      %54 = sbr.rel (0) target = $region29
    $region28: #{transformer_forward.1} parent=1 // pred_region
      _
    $region29: #{transformer_forward.1} parent=1 // pred_fallthru
      _
    // Predicated region
    $region30: #{transformer_forward.1} parent=1 // pred_check
      _
    $region31: #{transformer_forward.1} parent=1 // pred_check_branch
      %56 = sbr.rel (0) target = $region33
    $region32: #{transformer_forward.1} parent=1 // pred_region
      %s58 = ssub.s32 4096, 4096
      %59 = vsyncadd [#allocation6], %s58
      %s60 = sshll.u32 [#allocation5], 4
      %s61 = int_to_ptr.vmem [resolvable:$true] %s60
      %66 = dma.hbm_to_vmem [thread:$0]  %s7, 4096, %s61, [#allocation6], 128, 128, 8
    $region33: #{transformer_forward.1} parent=1 // pred_fallthru
      _
    // Predicated region
    $region34: #{transformer_forward.1} parent=1 // pred_check
      _
    $region35: #{transformer_forward.1} parent=1 // pred_check_branch
      %68 = sbr.rel (0) target = $region37
    $region36: #{transformer_forward.1} parent=1 // pred_region
      %s70 = ssub.s32 32, 32
      %71 = vsyncadd [#allocation6], %s70
      %s72 = sshll.u32 [#allocation7], 4
      %s73 = int_to_ptr.vmem [resolvable:$true] %s72
      %78 = dma.hbm_to_vmem [thread:$0]  %s8, 32, %s73, [#allocation6], 16, 16, 1
    $region37: #{transformer_forward.1} parent=1 // pred_fallthru
      _
    // Predicated region
    $region38: #{transformer_forward.1} parent=1 // pred_check
      _
    $region39: #{transformer_forward.1} parent=1 // pred_check_branch
      %80 = sbr.rel (0) target = $region41
    $region40: #{transformer_forward.1} parent=1 // pred_region
      %s82 = ssub.s32 32, 32
      %83 = vsyncadd [#allocation9], %s82
      %s84 = sshll.u32 [#allocation8], 4
      %s85 = int_to_ptr.vmem [resolvable:$true] %s84
      %90 = dma.hbm_to_vmem [thread:$0]  %s9, 32, %s85, [#allocation9], 16, 16, 1
    $region41: #{transformer_forward.1} parent=1 // pred_fallthru
      _
    // Predicated region
    $region42: #{transformer_forward.1} parent=1 // pred_check
      _
    $region43: #{transformer_forward.1} parent=1 // pred_check_branch
      %92 = sbr.rel (0) target = $region45
    $region44: #{transformer_forward.1} parent=1 // pred_region
      %s94 = ssub.s32 32, 32
      %95 = vsyncadd [#allocation9], %s94
      %s96 = sshll.u32 [#allocation10], 4
      %s97 = int_to_ptr.vmem [resolvable:$true] %s96
      %102 = dma.hbm_to_vmem [thread:$0]  %s10, 32, %s97, [#allocation9], 16, 16, 1
    $region45: #{transformer_forward.1} parent=1 // pred_fallthru
      _
    // Predicated region
    $region46: #{transformer_forward.1} parent=1 // pred_check
      _
    $region47: #{transformer_forward.1} parent=1 // pred_check_branch
      %104 = sbr.rel (0) target = $region49
    $region48: #{transformer_forward.1} parent=1 // pred_region
      %s106 = ssub.s32 8192, 8192
      %107 = vsyncadd [#allocation12], %s106
      %s108 = sshll.u32 [#allocation11], 4
      %s109 = int_to_ptr.vmem [resolvable:$true] %s108
      %114 = dma.hbm_to_vmem [thread:$0]  %s11, 8192, %s109, [#allocation12], 256, 256, 16
    $region49: #{transformer_forward.1} parent=1 // pred_fallthru
      _
    // Predicated region
    $region50: #{transformer_forward.1} parent=1 // pred_check
      _
    $region51: #{transformer_forward.1} parent=1 // pred_check_branch
      %116 = sbr.rel (0) target = $region53
    $region52: #{transformer_forward.1} parent=1 // pred_region
      _
    $region53: #{transformer_forward.1} parent=1 // pred_fallthru
      _
    // Predicated region
    $region54: #{transformer_forward.1} parent=1 // pred_check
      _
    $region55: #{transformer_forward.1} parent=1 // pred_check_branch
      %118 = sbr.rel (0) target = $region57
    $region56: #{transformer_forward.1} parent=1 // pred_region
      %s120 = ssub.s32 8192, 8192
      %121 = vsyncadd [#allocation12], %s120
      %s122 = sshll.u32 [#allocation13], 4
      %s123 = int_to_ptr.vmem [resolvable:$true] %s122
      %128 = dma.hbm_to_vmem [thread:$0]  %s13, 8192, %s123, [#allocation12], 128, 128, 8
    $region57: #{transformer_forward.1} parent=1 // pred_fallthru
      _
    // Predicated region
    $region58: #{transformer_forward.1} parent=1 // pred_check
      _
    $region59: #{transformer_forward.1} parent=1 // pred_check_branch
      %130 = sbr.rel (0) target = $region61
    $region60: #{transformer_forward.1} parent=1 // pred_region
      %s132 = ssub.s32 32, 32
      %133 = vsyncadd [#allocation15], %s132
      %s134 = sshll.u32 [#allocation14], 4
      %s135 = int_to_ptr.vmem [resolvable:$true] %s134
      %140 = dma.hbm_to_vmem [thread:$0]  %s14, 32, %s135, [#allocation15], 16, 16, 1
    $region61: #{transformer_forward.1} parent=1 // pred_fallthru
      _
    // Predicated region
    $region62: #{transformer_forward.1} parent=1 // pred_check
      _
    $region63: #{transformer_forward.1} parent=1 // pred_check_branch
      %142 = sbr.rel (0) target = $region65
    $region64: #{transformer_forward.1} parent=1 // pred_region
      %s144 = ssub.s32 32, 32
      %145 = vsyncadd [#allocation15], %s144
      %s146 = sshll.u32 [#allocation16], 4
      %s147 = int_to_ptr.vmem [resolvable:$true] %s146
      %152 = dma.hbm_to_vmem [thread:$0]  %s15, 32, %s147, [#allocation15], 16, 16, 1
    $region65: #{transformer_forward.1} parent=1 // pred_fallthru
      _
    // Predicated region
    $region66: #{transformer_forward.1} parent=1 // pred_check
      _
    $region67: #{transformer_forward.1} parent=1 // pred_check_branch
      %154 = sbr.rel (0) target = $region69
    $region68: #{transformer_forward.1} parent=1 // pred_region
      %s156 = ssub.s32 32, 32
      %157 = vsyncadd [#allocation18], %s156
      %s158 = sshll.u32 [#allocation17], 4
      %s159 = int_to_ptr.vmem [resolvable:$true] %s158
      %164 = dma.hbm_to_vmem [thread:$0]  %s16, 32, %s159, [#allocation18], 16, 16, 1
    $region69: #{transformer_forward.1} parent=1 // pred_fallthru
      _
    // Predicated region
    $region70: #{transformer_forward.1} parent=1 // pred_check
      _
    $region71: #{transformer_forward.1} parent=1 // pred_check_branch
      %166 = sbr.rel (0) target = $region73
    $region72: #{transformer_forward.1} parent=1 // pred_region
      _
    $region73: #{transformer_forward.1} parent=1 // pred_fallthru
      _
    // Predicated region
    $region74: #{transformer_forward.1} parent=1 // pred_check
      _
    $region75: #{transformer_forward.1} parent=1 // pred_check_branch
      %168 = sbr.rel (0) target = $region77
    $region76: #{transformer_forward.1} parent=1 // pred_region
      %s170 = ssub.s32 16, 16
      %171 = vsyncadd [#allocation18], %s170
      %s173 = sshll.u32 [#allocation19], 4
      %s174 = int_to_ptr.vmem [resolvable:$true] %s173
      %176 = dma.hbm_to_vmem [thread:$0]  %s18, 16, %s174, [#allocation18]
    $region77: #{transformer_forward.1} parent=1 // pred_fallthru
      _
    // Predicated region
    $region78: #{transformer_forward.1} parent=1 // pred_check
      _
    $region79: #{transformer_forward.1} parent=1 // pred_check_branch
      %178 = sbr.rel (0) target = $region81
    $region80: #{transformer_forward.1} parent=1 // pred_region
      %179 = dma.done [#allocation3], 256
    $region81: #{transformer_forward.1} parent=1 // pred_fallthru
      _
    // Predicated region
    $region82: #{transformer_forward.1} parent=1 // pred_check
      _
    $region83: #{transformer_forward.1} parent=1 // pred_check_branch
      %181 = sbr.rel (0) target = $region85
    $region84: #{transformer_forward.1} parent=1 // pred_region
      %182 = dma.done [#allocation6], 4096
    $region85: #{transformer_forward.1} parent=1 // pred_fallthru
      _
    // Predicated region
    $region86: #{transformer_forward.1} parent=1 // pred_check
      _
    $region87: #{transformer_forward.1} parent=1 // pred_check_branch
      %184 = sbr.rel (0) target = $region89
    $region88: #{transformer_forward.1} parent=1 // pred_region
      %185 = dma.done [#allocation6], 32
    $region89: #{transformer_forward.1} parent=1 // pred_fallthru
      _
    // Predicated region
    $region90: #{transformer_forward.1} parent=1 // pred_check
      _
    $region91: #{transformer_forward.1} parent=1 // pred_check_branch
      %187 = sbr.rel (0) target = $region93
    $region92: #{transformer_forward.1} parent=1 // pred_region
      %188 = dma.done [#allocation9], 32
    $region93: #{transformer_forward.1} parent=1 // pred_fallthru
      _
    // Predicated region
    $region94: #{transformer_forward.1} parent=1 // pred_check
      _
    $region95: #{transformer_forward.1} parent=1 // pred_check_branch
      %190 = sbr.rel (0) target = $region97
    $region96: #{transformer_forward.1} parent=1 // pred_region
      %191 = dma.done [#allocation9], 32
    $region97: #{transformer_forward.1} parent=1 // pred_fallthru
      _
    // Predicated region
    $region98: #{transformer_forward.1} parent=1 // pred_check
      _
    $region99: #{transformer_forward.1} parent=1 // pred_check_branch
      %193 = sbr.rel (0) target = $region101
    $region100: #{transformer_forward.1} parent=1 // pred_region
      %194 = dma.done [#allocation12], 8192
    $region101: #{transformer_forward.1} parent=1 // pred_fallthru
      _
    // Predicated region
    $region102: #{transformer_forward.1} parent=1 // pred_check
      _
    $region103: #{transformer_forward.1} parent=1 // pred_check_branch
      %196 = sbr.rel (0) target = $region105
    $region104: #{transformer_forward.1} parent=1 // pred_region
      %197 = dma.done [#allocation12], 8192
    $region105: #{transformer_forward.1} parent=1 // pred_fallthru
      _
    // Predicated region
    $region106: #{transformer_forward.1} parent=1 // pred_check
      _
    $region107: #{transformer_forward.1} parent=1 // pred_check_branch
      %199 = sbr.rel (0) target = $region109
    $region108: #{transformer_forward.1} parent=1 // pred_region
      %200 = dma.done [#allocation15], 32
    $region109: #{transformer_forward.1} parent=1 // pred_fallthru
      _
    // Predicated region
    $region110: #{transformer_forward.1} parent=1 // pred_check
      _
    $region111: #{transformer_forward.1} parent=1 // pred_check_branch
      %202 = sbr.rel (0) target = $region113
    $region112: #{transformer_forward.1} parent=1 // pred_region
      %203 = dma.done [#allocation15], 32
    $region113: #{transformer_forward.1} parent=1 // pred_fallthru
      _
    // Predicated region
    $region114: #{transformer_forward.1} parent=1 // pred_check
      _
    $region115: #{transformer_forward.1} parent=1 // pred_check_branch
      %205 = sbr.rel (0) target = $region117
    $region116: #{transformer_forward.1} parent=1 // pred_region
      %206 = dma.done [#allocation18], 32
    $region117: #{transformer_forward.1} parent=1 // pred_fallthru
      _
    // Predicated region
    $region118: #{transformer_forward.1} parent=1 // pred_check
      _
    $region119: #{transformer_forward.1} parent=1 // pred_check_branch
      %208 = sbr.rel (0) target = $region121
    $region120: #{transformer_forward.1} parent=1 // pred_region
      %209 = dma.done [#allocation18], 16
    $region121: #{transformer_forward.1} parent=1 // pred_fallthru
      _
    %v210 = vld [vmem:[%s0] sm:$0xff]
    %v211 = vld [vmem:[%s0 + $0x8] sm:$0xff]
    %v212 = vld [vmem:[%s4] sm:$0xf]
    %v213 = vld [vmem:[%s1] sm:$0xff]
    %v214 = vld [vmem:[%s1 + $0x8] sm:$0xff]
    %vm215 = vcmask 31744
    %v217 = vsel %vm215, %v210, 0
    %v220 = vsel %vm215, %v211, 0
    %vm222 = vcmask 1043456
    %v224 = vsel %vm222, %v212, 0
    %226 = vmatprep.subr.mxu0 0.0
    %227 = vmatpush1.msra.mxu0 0.0
    %228 = vmatprep.subr.mxu0 0.0
    %229 = vmatpush1.msra.mxu0 0.0
    %230 = vmatprep.subr.mxu0 0.0
    %231 = vmatpush1.msra.mxu0 0.0
    %232 = vmatprep.subr.mxu0 0.0
    %233 = vmatpush1.msra.mxu0 0.0
    %234 = vmatprep.subr.mxu0 0.0
    %235 = vmatpush1.msra.mxu0 0.0
    %236 = vmatprep.subr.mxu0 0.0
    %237 = vmatpush1.msra.mxu0 0.0
    %238 = vmatprep.subr.mxu0 0.0
    %239 = vmatpush1.msra.mxu0 0.0
    %240 = vmatprep.subr.mxu0 0.0
    %241 = vmatpush1.msra.mxu0 0.0
    %242 = vmatprep.subr.mxu0 0.0
    %243 = vmatpush1.msra.mxu0 0.0
    %244 = vmatprep.subr.mxu0 0.0
    %245 = vmatpush1.msra.mxu0 0.0
    %246 = vmatprep.subr.mxu0 0.0
    %247 = vmatpush1.msra.mxu0 0.0
    %248 = vmatprep.subr.mxu0 0.0
    %249 = vmatpush1.msra.mxu0 0.0
    %250 = vmatprep.subr.mxu0 0.0
    %251 = vmatpush1.msra.mxu0 0.0
    %252 = vmatprep.subr.mxu0 0.0
    %253 = vmatpush1.msra.mxu0 0.0
    %254 = vmatprep.subr.mxu0 0.0
    %255 = vmatpush1.msra.mxu0 0.0
    %256 = vmatprep.subr.mxu0 0.0
    %257 = vmatpush1.msra.mxu0 %v224
    %258 = vmatprep.subr.mxu0 0.0
    %259 = vmatpush2.msra.mxu0 0.0
    %260 = vmatprep.subr.mxu0 0.0
    %261 = vmatpush2.msra.mxu0 0.0
    %262 = vmatprep.subr.mxu0 0.0
    %263 = vmatpush2.msra.mxu0 0.0
    %264 = vmatprep.subr.mxu0 0.0
    %265 = vmatpush2.msra.mxu0 0.0
    %266 = vmatprep.subr.mxu0 0.0
    %267 = vmatpush2.msra.mxu0 0.0
    %268 = vmatprep.subr.mxu0 0.0
    %269 = vmatpush2.msra.mxu0 0.0
    %270 = vmatprep.subr.mxu0 0.0
    %271 = vmatpush2.msra.mxu0 0.0
    %272 = vmatprep.subr.mxu0 0.0
    %273 = vmatpush2.msra.mxu0 0.0
    %274 = vmatprep.subr.mxu0 0.0
    %275 = vmatpush2.msra.mxu0 0.0
    %276 = vmatprep.subr.mxu0 0.0
    %277 = vmatpush2.msra.mxu0 0.0
    %278 = vmatprep.subr.mxu0 0.0
    %279 = vmatpush2.msra.mxu0 0.0
    %280 = vmatprep.subr.mxu0 0.0
    %281 = vmatpush2.msra.mxu0 0.0
    %282 = vmatprep.subr.mxu0 0.0
    %283 = vmatpush2.msra.mxu0 0.0
    %284 = vmatprep.subr.mxu0 0.0
    %285 = vmatpush2.msra.mxu0 0.0
    %286 = vmatprep.subr.mxu0 0.0
    %287 = vmatpush2.msra.mxu0 0.0
    %288 = vmatprep.subr.mxu0 0.0
    %289 = vmatpush2.msra.mxu0 0.0
    %290 = vmatprep.mubr.f32.mxu0 0.0
    %291 = vmatmul.mubr.f32.gmra.mxu0 %v217
    %v292 = vpop.f32.mrf.mxu0
    %v293 = vadd.f32 %v213, %v292
    %v294 = vpop.f32.mrf.mxu0
    %295 = vmatprep.mubr.f32.mxu0 0.0
    %296 = vmatmul.mubr.f32.gmra.mxu0 %v220
    %v297 = vpop.f32.mrf.mxu0
    %v298 = vadd.f32 %v214, %v297
    %v299 = vpop.f32.mrf.mxu0
    %300 = vdwg.mxu0
    %v301 = vld [vmem:[#allocation2] sm:$0xff]
    %v302 = vld [vmem:[#allocation2 + $0x8] sm:$0xff]
    %v303 = vld [vmem:[%s5] sm:$0xff]
    %v304 = vld [vmem:[%s5 + $0x8] sm:$0xff]
    %v305 = vld [vmem:[%s5 + $0x10] sm:$0xff]
    %v306 = vld [vmem:[%s5 + $0x18] sm:$0xff]
    %v307 = vld [vmem:[%s5 + $0x20] sm:$0xff]
    %v308 = vld [vmem:[%s5 + $0x28] sm:$0xff]
    %v309 = vld [vmem:[%s5 + $0x30] sm:$0xff]
    %v310 = vld [vmem:[%s5 + $0x38] sm:$0xff]
    %v311 = vld [vmem:[%s5 + $0x40] sm:$0xff]
    %v312 = vld [vmem:[%s5 + $0x48] sm:$0xff]
    %v313 = vld [vmem:[%s5 + $0x50] sm:$0xff]
    %v314 = vld [vmem:[%s5 + $0x58] sm:$0xff]
    %v315 = vld [vmem:[%s5 + $0x60] sm:$0xff]
    %v316 = vld [vmem:[%s5 + $0x68] sm:$0xff]
    %v317 = vld [vmem:[%s5 + $0x70] sm:$0xff]
    %v318 = vld [vmem:[%s5 + $0x78] sm:$0xff]
    %v319 = vld [vmem:[%s5 + $0x80] sm:$0xff]
    %v320 = vld [vmem:[%s5 + $0x88] sm:$0xff]
    %v321 = vld [vmem:[%s5 + $0x90] sm:$0xff]
    %v322 = vld [vmem:[%s5 + $0x98] sm:$0xff]
    %v323 = vld [vmem:[%s5 + $0xa0] sm:$0xff]
    %v324 = vld [vmem:[%s5 + $0xa8] sm:$0xff]
    %v325 = vld [vmem:[%s5 + $0xb0] sm:$0xff]
    %v326 = vld [vmem:[%s5 + $0xb8] sm:$0xff]
    %v327 = vld [vmem:[%s5 + $0xc0] sm:$0xff]
    %v328 = vld [vmem:[%s5 + $0xc8] sm:$0xff]
    %v329 = vld [vmem:[%s5 + $0xd0] sm:$0xff]
    %v330 = vld [vmem:[%s5 + $0xd8] sm:$0xff]
    %v331 = vld [vmem:[%s5 + $0xe0] sm:$0xff]
    %v332 = vld [vmem:[%s5 + $0xe8] sm:$0xff]
    %v333 = vld [vmem:[%s5 + $0xf0] sm:$0xff]
    %v334 = vld [vmem:[%s5 + $0xf8] sm:$0xff]
    %v335 = vld [vmem:[%s5 + $0x100] sm:$0xff]
    %v336 = vld [vmem:[%s5 + $0x108] sm:$0xff]
    %v337 = vld [vmem:[%s5 + $0x110] sm:$0xff]
    %v338 = vld [vmem:[%s5 + $0x118] sm:$0xff]
    %v339 = vld [vmem:[%s5 + $0x120] sm:$0xff]
    %v340 = vld [vmem:[%s5 + $0x128] sm:$0xff]
    %v341 = vld [vmem:[%s5 + $0x130] sm:$0xff]
    %v342 = vld [vmem:[%s5 + $0x138] sm:$0xff]
    %v343 = vld [vmem:[%s5 + $0x140] sm:$0xff]
    %v344 = vld [vmem:[%s5 + $0x148] sm:$0xff]
    %v345 = vld [vmem:[%s5 + $0x150] sm:$0xff]
    %v346 = vld [vmem:[%s5 + $0x158] sm:$0xff]
    %v347 = vld [vmem:[%s5 + $0x160] sm:$0xff]
    %v348 = vld [vmem:[%s5 + $0x168] sm:$0xff]
    %v349 = vld [vmem:[%s5 + $0x170] sm:$0xff]
    %v350 = vld [vmem:[%s5 + $0x178] sm:$0xff]
    %v351 = vld [vmem:[%s6] sm:$0xff]
    %v352 = vld [vmem:[%s6 + $0x8] sm:$0xff]
    %v353 = vld [vmem:[%s6 + $0x10] sm:$0xff]
    %v354 = vld [vmem:[%s6 + $0x18] sm:$0xff]
    %v355 = vld [vmem:[%s6 + $0x20] sm:$0xff]
    %v356 = vld [vmem:[%s6 + $0x28] sm:$0xff]
    %v357 = vld [vmem:[%s6 + $0x30] sm:$0xff]
    %v358 = vld [vmem:[%s6 + $0x38] sm:$0xff]
    %v359 = vld [vmem:[%s6 + $0x40] sm:$0xff]
    %v360 = vld [vmem:[%s6 + $0x48] sm:$0xff]
    %v361 = vld [vmem:[%s6 + $0x50] sm:$0xff]
    %v362 = vld [vmem:[%s6 + $0x58] sm:$0xff]
    %v363 = vld [vmem:[%s6 + $0x60] sm:$0xff]
    %v364 = vld [vmem:[%s6 + $0x68] sm:$0xff]
    %v365 = vld [vmem:[%s6 + $0x70] sm:$0xff]
    %v366 = vld [vmem:[%s6 + $0x78] sm:$0xff]
    %v367 = vld [vmem:[%s6 + $0x80] sm:$0xff]
    %v368 = vld [vmem:[%s6 + $0x88] sm:$0xff]
    %v369 = vld [vmem:[%s6 + $0x90] sm:$0xff]
    %v370 = vld [vmem:[%s6 + $0x98] sm:$0xff]
    %v371 = vld [vmem:[%s6 + $0xa0] sm:$0xff]
    %v372 = vld [vmem:[%s6 + $0xa8] sm:$0xff]
    %v373 = vld [vmem:[%s6 + $0xb0] sm:$0xff]
    %v374 = vld [vmem:[%s6 + $0xb8] sm:$0xff]
    %v375 = vld [vmem:[%s6 + $0xc0] sm:$0xff]
    %v376 = vld [vmem:[%s6 + $0xc8] sm:$0xff]
    %v377 = vld [vmem:[%s6 + $0xd0] sm:$0xff]
    %v378 = vld [vmem:[%s6 + $0xd8] sm:$0xff]
    %v379 = vld [vmem:[%s6 + $0xe0] sm:$0xff]
    %v380 = vld [vmem:[%s6 + $0xe8] sm:$0xff]
    %v381 = vld [vmem:[%s6 + $0xf0] sm:$0xff]
    %v382 = vld [vmem:[%s6 + $0xf8] sm:$0xff]
    %v383 = vld [vmem:[%s6 + $0x100] sm:$0xff]
    %v384 = vld [vmem:[%s6 + $0x108] sm:$0xff]
    %v385 = vld [vmem:[%s6 + $0x110] sm:$0xff]
    %v386 = vld [vmem:[%s6 + $0x118] sm:$0xff]
    %v387 = vld [vmem:[%s6 + $0x120] sm:$0xff]
    %v388 = vld [vmem:[%s6 + $0x128] sm:$0xff]
    %v389 = vld [vmem:[%s6 + $0x130] sm:$0xff]
    %v390 = vld [vmem:[%s6 + $0x138] sm:$0xff]
    %v391 = vld [vmem:[%s6 + $0x140] sm:$0xff]
    %v392 = vld [vmem:[%s6 + $0x148] sm:$0xff]
    %v393 = vld [vmem:[%s6 + $0x150] sm:$0xff]
    %v394 = vld [vmem:[%s6 + $0x158] sm:$0xff]
    %v395 = vld [vmem:[%s6 + $0x160] sm:$0xff]
    %v396 = vld [vmem:[%s6 + $0x168] sm:$0xff]
    %v397 = vld [vmem:[%s6 + $0x170] sm:$0xff]
    %v398 = vld [vmem:[%s6 + $0x178] sm:$0xff]
    %399 = vmatprep.subr.mxu0 0.0
    %400 = vmatpush1.xpose.msra.mxu0 0.0
    %401 = vmatprep.subr.mxu0 0.0
    %402 = vmatpush1.xpose.msra.mxu0 0.0
    %403 = vmatprep.subr.mxu0 0.0
    %404 = vmatpush1.xpose.msra.mxu0 0.0
    %405 = vmatprep.subr.mxu0 0.0
    %406 = vmatpush1.xpose.msra.mxu0 0.0
    %407 = vmatprep.subr.mxu0 0.0
    %408 = vmatpush1.xpose.msra.mxu0 0.0
    %409 = vmatprep.subr.mxu0 0.0
    %410 = vmatpush1.xpose.msra.mxu0 0.0
    %411 = vmatprep.subr.mxu0 0.0
    %412 = vmatpush1.xpose.msra.mxu0 0.0
    %413 = vmatprep.subr.mxu0 0.0
    %414 = vmatpush1.xpose.msra.mxu0 0.0
    %415 = vmatprep.subr.mxu0 0.0
    %416 = vmatpush1.xpose.msra.mxu0 0.0
    %417 = vmatprep.subr.mxu0 0.0
    %418 = vmatpush1.xpose.msra.mxu0 0.0
    %419 = vmatprep.subr.mxu0 0.0
    %420 = vmatpush1.xpose.msra.mxu0 0.0
    %421 = vmatprep.subr.mxu0 0.0
    %422 = vmatpush1.xpose.msra.mxu0 0.0
    %423 = vmatprep.subr.mxu0 0.0
    %424 = vmatpush1.xpose.msra.mxu0 0.0
    %425 = vmatprep.subr.mxu0 0.0
    %426 = vmatpush1.xpose.msra.mxu0 0.0
    %427 = vmatprep.subr.mxu0 0.0
    %428 = vmatpush1.xpose.msra.mxu0 %v298
    %429 = vmatprep.subr.mxu0 0.0
    %430 = vmatpush1.xpose.msra.mxu0 %v293
    %431 = vmatprep.subr.mxu0 0.0
    %432 = vmatpush2.xpose.msra.mxu0 0.0
    %433 = vmatprep.subr.mxu0 0.0
    %434 = vmatpush2.xpose.msra.mxu0 0.0
    %435 = vmatprep.subr.mxu0 0.0
    %436 = vmatpush2.xpose.msra.mxu0 0.0
    %437 = vmatprep.subr.mxu0 0.0
    %438 = vmatpush2.xpose.msra.mxu0 0.0
    %439 = vmatprep.subr.mxu0 0.0
    %440 = vmatpush2.xpose.msra.mxu0 0.0
    %441 = vmatprep.subr.mxu0 0.0
    %442 = vmatpush2.xpose.msra.mxu0 0.0
    %443 = vmatprep.subr.mxu0 0.0
    %444 = vmatpush2.xpose.msra.mxu0 0.0
    %445 = vmatprep.subr.mxu0 0.0
    %446 = vmatpush2.xpose.msra.mxu0 0.0
    %447 = vmatprep.subr.mxu0 0.0
    %448 = vmatpush2.xpose.msra.mxu0 0.0
    %449 = vmatprep.subr.mxu0 0.0
    %450 = vmatpush2.xpose.msra.mxu0 0.0
    %451 = vmatprep.subr.mxu0 0.0
    %452 = vmatpush2.xpose.msra.mxu0 0.0
    %453 = vmatprep.subr.mxu0 0.0
    %454 = vmatpush2.xpose.msra.mxu0 0.0
    %455 = vmatprep.subr.mxu0 0.0
    %456 = vmatpush2.xpose.msra.mxu0 0.0
    %457 = vmatprep.subr.mxu0 0.0
    %458 = vmatpush2.xpose.msra.mxu0 0.0
    %459 = vmatprep.subr.mxu0 0.0
    %460 = vmatpush2.xpose.msra.mxu0 0.0
    %461 = vmatprep.subr.mxu0 0.0
    %462 = vmatpush2.xpose.msra.mxu0 0.0
    %463 = vmatprep.mubr.f32.mxu0 0.0
    %464 = vmatmul.mubr.f32.gmra.mxu0 %v303
    %v465 = vpop.f32.mrf.mxu0
    %v466 = vadd.f32 %v351, %v465
    %v467 = vpop.f32.mrf.mxu0
    %468 = vmatprep.mubr.f32.mxu0 0.0
    %469 = vmatmul.mubr.f32.gmra.mxu0 %v304
    %v470 = vpop.f32.mrf.mxu0
    %v471 = vadd.f32 %v352, %v470
    %v472 = vpop.f32.mrf.mxu0
    %473 = vmatprep.mubr.f32.mxu0 0.0
    %474 = vmatmul.mubr.f32.gmra.mxu0 %v305
    %v475 = vpop.f32.mrf.mxu0
    %v476 = vadd.f32 %v353, %v475
    %v477 = vpop.f32.mrf.mxu0
    %478 = vmatprep.mubr.f32.mxu0 0.0
    %479 = vmatmul.mubr.f32.gmra.mxu0 %v306
    %v480 = vpop.f32.mrf.mxu0
    %v481 = vadd.f32 %v354, %v480
    %v482 = vpop.f32.mrf.mxu0
    %483 = vmatprep.mubr.f32.mxu0 0.0
    %484 = vmatmul.mubr.f32.gmra.mxu0 %v307
    %v485 = vpop.f32.mrf.mxu0
    %v486 = vadd.f32 %v355, %v485
    %v487 = vpop.f32.mrf.mxu0
    %488 = vmatprep.mubr.f32.mxu0 0.0
    %489 = vmatmul.mubr.f32.gmra.mxu0 %v308
    %v490 = vpop.f32.mrf.mxu0
    %v491 = vadd.f32 %v356, %v490
    %v492 = vpop.f32.mrf.mxu0
    %493 = vmatprep.mubr.f32.mxu0 0.0
    %494 = vmatmul.mubr.f32.gmra.mxu0 %v309
    %v495 = vpop.f32.mrf.mxu0
    %v496 = vadd.f32 %v357, %v495
    %v497 = vpop.f32.mrf.mxu0
    %498 = vmatprep.mubr.f32.mxu0 0.0
    %499 = vmatmul.mubr.f32.gmra.mxu0 %v310
    %v500 = vpop.f32.mrf.mxu0
    %v501 = vadd.f32 %v358, %v500
    %v502 = vpop.f32.mrf.mxu0
    %503 = vmatprep.mubr.f32.mxu0 0.0
    %504 = vmatmul.mubr.f32.gmra.mxu0 %v311
    %v505 = vpop.f32.mrf.mxu0
    %v506 = vadd.f32 %v359, %v505
    %v507 = vpop.f32.mrf.mxu0
    %508 = vmatprep.mubr.f32.mxu0 0.0
    %509 = vmatmul.mubr.f32.gmra.mxu0 %v312
    %v510 = vpop.f32.mrf.mxu0
    %v511 = vadd.f32 %v360, %v510
    %v512 = vpop.f32.mrf.mxu0
    %513 = vmatprep.mubr.f32.mxu0 0.0
    %514 = vmatmul.mubr.f32.gmra.mxu0 %v313
    %v515 = vpop.f32.mrf.mxu0
    %v516 = vadd.f32 %v361, %v515
    %v517 = vpop.f32.mrf.mxu0
    %518 = vmatprep.mubr.f32.mxu0 0.0
    %519 = vmatmul.mubr.f32.gmra.mxu0 %v314
    %v520 = vpop.f32.mrf.mxu0
    %v521 = vadd.f32 %v362, %v520
    %v522 = vpop.f32.mrf.mxu0
    %523 = vmatprep.mubr.f32.mxu0 0.0
    %524 = vmatmul.mubr.f32.gmra.mxu0 %v315
    %v525 = vpop.f32.mrf.mxu0
    %v526 = vadd.f32 %v363, %v525
    %v527 = vpop.f32.mrf.mxu0
    %528 = vmatprep.mubr.f32.mxu0 0.0
    %529 = vmatmul.mubr.f32.gmra.mxu0 %v316
    %v530 = vpop.f32.mrf.mxu0
    %v531 = vadd.f32 %v364, %v530
    %v532 = vpop.f32.mrf.mxu0
    %533 = vmatprep.mubr.f32.mxu0 0.0
    %534 = vmatmul.mubr.f32.gmra.mxu0 %v317
    %v535 = vpop.f32.mrf.mxu0
    %v536 = vadd.f32 %v365, %v535
    %v537 = vpop.f32.mrf.mxu0
    %538 = vmatprep.mubr.f32.mxu0 0.0
    %539 = vmatmul.mubr.f32.gmra.mxu0 %v318
    %v540 = vpop.f32.mrf.mxu0
    %v541 = vadd.f32 %v366, %v540
    %v542 = vpop.f32.mrf.mxu0
    %543 = vmatprep.mubr.f32.mxu0 0.0
    %544 = vmatmul.mubr.f32.gmra.mxu0 %v319
    %v545 = vpop.f32.mrf.mxu0
    %v546 = vadd.f32 %v367, %v545
    %v547 = vpop.f32.mrf.mxu0
    %548 = vmatprep.mubr.f32.mxu0 0.0
    %549 = vmatmul.mubr.f32.gmra.mxu0 %v320
    %v550 = vpop.f32.mrf.mxu0
    %v551 = vadd.f32 %v368, %v550
    %v552 = vpop.f32.mrf.mxu0
    %553 = vmatprep.mubr.f32.mxu0 0.0
    %554 = vmatmul.mubr.f32.gmra.mxu0 %v321
    %v555 = vpop.f32.mrf.mxu0
    %v556 = vadd.f32 %v369, %v555
    %v557 = vpop.f32.mrf.mxu0
    %558 = vmatprep.mubr.f32.mxu0 0.0
    %559 = vmatmul.mubr.f32.gmra.mxu0 %v322
    %v560 = vpop.f32.mrf.mxu0
    %v561 = vadd.f32 %v370, %v560
    %v562 = vpop.f32.mrf.mxu0
    %563 = vmatprep.mubr.f32.mxu0 0.0
    %564 = vmatmul.mubr.f32.gmra.mxu0 %v323
    %v565 = vpop.f32.mrf.mxu0
    %v566 = vadd.f32 %v371, %v565
    %v567 = vpop.f32.mrf.mxu0
    %568 = vmatprep.mubr.f32.mxu0 0.0
    %569 = vmatmul.mubr.f32.gmra.mxu0 %v324
    %v570 = vpop.f32.mrf.mxu0
    %v571 = vadd.f32 %v372, %v570
    %v572 = vpop.f32.mrf.mxu0
    %573 = vmatprep.mubr.f32.mxu0 0.0
    %574 = vmatmul.mubr.f32.gmra.mxu0 %v325
    %v575 = vpop.f32.mrf.mxu0
    %v576 = vadd.f32 %v373, %v575
    %v577 = vpop.f32.mrf.mxu0
    %578 = vmatprep.mubr.f32.mxu0 0.0
    %579 = vmatmul.mubr.f32.gmra.mxu0 %v326
    %v580 = vpop.f32.mrf.mxu0
    %v581 = vadd.f32 %v374, %v580
    %v582 = vpop.f32.mrf.mxu0
    %583 = vmatprep.mubr.f32.mxu0 0.0
    %584 = vmatmul.mubr.f32.gmra.mxu0 %v327
    %v585 = vpop.f32.mrf.mxu0
    %v586 = vadd.f32 %v375, %v585
    %v587 = vpop.f32.mrf.mxu0
    %588 = vmatprep.mubr.f32.mxu0 0.0
    %589 = vmatmul.mubr.f32.gmra.mxu0 %v328
    %v590 = vpop.f32.mrf.mxu0
    %v591 = vadd.f32 %v376, %v590
    %v592 = vpop.f32.mrf.mxu0
    %593 = vmatprep.mubr.f32.mxu0 0.0
    %594 = vmatmul.mubr.f32.gmra.mxu0 %v329
    %v595 = vpop.f32.mrf.mxu0
    %v596 = vadd.f32 %v377, %v595
    %v597 = vpop.f32.mrf.mxu0
    %598 = vmatprep.mubr.f32.mxu0 0.0
    %599 = vmatmul.mubr.f32.gmra.mxu0 %v330
    %v600 = vpop.f32.mrf.mxu0
    %v601 = vadd.f32 %v378, %v600
    %v602 = vpop.f32.mrf.mxu0
    %603 = vmatprep.mubr.f32.mxu0 0.0
    %604 = vmatmul.mubr.f32.gmra.mxu0 %v331
    %v605 = vpop.f32.mrf.mxu0
    %v606 = vadd.f32 %v379, %v605
    %v607 = vpop.f32.mrf.mxu0
    %608 = vmatprep.mubr.f32.mxu0 0.0
    %609 = vmatmul.mubr.f32.gmra.mxu0 %v332
    %v610 = vpop.f32.mrf.mxu0
    %v611 = vadd.f32 %v380, %v610
    %v612 = vpop.f32.mrf.mxu0
    %613 = vmatprep.mubr.f32.mxu0 0.0
    %614 = vmatmul.mubr.f32.gmra.mxu0 %v333
    %v615 = vpop.f32.mrf.mxu0
    %v616 = vadd.f32 %v381, %v615
    %v617 = vpop.f32.mrf.mxu0
    %618 = vmatprep.mubr.f32.mxu0 0.0
    %619 = vmatmul.mubr.f32.gmra.mxu0 %v334
    %v620 = vpop.f32.mrf.mxu0
    %v621 = vadd.f32 %v382, %v620
    %v622 = vpop.f32.mrf.mxu0
    %623 = vmatprep.mubr.f32.mxu0 0.0
    %624 = vmatmul.mubr.f32.gmra.mxu0 %v335
    %v625 = vpop.f32.mrf.mxu0
    %v626 = vadd.f32 %v383, %v625
    %v627 = vpop.f32.mrf.mxu0
    %628 = vmatprep.mubr.f32.mxu0 0.0
    %629 = vmatmul.mubr.f32.gmra.mxu0 %v336
    %v630 = vpop.f32.mrf.mxu0
    %v631 = vadd.f32 %v384, %v630
    %v632 = vpop.f32.mrf.mxu0
    %633 = vmatprep.mubr.f32.mxu0 0.0
    %634 = vmatmul.mubr.f32.gmra.mxu0 %v337
    %v635 = vpop.f32.mrf.mxu0
    %v636 = vadd.f32 %v385, %v635
    %v637 = vpop.f32.mrf.mxu0
    %638 = vmatprep.mubr.f32.mxu0 0.0
    %639 = vmatmul.mubr.f32.gmra.mxu0 %v338
    %v640 = vpop.f32.mrf.mxu0
    %v641 = vadd.f32 %v386, %v640
    %v642 = vpop.f32.mrf.mxu0
    %643 = vmatprep.mubr.f32.mxu0 0.0
    %644 = vmatmul.mubr.f32.gmra.mxu0 %v339
    %v645 = vpop.f32.mrf.mxu0
    %v646 = vadd.f32 %v387, %v645
    %v647 = vpop.f32.mrf.mxu0
    %648 = vmatprep.mubr.f32.mxu0 0.0
    %649 = vmatmul.mubr.f32.gmra.mxu0 %v340
    %v650 = vpop.f32.mrf.mxu0
    %v651 = vadd.f32 %v388, %v650
    %v652 = vpop.f32.mrf.mxu0
    %653 = vmatprep.mubr.f32.mxu0 0.0
    %654 = vmatmul.mubr.f32.gmra.mxu0 %v341
    %v655 = vpop.f32.mrf.mxu0
    %v656 = vadd.f32 %v389, %v655
    %v657 = vpop.f32.mrf.mxu0
    %658 = vmatprep.mubr.f32.mxu0 0.0
    %659 = vmatmul.mubr.f32.gmra.mxu0 %v342
    %v660 = vpop.f32.mrf.mxu0
    %v661 = vadd.f32 %v390, %v660
    %v662 = vpop.f32.mrf.mxu0
    %663 = vmatprep.mubr.f32.mxu0 0.0
    %664 = vmatmul.mubr.f32.gmra.mxu0 %v343
    %v665 = vpop.f32.mrf.mxu0
    %v666 = vadd.f32 %v391, %v665
    %v667 = vpop.f32.mrf.mxu0
    %668 = vmatprep.mubr.f32.mxu0 0.0
    %669 = vmatmul.mubr.f32.gmra.mxu0 %v344
    %v670 = vpop.f32.mrf.mxu0
    %v671 = vadd.f32 %v392, %v670
    %v672 = vpop.f32.mrf.mxu0
    %673 = vmatprep.mubr.f32.mxu0 0.0
    %674 = vmatmul.mubr.f32.gmra.mxu0 %v345
    %v675 = vpop.f32.mrf.mxu0
    %v676 = vadd.f32 %v393, %v675
    %v677 = vpop.f32.mrf.mxu0
    %678 = vmatprep.mubr.f32.mxu0 0.0
    %679 = vmatmul.mubr.f32.gmra.mxu0 %v346
    %v680 = vpop.f32.mrf.mxu0
    %v681 = vadd.f32 %v394, %v680
    %v682 = vpop.f32.mrf.mxu0
    %683 = vmatprep.mubr.f32.mxu0 0.0
    %684 = vmatmul.mubr.f32.gmra.mxu0 %v347
    %v685 = vpop.f32.mrf.mxu0
    %v686 = vadd.f32 %v395, %v685
    %v687 = vpop.f32.mrf.mxu0
    %688 = vmatprep.mubr.f32.mxu0 0.0
    %689 = vmatmul.mubr.f32.gmra.mxu0 %v348
    %v690 = vpop.f32.mrf.mxu0
    %v691 = vadd.f32 %v396, %v690
    %v692 = vpop.f32.mrf.mxu0
    %693 = vmatprep.mubr.f32.mxu0 0.0
    %694 = vmatmul.mubr.f32.gmra.mxu0 %v349
    %v695 = vpop.f32.mrf.mxu0
    %v696 = vadd.f32 %v397, %v695
    %v697 = vpop.f32.mrf.mxu0
    %698 = vmatprep.mubr.f32.mxu0 0.0
    %699 = vmatmul.mubr.f32.gmra.mxu0 %v350
    %v700 = vpop.f32.mrf.mxu0
    %v701 = vadd.f32 %v398, %v700
    %v702 = vpop.f32.mrf.mxu0
    %703 = vdwg.mxu0
    %704 = vxpose.xlu0.b32.start [1/16] %v466, 128
    %705 = vxpose.xlu0.b32.cont [2/16] %v471, 128
    %706 = vxpose.xlu0.b32.cont [3/16] 0.0, 128
    %707 = vxpose.xlu0.b32.cont [4/16] 0.0, 128
    %708 = vxpose.xlu0.b32.cont [5/16] 0.0, 128
    %709 = vxpose.xlu0.b32.cont [6/16] 0.0, 128
    %710 = vxpose.xlu0.b32.cont [7/16] 0.0, 128
    %711 = vxpose.xlu0.b32.cont [8/16] 0.0, 128
    %712 = vxpose.xlu0.b32.cont [9/16] 0.0, 128
    %713 = vxpose.xlu0.b32.cont [10/16] 0.0, 128
    %714 = vxpose.xlu0.b32.cont [11/16] 0.0, 128
    %715 = vxpose.xlu0.b32.cont [12/16] 0.0, 128
    %716 = vxpose.xlu0.b32.cont [13/16] 0.0, 128
    %717 = vxpose.xlu0.b32.cont [14/16] 0.0, 128
    %718 = vxpose.xlu0.b32.cont [15/16] 0.0, 128
    %719 = vxpose.xlu0.b32.end [16/16] 0.0, 128
    %v720 = vpop.trf.xlu0
    %v721 = vpop.trf.xlu0
    %v722 = vpop.trf.xlu0
    %v723 = vpop.trf.xlu0
    %v724 = vpop.trf.xlu0
    %v725 = vpop.trf.xlu0
    %v726 = vpop.trf.xlu0
    %v727 = vpop.trf.xlu0
    %v728 = vpop.trf.xlu0
    %v729 = vpop.trf.xlu0
    %v730 = vpop.trf.xlu0
    %v731 = vpop.trf.xlu0
    %v732 = vpop.trf.xlu0
    %v733 = vpop.trf.xlu0
    %v734 = vpop.trf.xlu0
    %v735 = vpop.trf.xlu0
    %736 = vxpose.xlu0.b32.start [1/16] %v476, 128
    %737 = vxpose.xlu0.b32.cont [2/16] %v481, 128
    %738 = vxpose.xlu0.b32.cont [3/16] 0.0, 128
    %739 = vxpose.xlu0.b32.cont [4/16] 0.0, 128
    %740 = vxpose.xlu0.b32.cont [5/16] 0.0, 128
    %741 = vxpose.xlu0.b32.cont [6/16] 0.0, 128
    %742 = vxpose.xlu0.b32.cont [7/16] 0.0, 128
    %743 = vxpose.xlu0.b32.cont [8/16] 0.0, 128
    %744 = vxpose.xlu0.b32.cont [9/16] 0.0, 128
    %745 = vxpose.xlu0.b32.cont [10/16] 0.0, 128
    %746 = vxpose.xlu0.b32.cont [11/16] 0.0, 128
    %747 = vxpose.xlu0.b32.cont [12/16] 0.0, 128
    %748 = vxpose.xlu0.b32.cont [13/16] 0.0, 128
    %749 = vxpose.xlu0.b32.cont [14/16] 0.0, 128
    %750 = vxpose.xlu0.b32.cont [15/16] 0.0, 128
    %751 = vxpose.xlu0.b32.end [16/16] 0.0, 128
    %v752 = vpop.trf.xlu0
    %v753 = vpop.trf.xlu0
    %v754 = vpop.trf.xlu0
    %v755 = vpop.trf.xlu0
    %v756 = vpop.trf.xlu0
    %v757 = vpop.trf.xlu0
    %v758 = vpop.trf.xlu0
    %v759 = vpop.trf.xlu0
    %v760 = vpop.trf.xlu0
    %v761 = vpop.trf.xlu0
    %v762 = vpop.trf.xlu0
    %v763 = vpop.trf.xlu0
    %v764 = vpop.trf.xlu0
    %v765 = vpop.trf.xlu0
    %v766 = vpop.trf.xlu0
    %v767 = vpop.trf.xlu0
    %768 = vxpose.xlu0.b32.start [1/16] %v486, 128
    %769 = vxpose.xlu0.b32.cont [2/16] %v491, 128
    %770 = vxpose.xlu0.b32.cont [3/16] 0.0, 128
    %771 = vxpose.xlu0.b32.cont [4/16] 0.0, 128
    %772 = vxpose.xlu0.b32.cont [5/16] 0.0, 128
    %773 = vxpose.xlu0.b32.cont [6/16] 0.0, 128
    %774 = vxpose.xlu0.b32.cont [7/16] 0.0, 128
    %775 = vxpose.xlu0.b32.cont [8/16] 0.0, 128
    %776 = vxpose.xlu0.b32.cont [9/16] 0.0, 128
    %777 = vxpose.xlu0.b32.cont [10/16] 0.0, 128
    %778 = vxpose.xlu0.b32.cont [11/16] 0.0, 128
    %779 = vxpose.xlu0.b32.cont [12/16] 0.0, 128
    %780 = vxpose.xlu0.b32.cont [13/16] 0.0, 128
    %781 = vxpose.xlu0.b32.cont [14/16] 0.0, 128
    %782 = vxpose.xlu0.b32.cont [15/16] 0.0, 128
    %783 = vxpose.xlu0.b32.end [16/16] 0.0, 128
    %v784 = vpop.trf.xlu0
    %v785 = vpop.trf.xlu0
    %v786 = vpop.trf.xlu0
    %v787 = vpop.trf.xlu0
    %v788 = vpop.trf.xlu0
    %v789 = vpop.trf.xlu0
    %v790 = vpop.trf.xlu0
    %v791 = vpop.trf.xlu0
    %v792 = vpop.trf.xlu0
    %v793 = vpop.trf.xlu0
    %v794 = vpop.trf.xlu0
    %v795 = vpop.trf.xlu0
    %v796 = vpop.trf.xlu0
    %v797 = vpop.trf.xlu0
    %v798 = vpop.trf.xlu0
    %v799 = vpop.trf.xlu0
    %800 = vxpose.xlu0.b32.start [1/16] %v496, 128
    %801 = vxpose.xlu0.b32.cont [2/16] %v501, 128
    %802 = vxpose.xlu0.b32.cont [3/16] 0.0, 128
    %803 = vxpose.xlu0.b32.cont [4/16] 0.0, 128
    %804 = vxpose.xlu0.b32.cont [5/16] 0.0, 128
    %805 = vxpose.xlu0.b32.cont [6/16] 0.0, 128
    %806 = vxpose.xlu0.b32.cont [7/16] 0.0, 128
    %807 = vxpose.xlu0.b32.cont [8/16] 0.0, 128
    %808 = vxpose.xlu0.b32.cont [9/16] 0.0, 128
    %809 = vxpose.xlu0.b32.cont [10/16] 0.0, 128
    %810 = vxpose.xlu0.b32.cont [11/16] 0.0, 128
    %811 = vxpose.xlu0.b32.cont [12/16] 0.0, 128
    %812 = vxpose.xlu0.b32.cont [13/16] 0.0, 128
    %813 = vxpose.xlu0.b32.cont [14/16] 0.0, 128
    %814 = vxpose.xlu0.b32.cont [15/16] 0.0, 128
    %815 = vxpose.xlu0.b32.end [16/16] 0.0, 128
    %v816 = vpop.trf.xlu0
    %v817 = vpop.trf.xlu0
    %v818 = vpop.trf.xlu0
    %v819 = vpop.trf.xlu0
    %v820 = vpop.trf.xlu0
    %v821 = vpop.trf.xlu0
    %v822 = vpop.trf.xlu0
    %v823 = vpop.trf.xlu0
    %v824 = vpop.trf.xlu0
    %v825 = vpop.trf.xlu0
    %v826 = vpop.trf.xlu0
    %v827 = vpop.trf.xlu0
    %v828 = vpop.trf.xlu0
    %v829 = vpop.trf.xlu0
    %v830 = vpop.trf.xlu0
    %v831 = vpop.trf.xlu0
    %832 = vxpose.xlu0.b32.start [1/16] %v506, 128
    %833 = vxpose.xlu0.b32.cont [2/16] %v511, 128
    %834 = vxpose.xlu0.b32.cont [3/16] 0.0, 128
    %835 = vxpose.xlu0.b32.cont [4/16] 0.0, 128
    %836 = vxpose.xlu0.b32.cont [5/16] 0.0, 128
    %837 = vxpose.xlu0.b32.cont [6/16] 0.0, 128
    %838 = vxpose.xlu0.b32.cont [7/16] 0.0, 128
    %839 = vxpose.xlu0.b32.cont [8/16] 0.0, 128
    %840 = vxpose.xlu0.b32.cont [9/16] 0.0, 128
    %841 = vxpose.xlu0.b32.cont [10/16] 0.0, 128
    %842 = vxpose.xlu0.b32.cont [11/16] 0.0, 128
    %843 = vxpose.xlu0.b32.cont [12/16] 0.0, 128
    %844 = vxpose.xlu0.b32.cont [13/16] 0.0, 128
    %845 = vxpose.xlu0.b32.cont [14/16] 0.0, 128
    %846 = vxpose.xlu0.b32.cont [15/16] 0.0, 128
    %847 = vxpose.xlu0.b32.end [16/16] 0.0, 128
    %v848 = vpop.trf.xlu0
    %v849 = vpop.trf.xlu0
    %v850 = vpop.trf.xlu0
    %v851 = vpop.trf.xlu0
    %v852 = vpop.trf.xlu0
    %v853 = vpop.trf.xlu0
    %v854 = vpop.trf.xlu0
    %v855 = vpop.trf.xlu0
    %v856 = vpop.trf.xlu0
    %v857 = vpop.trf.xlu0
    %v858 = vpop.trf.xlu0
    %v859 = vpop.trf.xlu0
    %v860 = vpop.trf.xlu0
    %v861 = vpop.trf.xlu0
    %v862 = vpop.trf.xlu0
    %v863 = vpop.trf.xlu0
    %864 = vxpose.xlu0.b32.start [1/16] %v516, 128
    %865 = vxpose.xlu0.b32.cont [2/16] %v521, 128
    %866 = vxpose.xlu0.b32.cont [3/16] 0.0, 128
    %867 = vxpose.xlu0.b32.cont [4/16] 0.0, 128
    %868 = vxpose.xlu0.b32.cont [5/16] 0.0, 128
    %869 = vxpose.xlu0.b32.cont [6/16] 0.0, 128
    %870 = vxpose.xlu0.b32.cont [7/16] 0.0, 128
    %871 = vxpose.xlu0.b32.cont [8/16] 0.0, 128
    %872 = vxpose.xlu0.b32.cont [9/16] 0.0, 128
    %873 = vxpose.xlu0.b32.cont [10/16] 0.0, 128
    %874 = vxpose.xlu0.b32.cont [11/16] 0.0, 128
    %875 = vxpose.xlu0.b32.cont [12/16] 0.0, 128
    %876 = vxpose.xlu0.b32.cont [13/16] 0.0, 128
    %877 = vxpose.xlu0.b32.cont [14/16] 0.0, 128
    %878 = vxpose.xlu0.b32.cont [15/16] 0.0, 128
    %879 = vxpose.xlu0.b32.end [16/16] 0.0, 128
    %v880 = vpop.trf.xlu0
    %v881 = vpop.trf.xlu0
    %v882 = vpop.trf.xlu0
    %v883 = vpop.trf.xlu0
    %v884 = vpop.trf.xlu0
    %v885 = vpop.trf.xlu0
    %v886 = vpop.trf.xlu0
    %v887 = vpop.trf.xlu0
    %v888 = vpop.trf.xlu0
    %v889 = vpop.trf.xlu0
    %v890 = vpop.trf.xlu0
    %v891 = vpop.trf.xlu0
    %v892 = vpop.trf.xlu0
    %v893 = vpop.trf.xlu0
    %v894 = vpop.trf.xlu0
    %v895 = vpop.trf.xlu0
    %896 = vxpose.xlu0.b32.start [1/16] %v526, 128
    %897 = vxpose.xlu0.b32.cont [2/16] %v531, 128
    %898 = vxpose.xlu0.b32.cont [3/16] 0.0, 128
    %899 = vxpose.xlu0.b32.cont [4/16] 0.0, 128
    %900 = vxpose.xlu0.b32.cont [5/16] 0.0, 128
    %901 = vxpose.xlu0.b32.cont [6/16] 0.0, 128
    %902 = vxpose.xlu0.b32.cont [7/16] 0.0, 128
    %903 = vxpose.xlu0.b32.cont [8/16] 0.0, 128
    %904 = vxpose.xlu0.b32.cont [9/16] 0.0, 128
    %905 = vxpose.xlu0.b32.cont [10/16] 0.0, 128
    %906 = vxpose.xlu0.b32.cont [11/16] 0.0, 128
    %907 = vxpose.xlu0.b32.cont [12/16] 0.0, 128
    %908 = vxpose.xlu0.b32.cont [13/16] 0.0, 128
    %909 = vxpose.xlu0.b32.cont [14/16] 0.0, 128
    %910 = vxpose.xlu0.b32.cont [15/16] 0.0, 128
    %911 = vxpose.xlu0.b32.end [16/16] 0.0, 128
    %v912 = vpop.trf.xlu0
    %v913 = vpop.trf.xlu0
    %v914 = vpop.trf.xlu0
    %v915 = vpop.trf.xlu0
    %v916 = vpop.trf.xlu0
    %v917 = vpop.trf.xlu0
    %v918 = vpop.trf.xlu0
    %v919 = vpop.trf.xlu0
    %v920 = vpop.trf.xlu0
    %v921 = vpop.trf.xlu0
    %v922 = vpop.trf.xlu0
    %v923 = vpop.trf.xlu0
    %v924 = vpop.trf.xlu0
    %v925 = vpop.trf.xlu0
    %v926 = vpop.trf.xlu0
    %v927 = vpop.trf.xlu0
    %928 = vxpose.xlu0.b32.start [1/16] %v536, 128
    %929 = vxpose.xlu0.b32.cont [2/16] %v541, 128
    %930 = vxpose.xlu0.b32.cont [3/16] 0.0, 128
    %931 = vxpose.xlu0.b32.cont [4/16] 0.0, 128
    %932 = vxpose.xlu0.b32.cont [5/16] 0.0, 128
    %933 = vxpose.xlu0.b32.cont [6/16] 0.0, 128
    %934 = vxpose.xlu0.b32.cont [7/16] 0.0, 128
    %935 = vxpose.xlu0.b32.cont [8/16] 0.0, 128
    %936 = vxpose.xlu0.b32.cont [9/16] 0.0, 128
    %937 = vxpose.xlu0.b32.cont [10/16] 0.0, 128
    %938 = vxpose.xlu0.b32.cont [11/16] 0.0, 128
    %939 = vxpose.xlu0.b32.cont [12/16] 0.0, 128
    %940 = vxpose.xlu0.b32.cont [13/16] 0.0, 128
    %941 = vxpose.xlu0.b32.cont [14/16] 0.0, 128
    %942 = vxpose.xlu0.b32.cont [15/16] 0.0, 128
    %943 = vxpose.xlu0.b32.end [16/16] 0.0, 128
    %v944 = vpop.trf.xlu0
    %v945 = vpop.trf.xlu0
    %v946 = vpop.trf.xlu0
    %v947 = vpop.trf.xlu0
    %v948 = vpop.trf.xlu0
    %v949 = vpop.trf.xlu0
    %v950 = vpop.trf.xlu0
    %v951 = vpop.trf.xlu0
    %v952 = vpop.trf.xlu0
    %v953 = vpop.trf.xlu0
    %v954 = vpop.trf.xlu0
    %v955 = vpop.trf.xlu0
    %v956 = vpop.trf.xlu0
    %v957 = vpop.trf.xlu0
    %v958 = vpop.trf.xlu0
    %v959 = vpop.trf.xlu0
    %vm960 = vcmask 130048
    %v962 = vsel %vm960, %v720, 0
    %v965 = vsel %vm960, %v721, 0
    %967 = vmatprep.subr.mxu0 0.0
    %968 = vmatpush1.msra.mxu0 0.0
    %969 = vmatprep.subr.mxu0 0.0
    %970 = vmatpush1.msra.mxu0 0.0
    %971 = vmatprep.subr.mxu0 0.0
    %972 = vmatpush1.msra.mxu0 0.0
    %973 = vmatprep.subr.mxu0 0.0
    %974 = vmatpush1.msra.mxu0 0.0
    %975 = vmatprep.subr.mxu0 0.0
    %976 = vmatpush1.msra.mxu0 0.0
    %977 = vmatprep.subr.mxu0 0.0
    %978 = vmatpush1.msra.mxu0 0.0
    %979 = vmatprep.subr.mxu0 0.0
    %980 = vmatpush1.msra.mxu0 0.0
    %981 = vmatprep.subr.mxu0 0.0
    %982 = vmatpush1.msra.mxu0 0.0
    %983 = vmatprep.subr.mxu0 0.0
    %984 = vmatpush1.msra.mxu0 0.0
    %985 = vmatprep.subr.mxu0 0.0
    %986 = vmatpush1.msra.mxu0 0.0
    %987 = vmatprep.subr.mxu0 0.0
    %988 = vmatpush1.msra.mxu0 0.0
    %989 = vmatprep.subr.mxu0 0.0
    %990 = vmatpush1.msra.mxu0 0.0
    %991 = vmatprep.subr.mxu0 0.0
    %992 = vmatpush1.msra.mxu0 0.0
    %993 = vmatprep.subr.mxu0 0.0
    %994 = vmatpush1.msra.mxu0 0.0
    %995 = vmatprep.subr.mxu0 0.0
    %996 = vmatpush1.msra.mxu0 %v551
    %997 = vmatprep.subr.mxu0 0.0
    %998 = vmatpush1.msra.mxu0 %v546
    %999 = vmatprep.subr.mxu0 0.0
    %1000 = vmatpush2.msra.mxu0 0.0
    %1001 = vmatprep.subr.mxu0 0.0
    %1002 = vmatpush2.msra.mxu0 0.0
    %1003 = vmatprep.subr.mxu0 0.0
    %1004 = vmatpush2.msra.mxu0 0.0
    %1005 = vmatprep.subr.mxu0 0.0
    %1006 = vmatpush2.msra.mxu0 0.0
    %1007 = vmatprep.subr.mxu0 0.0
    %1008 = vmatpush2.msra.mxu0 0.0
    %1009 = vmatprep.subr.mxu0 0.0
    %1010 = vmatpush2.msra.mxu0 0.0
    %1011 = vmatprep.subr.mxu0 0.0
    %1012 = vmatpush2.msra.mxu0 0.0
    %1013 = vmatprep.subr.mxu0 0.0
    %1014 = vmatpush2.msra.mxu0 0.0
    %1015 = vmatprep.subr.mxu0 0.0
    %1016 = vmatpush2.msra.mxu0 0.0
    %1017 = vmatprep.subr.mxu0 0.0
    %1018 = vmatpush2.msra.mxu0 0.0
    %1019 = vmatprep.subr.mxu0 0.0
    %1020 = vmatpush2.msra.mxu0 0.0
    %1021 = vmatprep.subr.mxu0 0.0
    %1022 = vmatpush2.msra.mxu0 0.0
    %1023 = vmatprep.subr.mxu0 0.0
    %1024 = vmatpush2.msra.mxu0 0.0
    %1025 = vmatprep.subr.mxu0 0.0
    %1026 = vmatpush2.msra.mxu0 0.0
    %1027 = vmatprep.subr.mxu0 0.0
    %1028 = vmatpush2.msra.mxu0 0.0
    %1029 = vmatprep.subr.mxu0 0.0
    %1030 = vmatpush2.msra.mxu0 0.0
    %1031 = vmatprep.mubr.f32.mxu0 0.0
    %1032 = vmatmul.mubr.f32.gmra.mxu0 %v962
    %v1033 = vpop.f32.mrf.mxu0
    %v1034 = vadd.f32 %v301, %v1033
    %v1035 = vpop.f32.mrf.mxu0
    %1036 = vmatprep.mubr.f32.mxu0 0.0
    %1037 = vmatmul.mubr.f32.gmra.mxu0 %v965
    %v1038 = vpop.f32.mrf.mxu0
    %v1039 = vadd.f32 %v302, %v1038
    %v1040 = vpop.f32.mrf.mxu0
    %1041 = vdwg.mxu0
    %v1043 = vsel %vm960, %v752, 0
    %v1046 = vsel %vm960, %v753, 0
    %1048 = vmatprep.subr.mxu0 0.0
    %1049 = vmatpush1.msra.mxu0 0.0
    %1050 = vmatprep.subr.mxu0 0.0
    %1051 = vmatpush1.msra.mxu0 0.0
    %1052 = vmatprep.subr.mxu0 0.0
    %1053 = vmatpush1.msra.mxu0 0.0
    %1054 = vmatprep.subr.mxu0 0.0
    %1055 = vmatpush1.msra.mxu0 0.0
    %1056 = vmatprep.subr.mxu0 0.0
    %1057 = vmatpush1.msra.mxu0 0.0
    %1058 = vmatprep.subr.mxu0 0.0
    %1059 = vmatpush1.msra.mxu0 0.0
    %1060 = vmatprep.subr.mxu0 0.0
    %1061 = vmatpush1.msra.mxu0 0.0
    %1062 = vmatprep.subr.mxu0 0.0
    %1063 = vmatpush1.msra.mxu0 0.0
    %1064 = vmatprep.subr.mxu0 0.0
    %1065 = vmatpush1.msra.mxu0 0.0
    %1066 = vmatprep.subr.mxu0 0.0
    %1067 = vmatpush1.msra.mxu0 0.0
    %1068 = vmatprep.subr.mxu0 0.0
    %1069 = vmatpush1.msra.mxu0 0.0
    %1070 = vmatprep.subr.mxu0 0.0
    %1071 = vmatpush1.msra.mxu0 0.0
    %1072 = vmatprep.subr.mxu0 0.0
    %1073 = vmatpush1.msra.mxu0 0.0
    %1074 = vmatprep.subr.mxu0 0.0
    %1075 = vmatpush1.msra.mxu0 0.0
    %1076 = vmatprep.subr.mxu0 0.0
    %1077 = vmatpush1.msra.mxu0 %v561
    %1078 = vmatprep.subr.mxu0 0.0
    %1079 = vmatpush1.msra.mxu0 %v556
    %1080 = vmatprep.subr.mxu0 0.0
    %1081 = vmatpush2.msra.mxu0 0.0
    %1082 = vmatprep.subr.mxu0 0.0
    %1083 = vmatpush2.msra.mxu0 0.0
    %1084 = vmatprep.subr.mxu0 0.0
    %1085 = vmatpush2.msra.mxu0 0.0
    %1086 = vmatprep.subr.mxu0 0.0
    %1087 = vmatpush2.msra.mxu0 0.0
    %1088 = vmatprep.subr.mxu0 0.0
    %1089 = vmatpush2.msra.mxu0 0.0
    %1090 = vmatprep.subr.mxu0 0.0
    %1091 = vmatpush2.msra.mxu0 0.0
    %1092 = vmatprep.subr.mxu0 0.0
    %1093 = vmatpush2.msra.mxu0 0.0
    %1094 = vmatprep.subr.mxu0 0.0
    %1095 = vmatpush2.msra.mxu0 0.0
    %1096 = vmatprep.subr.mxu0 0.0
    %1097 = vmatpush2.msra.mxu0 0.0
    %1098 = vmatprep.subr.mxu0 0.0
    %1099 = vmatpush2.msra.mxu0 0.0
    %1100 = vmatprep.subr.mxu0 0.0
    %1101 = vmatpush2.msra.mxu0 0.0
    %1102 = vmatprep.subr.mxu0 0.0
    %1103 = vmatpush2.msra.mxu0 0.0
    %1104 = vmatprep.subr.mxu0 0.0
    %1105 = vmatpush2.msra.mxu0 0.0
    %1106 = vmatprep.subr.mxu0 0.0
    %1107 = vmatpush2.msra.mxu0 0.0
    %1108 = vmatprep.subr.mxu0 0.0
    %1109 = vmatpush2.msra.mxu0 0.0
    %1110 = vmatprep.subr.mxu0 0.0
    %1111 = vmatpush2.msra.mxu0 0.0
    %1112 = vmatprep.mubr.f32.mxu0 0.0
    %1113 = vmatmul.mubr.f32.gmra.mxu0 %v1043
    %v1114 = vpop.f32.mrf.mxu0
    %v1115 = vadd.f32 %v301, %v1114
    %v1116 = vpop.f32.mrf.mxu0
    %1117 = vmatprep.mubr.f32.mxu0 0.0
    %1118 = vmatmul.mubr.f32.gmra.mxu0 %v1046
    %v1119 = vpop.f32.mrf.mxu0
    %v1120 = vadd.f32 %v302, %v1119
    %v1121 = vpop.f32.mrf.mxu0
    %1122 = vdwg.mxu0
    %v1124 = vsel %vm960, %v784, 0
    %v1127 = vsel %vm960, %v785, 0
    %1129 = vmatprep.subr.mxu0 0.0
    %1130 = vmatpush1.msra.mxu0 0.0
    %1131 = vmatprep.subr.mxu0 0.0
    %1132 = vmatpush1.msra.mxu0 0.0
    %1133 = vmatprep.subr.mxu0 0.0
    %1134 = vmatpush1.msra.mxu0 0.0
    %1135 = vmatprep.subr.mxu0 0.0
    %1136 = vmatpush1.msra.mxu0 0.0
    %1137 = vmatprep.subr.mxu0 0.0
    %1138 = vmatpush1.msra.mxu0 0.0
    %1139 = vmatprep.subr.mxu0 0.0
    %1140 = vmatpush1.msra.mxu0 0.0
    %1141 = vmatprep.subr.mxu0 0.0
    %1142 = vmatpush1.msra.mxu0 0.0
    %1143 = vmatprep.subr.mxu0 0.0
    %1144 = vmatpush1.msra.mxu0 0.0
    %1145 = vmatprep.subr.mxu0 0.0
    %1146 = vmatpush1.msra.mxu0 0.0
    %1147 = vmatprep.subr.mxu0 0.0
    %1148 = vmatpush1.msra.mxu0 0.0
    %1149 = vmatprep.subr.mxu0 0.0
    %1150 = vmatpush1.msra.mxu0 0.0
    %1151 = vmatprep.subr.mxu0 0.0
    %1152 = vmatpush1.msra.mxu0 0.0
    %1153 = vmatprep.subr.mxu0 0.0
    %1154 = vmatpush1.msra.mxu0 0.0
    %1155 = vmatprep.subr.mxu0 0.0
    %1156 = vmatpush1.msra.mxu0 0.0
    %1157 = vmatprep.subr.mxu0 0.0
    %1158 = vmatpush1.msra.mxu0 %v571
    %1159 = vmatprep.subr.mxu0 0.0
    %1160 = vmatpush1.msra.mxu0 %v566
    %1161 = vmatprep.subr.mxu0 0.0
    %1162 = vmatpush2.msra.mxu0 0.0
    %1163 = vmatprep.subr.mxu0 0.0
    %1164 = vmatpush2.msra.mxu0 0.0
    %1165 = vmatprep.subr.mxu0 0.0
    %1166 = vmatpush2.msra.mxu0 0.0
    %1167 = vmatprep.subr.mxu0 0.0
    %1168 = vmatpush2.msra.mxu0 0.0
    %1169 = vmatprep.subr.mxu0 0.0
    %1170 = vmatpush2.msra.mxu0 0.0
    %1171 = vmatprep.subr.mxu0 0.0
    %1172 = vmatpush2.msra.mxu0 0.0
    %1173 = vmatprep.subr.mxu0 0.0
    %1174 = vmatpush2.msra.mxu0 0.0
    %1175 = vmatprep.subr.mxu0 0.0
    %1176 = vmatpush2.msra.mxu0 0.0
    %1177 = vmatprep.subr.mxu0 0.0
    %1178 = vmatpush2.msra.mxu0 0.0
    %1179 = vmatprep.subr.mxu0 0.0
    %1180 = vmatpush2.msra.mxu0 0.0
    %1181 = vmatprep.subr.mxu0 0.0
    %1182 = vmatpush2.msra.mxu0 0.0
    %1183 = vmatprep.subr.mxu0 0.0
    %1184 = vmatpush2.msra.mxu0 0.0
    %1185 = vmatprep.subr.mxu0 0.0
    %1186 = vmatpush2.msra.mxu0 0.0
    %1187 = vmatprep.subr.mxu0 0.0
    %1188 = vmatpush2.msra.mxu0 0.0
    %1189 = vmatprep.subr.mxu0 0.0
    %1190 = vmatpush2.msra.mxu0 0.0
    %1191 = vmatprep.subr.mxu0 0.0
    %1192 = vmatpush2.msra.mxu0 0.0
    %1193 = vmatprep.mubr.f32.mxu0 0.0
    %1194 = vmatmul.mubr.f32.gmra.mxu0 %v1124
    %v1195 = vpop.f32.mrf.mxu0
    %v1196 = vadd.f32 %v301, %v1195
    %v1197 = vpop.f32.mrf.mxu0
    %1198 = vmatprep.mubr.f32.mxu0 0.0
    %1199 = vmatmul.mubr.f32.gmra.mxu0 %v1127
    %v1200 = vpop.f32.mrf.mxu0
    %v1201 = vadd.f32 %v302, %v1200
    %v1202 = vpop.f32.mrf.mxu0
    %1203 = vdwg.mxu0
    %v1205 = vsel %vm960, %v816, 0
    %v1208 = vsel %vm960, %v817, 0
    %1210 = vmatprep.subr.mxu0 0.0
    %1211 = vmatpush1.msra.mxu0 0.0
    %1212 = vmatprep.subr.mxu0 0.0
    %1213 = vmatpush1.msra.mxu0 0.0
    %1214 = vmatprep.subr.mxu0 0.0
    %1215 = vmatpush1.msra.mxu0 0.0
    %1216 = vmatprep.subr.mxu0 0.0
    %1217 = vmatpush1.msra.mxu0 0.0
    %1218 = vmatprep.subr.mxu0 0.0
    %1219 = vmatpush1.msra.mxu0 0.0
    %1220 = vmatprep.subr.mxu0 0.0
    %1221 = vmatpush1.msra.mxu0 0.0
    %1222 = vmatprep.subr.mxu0 0.0
    %1223 = vmatpush1.msra.mxu0 0.0
    %1224 = vmatprep.subr.mxu0 0.0
    %1225 = vmatpush1.msra.mxu0 0.0
    %1226 = vmatprep.subr.mxu0 0.0
    %1227 = vmatpush1.msra.mxu0 0.0
    %1228 = vmatprep.subr.mxu0 0.0
    %1229 = vmatpush1.msra.mxu0 0.0
    %1230 = vmatprep.subr.mxu0 0.0
    %1231 = vmatpush1.msra.mxu0 0.0
    %1232 = vmatprep.subr.mxu0 0.0
    %1233 = vmatpush1.msra.mxu0 0.0
    %1234 = vmatprep.subr.mxu0 0.0
    %1235 = vmatpush1.msra.mxu0 0.0
    %1236 = vmatprep.subr.mxu0 0.0
    %1237 = vmatpush1.msra.mxu0 0.0
    %1238 = vmatprep.subr.mxu0 0.0
    %1239 = vmatpush1.msra.mxu0 %v581
    %1240 = vmatprep.subr.mxu0 0.0
    %1241 = vmatpush1.msra.mxu0 %v576
    %1242 = vmatprep.subr.mxu0 0.0
    %1243 = vmatpush2.msra.mxu0 0.0
    %1244 = vmatprep.subr.mxu0 0.0
    %1245 = vmatpush2.msra.mxu0 0.0
    %1246 = vmatprep.subr.mxu0 0.0
    %1247 = vmatpush2.msra.mxu0 0.0
    %1248 = vmatprep.subr.mxu0 0.0
    %1249 = vmatpush2.msra.mxu0 0.0
    %1250 = vmatprep.subr.mxu0 0.0
    %1251 = vmatpush2.msra.mxu0 0.0
    %1252 = vmatprep.subr.mxu0 0.0
    %1253 = vmatpush2.msra.mxu0 0.0
    %1254 = vmatprep.subr.mxu0 0.0
    %1255 = vmatpush2.msra.mxu0 0.0
    %1256 = vmatprep.subr.mxu0 0.0
    %1257 = vmatpush2.msra.mxu0 0.0
    %1258 = vmatprep.subr.mxu0 0.0
    %1259 = vmatpush2.msra.mxu0 0.0
    %1260 = vmatprep.subr.mxu0 0.0
    %1261 = vmatpush2.msra.mxu0 0.0
    %1262 = vmatprep.subr.mxu0 0.0
    %1263 = vmatpush2.msra.mxu0 0.0
    %1264 = vmatprep.subr.mxu0 0.0
    %1265 = vmatpush2.msra.mxu0 0.0
    %1266 = vmatprep.subr.mxu0 0.0
    %1267 = vmatpush2.msra.mxu0 0.0
    %1268 = vmatprep.subr.mxu0 0.0
    %1269 = vmatpush2.msra.mxu0 0.0
    %1270 = vmatprep.subr.mxu0 0.0
    %1271 = vmatpush2.msra.mxu0 0.0
    %1272 = vmatprep.subr.mxu0 0.0
    %1273 = vmatpush2.msra.mxu0 0.0
    %1274 = vmatprep.mubr.f32.mxu0 0.0
    %1275 = vmatmul.mubr.f32.gmra.mxu0 %v1205
    %v1276 = vpop.f32.mrf.mxu0
    %v1277 = vadd.f32 %v301, %v1276
    %v1278 = vpop.f32.mrf.mxu0
    %1279 = vmatprep.mubr.f32.mxu0 0.0
    %1280 = vmatmul.mubr.f32.gmra.mxu0 %v1208
    %v1281 = vpop.f32.mrf.mxu0
    %v1282 = vadd.f32 %v302, %v1281
    %v1283 = vpop.f32.mrf.mxu0
    %1284 = vdwg.mxu0
    %v1286 = vsel %vm960, %v848, 0
    %v1289 = vsel %vm960, %v849, 0
    %1291 = vmatprep.subr.mxu0 0.0
    %1292 = vmatpush1.msra.mxu0 0.0
    %1293 = vmatprep.subr.mxu0 0.0
    %1294 = vmatpush1.msra.mxu0 0.0
    %1295 = vmatprep.subr.mxu0 0.0
    %1296 = vmatpush1.msra.mxu0 0.0
    %1297 = vmatprep.subr.mxu0 0.0
    %1298 = vmatpush1.msra.mxu0 0.0
    %1299 = vmatprep.subr.mxu0 0.0
    %1300 = vmatpush1.msra.mxu0 0.0
    %1301 = vmatprep.subr.mxu0 0.0
    %1302 = vmatpush1.msra.mxu0 0.0
    %1303 = vmatprep.subr.mxu0 0.0
    %1304 = vmatpush1.msra.mxu0 0.0
    %1305 = vmatprep.subr.mxu0 0.0
    %1306 = vmatpush1.msra.mxu0 0.0
    %1307 = vmatprep.subr.mxu0 0.0
    %1308 = vmatpush1.msra.mxu0 0.0
    %1309 = vmatprep.subr.mxu0 0.0
    %1310 = vmatpush1.msra.mxu0 0.0
    %1311 = vmatprep.subr.mxu0 0.0
    %1312 = vmatpush1.msra.mxu0 0.0
    %1313 = vmatprep.subr.mxu0 0.0
    %1314 = vmatpush1.msra.mxu0 0.0
    %1315 = vmatprep.subr.mxu0 0.0
    %1316 = vmatpush1.msra.mxu0 0.0
    %1317 = vmatprep.subr.mxu0 0.0
    %1318 = vmatpush1.msra.mxu0 0.0
    %1319 = vmatprep.subr.mxu0 0.0
    %1320 = vmatpush1.msra.mxu0 %v591
    %1321 = vmatprep.subr.mxu0 0.0
    %1322 = vmatpush1.msra.mxu0 %v586
    %1323 = vmatprep.subr.mxu0 0.0
    %1324 = vmatpush2.msra.mxu0 0.0
    %1325 = vmatprep.subr.mxu0 0.0
    %1326 = vmatpush2.msra.mxu0 0.0
    %1327 = vmatprep.subr.mxu0 0.0
    %1328 = vmatpush2.msra.mxu0 0.0
    %1329 = vmatprep.subr.mxu0 0.0
    %1330 = vmatpush2.msra.mxu0 0.0
    %1331 = vmatprep.subr.mxu0 0.0
    %1332 = vmatpush2.msra.mxu0 0.0
    %1333 = vmatprep.subr.mxu0 0.0
    %1334 = vmatpush2.msra.mxu0 0.0
    %1335 = vmatprep.subr.mxu0 0.0
    %1336 = vmatpush2.msra.mxu0 0.0
    %1337 = vmatprep.subr.mxu0 0.0
    %1338 = vmatpush2.msra.mxu0 0.0
    %1339 = vmatprep.subr.mxu0 0.0
    %1340 = vmatpush2.msra.mxu0 0.0
    %1341 = vmatprep.subr.mxu0 0.0
    %1342 = vmatpush2.msra.mxu0 0.0
    %1343 = vmatprep.subr.mxu0 0.0
    %1344 = vmatpush2.msra.mxu0 0.0
    %1345 = vmatprep.subr.mxu0 0.0
    %1346 = vmatpush2.msra.mxu0 0.0
    %1347 = vmatprep.subr.mxu0 0.0
    %1348 = vmatpush2.msra.mxu0 0.0
    %1349 = vmatprep.subr.mxu0 0.0
    %1350 = vmatpush2.msra.mxu0 0.0
    %1351 = vmatprep.subr.mxu0 0.0
    %1352 = vmatpush2.msra.mxu0 0.0
    %1353 = vmatprep.subr.mxu0 0.0
    %1354 = vmatpush2.msra.mxu0 0.0
    %1355 = vmatprep.mubr.f32.mxu0 0.0
    %1356 = vmatmul.mubr.f32.gmra.mxu0 %v1286
    %v1357 = vpop.f32.mrf.mxu0
    %v1358 = vadd.f32 %v301, %v1357
    %v1359 = vpop.f32.mrf.mxu0
    %1360 = vmatprep.mubr.f32.mxu0 0.0
    %1361 = vmatmul.mubr.f32.gmra.mxu0 %v1289
    %v1362 = vpop.f32.mrf.mxu0
    %v1363 = vadd.f32 %v302, %v1362
    %v1364 = vpop.f32.mrf.mxu0
    %1365 = vdwg.mxu0
    %v1367 = vsel %vm960, %v880, 0
    %v1370 = vsel %vm960, %v881, 0
    %1372 = vmatprep.subr.mxu0 0.0
    %1373 = vmatpush1.msra.mxu0 0.0
    %1374 = vmatprep.subr.mxu0 0.0
    %1375 = vmatpush1.msra.mxu0 0.0
    %1376 = vmatprep.subr.mxu0 0.0
    %1377 = vmatpush1.msra.mxu0 0.0
    %1378 = vmatprep.subr.mxu0 0.0
    %1379 = vmatpush1.msra.mxu0 0.0
    %1380 = vmatprep.subr.mxu0 0.0
    %1381 = vmatpush1.msra.mxu0 0.0
    %1382 = vmatprep.subr.mxu0 0.0
    %1383 = vmatpush1.msra.mxu0 0.0
    %1384 = vmatprep.subr.mxu0 0.0
    %1385 = vmatpush1.msra.mxu0 0.0
    %1386 = vmatprep.subr.mxu0 0.0
    %1387 = vmatpush1.msra.mxu0 0.0
    %1388 = vmatprep.subr.mxu0 0.0
    %1389 = vmatpush1.msra.mxu0 0.0
    %1390 = vmatprep.subr.mxu0 0.0
    %1391 = vmatpush1.msra.mxu0 0.0
    %1392 = vmatprep.subr.mxu0 0.0
    %1393 = vmatpush1.msra.mxu0 0.0
    %1394 = vmatprep.subr.mxu0 0.0
    %1395 = vmatpush1.msra.mxu0 0.0
    %1396 = vmatprep.subr.mxu0 0.0
    %1397 = vmatpush1.msra.mxu0 0.0
    %1398 = vmatprep.subr.mxu0 0.0
    %1399 = vmatpush1.msra.mxu0 0.0
    %1400 = vmatprep.subr.mxu0 0.0
    %1401 = vmatpush1.msra.mxu0 %v601
    %1402 = vmatprep.subr.mxu0 0.0
    %1403 = vmatpush1.msra.mxu0 %v596
    %1404 = vmatprep.subr.mxu0 0.0
    %1405 = vmatpush2.msra.mxu0 0.0
    %1406 = vmatprep.subr.mxu0 0.0
    %1407 = vmatpush2.msra.mxu0 0.0
    %1408 = vmatprep.subr.mxu0 0.0
    %1409 = vmatpush2.msra.mxu0 0.0
    %1410 = vmatprep.subr.mxu0 0.0
    %1411 = vmatpush2.msra.mxu0 0.0
    %1412 = vmatprep.subr.mxu0 0.0
    %1413 = vmatpush2.msra.mxu0 0.0
    %1414 = vmatprep.subr.mxu0 0.0
    %1415 = vmatpush2.msra.mxu0 0.0
    %1416 = vmatprep.subr.mxu0 0.0
    %1417 = vmatpush2.msra.mxu0 0.0
    %1418 = vmatprep.subr.mxu0 0.0
    %1419 = vmatpush2.msra.mxu0 0.0
    %1420 = vmatprep.subr.mxu0 0.0
    %1421 = vmatpush2.msra.mxu0 0.0
    %1422 = vmatprep.subr.mxu0 0.0
    %1423 = vmatpush2.msra.mxu0 0.0
    %1424 = vmatprep.subr.mxu0 0.0
    %1425 = vmatpush2.msra.mxu0 0.0
    %1426 = vmatprep.subr.mxu0 0.0
    %1427 = vmatpush2.msra.mxu0 0.0
    %1428 = vmatprep.subr.mxu0 0.0
    %1429 = vmatpush2.msra.mxu0 0.0
    %1430 = vmatprep.subr.mxu0 0.0
    %1431 = vmatpush2.msra.mxu0 0.0
    %1432 = vmatprep.subr.mxu0 0.0
    %1433 = vmatpush2.msra.mxu0 0.0
    %1434 = vmatprep.subr.mxu0 0.0
    %1435 = vmatpush2.msra.mxu0 0.0
    %1436 = vmatprep.mubr.f32.mxu0 0.0
    %1437 = vmatmul.mubr.f32.gmra.mxu0 %v1367
    %v1438 = vpop.f32.mrf.mxu0
    %v1439 = vadd.f32 %v301, %v1438
    %v1440 = vpop.f32.mrf.mxu0
    %1441 = vmatprep.mubr.f32.mxu0 0.0
    %1442 = vmatmul.mubr.f32.gmra.mxu0 %v1370
    %v1443 = vpop.f32.mrf.mxu0
    %v1444 = vadd.f32 %v302, %v1443
    %v1445 = vpop.f32.mrf.mxu0
    %1446 = vdwg.mxu0
    %v1448 = vsel %vm960, %v912, 0
    %v1451 = vsel %vm960, %v913, 0
    %1453 = vmatprep.subr.mxu0 0.0
    %1454 = vmatpush1.msra.mxu0 0.0
    %1455 = vmatprep.subr.mxu0 0.0
    %1456 = vmatpush1.msra.mxu0 0.0
    %1457 = vmatprep.subr.mxu0 0.0
    %1458 = vmatpush1.msra.mxu0 0.0
    %1459 = vmatprep.subr.mxu0 0.0
    %1460 = vmatpush1.msra.mxu0 0.0
    %1461 = vmatprep.subr.mxu0 0.0
    %1462 = vmatpush1.msra.mxu0 0.0
    %1463 = vmatprep.subr.mxu0 0.0
    %1464 = vmatpush1.msra.mxu0 0.0
    %1465 = vmatprep.subr.mxu0 0.0
    %1466 = vmatpush1.msra.mxu0 0.0
    %1467 = vmatprep.subr.mxu0 0.0
    %1468 = vmatpush1.msra.mxu0 0.0
    %1469 = vmatprep.subr.mxu0 0.0
    %1470 = vmatpush1.msra.mxu0 0.0
    %1471 = vmatprep.subr.mxu0 0.0
    %1472 = vmatpush1.msra.mxu0 0.0
    %1473 = vmatprep.subr.mxu0 0.0
    %1474 = vmatpush1.msra.mxu0 0.0
    %1475 = vmatprep.subr.mxu0 0.0
    %1476 = vmatpush1.msra.mxu0 0.0
    %1477 = vmatprep.subr.mxu0 0.0
    %1478 = vmatpush1.msra.mxu0 0.0
    %1479 = vmatprep.subr.mxu0 0.0
    %1480 = vmatpush1.msra.mxu0 0.0
    %1481 = vmatprep.subr.mxu0 0.0
    %1482 = vmatpush1.msra.mxu0 %v611
    %1483 = vmatprep.subr.mxu0 0.0
    %1484 = vmatpush1.msra.mxu0 %v606
    %1485 = vmatprep.subr.mxu0 0.0
    %1486 = vmatpush2.msra.mxu0 0.0
    %1487 = vmatprep.subr.mxu0 0.0
    %1488 = vmatpush2.msra.mxu0 0.0
    %1489 = vmatprep.subr.mxu0 0.0
    %1490 = vmatpush2.msra.mxu0 0.0
    %1491 = vmatprep.subr.mxu0 0.0
    %1492 = vmatpush2.msra.mxu0 0.0
    %1493 = vmatprep.subr.mxu0 0.0
    %1494 = vmatpush2.msra.mxu0 0.0
    %1495 = vmatprep.subr.mxu0 0.0
    %1496 = vmatpush2.msra.mxu0 0.0
    %1497 = vmatprep.subr.mxu0 0.0
    %1498 = vmatpush2.msra.mxu0 0.0
    %1499 = vmatprep.subr.mxu0 0.0
    %1500 = vmatpush2.msra.mxu0 0.0
    %1501 = vmatprep.subr.mxu0 0.0
    %1502 = vmatpush2.msra.mxu0 0.0
    %1503 = vmatprep.subr.mxu0 0.0
    %1504 = vmatpush2.msra.mxu0 0.0
    %1505 = vmatprep.subr.mxu0 0.0
    %1506 = vmatpush2.msra.mxu0 0.0
    %1507 = vmatprep.subr.mxu0 0.0
    %1508 = vmatpush2.msra.mxu0 0.0
    %1509 = vmatprep.subr.mxu0 0.0
    %1510 = vmatpush2.msra.mxu0 0.0
    %1511 = vmatprep.subr.mxu0 0.0
    %1512 = vmatpush2.msra.mxu0 0.0
    %1513 = vmatprep.subr.mxu0 0.0
    %1514 = vmatpush2.msra.mxu0 0.0
    %1515 = vmatprep.subr.mxu0 0.0
    %1516 = vmatpush2.msra.mxu0 0.0
    %1517 = vmatprep.mubr.f32.mxu0 0.0
    %1518 = vmatmul.mubr.f32.gmra.mxu0 %v1448
    %v1519 = vpop.f32.mrf.mxu0
    %v1520 = vadd.f32 %v301, %v1519
    %v1521 = vpop.f32.mrf.mxu0
    %1522 = vmatprep.mubr.f32.mxu0 0.0
    %1523 = vmatmul.mubr.f32.gmra.mxu0 %v1451
    %v1524 = vpop.f32.mrf.mxu0
    %v1525 = vadd.f32 %v302, %v1524
    %v1526 = vpop.f32.mrf.mxu0
    %1527 = vdwg.mxu0
    %v1529 = vsel %vm960, %v944, 0
    %v1532 = vsel %vm960, %v945, 0
    %1534 = vmatprep.subr.mxu0 0.0
    %1535 = vmatpush1.msra.mxu0 0.0
    %1536 = vmatprep.subr.mxu0 0.0
    %1537 = vmatpush1.msra.mxu0 0.0
    %1538 = vmatprep.subr.mxu0 0.0
    %1539 = vmatpush1.msra.mxu0 0.0
    %1540 = vmatprep.subr.mxu0 0.0
    %1541 = vmatpush1.msra.mxu0 0.0
    %1542 = vmatprep.subr.mxu0 0.0
    %1543 = vmatpush1.msra.mxu0 0.0
    %1544 = vmatprep.subr.mxu0 0.0
    %1545 = vmatpush1.msra.mxu0 0.0
    %1546 = vmatprep.subr.mxu0 0.0
    %1547 = vmatpush1.msra.mxu0 0.0
    %1548 = vmatprep.subr.mxu0 0.0
    %1549 = vmatpush1.msra.mxu0 0.0
    %1550 = vmatprep.subr.mxu0 0.0
    %1551 = vmatpush1.msra.mxu0 0.0
    %1552 = vmatprep.subr.mxu0 0.0
    %1553 = vmatpush1.msra.mxu0 0.0
    %1554 = vmatprep.subr.mxu0 0.0
    %1555 = vmatpush1.msra.mxu0 0.0
    %1556 = vmatprep.subr.mxu0 0.0
    %1557 = vmatpush1.msra.mxu0 0.0
    %1558 = vmatprep.subr.mxu0 0.0
    %1559 = vmatpush1.msra.mxu0 0.0
    %1560 = vmatprep.subr.mxu0 0.0
    %1561 = vmatpush1.msra.mxu0 0.0
    %1562 = vmatprep.subr.mxu0 0.0
    %1563 = vmatpush1.msra.mxu0 %v621
    %1564 = vmatprep.subr.mxu0 0.0
    %1565 = vmatpush1.msra.mxu0 %v616
    %1566 = vmatprep.subr.mxu0 0.0
    %1567 = vmatpush2.msra.mxu0 0.0
    %1568 = vmatprep.subr.mxu0 0.0
    %1569 = vmatpush2.msra.mxu0 0.0
    %1570 = vmatprep.subr.mxu0 0.0
    %1571 = vmatpush2.msra.mxu0 0.0
    %1572 = vmatprep.subr.mxu0 0.0
    %1573 = vmatpush2.msra.mxu0 0.0
    %1574 = vmatprep.subr.mxu0 0.0
    %1575 = vmatpush2.msra.mxu0 0.0
    %1576 = vmatprep.subr.mxu0 0.0
    %1577 = vmatpush2.msra.mxu0 0.0
    %1578 = vmatprep.subr.mxu0 0.0
    %1579 = vmatpush2.msra.mxu0 0.0
    %1580 = vmatprep.subr.mxu0 0.0
    %1581 = vmatpush2.msra.mxu0 0.0
    %1582 = vmatprep.subr.mxu0 0.0
    %1583 = vmatpush2.msra.mxu0 0.0
    %1584 = vmatprep.subr.mxu0 0.0
    %1585 = vmatpush2.msra.mxu0 0.0
    %1586 = vmatprep.subr.mxu0 0.0
    %1587 = vmatpush2.msra.mxu0 0.0
    %1588 = vmatprep.subr.mxu0 0.0
    %1589 = vmatpush2.msra.mxu0 0.0
    %1590 = vmatprep.subr.mxu0 0.0
    %1591 = vmatpush2.msra.mxu0 0.0
    %1592 = vmatprep.subr.mxu0 0.0
    %1593 = vmatpush2.msra.mxu0 0.0
    %1594 = vmatprep.subr.mxu0 0.0
    %1595 = vmatpush2.msra.mxu0 0.0
    %1596 = vmatprep.subr.mxu0 0.0
    %1597 = vmatpush2.msra.mxu0 0.0
    %1598 = vmatprep.mubr.f32.mxu0 0.0
    %1599 = vmatmul.mubr.f32.gmra.mxu0 %v1529
    %v1600 = vpop.f32.mrf.mxu0
    %v1601 = vadd.f32 %v301, %v1600
    %v1602 = vpop.f32.mrf.mxu0
    %1603 = vmatprep.mubr.f32.mxu0 0.0
    %1604 = vmatmul.mubr.f32.gmra.mxu0 %v1532
    %v1605 = vpop.f32.mrf.mxu0
    %v1606 = vadd.f32 %v302, %v1605
    %v1607 = vpop.f32.mrf.mxu0
    %1608 = vdwg.mxu0
    %v1609 = vsel %vm960, %v1034, -inf
    %1610 = vmax.xlane.f32.xlu0 %v1609
    %v1611 = vpop.xlane.xlu0 %1610
    %v1612 = vsel %vm960, %v1039, -inf
    %1613 = vmax.xlane.f32.xlu0 %v1612
    %v1614 = vpop.xlane.xlu0 %1613
    %v1615 = vsel %vm960, %v1115, -inf
    %1616 = vmax.xlane.f32.xlu0 %v1615
    %v1617 = vpop.xlane.xlu0 %1616
    %v1618 = vsel %vm960, %v1120, -inf
    %1619 = vmax.xlane.f32.xlu0 %v1618
    %v1620 = vpop.xlane.xlu0 %1619
    %v1621 = vsel %vm960, %v1196, -inf
    %1622 = vmax.xlane.f32.xlu0 %v1621
    %v1623 = vpop.xlane.xlu0 %1622
    %v1624 = vsel %vm960, %v1201, -inf
    %1625 = vmax.xlane.f32.xlu0 %v1624
    %v1626 = vpop.xlane.xlu0 %1625
    %v1627 = vsel %vm960, %v1277, -inf
    %1628 = vmax.xlane.f32.xlu0 %v1627
    %v1629 = vpop.xlane.xlu0 %1628
    %v1630 = vsel %vm960, %v1282, -inf
    %1631 = vmax.xlane.f32.xlu0 %v1630
    %v1632 = vpop.xlane.xlu0 %1631
    %v1633 = vsel %vm960, %v1358, -inf
    %1634 = vmax.xlane.f32.xlu0 %v1633
    %v1635 = vpop.xlane.xlu0 %1634
    %v1636 = vsel %vm960, %v1363, -inf
    %1637 = vmax.xlane.f32.xlu0 %v1636
    %v1638 = vpop.xlane.xlu0 %1637
    %v1639 = vsel %vm960, %v1439, -inf
    %1640 = vmax.xlane.f32.xlu0 %v1639
    %v1641 = vpop.xlane.xlu0 %1640
    %v1642 = vsel %vm960, %v1444, -inf
    %1643 = vmax.xlane.f32.xlu0 %v1642
    %v1644 = vpop.xlane.xlu0 %1643
    %v1645 = vsel %vm960, %v1520, -inf
    %1646 = vmax.xlane.f32.xlu0 %v1645
    %v1647 = vpop.xlane.xlu0 %1646
    %v1648 = vsel %vm960, %v1525, -inf
    %1649 = vmax.xlane.f32.xlu0 %v1648
    %v1650 = vpop.xlane.xlu0 %1649
    %v1651 = vsel %vm960, %v1601, -inf
    %1652 = vmax.xlane.f32.xlu0 %v1651
    %v1653 = vpop.xlane.xlu0 %1652
    %v1654 = vsel %vm960, %v1606, -inf
    %1655 = vmax.xlane.f32.xlu0 %v1654
    %v1656 = vpop.xlane.xlu0 %1655
    %v1657 = vsub.f32 %v1034, %v1611
    %v1658 = vsub.f32 %v1039, %v1614
    %v1659 = vsub.f32 %v1115, %v1617
    %v1660 = vsub.f32 %v1120, %v1620
    %v1661 = vsub.f32 %v1196, %v1623
    %v1662 = vsub.f32 %v1201, %v1626
    %v1663 = vsub.f32 %v1277, %v1629
    %v1664 = vsub.f32 %v1282, %v1632
    %v1665 = vsub.f32 %v1358, %v1635
    %v1666 = vsub.f32 %v1363, %v1638
    %v1667 = vsub.f32 %v1439, %v1641
    %v1668 = vsub.f32 %v1444, %v1644
    %v1669 = vsub.f32 %v1520, %v1647
    %v1670 = vsub.f32 %v1525, %v1650
    %v1671 = vsub.f32 %v1601, %v1653
    %v1672 = vsub.f32 %v1606, %v1656
    %v1673 = vmul.f32 %v1657, 1.442695
    %v1674 = vpow.pop %v1673
    %v1675 = vmul.f32 %v1658, 1.442695
    %v1676 = vpow.pop %v1675
    %v1677 = vmul.f32 %v1659, 1.442695
    %v1678 = vpow.pop %v1677
    %v1679 = vmul.f32 %v1660, 1.442695
    %v1680 = vpow.pop %v1679
    %v1681 = vmul.f32 %v1661, 1.442695
    %v1682 = vpow.pop %v1681
    %v1683 = vmul.f32 %v1662, 1.442695
    %v1684 = vpow.pop %v1683
    %v1685 = vmul.f32 %v1663, 1.442695
    %v1686 = vpow.pop %v1685
    %v1687 = vmul.f32 %v1664, 1.442695
    %v1688 = vpow.pop %v1687
    %v1689 = vmul.f32 %v1665, 1.442695
    %v1690 = vpow.pop %v1689
    %v1691 = vmul.f32 %v1666, 1.442695
    %v1692 = vpow.pop %v1691
    %v1693 = vmul.f32 %v1667, 1.442695
    %v1694 = vpow.pop %v1693
    %v1695 = vmul.f32 %v1668, 1.442695
    %v1696 = vpow.pop %v1695
    %v1697 = vmul.f32 %v1669, 1.442695
    %v1698 = vpow.pop %v1697
    %v1699 = vmul.f32 %v1670, 1.442695
    %v1700 = vpow.pop %v1699
    %v1701 = vmul.f32 %v1671, 1.442695
    %v1702 = vpow.pop %v1701
    %v1703 = vmul.f32 %v1672, 1.442695
    %v1704 = vpow.pop %v1703
    %v1705 = vsel %vm960, %v1674, 0.0
    %1706 = vadd.xlane.f32.xlu0 %v1705
    %v1707 = vpop.xlane.xlu0 %1706
    %v1708 = vsel %vm960, %v1676, 0.0
    %1709 = vadd.xlane.f32.xlu0 %v1708
    %v1710 = vpop.xlane.xlu0 %1709
    %v1711 = vsel %vm960, %v1678, 0.0
    %1712 = vadd.xlane.f32.xlu0 %v1711
    %v1713 = vpop.xlane.xlu0 %1712
    %v1714 = vsel %vm960, %v1680, 0.0
    %1715 = vadd.xlane.f32.xlu0 %v1714
    %v1716 = vpop.xlane.xlu0 %1715
    %v1717 = vsel %vm960, %v1682, 0.0
    %1718 = vadd.xlane.f32.xlu0 %v1717
    %v1719 = vpop.xlane.xlu0 %1718
    %v1720 = vsel %vm960, %v1684, 0.0
    %1721 = vadd.xlane.f32.xlu0 %v1720
    %v1722 = vpop.xlane.xlu0 %1721
    %v1723 = vsel %vm960, %v1686, 0.0
    %1724 = vadd.xlane.f32.xlu0 %v1723
    %v1725 = vpop.xlane.xlu0 %1724
    %v1726 = vsel %vm960, %v1688, 0.0
    %1727 = vadd.xlane.f32.xlu0 %v1726
    %v1728 = vpop.xlane.xlu0 %1727
    %v1729 = vsel %vm960, %v1690, 0.0
    %1730 = vadd.xlane.f32.xlu0 %v1729
    %v1731 = vpop.xlane.xlu0 %1730
    %v1732 = vsel %vm960, %v1692, 0.0
    %1733 = vadd.xlane.f32.xlu0 %v1732
    %v1734 = vpop.xlane.xlu0 %1733
    %v1735 = vsel %vm960, %v1694, 0.0
    %1736 = vadd.xlane.f32.xlu0 %v1735
    %v1737 = vpop.xlane.xlu0 %1736
    %v1738 = vsel %vm960, %v1696, 0.0
    %1739 = vadd.xlane.f32.xlu0 %v1738
    %v1740 = vpop.xlane.xlu0 %1739
    %v1741 = vsel %vm960, %v1698, 0.0
    %1742 = vadd.xlane.f32.xlu0 %v1741
    %v1743 = vpop.xlane.xlu0 %1742
    %v1744 = vsel %vm960, %v1700, 0.0
    %1745 = vadd.xlane.f32.xlu0 %v1744
    %v1746 = vpop.xlane.xlu0 %1745
    %v1747 = vsel %vm960, %v1702, 0.0
    %1748 = vadd.xlane.f32.xlu0 %v1747
    %v1749 = vpop.xlane.xlu0 %1748
    %v1750 = vsel %vm960, %v1704, 0.0
    %1751 = vadd.xlane.f32.xlu0 %v1750
    %v1752 = vpop.xlane.xlu0 %1751
    %v1753 = vrcp.pop %v1707
    %v1754 = vrcp.pop %v1710
    %v1755 = vrcp.pop %v1713
    %v1756 = vrcp.pop %v1716
    %v1757 = vrcp.pop %v1719
    %v1758 = vrcp.pop %v1722
    %v1759 = vrcp.pop %v1725
    %v1760 = vrcp.pop %v1728
    %v1761 = vrcp.pop %v1731
    %v1762 = vrcp.pop %v1734
    %v1763 = vrcp.pop %v1737
    %v1764 = vrcp.pop %v1740
    %v1765 = vrcp.pop %v1743
    %v1766 = vrcp.pop %v1746
    %v1767 = vrcp.pop %v1749
    %v1768 = vrcp.pop %v1752
    %v1769 = vmul.f32 %v1674, %v1753
    %v1770 = vmul.f32 %v1676, %v1754
    %v1771 = vmul.f32 %v1678, %v1755
    %v1772 = vmul.f32 %v1680, %v1756
    %v1773 = vmul.f32 %v1682, %v1757
    %v1774 = vmul.f32 %v1684, %v1758
    %v1775 = vmul.f32 %v1686, %v1759
    %v1776 = vmul.f32 %v1688, %v1760
    %v1777 = vmul.f32 %v1690, %v1761
    %v1778 = vmul.f32 %v1692, %v1762
    %v1779 = vmul.f32 %v1694, %v1763
    %v1780 = vmul.f32 %v1696, %v1764
    %v1781 = vmul.f32 %v1698, %v1765
    %v1782 = vmul.f32 %v1700, %v1766
    %v1783 = vmul.f32 %v1702, %v1767
    %v1784 = vmul.f32 %v1704, %v1768
    %v1786 = vsel %vm960, %v1769, 0
    %v1789 = vsel %vm960, %v1770, 0
    %v1792 = vsel %vm960, %v626, 0
    %v1795 = vsel %vm960, %v631, 0
    %1797 = vmatprep.subr.mxu0 0.0
    %1798 = vmatpush1.xpose.msra.mxu0 0.0
    %1799 = vmatprep.subr.mxu0 0.0
    %1800 = vmatpush1.xpose.msra.mxu0 0.0
    %1801 = vmatprep.subr.mxu0 0.0
    %1802 = vmatpush1.xpose.msra.mxu0 0.0
    %1803 = vmatprep.subr.mxu0 0.0
    %1804 = vmatpush1.xpose.msra.mxu0 0.0
    %1805 = vmatprep.subr.mxu0 0.0
    %1806 = vmatpush1.xpose.msra.mxu0 0.0
    %1807 = vmatprep.subr.mxu0 0.0
    %1808 = vmatpush1.xpose.msra.mxu0 0.0
    %1809 = vmatprep.subr.mxu0 0.0
    %1810 = vmatpush1.xpose.msra.mxu0 0.0
    %1811 = vmatprep.subr.mxu0 0.0
    %1812 = vmatpush1.xpose.msra.mxu0 0.0
    %1813 = vmatprep.subr.mxu0 0.0
    %1814 = vmatpush1.xpose.msra.mxu0 0.0
    %1815 = vmatprep.subr.mxu0 0.0
    %1816 = vmatpush1.xpose.msra.mxu0 0.0
    %1817 = vmatprep.subr.mxu0 0.0
    %1818 = vmatpush1.xpose.msra.mxu0 0.0
    %1819 = vmatprep.subr.mxu0 0.0
    %1820 = vmatpush1.xpose.msra.mxu0 0.0
    %1821 = vmatprep.subr.mxu0 0.0
    %1822 = vmatpush1.xpose.msra.mxu0 0.0
    %1823 = vmatprep.subr.mxu0 0.0
    %1824 = vmatpush1.xpose.msra.mxu0 0.0
    %1825 = vmatprep.subr.mxu0 0.0
    %1826 = vmatpush1.xpose.msra.mxu0 %v1795
    %1827 = vmatprep.subr.mxu0 0.0
    %1828 = vmatpush1.xpose.msra.mxu0 %v1792
    %1829 = vmatprep.subr.mxu0 0.0
    %1830 = vmatpush2.xpose.msra.mxu0 0.0
    %1831 = vmatprep.subr.mxu0 0.0
    %1832 = vmatpush2.xpose.msra.mxu0 0.0
    %1833 = vmatprep.subr.mxu0 0.0
    %1834 = vmatpush2.xpose.msra.mxu0 0.0
    %1835 = vmatprep.subr.mxu0 0.0
    %1836 = vmatpush2.xpose.msra.mxu0 0.0
    %1837 = vmatprep.subr.mxu0 0.0
    %1838 = vmatpush2.xpose.msra.mxu0 0.0
    %1839 = vmatprep.subr.mxu0 0.0
    %1840 = vmatpush2.xpose.msra.mxu0 0.0
    %1841 = vmatprep.subr.mxu0 0.0
    %1842 = vmatpush2.xpose.msra.mxu0 0.0
    %1843 = vmatprep.subr.mxu0 0.0
    %1844 = vmatpush2.xpose.msra.mxu0 0.0
    %1845 = vmatprep.subr.mxu0 0.0
    %1846 = vmatpush2.xpose.msra.mxu0 0.0
    %1847 = vmatprep.subr.mxu0 0.0
    %1848 = vmatpush2.xpose.msra.mxu0 0.0
    %1849 = vmatprep.subr.mxu0 0.0
    %1850 = vmatpush2.xpose.msra.mxu0 0.0
    %1851 = vmatprep.subr.mxu0 0.0
    %1852 = vmatpush2.xpose.msra.mxu0 0.0
    %1853 = vmatprep.subr.mxu0 0.0
    %1854 = vmatpush2.xpose.msra.mxu0 0.0
    %1855 = vmatprep.subr.mxu0 0.0
    %1856 = vmatpush2.xpose.msra.mxu0 0.0
    %1857 = vmatprep.subr.mxu0 0.0
    %1858 = vmatpush2.xpose.msra.mxu0 0.0
    %1859 = vmatprep.subr.mxu0 0.0
    %1860 = vmatpush2.xpose.msra.mxu0 0.0
    %1861 = vmatprep.mubr.f32.mxu0 0.0
    %1862 = vmatmul.mubr.f32.gmra.mxu0 %v1786
    %v1863 = vpop.f32.mrf.mxu0
    %v1864 = vadd.f32 0.0, %v1863
    %v1865 = vpop.f32.mrf.mxu0
    %1866 = vmatprep.mubr.f32.mxu0 0.0
    %1867 = vmatmul.mubr.f32.gmra.mxu0 %v1789
    %v1868 = vpop.f32.mrf.mxu0
    %v1869 = vadd.f32 0.0, %v1868
    %v1870 = vpop.f32.mrf.mxu0
    %1871 = vdwg.mxu0
    %v1873 = vsel %vm960, %v1771, 0
    %v1876 = vsel %vm960, %v1772, 0
    %v1879 = vsel %vm960, %v636, 0
    %v1882 = vsel %vm960, %v641, 0
    %1884 = vmatprep.subr.mxu0 0.0
    %1885 = vmatpush1.xpose.msra.mxu0 0.0
    %1886 = vmatprep.subr.mxu0 0.0
    %1887 = vmatpush1.xpose.msra.mxu0 0.0
    %1888 = vmatprep.subr.mxu0 0.0
    %1889 = vmatpush1.xpose.msra.mxu0 0.0
    %1890 = vmatprep.subr.mxu0 0.0
    %1891 = vmatpush1.xpose.msra.mxu0 0.0
    %1892 = vmatprep.subr.mxu0 0.0
    %1893 = vmatpush1.xpose.msra.mxu0 0.0
    %1894 = vmatprep.subr.mxu0 0.0
    %1895 = vmatpush1.xpose.msra.mxu0 0.0
    %1896 = vmatprep.subr.mxu0 0.0
    %1897 = vmatpush1.xpose.msra.mxu0 0.0
    %1898 = vmatprep.subr.mxu0 0.0
    %1899 = vmatpush1.xpose.msra.mxu0 0.0
    %1900 = vmatprep.subr.mxu0 0.0
    %1901 = vmatpush1.xpose.msra.mxu0 0.0
    %1902 = vmatprep.subr.mxu0 0.0
    %1903 = vmatpush1.xpose.msra.mxu0 0.0
    %1904 = vmatprep.subr.mxu0 0.0
    %1905 = vmatpush1.xpose.msra.mxu0 0.0
    %1906 = vmatprep.subr.mxu0 0.0
    %1907 = vmatpush1.xpose.msra.mxu0 0.0
    %1908 = vmatprep.subr.mxu0 0.0
    %1909 = vmatpush1.xpose.msra.mxu0 0.0
    %1910 = vmatprep.subr.mxu0 0.0
    %1911 = vmatpush1.xpose.msra.mxu0 0.0
    %1912 = vmatprep.subr.mxu0 0.0
    %1913 = vmatpush1.xpose.msra.mxu0 %v1882
    %1914 = vmatprep.subr.mxu0 0.0
    %1915 = vmatpush1.xpose.msra.mxu0 %v1879
    %1916 = vmatprep.subr.mxu0 0.0
    %1917 = vmatpush2.xpose.msra.mxu0 0.0
    %1918 = vmatprep.subr.mxu0 0.0
    %1919 = vmatpush2.xpose.msra.mxu0 0.0
    %1920 = vmatprep.subr.mxu0 0.0
    %1921 = vmatpush2.xpose.msra.mxu0 0.0
    %1922 = vmatprep.subr.mxu0 0.0
    %1923 = vmatpush2.xpose.msra.mxu0 0.0
    %1924 = vmatprep.subr.mxu0 0.0
    %1925 = vmatpush2.xpose.msra.mxu0 0.0
    %1926 = vmatprep.subr.mxu0 0.0
    %1927 = vmatpush2.xpose.msra.mxu0 0.0
    %1928 = vmatprep.subr.mxu0 0.0
    %1929 = vmatpush2.xpose.msra.mxu0 0.0
    %1930 = vmatprep.subr.mxu0 0.0
    %1931 = vmatpush2.xpose.msra.mxu0 0.0
    %1932 = vmatprep.subr.mxu0 0.0
    %1933 = vmatpush2.xpose.msra.mxu0 0.0
    %1934 = vmatprep.subr.mxu0 0.0
    %1935 = vmatpush2.xpose.msra.mxu0 0.0
    %1936 = vmatprep.subr.mxu0 0.0
    %1937 = vmatpush2.xpose.msra.mxu0 0.0
    %1938 = vmatprep.subr.mxu0 0.0
    %1939 = vmatpush2.xpose.msra.mxu0 0.0
    %1940 = vmatprep.subr.mxu0 0.0
    %1941 = vmatpush2.xpose.msra.mxu0 0.0
    %1942 = vmatprep.subr.mxu0 0.0
    %1943 = vmatpush2.xpose.msra.mxu0 0.0
    %1944 = vmatprep.subr.mxu0 0.0
    %1945 = vmatpush2.xpose.msra.mxu0 0.0
    %1946 = vmatprep.subr.mxu0 0.0
    %1947 = vmatpush2.xpose.msra.mxu0 0.0
    %1948 = vmatprep.mubr.f32.mxu0 0.0
    %1949 = vmatmul.mubr.f32.gmra.mxu0 %v1873
    %v1950 = vpop.f32.mrf.mxu0
    %v1951 = vadd.f32 0.0, %v1950
    %v1952 = vpop.f32.mrf.mxu0
    %1953 = vmatprep.mubr.f32.mxu0 0.0
    %1954 = vmatmul.mubr.f32.gmra.mxu0 %v1876
    %v1955 = vpop.f32.mrf.mxu0
    %v1956 = vadd.f32 0.0, %v1955
    %v1957 = vpop.f32.mrf.mxu0
    %1958 = vdwg.mxu0
    %v1960 = vsel %vm960, %v1773, 0
    %v1963 = vsel %vm960, %v1774, 0
    %v1966 = vsel %vm960, %v646, 0
    %v1969 = vsel %vm960, %v651, 0
    %1971 = vmatprep.subr.mxu0 0.0
    %1972 = vmatpush1.xpose.msra.mxu0 0.0
    %1973 = vmatprep.subr.mxu0 0.0
    %1974 = vmatpush1.xpose.msra.mxu0 0.0
    %1975 = vmatprep.subr.mxu0 0.0
    %1976 = vmatpush1.xpose.msra.mxu0 0.0
    %1977 = vmatprep.subr.mxu0 0.0
    %1978 = vmatpush1.xpose.msra.mxu0 0.0
    %1979 = vmatprep.subr.mxu0 0.0
    %1980 = vmatpush1.xpose.msra.mxu0 0.0
    %1981 = vmatprep.subr.mxu0 0.0
    %1982 = vmatpush1.xpose.msra.mxu0 0.0
    %1983 = vmatprep.subr.mxu0 0.0
    %1984 = vmatpush1.xpose.msra.mxu0 0.0
    %1985 = vmatprep.subr.mxu0 0.0
    %1986 = vmatpush1.xpose.msra.mxu0 0.0
    %1987 = vmatprep.subr.mxu0 0.0
    %1988 = vmatpush1.xpose.msra.mxu0 0.0
    %1989 = vmatprep.subr.mxu0 0.0
    %1990 = vmatpush1.xpose.msra.mxu0 0.0
    %1991 = vmatprep.subr.mxu0 0.0
    %1992 = vmatpush1.xpose.msra.mxu0 0.0
    %1993 = vmatprep.subr.mxu0 0.0
    %1994 = vmatpush1.xpose.msra.mxu0 0.0
    %1995 = vmatprep.subr.mxu0 0.0
    %1996 = vmatpush1.xpose.msra.mxu0 0.0
    %1997 = vmatprep.subr.mxu0 0.0
    %1998 = vmatpush1.xpose.msra.mxu0 0.0
    %1999 = vmatprep.subr.mxu0 0.0
    %2000 = vmatpush1.xpose.msra.mxu0 %v1969
    %2001 = vmatprep.subr.mxu0 0.0
    %2002 = vmatpush1.xpose.msra.mxu0 %v1966
    %2003 = vmatprep.subr.mxu0 0.0
    %2004 = vmatpush2.xpose.msra.mxu0 0.0
    %2005 = vmatprep.subr.mxu0 0.0
    %2006 = vmatpush2.xpose.msra.mxu0 0.0
    %2007 = vmatprep.subr.mxu0 0.0
    %2008 = vmatpush2.xpose.msra.mxu0 0.0
    %2009 = vmatprep.subr.mxu0 0.0
    %2010 = vmatpush2.xpose.msra.mxu0 0.0
    %2011 = vmatprep.subr.mxu0 0.0
    %2012 = vmatpush2.xpose.msra.mxu0 0.0
    %2013 = vmatprep.subr.mxu0 0.0
    %2014 = vmatpush2.xpose.msra.mxu0 0.0
    %2015 = vmatprep.subr.mxu0 0.0
    %2016 = vmatpush2.xpose.msra.mxu0 0.0
    %2017 = vmatprep.subr.mxu0 0.0
    %2018 = vmatpush2.xpose.msra.mxu0 0.0
    %2019 = vmatprep.subr.mxu0 0.0
    %2020 = vmatpush2.xpose.msra.mxu0 0.0
    %2021 = vmatprep.subr.mxu0 0.0
    %2022 = vmatpush2.xpose.msra.mxu0 0.0
    %2023 = vmatprep.subr.mxu0 0.0
    %2024 = vmatpush2.xpose.msra.mxu0 0.0
    %2025 = vmatprep.subr.mxu0 0.0
    %2026 = vmatpush2.xpose.msra.mxu0 0.0
    %2027 = vmatprep.subr.mxu0 0.0
    %2028 = vmatpush2.xpose.msra.mxu0 0.0
    %2029 = vmatprep.subr.mxu0 0.0
    %2030 = vmatpush2.xpose.msra.mxu0 0.0
    %2031 = vmatprep.subr.mxu0 0.0
    %2032 = vmatpush2.xpose.msra.mxu0 0.0
    %2033 = vmatprep.subr.mxu0 0.0
    %2034 = vmatpush2.xpose.msra.mxu0 0.0
    %2035 = vmatprep.mubr.f32.mxu0 0.0
    %2036 = vmatmul.mubr.f32.gmra.mxu0 %v1960
    %v2037 = vpop.f32.mrf.mxu0
    %v2038 = vadd.f32 0.0, %v2037
    %v2039 = vpop.f32.mrf.mxu0
    %2040 = vmatprep.mubr.f32.mxu0 0.0
    %2041 = vmatmul.mubr.f32.gmra.mxu0 %v1963
    %v2042 = vpop.f32.mrf.mxu0
    %v2043 = vadd.f32 0.0, %v2042
    %v2044 = vpop.f32.mrf.mxu0
    %2045 = vdwg.mxu0
    %v2047 = vsel %vm960, %v1775, 0
    %v2050 = vsel %vm960, %v1776, 0
    %v2053 = vsel %vm960, %v656, 0
    %v2056 = vsel %vm960, %v661, 0
    %2058 = vmatprep.subr.mxu0 0.0
    %2059 = vmatpush1.xpose.msra.mxu0 0.0
    %2060 = vmatprep.subr.mxu0 0.0
    %2061 = vmatpush1.xpose.msra.mxu0 0.0
    %2062 = vmatprep.subr.mxu0 0.0
    %2063 = vmatpush1.xpose.msra.mxu0 0.0
    %2064 = vmatprep.subr.mxu0 0.0
    %2065 = vmatpush1.xpose.msra.mxu0 0.0
    %2066 = vmatprep.subr.mxu0 0.0
    %2067 = vmatpush1.xpose.msra.mxu0 0.0
    %2068 = vmatprep.subr.mxu0 0.0
    %2069 = vmatpush1.xpose.msra.mxu0 0.0
    %2070 = vmatprep.subr.mxu0 0.0
    %2071 = vmatpush1.xpose.msra.mxu0 0.0
    %2072 = vmatprep.subr.mxu0 0.0
    %2073 = vmatpush1.xpose.msra.mxu0 0.0
    %2074 = vmatprep.subr.mxu0 0.0
    %2075 = vmatpush1.xpose.msra.mxu0 0.0
    %2076 = vmatprep.subr.mxu0 0.0
    %2077 = vmatpush1.xpose.msra.mxu0 0.0
    %2078 = vmatprep.subr.mxu0 0.0
    %2079 = vmatpush1.xpose.msra.mxu0 0.0
    %2080 = vmatprep.subr.mxu0 0.0
    %2081 = vmatpush1.xpose.msra.mxu0 0.0
    %2082 = vmatprep.subr.mxu0 0.0
    %2083 = vmatpush1.xpose.msra.mxu0 0.0
    %2084 = vmatprep.subr.mxu0 0.0
    %2085 = vmatpush1.xpose.msra.mxu0 0.0
    %2086 = vmatprep.subr.mxu0 0.0
    %2087 = vmatpush1.xpose.msra.mxu0 %v2056
    %2088 = vmatprep.subr.mxu0 0.0
    %2089 = vmatpush1.xpose.msra.mxu0 %v2053
    %2090 = vmatprep.subr.mxu0 0.0
    %2091 = vmatpush2.xpose.msra.mxu0 0.0
    %2092 = vmatprep.subr.mxu0 0.0
    %2093 = vmatpush2.xpose.msra.mxu0 0.0
    %2094 = vmatprep.subr.mxu0 0.0
    %2095 = vmatpush2.xpose.msra.mxu0 0.0
    %2096 = vmatprep.subr.mxu0 0.0
    %2097 = vmatpush2.xpose.msra.mxu0 0.0
    %2098 = vmatprep.subr.mxu0 0.0
    %2099 = vmatpush2.xpose.msra.mxu0 0.0
    %2100 = vmatprep.subr.mxu0 0.0
    %2101 = vmatpush2.xpose.msra.mxu0 0.0
    %2102 = vmatprep.subr.mxu0 0.0
    %2103 = vmatpush2.xpose.msra.mxu0 0.0
    %2104 = vmatprep.subr.mxu0 0.0
    %2105 = vmatpush2.xpose.msra.mxu0 0.0
    %2106 = vmatprep.subr.mxu0 0.0
    %2107 = vmatpush2.xpose.msra.mxu0 0.0
    %2108 = vmatprep.subr.mxu0 0.0
    %2109 = vmatpush2.xpose.msra.mxu0 0.0
    %2110 = vmatprep.subr.mxu0 0.0
    %2111 = vmatpush2.xpose.msra.mxu0 0.0
    %2112 = vmatprep.subr.mxu0 0.0
    %2113 = vmatpush2.xpose.msra.mxu0 0.0
    %2114 = vmatprep.subr.mxu0 0.0
    %2115 = vmatpush2.xpose.msra.mxu0 0.0
    %2116 = vmatprep.subr.mxu0 0.0
    %2117 = vmatpush2.xpose.msra.mxu0 0.0
    %2118 = vmatprep.subr.mxu0 0.0
    %2119 = vmatpush2.xpose.msra.mxu0 0.0
    %2120 = vmatprep.subr.mxu0 0.0
    %2121 = vmatpush2.xpose.msra.mxu0 0.0
    %2122 = vmatprep.mubr.f32.mxu0 0.0
    %2123 = vmatmul.mubr.f32.gmra.mxu0 %v2047
    %v2124 = vpop.f32.mrf.mxu0
    %v2125 = vadd.f32 0.0, %v2124
    %v2126 = vpop.f32.mrf.mxu0
    %2127 = vmatprep.mubr.f32.mxu0 0.0
    %2128 = vmatmul.mubr.f32.gmra.mxu0 %v2050
    %v2129 = vpop.f32.mrf.mxu0
    %v2130 = vadd.f32 0.0, %v2129
    %v2131 = vpop.f32.mrf.mxu0
    %2132 = vdwg.mxu0
    %v2134 = vsel %vm960, %v1777, 0
    %v2137 = vsel %vm960, %v1778, 0
    %v2140 = vsel %vm960, %v666, 0
    %v2143 = vsel %vm960, %v671, 0
    %2145 = vmatprep.subr.mxu0 0.0
    %2146 = vmatpush1.xpose.msra.mxu0 0.0
    %2147 = vmatprep.subr.mxu0 0.0
    %2148 = vmatpush1.xpose.msra.mxu0 0.0
    %2149 = vmatprep.subr.mxu0 0.0
    %2150 = vmatpush1.xpose.msra.mxu0 0.0
    %2151 = vmatprep.subr.mxu0 0.0
    %2152 = vmatpush1.xpose.msra.mxu0 0.0
    %2153 = vmatprep.subr.mxu0 0.0
    %2154 = vmatpush1.xpose.msra.mxu0 0.0
    %2155 = vmatprep.subr.mxu0 0.0
    %2156 = vmatpush1.xpose.msra.mxu0 0.0
    %2157 = vmatprep.subr.mxu0 0.0
    %2158 = vmatpush1.xpose.msra.mxu0 0.0
    %2159 = vmatprep.subr.mxu0 0.0
    %2160 = vmatpush1.xpose.msra.mxu0 0.0
    %2161 = vmatprep.subr.mxu0 0.0
    %2162 = vmatpush1.xpose.msra.mxu0 0.0
    %2163 = vmatprep.subr.mxu0 0.0
    %2164 = vmatpush1.xpose.msra.mxu0 0.0
    %2165 = vmatprep.subr.mxu0 0.0
    %2166 = vmatpush1.xpose.msra.mxu0 0.0
    %2167 = vmatprep.subr.mxu0 0.0
    %2168 = vmatpush1.xpose.msra.mxu0 0.0
    %2169 = vmatprep.subr.mxu0 0.0
    %2170 = vmatpush1.xpose.msra.mxu0 0.0
    %2171 = vmatprep.subr.mxu0 0.0
    %2172 = vmatpush1.xpose.msra.mxu0 0.0
    %2173 = vmatprep.subr.mxu0 0.0
    %2174 = vmatpush1.xpose.msra.mxu0 %v2143
    %2175 = vmatprep.subr.mxu0 0.0
    %2176 = vmatpush1.xpose.msra.mxu0 %v2140
    %2177 = vmatprep.subr.mxu0 0.0
    %2178 = vmatpush2.xpose.msra.mxu0 0.0
    %2179 = vmatprep.subr.mxu0 0.0
    %2180 = vmatpush2.xpose.msra.mxu0 0.0
    %2181 = vmatprep.subr.mxu0 0.0
    %2182 = vmatpush2.xpose.msra.mxu0 0.0
    %2183 = vmatprep.subr.mxu0 0.0
    %2184 = vmatpush2.xpose.msra.mxu0 0.0
    %2185 = vmatprep.subr.mxu0 0.0
    %2186 = vmatpush2.xpose.msra.mxu0 0.0
    %2187 = vmatprep.subr.mxu0 0.0
    %2188 = vmatpush2.xpose.msra.mxu0 0.0
    %2189 = vmatprep.subr.mxu0 0.0
    %2190 = vmatpush2.xpose.msra.mxu0 0.0
    %2191 = vmatprep.subr.mxu0 0.0
    %2192 = vmatpush2.xpose.msra.mxu0 0.0
    %2193 = vmatprep.subr.mxu0 0.0
    %2194 = vmatpush2.xpose.msra.mxu0 0.0
    %2195 = vmatprep.subr.mxu0 0.0
    %2196 = vmatpush2.xpose.msra.mxu0 0.0
    %2197 = vmatprep.subr.mxu0 0.0
    %2198 = vmatpush2.xpose.msra.mxu0 0.0
    %2199 = vmatprep.subr.mxu0 0.0
    %2200 = vmatpush2.xpose.msra.mxu0 0.0
    %2201 = vmatprep.subr.mxu0 0.0
    %2202 = vmatpush2.xpose.msra.mxu0 0.0
    %2203 = vmatprep.subr.mxu0 0.0
    %2204 = vmatpush2.xpose.msra.mxu0 0.0
    %2205 = vmatprep.subr.mxu0 0.0
    %2206 = vmatpush2.xpose.msra.mxu0 0.0
    %2207 = vmatprep.subr.mxu0 0.0
    %2208 = vmatpush2.xpose.msra.mxu0 0.0
    %2209 = vmatprep.mubr.f32.mxu0 0.0
    %2210 = vmatmul.mubr.f32.gmra.mxu0 %v2134
    %v2211 = vpop.f32.mrf.mxu0
    %v2212 = vadd.f32 0.0, %v2211
    %v2213 = vpop.f32.mrf.mxu0
    %2214 = vmatprep.mubr.f32.mxu0 0.0
    %2215 = vmatmul.mubr.f32.gmra.mxu0 %v2137
    %v2216 = vpop.f32.mrf.mxu0
    %v2217 = vadd.f32 0.0, %v2216
    %v2218 = vpop.f32.mrf.mxu0
    %2219 = vdwg.mxu0
    %v2221 = vsel %vm960, %v1779, 0
    %v2224 = vsel %vm960, %v1780, 0
    %v2227 = vsel %vm960, %v676, 0
    %v2230 = vsel %vm960, %v681, 0
    %2232 = vmatprep.subr.mxu0 0.0
    %2233 = vmatpush1.xpose.msra.mxu0 0.0
    %2234 = vmatprep.subr.mxu0 0.0
    %2235 = vmatpush1.xpose.msra.mxu0 0.0
    %2236 = vmatprep.subr.mxu0 0.0
    %2237 = vmatpush1.xpose.msra.mxu0 0.0
    %2238 = vmatprep.subr.mxu0 0.0
    %2239 = vmatpush1.xpose.msra.mxu0 0.0
    %2240 = vmatprep.subr.mxu0 0.0
    %2241 = vmatpush1.xpose.msra.mxu0 0.0
    %2242 = vmatprep.subr.mxu0 0.0
    %2243 = vmatpush1.xpose.msra.mxu0 0.0
    %2244 = vmatprep.subr.mxu0 0.0
    %2245 = vmatpush1.xpose.msra.mxu0 0.0
    %2246 = vmatprep.subr.mxu0 0.0
    %2247 = vmatpush1.xpose.msra.mxu0 0.0
    %2248 = vmatprep.subr.mxu0 0.0
    %2249 = vmatpush1.xpose.msra.mxu0 0.0
    %2250 = vmatprep.subr.mxu0 0.0
    %2251 = vmatpush1.xpose.msra.mxu0 0.0
    %2252 = vmatprep.subr.mxu0 0.0
    %2253 = vmatpush1.xpose.msra.mxu0 0.0
    %2254 = vmatprep.subr.mxu0 0.0
    %2255 = vmatpush1.xpose.msra.mxu0 0.0
    %2256 = vmatprep.subr.mxu0 0.0
    %2257 = vmatpush1.xpose.msra.mxu0 0.0
    %2258 = vmatprep.subr.mxu0 0.0
    %2259 = vmatpush1.xpose.msra.mxu0 0.0
    %2260 = vmatprep.subr.mxu0 0.0
    %2261 = vmatpush1.xpose.msra.mxu0 %v2230
    %2262 = vmatprep.subr.mxu0 0.0
    %2263 = vmatpush1.xpose.msra.mxu0 %v2227
    %2264 = vmatprep.subr.mxu0 0.0
    %2265 = vmatpush2.xpose.msra.mxu0 0.0
    %2266 = vmatprep.subr.mxu0 0.0
    %2267 = vmatpush2.xpose.msra.mxu0 0.0
    %2268 = vmatprep.subr.mxu0 0.0
    %2269 = vmatpush2.xpose.msra.mxu0 0.0
    %2270 = vmatprep.subr.mxu0 0.0
    %2271 = vmatpush2.xpose.msra.mxu0 0.0
    %2272 = vmatprep.subr.mxu0 0.0
    %2273 = vmatpush2.xpose.msra.mxu0 0.0
    %2274 = vmatprep.subr.mxu0 0.0
    %2275 = vmatpush2.xpose.msra.mxu0 0.0
    %2276 = vmatprep.subr.mxu0 0.0
    %2277 = vmatpush2.xpose.msra.mxu0 0.0
    %2278 = vmatprep.subr.mxu0 0.0
    %2279 = vmatpush2.xpose.msra.mxu0 0.0
    %2280 = vmatprep.subr.mxu0 0.0
    %2281 = vmatpush2.xpose.msra.mxu0 0.0
    %2282 = vmatprep.subr.mxu0 0.0
    %2283 = vmatpush2.xpose.msra.mxu0 0.0
    %2284 = vmatprep.subr.mxu0 0.0
    %2285 = vmatpush2.xpose.msra.mxu0 0.0
    %2286 = vmatprep.subr.mxu0 0.0
    %2287 = vmatpush2.xpose.msra.mxu0 0.0
    %2288 = vmatprep.subr.mxu0 0.0
    %2289 = vmatpush2.xpose.msra.mxu0 0.0
    %2290 = vmatprep.subr.mxu0 0.0
    %2291 = vmatpush2.xpose.msra.mxu0 0.0
    %2292 = vmatprep.subr.mxu0 0.0
    %2293 = vmatpush2.xpose.msra.mxu0 0.0
    %2294 = vmatprep.subr.mxu0 0.0
    %2295 = vmatpush2.xpose.msra.mxu0 0.0
    %2296 = vmatprep.mubr.f32.mxu0 0.0
    %2297 = vmatmul.mubr.f32.gmra.mxu0 %v2221
    %v2298 = vpop.f32.mrf.mxu0
    %v2299 = vadd.f32 0.0, %v2298
    %v2300 = vpop.f32.mrf.mxu0
    %2301 = vmatprep.mubr.f32.mxu0 0.0
    %2302 = vmatmul.mubr.f32.gmra.mxu0 %v2224
    %v2303 = vpop.f32.mrf.mxu0
    %v2304 = vadd.f32 0.0, %v2303
    %v2305 = vpop.f32.mrf.mxu0
    %2306 = vdwg.mxu0
    %v2308 = vsel %vm960, %v1781, 0
    %v2311 = vsel %vm960, %v1782, 0
    %v2314 = vsel %vm960, %v686, 0
    %v2317 = vsel %vm960, %v691, 0
    %2319 = vmatprep.subr.mxu0 0.0
    %2320 = vmatpush1.xpose.msra.mxu0 0.0
    %2321 = vmatprep.subr.mxu0 0.0
    %2322 = vmatpush1.xpose.msra.mxu0 0.0
    %2323 = vmatprep.subr.mxu0 0.0
    %2324 = vmatpush1.xpose.msra.mxu0 0.0
    %2325 = vmatprep.subr.mxu0 0.0
    %2326 = vmatpush1.xpose.msra.mxu0 0.0
    %2327 = vmatprep.subr.mxu0 0.0
    %2328 = vmatpush1.xpose.msra.mxu0 0.0
    %2329 = vmatprep.subr.mxu0 0.0
    %2330 = vmatpush1.xpose.msra.mxu0 0.0
    %2331 = vmatprep.subr.mxu0 0.0
    %2332 = vmatpush1.xpose.msra.mxu0 0.0
    %2333 = vmatprep.subr.mxu0 0.0
    %2334 = vmatpush1.xpose.msra.mxu0 0.0
    %2335 = vmatprep.subr.mxu0 0.0
    %2336 = vmatpush1.xpose.msra.mxu0 0.0
    %2337 = vmatprep.subr.mxu0 0.0
    %2338 = vmatpush1.xpose.msra.mxu0 0.0
    %2339 = vmatprep.subr.mxu0 0.0
    %2340 = vmatpush1.xpose.msra.mxu0 0.0
    %2341 = vmatprep.subr.mxu0 0.0
    %2342 = vmatpush1.xpose.msra.mxu0 0.0
    %2343 = vmatprep.subr.mxu0 0.0
    %2344 = vmatpush1.xpose.msra.mxu0 0.0
    %2345 = vmatprep.subr.mxu0 0.0
    %2346 = vmatpush1.xpose.msra.mxu0 0.0
    %2347 = vmatprep.subr.mxu0 0.0
    %2348 = vmatpush1.xpose.msra.mxu0 %v2317
    %2349 = vmatprep.subr.mxu0 0.0
    %2350 = vmatpush1.xpose.msra.mxu0 %v2314
    %2351 = vmatprep.subr.mxu0 0.0
    %2352 = vmatpush2.xpose.msra.mxu0 0.0
    %2353 = vmatprep.subr.mxu0 0.0
    %2354 = vmatpush2.xpose.msra.mxu0 0.0
    %2355 = vmatprep.subr.mxu0 0.0
    %2356 = vmatpush2.xpose.msra.mxu0 0.0
    %2357 = vmatprep.subr.mxu0 0.0
    %2358 = vmatpush2.xpose.msra.mxu0 0.0
    %2359 = vmatprep.subr.mxu0 0.0
    %2360 = vmatpush2.xpose.msra.mxu0 0.0
    %2361 = vmatprep.subr.mxu0 0.0
    %2362 = vmatpush2.xpose.msra.mxu0 0.0
    %2363 = vmatprep.subr.mxu0 0.0
    %2364 = vmatpush2.xpose.msra.mxu0 0.0
    %2365 = vmatprep.subr.mxu0 0.0
    %2366 = vmatpush2.xpose.msra.mxu0 0.0
    %2367 = vmatprep.subr.mxu0 0.0
    %2368 = vmatpush2.xpose.msra.mxu0 0.0
    %2369 = vmatprep.subr.mxu0 0.0
    %2370 = vmatpush2.xpose.msra.mxu0 0.0
    %2371 = vmatprep.subr.mxu0 0.0
    %2372 = vmatpush2.xpose.msra.mxu0 0.0
    %2373 = vmatprep.subr.mxu0 0.0
    %2374 = vmatpush2.xpose.msra.mxu0 0.0
    %2375 = vmatprep.subr.mxu0 0.0
    %2376 = vmatpush2.xpose.msra.mxu0 0.0
    %2377 = vmatprep.subr.mxu0 0.0
    %2378 = vmatpush2.xpose.msra.mxu0 0.0
    %2379 = vmatprep.subr.mxu0 0.0
    %2380 = vmatpush2.xpose.msra.mxu0 0.0
    %2381 = vmatprep.subr.mxu0 0.0
    %2382 = vmatpush2.xpose.msra.mxu0 0.0
    %2383 = vmatprep.mubr.f32.mxu0 0.0
    %2384 = vmatmul.mubr.f32.gmra.mxu0 %v2308
    %v2385 = vpop.f32.mrf.mxu0
    %v2386 = vadd.f32 0.0, %v2385
    %v2387 = vpop.f32.mrf.mxu0
    %2388 = vmatprep.mubr.f32.mxu0 0.0
    %2389 = vmatmul.mubr.f32.gmra.mxu0 %v2311
    %v2390 = vpop.f32.mrf.mxu0
    %v2391 = vadd.f32 0.0, %v2390
    %v2392 = vpop.f32.mrf.mxu0
    %2393 = vdwg.mxu0
    %v2395 = vsel %vm960, %v1783, 0
    %v2398 = vsel %vm960, %v1784, 0
    %v2401 = vsel %vm960, %v696, 0
    %v2404 = vsel %vm960, %v701, 0
    %2406 = vmatprep.subr.mxu0 0.0
    %2407 = vmatpush1.xpose.msra.mxu0 0.0
    %2408 = vmatprep.subr.mxu0 0.0
    %2409 = vmatpush1.xpose.msra.mxu0 0.0
    %2410 = vmatprep.subr.mxu0 0.0
    %2411 = vmatpush1.xpose.msra.mxu0 0.0
    %2412 = vmatprep.subr.mxu0 0.0
    %2413 = vmatpush1.xpose.msra.mxu0 0.0
    %2414 = vmatprep.subr.mxu0 0.0
    %2415 = vmatpush1.xpose.msra.mxu0 0.0
    %2416 = vmatprep.subr.mxu0 0.0
    %2417 = vmatpush1.xpose.msra.mxu0 0.0
    %2418 = vmatprep.subr.mxu0 0.0
    %2419 = vmatpush1.xpose.msra.mxu0 0.0
    %2420 = vmatprep.subr.mxu0 0.0
    %2421 = vmatpush1.xpose.msra.mxu0 0.0
    %2422 = vmatprep.subr.mxu0 0.0
    %2423 = vmatpush1.xpose.msra.mxu0 0.0
    %2424 = vmatprep.subr.mxu0 0.0
    %2425 = vmatpush1.xpose.msra.mxu0 0.0
    %2426 = vmatprep.subr.mxu0 0.0
    %2427 = vmatpush1.xpose.msra.mxu0 0.0
    %2428 = vmatprep.subr.mxu0 0.0
    %2429 = vmatpush1.xpose.msra.mxu0 0.0
    %2430 = vmatprep.subr.mxu0 0.0
    %2431 = vmatpush1.xpose.msra.mxu0 0.0
    %2432 = vmatprep.subr.mxu0 0.0
    %2433 = vmatpush1.xpose.msra.mxu0 0.0
    %2434 = vmatprep.subr.mxu0 0.0
    %2435 = vmatpush1.xpose.msra.mxu0 %v2404
    %2436 = vmatprep.subr.mxu0 0.0
    %2437 = vmatpush1.xpose.msra.mxu0 %v2401
    %2438 = vmatprep.subr.mxu0 0.0
    %2439 = vmatpush2.xpose.msra.mxu0 0.0
    %2440 = vmatprep.subr.mxu0 0.0
    %2441 = vmatpush2.xpose.msra.mxu0 0.0
    %2442 = vmatprep.subr.mxu0 0.0
    %2443 = vmatpush2.xpose.msra.mxu0 0.0
    %2444 = vmatprep.subr.mxu0 0.0
    %2445 = vmatpush2.xpose.msra.mxu0 0.0
    %2446 = vmatprep.subr.mxu0 0.0
    %2447 = vmatpush2.xpose.msra.mxu0 0.0
    %2448 = vmatprep.subr.mxu0 0.0
    %2449 = vmatpush2.xpose.msra.mxu0 0.0
    %2450 = vmatprep.subr.mxu0 0.0
    %2451 = vmatpush2.xpose.msra.mxu0 0.0
    %2452 = vmatprep.subr.mxu0 0.0
    %2453 = vmatpush2.xpose.msra.mxu0 0.0
    %2454 = vmatprep.subr.mxu0 0.0
    %2455 = vmatpush2.xpose.msra.mxu0 0.0
    %2456 = vmatprep.subr.mxu0 0.0
    %2457 = vmatpush2.xpose.msra.mxu0 0.0
    %2458 = vmatprep.subr.mxu0 0.0
    %2459 = vmatpush2.xpose.msra.mxu0 0.0
    %2460 = vmatprep.subr.mxu0 0.0
    %2461 = vmatpush2.xpose.msra.mxu0 0.0
    %2462 = vmatprep.subr.mxu0 0.0
    %2463 = vmatpush2.xpose.msra.mxu0 0.0
    %2464 = vmatprep.subr.mxu0 0.0
    %2465 = vmatpush2.xpose.msra.mxu0 0.0
    %2466 = vmatprep.subr.mxu0 0.0
    %2467 = vmatpush2.xpose.msra.mxu0 0.0
    %2468 = vmatprep.subr.mxu0 0.0
    %2469 = vmatpush2.xpose.msra.mxu0 0.0
    %2470 = vmatprep.mubr.f32.mxu0 0.0
    %2471 = vmatmul.mubr.f32.gmra.mxu0 %v2395
    %v2472 = vpop.f32.mrf.mxu0
    %v2473 = vadd.f32 0.0, %v2472
    %v2474 = vpop.f32.mrf.mxu0
    %2475 = vmatprep.mubr.f32.mxu0 0.0
    %2476 = vmatmul.mubr.f32.gmra.mxu0 %v2398
    %v2477 = vpop.f32.mrf.mxu0
    %v2478 = vadd.f32 0.0, %v2477
    %v2479 = vpop.f32.mrf.mxu0
    %2480 = vdwg.mxu0
    %v2481 = vld [vmem:[#allocation5] sm:$0xff]
    %v2482 = vld [vmem:[#allocation5 + $0x8] sm:$0xff]
    %v2483 = vld [vmem:[#allocation5 + $0x10] sm:$0xff]
    %v2484 = vld [vmem:[#allocation5 + $0x18] sm:$0xff]
    %v2485 = vld [vmem:[#allocation5 + $0x20] sm:$0xff]
    %v2486 = vld [vmem:[#allocation5 + $0x28] sm:$0xff]
    %v2487 = vld [vmem:[#allocation5 + $0x30] sm:$0xff]
    %v2488 = vld [vmem:[#allocation5 + $0x38] sm:$0xff]
    %v2489 = vld [vmem:[#allocation5 + $0x40] sm:$0xff]
    %v2490 = vld [vmem:[#allocation5 + $0x48] sm:$0xff]
    %v2491 = vld [vmem:[#allocation5 + $0x50] sm:$0xff]
    %v2492 = vld [vmem:[#allocation5 + $0x58] sm:$0xff]
    %v2493 = vld [vmem:[#allocation5 + $0x60] sm:$0xff]
    %v2494 = vld [vmem:[#allocation5 + $0x68] sm:$0xff]
    %v2495 = vld [vmem:[#allocation5 + $0x70] sm:$0xff]
    %v2496 = vld [vmem:[#allocation5 + $0x78] sm:$0xff]
    %v2498 = vsel %vm960, %v1864, 0
    %v2501 = vsel %vm960, %v1869, 0
    %2503 = vmatprep.subr.mxu0 0.0
    %2504 = vmatpush1.msra.mxu0 0.0
    %2505 = vmatprep.subr.mxu0 0.0
    %2506 = vmatpush1.msra.mxu0 0.0
    %2507 = vmatprep.subr.mxu0 0.0
    %2508 = vmatpush1.msra.mxu0 0.0
    %2509 = vmatprep.subr.mxu0 0.0
    %2510 = vmatpush1.msra.mxu0 0.0
    %2511 = vmatprep.subr.mxu0 0.0
    %2512 = vmatpush1.msra.mxu0 0.0
    %2513 = vmatprep.subr.mxu0 0.0
    %2514 = vmatpush1.msra.mxu0 0.0
    %2515 = vmatprep.subr.mxu0 0.0
    %2516 = vmatpush1.msra.mxu0 0.0
    %2517 = vmatprep.subr.mxu0 0.0
    %2518 = vmatpush1.msra.mxu0 0.0
    %2519 = vmatprep.subr.mxu0 0.0
    %2520 = vmatpush1.msra.mxu0 0.0
    %2521 = vmatprep.subr.mxu0 0.0
    %2522 = vmatpush1.msra.mxu0 0.0
    %2523 = vmatprep.subr.mxu0 0.0
    %2524 = vmatpush1.msra.mxu0 0.0
    %2525 = vmatprep.subr.mxu0 0.0
    %2526 = vmatpush1.msra.mxu0 0.0
    %2527 = vmatprep.subr.mxu0 0.0
    %2528 = vmatpush1.msra.mxu0 0.0
    %2529 = vmatprep.subr.mxu0 0.0
    %2530 = vmatpush1.msra.mxu0 0.0
    %2531 = vmatprep.subr.mxu0 0.0
    %2532 = vmatpush1.msra.mxu0 %v2482
    %2533 = vmatprep.subr.mxu0 0.0
    %2534 = vmatpush1.msra.mxu0 %v2481
    %2535 = vmatprep.subr.mxu0 0.0
    %2536 = vmatpush2.msra.mxu0 0.0
    %2537 = vmatprep.subr.mxu0 0.0
    %2538 = vmatpush2.msra.mxu0 0.0
    %2539 = vmatprep.subr.mxu0 0.0
    %2540 = vmatpush2.msra.mxu0 0.0
    %2541 = vmatprep.subr.mxu0 0.0
    %2542 = vmatpush2.msra.mxu0 0.0
    %2543 = vmatprep.subr.mxu0 0.0
    %2544 = vmatpush2.msra.mxu0 0.0
    %2545 = vmatprep.subr.mxu0 0.0
    %2546 = vmatpush2.msra.mxu0 0.0
    %2547 = vmatprep.subr.mxu0 0.0
    %2548 = vmatpush2.msra.mxu0 0.0
    %2549 = vmatprep.subr.mxu0 0.0
    %2550 = vmatpush2.msra.mxu0 0.0
    %2551 = vmatprep.subr.mxu0 0.0
    %2552 = vmatpush2.msra.mxu0 0.0
    %2553 = vmatprep.subr.mxu0 0.0
    %2554 = vmatpush2.msra.mxu0 0.0
    %2555 = vmatprep.subr.mxu0 0.0
    %2556 = vmatpush2.msra.mxu0 0.0
    %2557 = vmatprep.subr.mxu0 0.0
    %2558 = vmatpush2.msra.mxu0 0.0
    %2559 = vmatprep.subr.mxu0 0.0
    %2560 = vmatpush2.msra.mxu0 0.0
    %2561 = vmatprep.subr.mxu0 0.0
    %2562 = vmatpush2.msra.mxu0 0.0
    %2563 = vmatprep.subr.mxu0 0.0
    %2564 = vmatpush2.msra.mxu0 0.0
    %2565 = vmatprep.subr.mxu0 0.0
    %2566 = vmatpush2.msra.mxu0 0.0
    %2567 = vmatprep.mubr.f32.mxu0 0.0
    %2568 = vmatmul.mubr.f32.gmra.mxu0 %v2498
    %v2569 = vpop.f32.mrf.mxu0
    %v2570 = vadd.f32 0.0, %v2569
    %v2571 = vpop.f32.mrf.mxu0
    %2572 = vmatprep.mubr.f32.mxu0 0.0
    %2573 = vmatmul.mubr.f32.gmra.mxu0 %v2501
    %v2574 = vpop.f32.mrf.mxu0
    %v2575 = vadd.f32 0.0, %v2574
    %v2576 = vpop.f32.mrf.mxu0
    %2577 = vdwg.mxu0
    %v2579 = vsel %vm960, %v1951, 0
    %v2582 = vsel %vm960, %v1956, 0
    %2584 = vmatprep.subr.mxu0 0.0
    %2585 = vmatpush1.msra.mxu0 0.0
    %2586 = vmatprep.subr.mxu0 0.0
    %2587 = vmatpush1.msra.mxu0 0.0
    %2588 = vmatprep.subr.mxu0 0.0
    %2589 = vmatpush1.msra.mxu0 0.0
    %2590 = vmatprep.subr.mxu0 0.0
    %2591 = vmatpush1.msra.mxu0 0.0
    %2592 = vmatprep.subr.mxu0 0.0
    %2593 = vmatpush1.msra.mxu0 0.0
    %2594 = vmatprep.subr.mxu0 0.0
    %2595 = vmatpush1.msra.mxu0 0.0
    %2596 = vmatprep.subr.mxu0 0.0
    %2597 = vmatpush1.msra.mxu0 0.0
    %2598 = vmatprep.subr.mxu0 0.0
    %2599 = vmatpush1.msra.mxu0 0.0
    %2600 = vmatprep.subr.mxu0 0.0
    %2601 = vmatpush1.msra.mxu0 0.0
    %2602 = vmatprep.subr.mxu0 0.0
    %2603 = vmatpush1.msra.mxu0 0.0
    %2604 = vmatprep.subr.mxu0 0.0
    %2605 = vmatpush1.msra.mxu0 0.0
    %2606 = vmatprep.subr.mxu0 0.0
    %2607 = vmatpush1.msra.mxu0 0.0
    %2608 = vmatprep.subr.mxu0 0.0
    %2609 = vmatpush1.msra.mxu0 0.0
    %2610 = vmatprep.subr.mxu0 0.0
    %2611 = vmatpush1.msra.mxu0 0.0
    %2612 = vmatprep.subr.mxu0 0.0
    %2613 = vmatpush1.msra.mxu0 %v2484
    %2614 = vmatprep.subr.mxu0 0.0
    %2615 = vmatpush1.msra.mxu0 %v2483
    %2616 = vmatprep.subr.mxu0 0.0
    %2617 = vmatpush2.msra.mxu0 0.0
    %2618 = vmatprep.subr.mxu0 0.0
    %2619 = vmatpush2.msra.mxu0 0.0
    %2620 = vmatprep.subr.mxu0 0.0
    %2621 = vmatpush2.msra.mxu0 0.0
    %2622 = vmatprep.subr.mxu0 0.0
    %2623 = vmatpush2.msra.mxu0 0.0
    %2624 = vmatprep.subr.mxu0 0.0
    %2625 = vmatpush2.msra.mxu0 0.0
    %2626 = vmatprep.subr.mxu0 0.0
    %2627 = vmatpush2.msra.mxu0 0.0
    %2628 = vmatprep.subr.mxu0 0.0
    %2629 = vmatpush2.msra.mxu0 0.0
    %2630 = vmatprep.subr.mxu0 0.0
    %2631 = vmatpush2.msra.mxu0 0.0
    %2632 = vmatprep.subr.mxu0 0.0
    %2633 = vmatpush2.msra.mxu0 0.0
    %2634 = vmatprep.subr.mxu0 0.0
    %2635 = vmatpush2.msra.mxu0 0.0
    %2636 = vmatprep.subr.mxu0 0.0
    %2637 = vmatpush2.msra.mxu0 0.0
    %2638 = vmatprep.subr.mxu0 0.0
    %2639 = vmatpush2.msra.mxu0 0.0
    %2640 = vmatprep.subr.mxu0 0.0
    %2641 = vmatpush2.msra.mxu0 0.0
    %2642 = vmatprep.subr.mxu0 0.0
    %2643 = vmatpush2.msra.mxu0 0.0
    %2644 = vmatprep.subr.mxu0 0.0
    %2645 = vmatpush2.msra.mxu0 0.0
    %2646 = vmatprep.subr.mxu0 0.0
    %2647 = vmatpush2.msra.mxu0 0.0
    %2648 = vmatprep.mubr.f32.mxu0 0.0
    %2649 = vmatmul.mubr.f32.gmra.mxu0 %v2579
    %v2650 = vpop.f32.mrf.mxu0
    %v2651 = vadd.f32 0.0, %v2650
    %v2652 = vpop.f32.mrf.mxu0
    %2653 = vmatprep.mubr.f32.mxu0 0.0
    %2654 = vmatmul.mubr.f32.gmra.mxu0 %v2582
    %v2655 = vpop.f32.mrf.mxu0
    %v2656 = vadd.f32 0.0, %v2655
    %v2657 = vpop.f32.mrf.mxu0
    %2658 = vdwg.mxu0
    %v2660 = vsel %vm960, %v2038, 0
    %v2663 = vsel %vm960, %v2043, 0
    %2665 = vmatprep.subr.mxu0 0.0
    %2666 = vmatpush1.msra.mxu0 0.0
    %2667 = vmatprep.subr.mxu0 0.0
    %2668 = vmatpush1.msra.mxu0 0.0
    %2669 = vmatprep.subr.mxu0 0.0
    %2670 = vmatpush1.msra.mxu0 0.0
    %2671 = vmatprep.subr.mxu0 0.0
    %2672 = vmatpush1.msra.mxu0 0.0
    %2673 = vmatprep.subr.mxu0 0.0
    %2674 = vmatpush1.msra.mxu0 0.0
    %2675 = vmatprep.subr.mxu0 0.0
    %2676 = vmatpush1.msra.mxu0 0.0
    %2677 = vmatprep.subr.mxu0 0.0
    %2678 = vmatpush1.msra.mxu0 0.0
    %2679 = vmatprep.subr.mxu0 0.0
    %2680 = vmatpush1.msra.mxu0 0.0
    %2681 = vmatprep.subr.mxu0 0.0
    %2682 = vmatpush1.msra.mxu0 0.0
    %2683 = vmatprep.subr.mxu0 0.0
    %2684 = vmatpush1.msra.mxu0 0.0
    %2685 = vmatprep.subr.mxu0 0.0
    %2686 = vmatpush1.msra.mxu0 0.0
    %2687 = vmatprep.subr.mxu0 0.0
    %2688 = vmatpush1.msra.mxu0 0.0
    %2689 = vmatprep.subr.mxu0 0.0
    %2690 = vmatpush1.msra.mxu0 0.0
    %2691 = vmatprep.subr.mxu0 0.0
    %2692 = vmatpush1.msra.mxu0 0.0
    %2693 = vmatprep.subr.mxu0 0.0
    %2694 = vmatpush1.msra.mxu0 %v2486
    %2695 = vmatprep.subr.mxu0 0.0
    %2696 = vmatpush1.msra.mxu0 %v2485
    %2697 = vmatprep.subr.mxu0 0.0
    %2698 = vmatpush2.msra.mxu0 0.0
    %2699 = vmatprep.subr.mxu0 0.0
    %2700 = vmatpush2.msra.mxu0 0.0
    %2701 = vmatprep.subr.mxu0 0.0
    %2702 = vmatpush2.msra.mxu0 0.0
    %2703 = vmatprep.subr.mxu0 0.0
    %2704 = vmatpush2.msra.mxu0 0.0
    %2705 = vmatprep.subr.mxu0 0.0
    %2706 = vmatpush2.msra.mxu0 0.0
    %2707 = vmatprep.subr.mxu0 0.0
    %2708 = vmatpush2.msra.mxu0 0.0
    %2709 = vmatprep.subr.mxu0 0.0
    %2710 = vmatpush2.msra.mxu0 0.0
    %2711 = vmatprep.subr.mxu0 0.0
    %2712 = vmatpush2.msra.mxu0 0.0
    %2713 = vmatprep.subr.mxu0 0.0
    %2714 = vmatpush2.msra.mxu0 0.0
    %2715 = vmatprep.subr.mxu0 0.0
    %2716 = vmatpush2.msra.mxu0 0.0
    %2717 = vmatprep.subr.mxu0 0.0
    %2718 = vmatpush2.msra.mxu0 0.0
    %2719 = vmatprep.subr.mxu0 0.0
    %2720 = vmatpush2.msra.mxu0 0.0
    %2721 = vmatprep.subr.mxu0 0.0
    %2722 = vmatpush2.msra.mxu0 0.0
    %2723 = vmatprep.subr.mxu0 0.0
    %2724 = vmatpush2.msra.mxu0 0.0
    %2725 = vmatprep.subr.mxu0 0.0
    %2726 = vmatpush2.msra.mxu0 0.0
    %2727 = vmatprep.subr.mxu0 0.0
    %2728 = vmatpush2.msra.mxu0 0.0
    %2729 = vmatprep.mubr.f32.mxu0 0.0
    %2730 = vmatmul.mubr.f32.gmra.mxu0 %v2660
    %v2731 = vpop.f32.mrf.mxu0
    %v2732 = vadd.f32 0.0, %v2731
    %v2733 = vpop.f32.mrf.mxu0
    %2734 = vmatprep.mubr.f32.mxu0 0.0
    %2735 = vmatmul.mubr.f32.gmra.mxu0 %v2663
    %v2736 = vpop.f32.mrf.mxu0
    %v2737 = vadd.f32 0.0, %v2736
    %v2738 = vpop.f32.mrf.mxu0
    %2739 = vdwg.mxu0
    %v2741 = vsel %vm960, %v2125, 0
    %v2744 = vsel %vm960, %v2130, 0
    %2746 = vmatprep.subr.mxu0 0.0
    %2747 = vmatpush1.msra.mxu0 0.0
    %2748 = vmatprep.subr.mxu0 0.0
    %2749 = vmatpush1.msra.mxu0 0.0
    %2750 = vmatprep.subr.mxu0 0.0
    %2751 = vmatpush1.msra.mxu0 0.0
    %2752 = vmatprep.subr.mxu0 0.0
    %2753 = vmatpush1.msra.mxu0 0.0
    %2754 = vmatprep.subr.mxu0 0.0
    %2755 = vmatpush1.msra.mxu0 0.0
    %2756 = vmatprep.subr.mxu0 0.0
    %2757 = vmatpush1.msra.mxu0 0.0
    %2758 = vmatprep.subr.mxu0 0.0
    %2759 = vmatpush1.msra.mxu0 0.0
    %2760 = vmatprep.subr.mxu0 0.0
    %2761 = vmatpush1.msra.mxu0 0.0
    %2762 = vmatprep.subr.mxu0 0.0
    %2763 = vmatpush1.msra.mxu0 0.0
    %2764 = vmatprep.subr.mxu0 0.0
    %2765 = vmatpush1.msra.mxu0 0.0
    %2766 = vmatprep.subr.mxu0 0.0
    %2767 = vmatpush1.msra.mxu0 0.0
    %2768 = vmatprep.subr.mxu0 0.0
    %2769 = vmatpush1.msra.mxu0 0.0
    %2770 = vmatprep.subr.mxu0 0.0
    %2771 = vmatpush1.msra.mxu0 0.0
    %2772 = vmatprep.subr.mxu0 0.0
    %2773 = vmatpush1.msra.mxu0 0.0
    %2774 = vmatprep.subr.mxu0 0.0
    %2775 = vmatpush1.msra.mxu0 %v2488
    %2776 = vmatprep.subr.mxu0 0.0
    %2777 = vmatpush1.msra.mxu0 %v2487
    %2778 = vmatprep.subr.mxu0 0.0
    %2779 = vmatpush2.msra.mxu0 0.0
    %2780 = vmatprep.subr.mxu0 0.0
    %2781 = vmatpush2.msra.mxu0 0.0
    %2782 = vmatprep.subr.mxu0 0.0
    %2783 = vmatpush2.msra.mxu0 0.0
    %2784 = vmatprep.subr.mxu0 0.0
    %2785 = vmatpush2.msra.mxu0 0.0
    %2786 = vmatprep.subr.mxu0 0.0
    %2787 = vmatpush2.msra.mxu0 0.0
    %2788 = vmatprep.subr.mxu0 0.0
    %2789 = vmatpush2.msra.mxu0 0.0
    %2790 = vmatprep.subr.mxu0 0.0
    %2791 = vmatpush2.msra.mxu0 0.0
    %2792 = vmatprep.subr.mxu0 0.0
    %2793 = vmatpush2.msra.mxu0 0.0
    %2794 = vmatprep.subr.mxu0 0.0
    %2795 = vmatpush2.msra.mxu0 0.0
    %2796 = vmatprep.subr.mxu0 0.0
    %2797 = vmatpush2.msra.mxu0 0.0
    %2798 = vmatprep.subr.mxu0 0.0
    %2799 = vmatpush2.msra.mxu0 0.0
    %2800 = vmatprep.subr.mxu0 0.0
    %2801 = vmatpush2.msra.mxu0 0.0
    %2802 = vmatprep.subr.mxu0 0.0
    %2803 = vmatpush2.msra.mxu0 0.0
    %2804 = vmatprep.subr.mxu0 0.0
    %2805 = vmatpush2.msra.mxu0 0.0
    %2806 = vmatprep.subr.mxu0 0.0
    %2807 = vmatpush2.msra.mxu0 0.0
    %2808 = vmatprep.subr.mxu0 0.0
    %2809 = vmatpush2.msra.mxu0 0.0
    %2810 = vmatprep.mubr.f32.mxu0 0.0
    %2811 = vmatmul.mubr.f32.gmra.mxu0 %v2741
    %v2812 = vpop.f32.mrf.mxu0
    %v2813 = vadd.f32 0.0, %v2812
    %v2814 = vpop.f32.mrf.mxu0
    %2815 = vmatprep.mubr.f32.mxu0 0.0
    %2816 = vmatmul.mubr.f32.gmra.mxu0 %v2744
    %v2817 = vpop.f32.mrf.mxu0
    %v2818 = vadd.f32 0.0, %v2817
    %v2819 = vpop.f32.mrf.mxu0
    %2820 = vdwg.mxu0
    %v2822 = vsel %vm960, %v2212, 0
    %v2825 = vsel %vm960, %v2217, 0
    %2827 = vmatprep.subr.mxu0 0.0
    %2828 = vmatpush1.msra.mxu0 0.0
    %2829 = vmatprep.subr.mxu0 0.0
    %2830 = vmatpush1.msra.mxu0 0.0
    %2831 = vmatprep.subr.mxu0 0.0
    %2832 = vmatpush1.msra.mxu0 0.0
    %2833 = vmatprep.subr.mxu0 0.0
    %2834 = vmatpush1.msra.mxu0 0.0
    %2835 = vmatprep.subr.mxu0 0.0
    %2836 = vmatpush1.msra.mxu0 0.0
    %2837 = vmatprep.subr.mxu0 0.0
    %2838 = vmatpush1.msra.mxu0 0.0
    %2839 = vmatprep.subr.mxu0 0.0
    %2840 = vmatpush1.msra.mxu0 0.0
    %2841 = vmatprep.subr.mxu0 0.0
    %2842 = vmatpush1.msra.mxu0 0.0
    %2843 = vmatprep.subr.mxu0 0.0
    %2844 = vmatpush1.msra.mxu0 0.0
    %2845 = vmatprep.subr.mxu0 0.0
    %2846 = vmatpush1.msra.mxu0 0.0
    %2847 = vmatprep.subr.mxu0 0.0
    %2848 = vmatpush1.msra.mxu0 0.0
    %2849 = vmatprep.subr.mxu0 0.0
    %2850 = vmatpush1.msra.mxu0 0.0
    %2851 = vmatprep.subr.mxu0 0.0
    %2852 = vmatpush1.msra.mxu0 0.0
    %2853 = vmatprep.subr.mxu0 0.0
    %2854 = vmatpush1.msra.mxu0 0.0
    %2855 = vmatprep.subr.mxu0 0.0
    %2856 = vmatpush1.msra.mxu0 %v2490
    %2857 = vmatprep.subr.mxu0 0.0
    %2858 = vmatpush1.msra.mxu0 %v2489
    %2859 = vmatprep.subr.mxu0 0.0
    %2860 = vmatpush2.msra.mxu0 0.0
    %2861 = vmatprep.subr.mxu0 0.0
    %2862 = vmatpush2.msra.mxu0 0.0
    %2863 = vmatprep.subr.mxu0 0.0
    %2864 = vmatpush2.msra.mxu0 0.0
    %2865 = vmatprep.subr.mxu0 0.0
    %2866 = vmatpush2.msra.mxu0 0.0
    %2867 = vmatprep.subr.mxu0 0.0
    %2868 = vmatpush2.msra.mxu0 0.0
    %2869 = vmatprep.subr.mxu0 0.0
    %2870 = vmatpush2.msra.mxu0 0.0
    %2871 = vmatprep.subr.mxu0 0.0
    %2872 = vmatpush2.msra.mxu0 0.0
    %2873 = vmatprep.subr.mxu0 0.0
    %2874 = vmatpush2.msra.mxu0 0.0
    %2875 = vmatprep.subr.mxu0 0.0
    %2876 = vmatpush2.msra.mxu0 0.0
    %2877 = vmatprep.subr.mxu0 0.0
    %2878 = vmatpush2.msra.mxu0 0.0
    %2879 = vmatprep.subr.mxu0 0.0
    %2880 = vmatpush2.msra.mxu0 0.0
    %2881 = vmatprep.subr.mxu0 0.0
    %2882 = vmatpush2.msra.mxu0 0.0
    %2883 = vmatprep.subr.mxu0 0.0
    %2884 = vmatpush2.msra.mxu0 0.0
    %2885 = vmatprep.subr.mxu0 0.0
    %2886 = vmatpush2.msra.mxu0 0.0
    %2887 = vmatprep.subr.mxu0 0.0
    %2888 = vmatpush2.msra.mxu0 0.0
    %2889 = vmatprep.subr.mxu0 0.0
    %2890 = vmatpush2.msra.mxu0 0.0
    %2891 = vmatprep.mubr.f32.mxu0 0.0
    %2892 = vmatmul.mubr.f32.gmra.mxu0 %v2822
    %v2893 = vpop.f32.mrf.mxu0
    %v2894 = vadd.f32 0.0, %v2893
    %v2895 = vpop.f32.mrf.mxu0
    %2896 = vmatprep.mubr.f32.mxu0 0.0
    %2897 = vmatmul.mubr.f32.gmra.mxu0 %v2825
    %v2898 = vpop.f32.mrf.mxu0
    %v2899 = vadd.f32 0.0, %v2898
    %v2900 = vpop.f32.mrf.mxu0
    %2901 = vdwg.mxu0
    %v2903 = vsel %vm960, %v2299, 0
    %v2906 = vsel %vm960, %v2304, 0
    %2908 = vmatprep.subr.mxu0 0.0
    %2909 = vmatpush1.msra.mxu0 0.0
    %2910 = vmatprep.subr.mxu0 0.0
    %2911 = vmatpush1.msra.mxu0 0.0
    %2912 = vmatprep.subr.mxu0 0.0
    %2913 = vmatpush1.msra.mxu0 0.0
    %2914 = vmatprep.subr.mxu0 0.0
    %2915 = vmatpush1.msra.mxu0 0.0
    %2916 = vmatprep.subr.mxu0 0.0
    %2917 = vmatpush1.msra.mxu0 0.0
    %2918 = vmatprep.subr.mxu0 0.0
    %2919 = vmatpush1.msra.mxu0 0.0
    %2920 = vmatprep.subr.mxu0 0.0
    %2921 = vmatpush1.msra.mxu0 0.0
    %2922 = vmatprep.subr.mxu0 0.0
    %2923 = vmatpush1.msra.mxu0 0.0
    %2924 = vmatprep.subr.mxu0 0.0
    %2925 = vmatpush1.msra.mxu0 0.0
    %2926 = vmatprep.subr.mxu0 0.0
    %2927 = vmatpush1.msra.mxu0 0.0
    %2928 = vmatprep.subr.mxu0 0.0
    %2929 = vmatpush1.msra.mxu0 0.0
    %2930 = vmatprep.subr.mxu0 0.0
    %2931 = vmatpush1.msra.mxu0 0.0
    %2932 = vmatprep.subr.mxu0 0.0
    %2933 = vmatpush1.msra.mxu0 0.0
    %2934 = vmatprep.subr.mxu0 0.0
    %2935 = vmatpush1.msra.mxu0 0.0
    %2936 = vmatprep.subr.mxu0 0.0
    %2937 = vmatpush1.msra.mxu0 %v2492
    %2938 = vmatprep.subr.mxu0 0.0
    %2939 = vmatpush1.msra.mxu0 %v2491
    %2940 = vmatprep.subr.mxu0 0.0
    %2941 = vmatpush2.msra.mxu0 0.0
    %2942 = vmatprep.subr.mxu0 0.0
    %2943 = vmatpush2.msra.mxu0 0.0
    %2944 = vmatprep.subr.mxu0 0.0
    %2945 = vmatpush2.msra.mxu0 0.0
    %2946 = vmatprep.subr.mxu0 0.0
    %2947 = vmatpush2.msra.mxu0 0.0
    %2948 = vmatprep.subr.mxu0 0.0
    %2949 = vmatpush2.msra.mxu0 0.0
    %2950 = vmatprep.subr.mxu0 0.0
    %2951 = vmatpush2.msra.mxu0 0.0
    %2952 = vmatprep.subr.mxu0 0.0
    %2953 = vmatpush2.msra.mxu0 0.0
    %2954 = vmatprep.subr.mxu0 0.0
    %2955 = vmatpush2.msra.mxu0 0.0
    %2956 = vmatprep.subr.mxu0 0.0
    %2957 = vmatpush2.msra.mxu0 0.0
    %2958 = vmatprep.subr.mxu0 0.0
    %2959 = vmatpush2.msra.mxu0 0.0
    %2960 = vmatprep.subr.mxu0 0.0
    %2961 = vmatpush2.msra.mxu0 0.0
    %2962 = vmatprep.subr.mxu0 0.0
    %2963 = vmatpush2.msra.mxu0 0.0
    %2964 = vmatprep.subr.mxu0 0.0
    %2965 = vmatpush2.msra.mxu0 0.0
    %2966 = vmatprep.subr.mxu0 0.0
    %2967 = vmatpush2.msra.mxu0 0.0
    %2968 = vmatprep.subr.mxu0 0.0
    %2969 = vmatpush2.msra.mxu0 0.0
    %2970 = vmatprep.subr.mxu0 0.0
    %2971 = vmatpush2.msra.mxu0 0.0
    %2972 = vmatprep.mubr.f32.mxu0 0.0
    %2973 = vmatmul.mubr.f32.gmra.mxu0 %v2903
    %v2974 = vpop.f32.mrf.mxu0
    %v2975 = vadd.f32 0.0, %v2974
    %v2976 = vpop.f32.mrf.mxu0
    %2977 = vmatprep.mubr.f32.mxu0 0.0
    %2978 = vmatmul.mubr.f32.gmra.mxu0 %v2906
    %v2979 = vpop.f32.mrf.mxu0
    %v2980 = vadd.f32 0.0, %v2979
    %v2981 = vpop.f32.mrf.mxu0
    %2982 = vdwg.mxu0
    %v2984 = vsel %vm960, %v2386, 0
    %v2987 = vsel %vm960, %v2391, 0
    %2989 = vmatprep.subr.mxu0 0.0
    %2990 = vmatpush1.msra.mxu0 0.0
    %2991 = vmatprep.subr.mxu0 0.0
    %2992 = vmatpush1.msra.mxu0 0.0
    %2993 = vmatprep.subr.mxu0 0.0
    %2994 = vmatpush1.msra.mxu0 0.0
    %2995 = vmatprep.subr.mxu0 0.0
    %2996 = vmatpush1.msra.mxu0 0.0
    %2997 = vmatprep.subr.mxu0 0.0
    %2998 = vmatpush1.msra.mxu0 0.0
    %2999 = vmatprep.subr.mxu0 0.0
    %3000 = vmatpush1.msra.mxu0 0.0
    %3001 = vmatprep.subr.mxu0 0.0
    %3002 = vmatpush1.msra.mxu0 0.0
    %3003 = vmatprep.subr.mxu0 0.0
    %3004 = vmatpush1.msra.mxu0 0.0
    %3005 = vmatprep.subr.mxu0 0.0
    %3006 = vmatpush1.msra.mxu0 0.0
    %3007 = vmatprep.subr.mxu0 0.0
    %3008 = vmatpush1.msra.mxu0 0.0
    %3009 = vmatprep.subr.mxu0 0.0
    %3010 = vmatpush1.msra.mxu0 0.0
    %3011 = vmatprep.subr.mxu0 0.0
    %3012 = vmatpush1.msra.mxu0 0.0
    %3013 = vmatprep.subr.mxu0 0.0
    %3014 = vmatpush1.msra.mxu0 0.0
    %3015 = vmatprep.subr.mxu0 0.0
    %3016 = vmatpush1.msra.mxu0 0.0
    %3017 = vmatprep.subr.mxu0 0.0
    %3018 = vmatpush1.msra.mxu0 %v2494
    %3019 = vmatprep.subr.mxu0 0.0
    %3020 = vmatpush1.msra.mxu0 %v2493
    %3021 = vmatprep.subr.mxu0 0.0
    %3022 = vmatpush2.msra.mxu0 0.0
    %3023 = vmatprep.subr.mxu0 0.0
    %3024 = vmatpush2.msra.mxu0 0.0
    %3025 = vmatprep.subr.mxu0 0.0
    %3026 = vmatpush2.msra.mxu0 0.0
    %3027 = vmatprep.subr.mxu0 0.0
    %3028 = vmatpush2.msra.mxu0 0.0
    %3029 = vmatprep.subr.mxu0 0.0
    %3030 = vmatpush2.msra.mxu0 0.0
    %3031 = vmatprep.subr.mxu0 0.0
    %3032 = vmatpush2.msra.mxu0 0.0
    %3033 = vmatprep.subr.mxu0 0.0
    %3034 = vmatpush2.msra.mxu0 0.0
    %3035 = vmatprep.subr.mxu0 0.0
    %3036 = vmatpush2.msra.mxu0 0.0
    %3037 = vmatprep.subr.mxu0 0.0
    %3038 = vmatpush2.msra.mxu0 0.0
    %3039 = vmatprep.subr.mxu0 0.0
    %3040 = vmatpush2.msra.mxu0 0.0
    %3041 = vmatprep.subr.mxu0 0.0
    %3042 = vmatpush2.msra.mxu0 0.0
    %3043 = vmatprep.subr.mxu0 0.0
    %3044 = vmatpush2.msra.mxu0 0.0
    %3045 = vmatprep.subr.mxu0 0.0
    %3046 = vmatpush2.msra.mxu0 0.0
    %3047 = vmatprep.subr.mxu0 0.0
    %3048 = vmatpush2.msra.mxu0 0.0
    %3049 = vmatprep.subr.mxu0 0.0
    %3050 = vmatpush2.msra.mxu0 0.0
    %3051 = vmatprep.subr.mxu0 0.0
    %3052 = vmatpush2.msra.mxu0 0.0
    %3053 = vmatprep.mubr.f32.mxu0 0.0
    %3054 = vmatmul.mubr.f32.gmra.mxu0 %v2984
    %v3055 = vpop.f32.mrf.mxu0
    %v3056 = vadd.f32 0.0, %v3055
    %v3057 = vpop.f32.mrf.mxu0
    %3058 = vmatprep.mubr.f32.mxu0 0.0
    %3059 = vmatmul.mubr.f32.gmra.mxu0 %v2987
    %v3060 = vpop.f32.mrf.mxu0
    %v3061 = vadd.f32 0.0, %v3060
    %v3062 = vpop.f32.mrf.mxu0
    %3063 = vdwg.mxu0
    %v3065 = vsel %vm960, %v2473, 0
    %v3068 = vsel %vm960, %v2478, 0
    %3070 = vmatprep.subr.mxu0 0.0
    %3071 = vmatpush1.msra.mxu0 0.0
    %3072 = vmatprep.subr.mxu0 0.0
    %3073 = vmatpush1.msra.mxu0 0.0
    %3074 = vmatprep.subr.mxu0 0.0
    %3075 = vmatpush1.msra.mxu0 0.0
    %3076 = vmatprep.subr.mxu0 0.0
    %3077 = vmatpush1.msra.mxu0 0.0
    %3078 = vmatprep.subr.mxu0 0.0
    %3079 = vmatpush1.msra.mxu0 0.0
    %3080 = vmatprep.subr.mxu0 0.0
    %3081 = vmatpush1.msra.mxu0 0.0
    %3082 = vmatprep.subr.mxu0 0.0
    %3083 = vmatpush1.msra.mxu0 0.0
    %3084 = vmatprep.subr.mxu0 0.0
    %3085 = vmatpush1.msra.mxu0 0.0
    %3086 = vmatprep.subr.mxu0 0.0
    %3087 = vmatpush1.msra.mxu0 0.0
    %3088 = vmatprep.subr.mxu0 0.0
    %3089 = vmatpush1.msra.mxu0 0.0
    %3090 = vmatprep.subr.mxu0 0.0
    %3091 = vmatpush1.msra.mxu0 0.0
    %3092 = vmatprep.subr.mxu0 0.0
    %3093 = vmatpush1.msra.mxu0 0.0
    %3094 = vmatprep.subr.mxu0 0.0
    %3095 = vmatpush1.msra.mxu0 0.0
    %3096 = vmatprep.subr.mxu0 0.0
    %3097 = vmatpush1.msra.mxu0 0.0
    %3098 = vmatprep.subr.mxu0 0.0
    %3099 = vmatpush1.msra.mxu0 %v2496
    %3100 = vmatprep.subr.mxu0 0.0
    %3101 = vmatpush1.msra.mxu0 %v2495
    %3102 = vmatprep.subr.mxu0 0.0
    %3103 = vmatpush2.msra.mxu0 0.0
    %3104 = vmatprep.subr.mxu0 0.0
    %3105 = vmatpush2.msra.mxu0 0.0
    %3106 = vmatprep.subr.mxu0 0.0
    %3107 = vmatpush2.msra.mxu0 0.0
    %3108 = vmatprep.subr.mxu0 0.0
    %3109 = vmatpush2.msra.mxu0 0.0
    %3110 = vmatprep.subr.mxu0 0.0
    %3111 = vmatpush2.msra.mxu0 0.0
    %3112 = vmatprep.subr.mxu0 0.0
    %3113 = vmatpush2.msra.mxu0 0.0
    %3114 = vmatprep.subr.mxu0 0.0
    %3115 = vmatpush2.msra.mxu0 0.0
    %3116 = vmatprep.subr.mxu0 0.0
    %3117 = vmatpush2.msra.mxu0 0.0
    %3118 = vmatprep.subr.mxu0 0.0
    %3119 = vmatpush2.msra.mxu0 0.0
    %3120 = vmatprep.subr.mxu0 0.0
    %3121 = vmatpush2.msra.mxu0 0.0
    %3122 = vmatprep.subr.mxu0 0.0
    %3123 = vmatpush2.msra.mxu0 0.0
    %3124 = vmatprep.subr.mxu0 0.0
    %3125 = vmatpush2.msra.mxu0 0.0
    %3126 = vmatprep.subr.mxu0 0.0
    %3127 = vmatpush2.msra.mxu0 0.0
    %3128 = vmatprep.subr.mxu0 0.0
    %3129 = vmatpush2.msra.mxu0 0.0
    %3130 = vmatprep.subr.mxu0 0.0
    %3131 = vmatpush2.msra.mxu0 0.0
    %3132 = vmatprep.subr.mxu0 0.0
    %3133 = vmatpush2.msra.mxu0 0.0
    %3134 = vmatprep.mubr.f32.mxu0 0.0
    %3135 = vmatmul.mubr.f32.gmra.mxu0 %v3065
    %v3136 = vpop.f32.mrf.mxu0
    %v3137 = vadd.f32 0.0, %v3136
    %v3138 = vpop.f32.mrf.mxu0
    %3139 = vmatprep.mubr.f32.mxu0 0.0
    %3140 = vmatmul.mubr.f32.gmra.mxu0 %v3068
    %v3141 = vpop.f32.mrf.mxu0
    %v3142 = vadd.f32 0.0, %v3141
    %v3143 = vpop.f32.mrf.mxu0
    %3144 = vdwg.mxu0
    %v3145 = vadd.f32 %v2570, %v2651
    %v3146 = vadd.f32 %v3145, %v2732
    %v3147 = vadd.f32 %v3146, %v2813
    %v3148 = vadd.f32 %v3147, %v2894
    %v3149 = vadd.f32 %v3148, %v2975
    %v3150 = vadd.f32 %v3149, %v3056
    %v3151 = vadd.f32 %v3150, %v3137
    %v3152 = vadd.f32 %v2575, %v2656
    %v3153 = vadd.f32 %v3152, %v2737
    %v3154 = vadd.f32 %v3153, %v2818
    %v3155 = vadd.f32 %v3154, %v2899
    %v3156 = vadd.f32 %v3155, %v2980
    %v3157 = vadd.f32 %v3156, %v3061
    %v3158 = vadd.f32 %v3157, %v3142
    %v3159 = vld [vmem:[#allocation7] sm:$0x1]
    %v3161 = vlaneseq
    %v3162 = vshrl.u32 %v3161, 7
    %v3163 = vsub.s32 0, %v3162
    %v3164 = vrot.slane %v3159, %v3163
    %v3166 = vadd.f32 %v3151, %v3164
    %v3167 = vadd.f32 %v3158, %v3164
    %v3168 = vadd.f32 %v293, %v3166
    %v3169 = vadd.f32 %v298, %v3167
    %v3170 = vld [vmem:[#allocation8] sm:$0x1]
    %v3171 = vld [vmem:[#allocation10] sm:$0x1]
    %3172 = vadd.xlane.f32.xlu0 %v3168
    %v3173 = vpop.xlane.xlu0 %3172
    %3174 = vadd.xlane.f32.xlu0 %v3169
    %v3175 = vpop.xlane.xlu0 %3174
    %v3176 = vrcp.pop 128.0
    %v3177 = vmul.f32 %v3173, %v3176
    %v3178 = vmul.f32 %v3175, %v3176
    %v3179 = vsub.f32 %v3168, %v3177
    %v3180 = vsub.f32 %v3169, %v3178
    %v3181 = vmul.f32 %v3179, %v3179
    %v3182 = vmul.f32 %v3180, %v3180
    %3183 = vadd.xlane.f32.xlu0 %v3181
    %v3184 = vpop.xlane.xlu0 %3183
    %3185 = vadd.xlane.f32.xlu0 %v3182
    %v3186 = vpop.xlane.xlu0 %3185
    %v3187 = vmul.f32 %v3184, %v3176
    %v3188 = vmul.f32 %v3186, %v3176
    %v3189 = vadd.f32 %v3187, 1e-05
    %v3190 = vadd.f32 %v3188, 1e-05
    %v3191 = vrsqrt.pop %v3189
    %v3192 = vrsqrt.pop %v3190
    %v3193 = vmul.f32 %v3179, %v3191
    %v3194 = vmul.f32 %v3180, %v3192
    %v3196 = vlaneseq
    %v3197 = vshrl.u32 %v3196, 7
    %v3198 = vsub.s32 0, %v3197
    %v3199 = vrot.slane %v3170, %v3198
    %v3201 = vmul.f32 %v3193, %v3199
    %v3202 = vmul.f32 %v3194, %v3199
    %v3204 = vlaneseq
    %v3205 = vshrl.u32 %v3204, 7
    %v3206 = vsub.s32 0, %v3205
    %v3207 = vrot.slane %v3171, %v3206
    %v3209 = vadd.f32 %v3201, %v3207
    %v3210 = vadd.f32 %v3202, %v3207
    %v3211 = vld [vmem:[#allocation11] sm:$0xff]
    %v3212 = vld [vmem:[#allocation11 + $0x8] sm:$0xff]
    %v3213 = vld [vmem:[#allocation11 + $0x10] sm:$0xff]
    %v3214 = vld [vmem:[#allocation11 + $0x18] sm:$0xff]
    %v3215 = vld [vmem:[#allocation11 + $0x20] sm:$0xff]
    %v3216 = vld [vmem:[#allocation11 + $0x28] sm:$0xff]
    %v3217 = vld [vmem:[#allocation11 + $0x30] sm:$0xff]
    %v3218 = vld [vmem:[#allocation11 + $0x38] sm:$0xff]
    %v3219 = vld [vmem:[#allocation11 + $0x40] sm:$0xff]
    %v3220 = vld [vmem:[#allocation11 + $0x48] sm:$0xff]
    %v3221 = vld [vmem:[#allocation11 + $0x50] sm:$0xff]
    %v3222 = vld [vmem:[#allocation11 + $0x58] sm:$0xff]
    %v3223 = vld [vmem:[#allocation11 + $0x60] sm:$0xff]
    %v3224 = vld [vmem:[#allocation11 + $0x68] sm:$0xff]
    %v3225 = vld [vmem:[#allocation11 + $0x70] sm:$0xff]
    %v3226 = vld [vmem:[#allocation11 + $0x78] sm:$0xff]
    %v3227 = vld [vmem:[#allocation11 + $0x80] sm:$0xff]
    %v3228 = vld [vmem:[#allocation11 + $0x88] sm:$0xff]
    %v3229 = vld [vmem:[#allocation11 + $0x90] sm:$0xff]
    %v3230 = vld [vmem:[#allocation11 + $0x98] sm:$0xff]
    %v3231 = vld [vmem:[#allocation11 + $0xa0] sm:$0xff]
    %v3232 = vld [vmem:[#allocation11 + $0xa8] sm:$0xff]
    %v3233 = vld [vmem:[#allocation11 + $0xb0] sm:$0xff]
    %v3234 = vld [vmem:[#allocation11 + $0xb8] sm:$0xff]
    %v3235 = vld [vmem:[#allocation11 + $0xc0] sm:$0xff]
    %v3236 = vld [vmem:[#allocation11 + $0xc8] sm:$0xff]
    %v3237 = vld [vmem:[#allocation11 + $0xd0] sm:$0xff]
    %v3238 = vld [vmem:[#allocation11 + $0xd8] sm:$0xff]
    %v3239 = vld [vmem:[#allocation11 + $0xe0] sm:$0xff]
    %v3240 = vld [vmem:[#allocation11 + $0xe8] sm:$0xff]
    %v3241 = vld [vmem:[#allocation11 + $0xf0] sm:$0xff]
    %v3242 = vld [vmem:[#allocation11 + $0xf8] sm:$0xff]
    %v3243 = vld [vmem:[%s12] sm:$0x3]
    %v3245 = vlaneseq
    %v3246 = vshrl.u32 %v3245, 7
    %v3247 = vsub.s32 0, %v3246
    %v3248 = vrot.slane %v3243, %v3247
    %v3249 = vlaneseq
    %v3250 = vshrl.u32 %v3249, 7
    %v3251 = vsub.s32 1, %v3250
    %v3252 = vrot.slane %v3243, %v3251
    %3255 = vmatprep.subr.mxu0 %v3242
    %3256 = vmatpush1.msra.mxu0 %v3241
    %3257 = vmatprep.subr.mxu0 %v3240
    %3258 = vmatpush1.msra.mxu0 %v3239
    %3259 = vmatprep.subr.mxu0 %v3238
    %3260 = vmatpush1.msra.mxu0 %v3237
    %3261 = vmatprep.subr.mxu0 %v3236
    %3262 = vmatpush1.msra.mxu0 %v3235
    %3263 = vmatprep.subr.mxu0 %v3234
    %3264 = vmatpush1.msra.mxu0 %v3233
    %3265 = vmatprep.subr.mxu0 %v3232
    %3266 = vmatpush1.msra.mxu0 %v3231
    %3267 = vmatprep.subr.mxu0 %v3230
    %3268 = vmatpush1.msra.mxu0 %v3229
    %3269 = vmatprep.subr.mxu0 %v3228
    %3270 = vmatpush1.msra.mxu0 %v3227
    %3271 = vmatprep.subr.mxu0 %v3226
    %3272 = vmatpush1.msra.mxu0 %v3225
    %3273 = vmatprep.subr.mxu0 %v3224
    %3274 = vmatpush1.msra.mxu0 %v3223
    %3275 = vmatprep.subr.mxu0 %v3222
    %3276 = vmatpush1.msra.mxu0 %v3221
    %3277 = vmatprep.subr.mxu0 %v3220
    %3278 = vmatpush1.msra.mxu0 %v3219
    %3279 = vmatprep.subr.mxu0 %v3218
    %3280 = vmatpush1.msra.mxu0 %v3217
    %3281 = vmatprep.subr.mxu0 %v3216
    %3282 = vmatpush1.msra.mxu0 %v3215
    %3283 = vmatprep.subr.mxu0 %v3214
    %3284 = vmatpush1.msra.mxu0 %v3213
    %3285 = vmatprep.subr.mxu0 %v3212
    %3286 = vmatpush1.msra.mxu0 %v3211
    %3287 = vmatprep.subr.mxu0 0.0
    %3288 = vmatpush2.msra.mxu0 0.0
    %3289 = vmatprep.subr.mxu0 0.0
    %3290 = vmatpush2.msra.mxu0 0.0
    %3291 = vmatprep.subr.mxu0 0.0
    %3292 = vmatpush2.msra.mxu0 0.0
    %3293 = vmatprep.subr.mxu0 0.0
    %3294 = vmatpush2.msra.mxu0 0.0
    %3295 = vmatprep.subr.mxu0 0.0
    %3296 = vmatpush2.msra.mxu0 0.0
    %3297 = vmatprep.subr.mxu0 0.0
    %3298 = vmatpush2.msra.mxu0 0.0
    %3299 = vmatprep.subr.mxu0 0.0
    %3300 = vmatpush2.msra.mxu0 0.0
    %3301 = vmatprep.subr.mxu0 0.0
    %3302 = vmatpush2.msra.mxu0 0.0
    %3303 = vmatprep.subr.mxu0 0.0
    %3304 = vmatpush2.msra.mxu0 0.0
    %3305 = vmatprep.subr.mxu0 0.0
    %3306 = vmatpush2.msra.mxu0 0.0
    %3307 = vmatprep.subr.mxu0 0.0
    %3308 = vmatpush2.msra.mxu0 0.0
    %3309 = vmatprep.subr.mxu0 0.0
    %3310 = vmatpush2.msra.mxu0 0.0
    %3311 = vmatprep.subr.mxu0 0.0
    %3312 = vmatpush2.msra.mxu0 0.0
    %3313 = vmatprep.subr.mxu0 0.0
    %3314 = vmatpush2.msra.mxu0 0.0
    %3315 = vmatprep.subr.mxu0 0.0
    %3316 = vmatpush2.msra.mxu0 0.0
    %3317 = vmatprep.subr.mxu0 0.0
    %3318 = vmatpush2.msra.mxu0 0.0
    %3319 = vmatprep.mubr.f32.mxu0 0.0
    %3320 = vmatmul.mubr.f32.gmra.mxu0 %v3209
    %v3321 = vpop.f32.mrf.mxu0
    %v3322 = vadd.f32 %v3248, %v3321
    %v3323 = vpop.f32.mrf.mxu0
    %v3324 = vadd.f32 %v3252, %v3323
    %3325 = vmatprep.mubr.f32.mxu0 0.0
    %3326 = vmatmul.mubr.f32.gmra.mxu0 %v3210
    %v3327 = vpop.f32.mrf.mxu0
    %v3328 = vadd.f32 %v3248, %v3327
    %v3329 = vpop.f32.mrf.mxu0
    %v3330 = vadd.f32 %v3252, %v3329
    %3331 = vdwg.mxu0
    %v3332 = vmax.f32 %v3322, 0.0
    %v3333 = vmax.f32 %v3324, 0.0
    %v3334 = vmax.f32 %v3328, 0.0
    %v3335 = vmax.f32 %v3330, 0.0
    %v3336 = vld [vmem:[#allocation13] sm:$0xff]
    %v3337 = vld [vmem:[#allocation13 + $0x8] sm:$0xff]
    %v3338 = vld [vmem:[#allocation13 + $0x10] sm:$0xff]
    %v3339 = vld [vmem:[#allocation13 + $0x18] sm:$0xff]
    %v3340 = vld [vmem:[#allocation13 + $0x20] sm:$0xff]
    %v3341 = vld [vmem:[#allocation13 + $0x28] sm:$0xff]
    %v3342 = vld [vmem:[#allocation13 + $0x30] sm:$0xff]
    %v3343 = vld [vmem:[#allocation13 + $0x38] sm:$0xff]
    %v3344 = vld [vmem:[#allocation13 + $0x40] sm:$0xff]
    %v3345 = vld [vmem:[#allocation13 + $0x48] sm:$0xff]
    %v3346 = vld [vmem:[#allocation13 + $0x50] sm:$0xff]
    %v3347 = vld [vmem:[#allocation13 + $0x58] sm:$0xff]
    %v3348 = vld [vmem:[#allocation13 + $0x60] sm:$0xff]
    %v3349 = vld [vmem:[#allocation13 + $0x68] sm:$0xff]
    %v3350 = vld [vmem:[#allocation13 + $0x70] sm:$0xff]
    %v3351 = vld [vmem:[#allocation13 + $0x78] sm:$0xff]
    %v3352 = vld [vmem:[#allocation13 + $0x80] sm:$0xff]
    %v3353 = vld [vmem:[#allocation13 + $0x88] sm:$0xff]
    %v3354 = vld [vmem:[#allocation13 + $0x90] sm:$0xff]
    %v3355 = vld [vmem:[#allocation13 + $0x98] sm:$0xff]
    %v3356 = vld [vmem:[#allocation13 + $0xa0] sm:$0xff]
    %v3357 = vld [vmem:[#allocation13 + $0xa8] sm:$0xff]
    %v3358 = vld [vmem:[#allocation13 + $0xb0] sm:$0xff]
    %v3359 = vld [vmem:[#allocation13 + $0xb8] sm:$0xff]
    %v3360 = vld [vmem:[#allocation13 + $0xc0] sm:$0xff]
    %v3361 = vld [vmem:[#allocation13 + $0xc8] sm:$0xff]
    %v3362 = vld [vmem:[#allocation13 + $0xd0] sm:$0xff]
    %v3363 = vld [vmem:[#allocation13 + $0xd8] sm:$0xff]
    %v3364 = vld [vmem:[#allocation13 + $0xe0] sm:$0xff]
    %v3365 = vld [vmem:[#allocation13 + $0xe8] sm:$0xff]
    %v3366 = vld [vmem:[#allocation13 + $0xf0] sm:$0xff]
    %v3367 = vld [vmem:[#allocation13 + $0xf8] sm:$0xff]
    %v3368 = vld [vmem:[#allocation14] sm:$0x1]
    %v3370 = vlaneseq
    %v3371 = vshrl.u32 %v3370, 7
    %v3372 = vsub.s32 0, %v3371
    %v3373 = vrot.slane %v3368, %v3372
    %3375 = vmatprep.subr.mxu0 0.0
    %3376 = vmatpush1.msra.mxu0 %v3351
    %3377 = vmatprep.subr.mxu0 0.0
    %3378 = vmatpush1.msra.mxu0 %v3350
    %3379 = vmatprep.subr.mxu0 0.0
    %3380 = vmatpush1.msra.mxu0 %v3349
    %3381 = vmatprep.subr.mxu0 0.0
    %3382 = vmatpush1.msra.mxu0 %v3348
    %3383 = vmatprep.subr.mxu0 0.0
    %3384 = vmatpush1.msra.mxu0 %v3347
    %3385 = vmatprep.subr.mxu0 0.0
    %3386 = vmatpush1.msra.mxu0 %v3346
    %3387 = vmatprep.subr.mxu0 0.0
    %3388 = vmatpush1.msra.mxu0 %v3345
    %3389 = vmatprep.subr.mxu0 0.0
    %3390 = vmatpush1.msra.mxu0 %v3344
    %3391 = vmatprep.subr.mxu0 0.0
    %3392 = vmatpush1.msra.mxu0 %v3343
    %3393 = vmatprep.subr.mxu0 0.0
    %3394 = vmatpush1.msra.mxu0 %v3342
    %3395 = vmatprep.subr.mxu0 0.0
    %3396 = vmatpush1.msra.mxu0 %v3341
    %3397 = vmatprep.subr.mxu0 0.0
    %3398 = vmatpush1.msra.mxu0 %v3340
    %3399 = vmatprep.subr.mxu0 0.0
    %3400 = vmatpush1.msra.mxu0 %v3339
    %3401 = vmatprep.subr.mxu0 0.0
    %3402 = vmatpush1.msra.mxu0 %v3338
    %3403 = vmatprep.subr.mxu0 0.0
    %3404 = vmatpush1.msra.mxu0 %v3337
    %3405 = vmatprep.subr.mxu0 0.0
    %3406 = vmatpush1.msra.mxu0 %v3336
    %3407 = vmatprep.subr.mxu0 0.0
    %3408 = vmatpush2.msra.mxu0 %v3367
    %3409 = vmatprep.subr.mxu0 0.0
    %3410 = vmatpush2.msra.mxu0 %v3366
    %3411 = vmatprep.subr.mxu0 0.0
    %3412 = vmatpush2.msra.mxu0 %v3365
    %3413 = vmatprep.subr.mxu0 0.0
    %3414 = vmatpush2.msra.mxu0 %v3364
    %3415 = vmatprep.subr.mxu0 0.0
    %3416 = vmatpush2.msra.mxu0 %v3363
    %3417 = vmatprep.subr.mxu0 0.0
    %3418 = vmatpush2.msra.mxu0 %v3362
    %3419 = vmatprep.subr.mxu0 0.0
    %3420 = vmatpush2.msra.mxu0 %v3361
    %3421 = vmatprep.subr.mxu0 0.0
    %3422 = vmatpush2.msra.mxu0 %v3360
    %3423 = vmatprep.subr.mxu0 0.0
    %3424 = vmatpush2.msra.mxu0 %v3359
    %3425 = vmatprep.subr.mxu0 0.0
    %3426 = vmatpush2.msra.mxu0 %v3358
    %3427 = vmatprep.subr.mxu0 0.0
    %3428 = vmatpush2.msra.mxu0 %v3357
    %3429 = vmatprep.subr.mxu0 0.0
    %3430 = vmatpush2.msra.mxu0 %v3356
    %3431 = vmatprep.subr.mxu0 0.0
    %3432 = vmatpush2.msra.mxu0 %v3355
    %3433 = vmatprep.subr.mxu0 0.0
    %3434 = vmatpush2.msra.mxu0 %v3354
    %3435 = vmatprep.subr.mxu0 0.0
    %3436 = vmatpush2.msra.mxu0 %v3353
    %3437 = vmatprep.subr.mxu0 0.0
    %3438 = vmatpush2.msra.mxu0 %v3352
    %3439 = vmatprep.mubr.f32.mxu0 %v3333
    %3440 = vmatmul.mubr.f32.gmra.mxu0 %v3332
    %v3441 = vpop.f32.mrf.mxu0
    %v3442 = vadd.f32 %v3373, %v3441
    %v3443 = vpop.f32.mrf.mxu0
    %3444 = vmatprep.mubr.f32.mxu0 %v3335
    %3445 = vmatmul.mubr.f32.gmra.mxu0 %v3334
    %v3446 = vpop.f32.mrf.mxu0
    %v3447 = vadd.f32 %v3373, %v3446
    %v3448 = vpop.f32.mrf.mxu0
    %3449 = vdwg.mxu0
    %v3450 = vadd.f32 %v3209, %v3442
    %v3451 = vadd.f32 %v3210, %v3447
    %v3452 = vld [vmem:[#allocation16] sm:$0x1]
    %v3453 = vld [vmem:[#allocation17] sm:$0x1]
    %3454 = vadd.xlane.f32.xlu0 %v3450
    %v3455 = vpop.xlane.xlu0 %3454
    %3456 = vadd.xlane.f32.xlu0 %v3451
    %v3457 = vpop.xlane.xlu0 %3456
    %v3458 = vmul.f32 %v3455, %v3176
    %v3459 = vmul.f32 %v3457, %v3176
    %v3460 = vsub.f32 %v3450, %v3458
    %v3461 = vsub.f32 %v3451, %v3459
    %v3462 = vmul.f32 %v3460, %v3460
    %v3463 = vmul.f32 %v3461, %v3461
    %3464 = vadd.xlane.f32.xlu0 %v3462
    %v3465 = vpop.xlane.xlu0 %3464
    %3466 = vadd.xlane.f32.xlu0 %v3463
    %v3467 = vpop.xlane.xlu0 %3466
    %v3468 = vmul.f32 %v3465, %v3176
    %v3469 = vmul.f32 %v3467, %v3176
    %v3470 = vadd.f32 %v3468, 1e-05
    %v3471 = vadd.f32 %v3469, 1e-05
    %v3472 = vrsqrt.pop %v3470
    %v3473 = vrsqrt.pop %v3471
    %v3474 = vmul.f32 %v3460, %v3472
    %v3475 = vmul.f32 %v3461, %v3473
    %v3477 = vlaneseq
    %v3478 = vshrl.u32 %v3477, 7
    %v3479 = vsub.s32 0, %v3478
    %v3480 = vrot.slane %v3452, %v3479
    %v3482 = vmul.f32 %v3474, %v3480
    %v3483 = vmul.f32 %v3475, %v3480
    %v3485 = vlaneseq
    %v3486 = vshrl.u32 %v3485, 7
    %v3487 = vsub.s32 0, %v3486
    %v3488 = vrot.slane %v3453, %v3487
    %v3490 = vadd.f32 %v3482, %v3488
    %v3491 = vadd.f32 %v3483, %v3488
    %s3492 = scalar_lea.vmem %s5, 384
    %v3493 = vld [vmem:[%s3492] sm:$0xff]
    %v3494 = vld [vmem:[%s3492 + $0x8] sm:$0xff]
    %v3495 = vld [vmem:[%s3492 + $0x10] sm:$0xff]
    %v3496 = vld [vmem:[%s3492 + $0x18] sm:$0xff]
    %v3497 = vld [vmem:[%s3492 + $0x20] sm:$0xff]
    %v3498 = vld [vmem:[%s3492 + $0x28] sm:$0xff]
    %v3499 = vld [vmem:[%s3492 + $0x30] sm:$0xff]
    %v3500 = vld [vmem:[%s3492 + $0x38] sm:$0xff]
    %v3501 = vld [vmem:[%s3492 + $0x40] sm:$0xff]
    %v3502 = vld [vmem:[%s3492 + $0x48] sm:$0xff]
    %v3503 = vld [vmem:[%s3492 + $0x50] sm:$0xff]
    %v3504 = vld [vmem:[%s3492 + $0x58] sm:$0xff]
    %v3505 = vld [vmem:[%s3492 + $0x60] sm:$0xff]
    %v3506 = vld [vmem:[%s3492 + $0x68] sm:$0xff]
    %v3507 = vld [vmem:[%s3492 + $0x70] sm:$0xff]
    %v3508 = vld [vmem:[%s3492 + $0x78] sm:$0xff]
    %v3509 = vld [vmem:[%s3492 + $0x80] sm:$0xff]
    %v3510 = vld [vmem:[%s3492 + $0x88] sm:$0xff]
    %v3511 = vld [vmem:[%s3492 + $0x90] sm:$0xff]
    %v3512 = vld [vmem:[%s3492 + $0x98] sm:$0xff]
    %v3513 = vld [vmem:[%s3492 + $0xa0] sm:$0xff]
    %v3514 = vld [vmem:[%s3492 + $0xa8] sm:$0xff]
    %v3515 = vld [vmem:[%s3492 + $0xb0] sm:$0xff]
    %v3516 = vld [vmem:[%s3492 + $0xb8] sm:$0xff]
    %v3517 = vld [vmem:[%s3492 + $0xc0] sm:$0xff]
    %v3518 = vld [vmem:[%s3492 + $0xc8] sm:$0xff]
    %v3519 = vld [vmem:[%s3492 + $0xd0] sm:$0xff]
    %v3520 = vld [vmem:[%s3492 + $0xd8] sm:$0xff]
    %v3521 = vld [vmem:[%s3492 + $0xe0] sm:$0xff]
    %v3522 = vld [vmem:[%s3492 + $0xe8] sm:$0xff]
    %v3523 = vld [vmem:[%s3492 + $0xf0] sm:$0xff]
    %v3524 = vld [vmem:[%s3492 + $0xf8] sm:$0xff]
    %v3525 = vld [vmem:[%s3492 + $0x100] sm:$0xff]
    %v3526 = vld [vmem:[%s3492 + $0x108] sm:$0xff]
    %v3527 = vld [vmem:[%s3492 + $0x110] sm:$0xff]
    %v3528 = vld [vmem:[%s3492 + $0x118] sm:$0xff]
    %v3529 = vld [vmem:[%s3492 + $0x120] sm:$0xff]
    %v3530 = vld [vmem:[%s3492 + $0x128] sm:$0xff]
    %v3531 = vld [vmem:[%s3492 + $0x130] sm:$0xff]
    %v3532 = vld [vmem:[%s3492 + $0x138] sm:$0xff]
    %v3533 = vld [vmem:[%s3492 + $0x140] sm:$0xff]
    %v3534 = vld [vmem:[%s3492 + $0x148] sm:$0xff]
    %v3535 = vld [vmem:[%s3492 + $0x150] sm:$0xff]
    %v3536 = vld [vmem:[%s3492 + $0x158] sm:$0xff]
    %v3537 = vld [vmem:[%s3492 + $0x160] sm:$0xff]
    %v3538 = vld [vmem:[%s3492 + $0x168] sm:$0xff]
    %v3539 = vld [vmem:[%s3492 + $0x170] sm:$0xff]
    %v3540 = vld [vmem:[%s3492 + $0x178] sm:$0xff]
    %s3541 = scalar_lea.vmem %s6, 384
    %v3542 = vld [vmem:[%s3541] sm:$0xff]
    %v3543 = vld [vmem:[%s3541 + $0x8] sm:$0xff]
    %v3544 = vld [vmem:[%s3541 + $0x10] sm:$0xff]
    %v3545 = vld [vmem:[%s3541 + $0x18] sm:$0xff]
    %v3546 = vld [vmem:[%s3541 + $0x20] sm:$0xff]
    %v3547 = vld [vmem:[%s3541 + $0x28] sm:$0xff]
    %v3548 = vld [vmem:[%s3541 + $0x30] sm:$0xff]
    %v3549 = vld [vmem:[%s3541 + $0x38] sm:$0xff]
    %v3550 = vld [vmem:[%s3541 + $0x40] sm:$0xff]
    %v3551 = vld [vmem:[%s3541 + $0x48] sm:$0xff]
    %v3552 = vld [vmem:[%s3541 + $0x50] sm:$0xff]
    %v3553 = vld [vmem:[%s3541 + $0x58] sm:$0xff]
    %v3554 = vld [vmem:[%s3541 + $0x60] sm:$0xff]
    %v3555 = vld [vmem:[%s3541 + $0x68] sm:$0xff]
    %v3556 = vld [vmem:[%s3541 + $0x70] sm:$0xff]
    %v3557 = vld [vmem:[%s3541 + $0x78] sm:$0xff]
    %v3558 = vld [vmem:[%s3541 + $0x80] sm:$0xff]
    %v3559 = vld [vmem:[%s3541 + $0x88] sm:$0xff]
    %v3560 = vld [vmem:[%s3541 + $0x90] sm:$0xff]
    %v3561 = vld [vmem:[%s3541 + $0x98] sm:$0xff]
    %v3562 = vld [vmem:[%s3541 + $0xa0] sm:$0xff]
    %v3563 = vld [vmem:[%s3541 + $0xa8] sm:$0xff]
    %v3564 = vld [vmem:[%s3541 + $0xb0] sm:$0xff]
    %v3565 = vld [vmem:[%s3541 + $0xb8] sm:$0xff]
    %v3566 = vld [vmem:[%s3541 + $0xc0] sm:$0xff]
    %v3567 = vld [vmem:[%s3541 + $0xc8] sm:$0xff]
    %v3568 = vld [vmem:[%s3541 + $0xd0] sm:$0xff]
    %v3569 = vld [vmem:[%s3541 + $0xd8] sm:$0xff]
    %v3570 = vld [vmem:[%s3541 + $0xe0] sm:$0xff]
    %v3571 = vld [vmem:[%s3541 + $0xe8] sm:$0xff]
    %v3572 = vld [vmem:[%s3541 + $0xf0] sm:$0xff]
    %v3573 = vld [vmem:[%s3541 + $0xf8] sm:$0xff]
    %v3574 = vld [vmem:[%s3541 + $0x100] sm:$0xff]
    %v3575 = vld [vmem:[%s3541 + $0x108] sm:$0xff]
    %v3576 = vld [vmem:[%s3541 + $0x110] sm:$0xff]
    %v3577 = vld [vmem:[%s3541 + $0x118] sm:$0xff]
    %v3578 = vld [vmem:[%s3541 + $0x120] sm:$0xff]
    %v3579 = vld [vmem:[%s3541 + $0x128] sm:$0xff]
    %v3580 = vld [vmem:[%s3541 + $0x130] sm:$0xff]
    %v3581 = vld [vmem:[%s3541 + $0x138] sm:$0xff]
    %v3582 = vld [vmem:[%s3541 + $0x140] sm:$0xff]
    %v3583 = vld [vmem:[%s3541 + $0x148] sm:$0xff]
    %v3584 = vld [vmem:[%s3541 + $0x150] sm:$0xff]
    %v3585 = vld [vmem:[%s3541 + $0x158] sm:$0xff]
    %v3586 = vld [vmem:[%s3541 + $0x160] sm:$0xff]
    %v3587 = vld [vmem:[%s3541 + $0x168] sm:$0xff]
    %v3588 = vld [vmem:[%s3541 + $0x170] sm:$0xff]
    %v3589 = vld [vmem:[%s3541 + $0x178] sm:$0xff]
    %3590 = vmatprep.subr.mxu0 0.0
    %3591 = vmatpush1.xpose.msra.mxu0 0.0
    %3592 = vmatprep.subr.mxu0 0.0
    %3593 = vmatpush1.xpose.msra.mxu0 0.0
    %3594 = vmatprep.subr.mxu0 0.0
    %3595 = vmatpush1.xpose.msra.mxu0 0.0
    %3596 = vmatprep.subr.mxu0 0.0
    %3597 = vmatpush1.xpose.msra.mxu0 0.0
    %3598 = vmatprep.subr.mxu0 0.0
    %3599 = vmatpush1.xpose.msra.mxu0 0.0
    %3600 = vmatprep.subr.mxu0 0.0
    %3601 = vmatpush1.xpose.msra.mxu0 0.0
    %3602 = vmatprep.subr.mxu0 0.0
    %3603 = vmatpush1.xpose.msra.mxu0 0.0
    %3604 = vmatprep.subr.mxu0 0.0
    %3605 = vmatpush1.xpose.msra.mxu0 0.0
    %3606 = vmatprep.subr.mxu0 0.0
    %3607 = vmatpush1.xpose.msra.mxu0 0.0
    %3608 = vmatprep.subr.mxu0 0.0
    %3609 = vmatpush1.xpose.msra.mxu0 0.0
    %3610 = vmatprep.subr.mxu0 0.0
    %3611 = vmatpush1.xpose.msra.mxu0 0.0
    %3612 = vmatprep.subr.mxu0 0.0
    %3613 = vmatpush1.xpose.msra.mxu0 0.0
    %3614 = vmatprep.subr.mxu0 0.0
    %3615 = vmatpush1.xpose.msra.mxu0 0.0
    %3616 = vmatprep.subr.mxu0 0.0
    %3617 = vmatpush1.xpose.msra.mxu0 0.0
    %3618 = vmatprep.subr.mxu0 0.0
    %3619 = vmatpush1.xpose.msra.mxu0 %v3491
    %3620 = vmatprep.subr.mxu0 0.0
    %3621 = vmatpush1.xpose.msra.mxu0 %v3490
    %3622 = vmatprep.subr.mxu0 0.0
    %3623 = vmatpush2.xpose.msra.mxu0 0.0
    %3624 = vmatprep.subr.mxu0 0.0
    %3625 = vmatpush2.xpose.msra.mxu0 0.0
    %3626 = vmatprep.subr.mxu0 0.0
    %3627 = vmatpush2.xpose.msra.mxu0 0.0
    %3628 = vmatprep.subr.mxu0 0.0
    %3629 = vmatpush2.xpose.msra.mxu0 0.0
    %3630 = vmatprep.subr.mxu0 0.0
    %3631 = vmatpush2.xpose.msra.mxu0 0.0
    %3632 = vmatprep.subr.mxu0 0.0
    %3633 = vmatpush2.xpose.msra.mxu0 0.0
    %3634 = vmatprep.subr.mxu0 0.0
    %3635 = vmatpush2.xpose.msra.mxu0 0.0
    %3636 = vmatprep.subr.mxu0 0.0
    %3637 = vmatpush2.xpose.msra.mxu0 0.0
    %3638 = vmatprep.subr.mxu0 0.0
    %3639 = vmatpush2.xpose.msra.mxu0 0.0
    %3640 = vmatprep.subr.mxu0 0.0
    %3641 = vmatpush2.xpose.msra.mxu0 0.0
    %3642 = vmatprep.subr.mxu0 0.0
    %3643 = vmatpush2.xpose.msra.mxu0 0.0
    %3644 = vmatprep.subr.mxu0 0.0
    %3645 = vmatpush2.xpose.msra.mxu0 0.0
    %3646 = vmatprep.subr.mxu0 0.0
    %3647 = vmatpush2.xpose.msra.mxu0 0.0
    %3648 = vmatprep.subr.mxu0 0.0
    %3649 = vmatpush2.xpose.msra.mxu0 0.0
    %3650 = vmatprep.subr.mxu0 0.0
    %3651 = vmatpush2.xpose.msra.mxu0 0.0
    %3652 = vmatprep.subr.mxu0 0.0
    %3653 = vmatpush2.xpose.msra.mxu0 0.0
    %3654 = vmatprep.mubr.f32.mxu0 0.0
    %3655 = vmatmul.mubr.f32.gmra.mxu0 %v3493
    %v3656 = vpop.f32.mrf.mxu0
    %v3657 = vadd.f32 %v3542, %v3656
    %v3658 = vpop.f32.mrf.mxu0
    %3659 = vmatprep.mubr.f32.mxu0 0.0
    %3660 = vmatmul.mubr.f32.gmra.mxu0 %v3494
    %v3661 = vpop.f32.mrf.mxu0
    %v3662 = vadd.f32 %v3543, %v3661
    %v3663 = vpop.f32.mrf.mxu0
    %3664 = vmatprep.mubr.f32.mxu0 0.0
    %3665 = vmatmul.mubr.f32.gmra.mxu0 %v3495
    %v3666 = vpop.f32.mrf.mxu0
    %v3667 = vadd.f32 %v3544, %v3666
    %v3668 = vpop.f32.mrf.mxu0
    %3669 = vmatprep.mubr.f32.mxu0 0.0
    %3670 = vmatmul.mubr.f32.gmra.mxu0 %v3496
    %v3671 = vpop.f32.mrf.mxu0
    %v3672 = vadd.f32 %v3545, %v3671
    %v3673 = vpop.f32.mrf.mxu0
    %3674 = vmatprep.mubr.f32.mxu0 0.0
    %3675 = vmatmul.mubr.f32.gmra.mxu0 %v3497
    %v3676 = vpop.f32.mrf.mxu0
    %v3677 = vadd.f32 %v3546, %v3676
    %v3678 = vpop.f32.mrf.mxu0
    %3679 = vmatprep.mubr.f32.mxu0 0.0
    %3680 = vmatmul.mubr.f32.gmra.mxu0 %v3498
    %v3681 = vpop.f32.mrf.mxu0
    %v3682 = vadd.f32 %v3547, %v3681
    %v3683 = vpop.f32.mrf.mxu0
    %3684 = vmatprep.mubr.f32.mxu0 0.0
    %3685 = vmatmul.mubr.f32.gmra.mxu0 %v3499
    %v3686 = vpop.f32.mrf.mxu0
    %v3687 = vadd.f32 %v3548, %v3686
    %v3688 = vpop.f32.mrf.mxu0
    %3689 = vmatprep.mubr.f32.mxu0 0.0
    %3690 = vmatmul.mubr.f32.gmra.mxu0 %v3500
    %v3691 = vpop.f32.mrf.mxu0
    %v3692 = vadd.f32 %v3549, %v3691
    %v3693 = vpop.f32.mrf.mxu0
    %3694 = vmatprep.mubr.f32.mxu0 0.0
    %3695 = vmatmul.mubr.f32.gmra.mxu0 %v3501
    %v3696 = vpop.f32.mrf.mxu0
    %v3697 = vadd.f32 %v3550, %v3696
    %v3698 = vpop.f32.mrf.mxu0
    %3699 = vmatprep.mubr.f32.mxu0 0.0
    %3700 = vmatmul.mubr.f32.gmra.mxu0 %v3502
    %v3701 = vpop.f32.mrf.mxu0
    %v3702 = vadd.f32 %v3551, %v3701
    %v3703 = vpop.f32.mrf.mxu0
    %3704 = vmatprep.mubr.f32.mxu0 0.0
    %3705 = vmatmul.mubr.f32.gmra.mxu0 %v3503
    %v3706 = vpop.f32.mrf.mxu0
    %v3707 = vadd.f32 %v3552, %v3706
    %v3708 = vpop.f32.mrf.mxu0
    %3709 = vmatprep.mubr.f32.mxu0 0.0
    %3710 = vmatmul.mubr.f32.gmra.mxu0 %v3504
    %v3711 = vpop.f32.mrf.mxu0
    %v3712 = vadd.f32 %v3553, %v3711
    %v3713 = vpop.f32.mrf.mxu0
    %3714 = vmatprep.mubr.f32.mxu0 0.0
    %3715 = vmatmul.mubr.f32.gmra.mxu0 %v3505
    %v3716 = vpop.f32.mrf.mxu0
    %v3717 = vadd.f32 %v3554, %v3716
    %v3718 = vpop.f32.mrf.mxu0
    %3719 = vmatprep.mubr.f32.mxu0 0.0
    %3720 = vmatmul.mubr.f32.gmra.mxu0 %v3506
    %v3721 = vpop.f32.mrf.mxu0
    %v3722 = vadd.f32 %v3555, %v3721
    %v3723 = vpop.f32.mrf.mxu0
    %3724 = vmatprep.mubr.f32.mxu0 0.0
    %3725 = vmatmul.mubr.f32.gmra.mxu0 %v3507
    %v3726 = vpop.f32.mrf.mxu0
    %v3727 = vadd.f32 %v3556, %v3726
    %v3728 = vpop.f32.mrf.mxu0
    %3729 = vmatprep.mubr.f32.mxu0 0.0
    %3730 = vmatmul.mubr.f32.gmra.mxu0 %v3508
    %v3731 = vpop.f32.mrf.mxu0
    %v3732 = vadd.f32 %v3557, %v3731
    %v3733 = vpop.f32.mrf.mxu0
    %3734 = vmatprep.mubr.f32.mxu0 0.0
    %3735 = vmatmul.mubr.f32.gmra.mxu0 %v3509
    %v3736 = vpop.f32.mrf.mxu0
    %v3737 = vadd.f32 %v3558, %v3736
    %v3738 = vpop.f32.mrf.mxu0
    %3739 = vmatprep.mubr.f32.mxu0 0.0
    %3740 = vmatmul.mubr.f32.gmra.mxu0 %v3510
    %v3741 = vpop.f32.mrf.mxu0
    %v3742 = vadd.f32 %v3559, %v3741
    %v3743 = vpop.f32.mrf.mxu0
    %3744 = vmatprep.mubr.f32.mxu0 0.0
    %3745 = vmatmul.mubr.f32.gmra.mxu0 %v3511
    %v3746 = vpop.f32.mrf.mxu0
    %v3747 = vadd.f32 %v3560, %v3746
    %v3748 = vpop.f32.mrf.mxu0
    %3749 = vmatprep.mubr.f32.mxu0 0.0
    %3750 = vmatmul.mubr.f32.gmra.mxu0 %v3512
    %v3751 = vpop.f32.mrf.mxu0
    %v3752 = vadd.f32 %v3561, %v3751
    %v3753 = vpop.f32.mrf.mxu0
    %3754 = vmatprep.mubr.f32.mxu0 0.0
    %3755 = vmatmul.mubr.f32.gmra.mxu0 %v3513
    %v3756 = vpop.f32.mrf.mxu0
    %v3757 = vadd.f32 %v3562, %v3756
    %v3758 = vpop.f32.mrf.mxu0
    %3759 = vmatprep.mubr.f32.mxu0 0.0
    %3760 = vmatmul.mubr.f32.gmra.mxu0 %v3514
    %v3761 = vpop.f32.mrf.mxu0
    %v3762 = vadd.f32 %v3563, %v3761
    %v3763 = vpop.f32.mrf.mxu0
    %3764 = vmatprep.mubr.f32.mxu0 0.0
    %3765 = vmatmul.mubr.f32.gmra.mxu0 %v3515
    %v3766 = vpop.f32.mrf.mxu0
    %v3767 = vadd.f32 %v3564, %v3766
    %v3768 = vpop.f32.mrf.mxu0
    %3769 = vmatprep.mubr.f32.mxu0 0.0
    %3770 = vmatmul.mubr.f32.gmra.mxu0 %v3516
    %v3771 = vpop.f32.mrf.mxu0
    %v3772 = vadd.f32 %v3565, %v3771
    %v3773 = vpop.f32.mrf.mxu0
    %3774 = vmatprep.mubr.f32.mxu0 0.0
    %3775 = vmatmul.mubr.f32.gmra.mxu0 %v3517
    %v3776 = vpop.f32.mrf.mxu0
    %v3777 = vadd.f32 %v3566, %v3776
    %v3778 = vpop.f32.mrf.mxu0
    %3779 = vmatprep.mubr.f32.mxu0 0.0
    %3780 = vmatmul.mubr.f32.gmra.mxu0 %v3518
    %v3781 = vpop.f32.mrf.mxu0
    %v3782 = vadd.f32 %v3567, %v3781
    %v3783 = vpop.f32.mrf.mxu0
    %3784 = vmatprep.mubr.f32.mxu0 0.0
    %3785 = vmatmul.mubr.f32.gmra.mxu0 %v3519
    %v3786 = vpop.f32.mrf.mxu0
    %v3787 = vadd.f32 %v3568, %v3786
    %v3788 = vpop.f32.mrf.mxu0
    %3789 = vmatprep.mubr.f32.mxu0 0.0
    %3790 = vmatmul.mubr.f32.gmra.mxu0 %v3520
    %v3791 = vpop.f32.mrf.mxu0
    %v3792 = vadd.f32 %v3569, %v3791
    %v3793 = vpop.f32.mrf.mxu0
    %3794 = vmatprep.mubr.f32.mxu0 0.0
    %3795 = vmatmul.mubr.f32.gmra.mxu0 %v3521
    %v3796 = vpop.f32.mrf.mxu0
    %v3797 = vadd.f32 %v3570, %v3796
    %v3798 = vpop.f32.mrf.mxu0
    %3799 = vmatprep.mubr.f32.mxu0 0.0
    %3800 = vmatmul.mubr.f32.gmra.mxu0 %v3522
    %v3801 = vpop.f32.mrf.mxu0
    %v3802 = vadd.f32 %v3571, %v3801
    %v3803 = vpop.f32.mrf.mxu0
    %3804 = vmatprep.mubr.f32.mxu0 0.0
    %3805 = vmatmul.mubr.f32.gmra.mxu0 %v3523
    %v3806 = vpop.f32.mrf.mxu0
    %v3807 = vadd.f32 %v3572, %v3806
    %v3808 = vpop.f32.mrf.mxu0
    %3809 = vmatprep.mubr.f32.mxu0 0.0
    %3810 = vmatmul.mubr.f32.gmra.mxu0 %v3524
    %v3811 = vpop.f32.mrf.mxu0
    %v3812 = vadd.f32 %v3573, %v3811
    %v3813 = vpop.f32.mrf.mxu0
    %3814 = vmatprep.mubr.f32.mxu0 0.0
    %3815 = vmatmul.mubr.f32.gmra.mxu0 %v3525
    %v3816 = vpop.f32.mrf.mxu0
    %v3817 = vadd.f32 %v3574, %v3816
    %v3818 = vpop.f32.mrf.mxu0
    %3819 = vmatprep.mubr.f32.mxu0 0.0
    %3820 = vmatmul.mubr.f32.gmra.mxu0 %v3526
    %v3821 = vpop.f32.mrf.mxu0
    %v3822 = vadd.f32 %v3575, %v3821
    %v3823 = vpop.f32.mrf.mxu0
    %3824 = vmatprep.mubr.f32.mxu0 0.0
    %3825 = vmatmul.mubr.f32.gmra.mxu0 %v3527
    %v3826 = vpop.f32.mrf.mxu0
    %v3827 = vadd.f32 %v3576, %v3826
    %v3828 = vpop.f32.mrf.mxu0
    %3829 = vmatprep.mubr.f32.mxu0 0.0
    %3830 = vmatmul.mubr.f32.gmra.mxu0 %v3528
    %v3831 = vpop.f32.mrf.mxu0
    %v3832 = vadd.f32 %v3577, %v3831
    %v3833 = vpop.f32.mrf.mxu0
    %3834 = vmatprep.mubr.f32.mxu0 0.0
    %3835 = vmatmul.mubr.f32.gmra.mxu0 %v3529
    %v3836 = vpop.f32.mrf.mxu0
    %v3837 = vadd.f32 %v3578, %v3836
    %v3838 = vpop.f32.mrf.mxu0
    %3839 = vmatprep.mubr.f32.mxu0 0.0
    %3840 = vmatmul.mubr.f32.gmra.mxu0 %v3530
    %v3841 = vpop.f32.mrf.mxu0
    %v3842 = vadd.f32 %v3579, %v3841
    %v3843 = vpop.f32.mrf.mxu0
    %3844 = vmatprep.mubr.f32.mxu0 0.0
    %3845 = vmatmul.mubr.f32.gmra.mxu0 %v3531
    %v3846 = vpop.f32.mrf.mxu0
    %v3847 = vadd.f32 %v3580, %v3846
    %v3848 = vpop.f32.mrf.mxu0
    %3849 = vmatprep.mubr.f32.mxu0 0.0
    %3850 = vmatmul.mubr.f32.gmra.mxu0 %v3532
    %v3851 = vpop.f32.mrf.mxu0
    %v3852 = vadd.f32 %v3581, %v3851
    %v3853 = vpop.f32.mrf.mxu0
    %3854 = vmatprep.mubr.f32.mxu0 0.0
    %3855 = vmatmul.mubr.f32.gmra.mxu0 %v3533
    %v3856 = vpop.f32.mrf.mxu0
    %v3857 = vadd.f32 %v3582, %v3856
    %v3858 = vpop.f32.mrf.mxu0
    %3859 = vmatprep.mubr.f32.mxu0 0.0
    %3860 = vmatmul.mubr.f32.gmra.mxu0 %v3534
    %v3861 = vpop.f32.mrf.mxu0
    %v3862 = vadd.f32 %v3583, %v3861
    %v3863 = vpop.f32.mrf.mxu0
    %3864 = vmatprep.mubr.f32.mxu0 0.0
    %3865 = vmatmul.mubr.f32.gmra.mxu0 %v3535
    %v3866 = vpop.f32.mrf.mxu0
    %v3867 = vadd.f32 %v3584, %v3866
    %v3868 = vpop.f32.mrf.mxu0
    %3869 = vmatprep.mubr.f32.mxu0 0.0
    %3870 = vmatmul.mubr.f32.gmra.mxu0 %v3536
    %v3871 = vpop.f32.mrf.mxu0
    %v3872 = vadd.f32 %v3585, %v3871
    %v3873 = vpop.f32.mrf.mxu0
    %3874 = vmatprep.mubr.f32.mxu0 0.0
    %3875 = vmatmul.mubr.f32.gmra.mxu0 %v3537
    %v3876 = vpop.f32.mrf.mxu0
    %v3877 = vadd.f32 %v3586, %v3876
    %v3878 = vpop.f32.mrf.mxu0
    %3879 = vmatprep.mubr.f32.mxu0 0.0
    %3880 = vmatmul.mubr.f32.gmra.mxu0 %v3538
    %v3881 = vpop.f32.mrf.mxu0
    %v3882 = vadd.f32 %v3587, %v3881
    %v3883 = vpop.f32.mrf.mxu0
    %3884 = vmatprep.mubr.f32.mxu0 0.0
    %3885 = vmatmul.mubr.f32.gmra.mxu0 %v3539
    %v3886 = vpop.f32.mrf.mxu0
    %v3887 = vadd.f32 %v3588, %v3886
    %v3888 = vpop.f32.mrf.mxu0
    %3889 = vmatprep.mubr.f32.mxu0 0.0
    %3890 = vmatmul.mubr.f32.gmra.mxu0 %v3540
    %v3891 = vpop.f32.mrf.mxu0
    %v3892 = vadd.f32 %v3589, %v3891
    %v3893 = vpop.f32.mrf.mxu0
    %3894 = vdwg.mxu0
    %3895 = vxpose.xlu0.b32.start [1/16] %v3657, 128
    %3896 = vxpose.xlu0.b32.cont [2/16] %v3662, 128
    %3897 = vxpose.xlu0.b32.cont [3/16] 0.0, 128
    %3898 = vxpose.xlu0.b32.cont [4/16] 0.0, 128
    %3899 = vxpose.xlu0.b32.cont [5/16] 0.0, 128
    %3900 = vxpose.xlu0.b32.cont [6/16] 0.0, 128
    %3901 = vxpose.xlu0.b32.cont [7/16] 0.0, 128
    %3902 = vxpose.xlu0.b32.cont [8/16] 0.0, 128
    %3903 = vxpose.xlu0.b32.cont [9/16] 0.0, 128
    %3904 = vxpose.xlu0.b32.cont [10/16] 0.0, 128
    %3905 = vxpose.xlu0.b32.cont [11/16] 0.0, 128
    %3906 = vxpose.xlu0.b32.cont [12/16] 0.0, 128
    %3907 = vxpose.xlu0.b32.cont [13/16] 0.0, 128
    %3908 = vxpose.xlu0.b32.cont [14/16] 0.0, 128
    %3909 = vxpose.xlu0.b32.cont [15/16] 0.0, 128
    %3910 = vxpose.xlu0.b32.end [16/16] 0.0, 128
    %v3911 = vpop.trf.xlu0
    %v3912 = vpop.trf.xlu0
    %v3913 = vpop.trf.xlu0
    %v3914 = vpop.trf.xlu0
    %v3915 = vpop.trf.xlu0
    %v3916 = vpop.trf.xlu0
    %v3917 = vpop.trf.xlu0
    %v3918 = vpop.trf.xlu0
    %v3919 = vpop.trf.xlu0
    %v3920 = vpop.trf.xlu0
    %v3921 = vpop.trf.xlu0
    %v3922 = vpop.trf.xlu0
    %v3923 = vpop.trf.xlu0
    %v3924 = vpop.trf.xlu0
    %v3925 = vpop.trf.xlu0
    %v3926 = vpop.trf.xlu0
    %3927 = vxpose.xlu0.b32.start [1/16] %v3667, 128
    %3928 = vxpose.xlu0.b32.cont [2/16] %v3672, 128
    %3929 = vxpose.xlu0.b32.cont [3/16] 0.0, 128
    %3930 = vxpose.xlu0.b32.cont [4/16] 0.0, 128
    %3931 = vxpose.xlu0.b32.cont [5/16] 0.0, 128
    %3932 = vxpose.xlu0.b32.cont [6/16] 0.0, 128
    %3933 = vxpose.xlu0.b32.cont [7/16] 0.0, 128
    %3934 = vxpose.xlu0.b32.cont [8/16] 0.0, 128
    %3935 = vxpose.xlu0.b32.cont [9/16] 0.0, 128
    %3936 = vxpose.xlu0.b32.cont [10/16] 0.0, 128
    %3937 = vxpose.xlu0.b32.cont [11/16] 0.0, 128
    %3938 = vxpose.xlu0.b32.cont [12/16] 0.0, 128
    %3939 = vxpose.xlu0.b32.cont [13/16] 0.0, 128
    %3940 = vxpose.xlu0.b32.cont [14/16] 0.0, 128
    %3941 = vxpose.xlu0.b32.cont [15/16] 0.0, 128
    %3942 = vxpose.xlu0.b32.end [16/16] 0.0, 128
    %v3943 = vpop.trf.xlu0
    %v3944 = vpop.trf.xlu0
    %v3945 = vpop.trf.xlu0
    %v3946 = vpop.trf.xlu0
    %v3947 = vpop.trf.xlu0
    %v3948 = vpop.trf.xlu0
    %v3949 = vpop.trf.xlu0
    %v3950 = vpop.trf.xlu0
    %v3951 = vpop.trf.xlu0
    %v3952 = vpop.trf.xlu0
    %v3953 = vpop.trf.xlu0
    %v3954 = vpop.trf.xlu0
    %v3955 = vpop.trf.xlu0
    %v3956 = vpop.trf.xlu0
    %v3957 = vpop.trf.xlu0
    %v3958 = vpop.trf.xlu0
    %3959 = vxpose.xlu0.b32.start [1/16] %v3677, 128
    %3960 = vxpose.xlu0.b32.cont [2/16] %v3682, 128
    %3961 = vxpose.xlu0.b32.cont [3/16] 0.0, 128
    %3962 = vxpose.xlu0.b32.cont [4/16] 0.0, 128
    %3963 = vxpose.xlu0.b32.cont [5/16] 0.0, 128
    %3964 = vxpose.xlu0.b32.cont [6/16] 0.0, 128
    %3965 = vxpose.xlu0.b32.cont [7/16] 0.0, 128
    %3966 = vxpose.xlu0.b32.cont [8/16] 0.0, 128
    %3967 = vxpose.xlu0.b32.cont [9/16] 0.0, 128
    %3968 = vxpose.xlu0.b32.cont [10/16] 0.0, 128
    %3969 = vxpose.xlu0.b32.cont [11/16] 0.0, 128
    %3970 = vxpose.xlu0.b32.cont [12/16] 0.0, 128
    %3971 = vxpose.xlu0.b32.cont [13/16] 0.0, 128
    %3972 = vxpose.xlu0.b32.cont [14/16] 0.0, 128
    %3973 = vxpose.xlu0.b32.cont [15/16] 0.0, 128
    %3974 = vxpose.xlu0.b32.end [16/16] 0.0, 128
    %v3975 = vpop.trf.xlu0
    %v3976 = vpop.trf.xlu0
    %v3977 = vpop.trf.xlu0
    %v3978 = vpop.trf.xlu0
    %v3979 = vpop.trf.xlu0
    %v3980 = vpop.trf.xlu0
    %v3981 = vpop.trf.xlu0
    %v3982 = vpop.trf.xlu0
    %v3983 = vpop.trf.xlu0
    %v3984 = vpop.trf.xlu0
    %v3985 = vpop.trf.xlu0
    %v3986 = vpop.trf.xlu0
    %v3987 = vpop.trf.xlu0
    %v3988 = vpop.trf.xlu0
    %v3989 = vpop.trf.xlu0
    %v3990 = vpop.trf.xlu0
    %3991 = vxpose.xlu0.b32.start [1/16] %v3687, 128
    %3992 = vxpose.xlu0.b32.cont [2/16] %v3692, 128
    %3993 = vxpose.xlu0.b32.cont [3/16] 0.0, 128
    %3994 = vxpose.xlu0.b32.cont [4/16] 0.0, 128
    %3995 = vxpose.xlu0.b32.cont [5/16] 0.0, 128
    %3996 = vxpose.xlu0.b32.cont [6/16] 0.0, 128
    %3997 = vxpose.xlu0.b32.cont [7/16] 0.0, 128
    %3998 = vxpose.xlu0.b32.cont [8/16] 0.0, 128
    %3999 = vxpose.xlu0.b32.cont [9/16] 0.0, 128
    %4000 = vxpose.xlu0.b32.cont [10/16] 0.0, 128
    %4001 = vxpose.xlu0.b32.cont [11/16] 0.0, 128
    %4002 = vxpose.xlu0.b32.cont [12/16] 0.0, 128
    %4003 = vxpose.xlu0.b32.cont [13/16] 0.0, 128
    %4004 = vxpose.xlu0.b32.cont [14/16] 0.0, 128
    %4005 = vxpose.xlu0.b32.cont [15/16] 0.0, 128
    %4006 = vxpose.xlu0.b32.end [16/16] 0.0, 128
    %v4007 = vpop.trf.xlu0
    %v4008 = vpop.trf.xlu0
    %v4009 = vpop.trf.xlu0
    %v4010 = vpop.trf.xlu0
    %v4011 = vpop.trf.xlu0
    %v4012 = vpop.trf.xlu0
    %v4013 = vpop.trf.xlu0
    %v4014 = vpop.trf.xlu0
    %v4015 = vpop.trf.xlu0
    %v4016 = vpop.trf.xlu0
    %v4017 = vpop.trf.xlu0
    %v4018 = vpop.trf.xlu0
    %v4019 = vpop.trf.xlu0
    %v4020 = vpop.trf.xlu0
    %v4021 = vpop.trf.xlu0
    %v4022 = vpop.trf.xlu0
    %4023 = vxpose.xlu0.b32.start [1/16] %v3697, 128
    %4024 = vxpose.xlu0.b32.cont [2/16] %v3702, 128
    %4025 = vxpose.xlu0.b32.cont [3/16] 0.0, 128
    %4026 = vxpose.xlu0.b32.cont [4/16] 0.0, 128
    %4027 = vxpose.xlu0.b32.cont [5/16] 0.0, 128
    %4028 = vxpose.xlu0.b32.cont [6/16] 0.0, 128
    %4029 = vxpose.xlu0.b32.cont [7/16] 0.0, 128
    %4030 = vxpose.xlu0.b32.cont [8/16] 0.0, 128
    %4031 = vxpose.xlu0.b32.cont [9/16] 0.0, 128
    %4032 = vxpose.xlu0.b32.cont [10/16] 0.0, 128
    %4033 = vxpose.xlu0.b32.cont [11/16] 0.0, 128
    %4034 = vxpose.xlu0.b32.cont [12/16] 0.0, 128
    %4035 = vxpose.xlu0.b32.cont [13/16] 0.0, 128
    %4036 = vxpose.xlu0.b32.cont [14/16] 0.0, 128
    %4037 = vxpose.xlu0.b32.cont [15/16] 0.0, 128
    %4038 = vxpose.xlu0.b32.end [16/16] 0.0, 128
    %v4039 = vpop.trf.xlu0
    %v4040 = vpop.trf.xlu0
    %v4041 = vpop.trf.xlu0
    %v4042 = vpop.trf.xlu0
    %v4043 = vpop.trf.xlu0
    %v4044 = vpop.trf.xlu0
    %v4045 = vpop.trf.xlu0
    %v4046 = vpop.trf.xlu0
    %v4047 = vpop.trf.xlu0
    %v4048 = vpop.trf.xlu0
    %v4049 = vpop.trf.xlu0
    %v4050 = vpop.trf.xlu0
    %v4051 = vpop.trf.xlu0
    %v4052 = vpop.trf.xlu0
    %v4053 = vpop.trf.xlu0
    %v4054 = vpop.trf.xlu0
    %4055 = vxpose.xlu0.b32.start [1/16] %v3707, 128
    %4056 = vxpose.xlu0.b32.cont [2/16] %v3712, 128
    %4057 = vxpose.xlu0.b32.cont [3/16] 0.0, 128
    %4058 = vxpose.xlu0.b32.cont [4/16] 0.0, 128
    %4059 = vxpose.xlu0.b32.cont [5/16] 0.0, 128
    %4060 = vxpose.xlu0.b32.cont [6/16] 0.0, 128
    %4061 = vxpose.xlu0.b32.cont [7/16] 0.0, 128
    %4062 = vxpose.xlu0.b32.cont [8/16] 0.0, 128
    %4063 = vxpose.xlu0.b32.cont [9/16] 0.0, 128
    %4064 = vxpose.xlu0.b32.cont [10/16] 0.0, 128
    %4065 = vxpose.xlu0.b32.cont [11/16] 0.0, 128
    %4066 = vxpose.xlu0.b32.cont [12/16] 0.0, 128
    %4067 = vxpose.xlu0.b32.cont [13/16] 0.0, 128
    %4068 = vxpose.xlu0.b32.cont [14/16] 0.0, 128
    %4069 = vxpose.xlu0.b32.cont [15/16] 0.0, 128
    %4070 = vxpose.xlu0.b32.end [16/16] 0.0, 128
    %v4071 = vpop.trf.xlu0
    %v4072 = vpop.trf.xlu0
    %v4073 = vpop.trf.xlu0
    %v4074 = vpop.trf.xlu0
    %v4075 = vpop.trf.xlu0
    %v4076 = vpop.trf.xlu0
    %v4077 = vpop.trf.xlu0
    %v4078 = vpop.trf.xlu0
    %v4079 = vpop.trf.xlu0
    %v4080 = vpop.trf.xlu0
    %v4081 = vpop.trf.xlu0
    %v4082 = vpop.trf.xlu0
    %v4083 = vpop.trf.xlu0
    %v4084 = vpop.trf.xlu0
    %v4085 = vpop.trf.xlu0
    %v4086 = vpop.trf.xlu0
    %4087 = vxpose.xlu0.b32.start [1/16] %v3717, 128
    %4088 = vxpose.xlu0.b32.cont [2/16] %v3722, 128
    %4089 = vxpose.xlu0.b32.cont [3/16] 0.0, 128
    %4090 = vxpose.xlu0.b32.cont [4/16] 0.0, 128
    %4091 = vxpose.xlu0.b32.cont [5/16] 0.0, 128
    %4092 = vxpose.xlu0.b32.cont [6/16] 0.0, 128
    %4093 = vxpose.xlu0.b32.cont [7/16] 0.0, 128
    %4094 = vxpose.xlu0.b32.cont [8/16] 0.0, 128
    %4095 = vxpose.xlu0.b32.cont [9/16] 0.0, 128
    %4096 = vxpose.xlu0.b32.cont [10/16] 0.0, 128
    %4097 = vxpose.xlu0.b32.cont [11/16] 0.0, 128
    %4098 = vxpose.xlu0.b32.cont [12/16] 0.0, 128
    %4099 = vxpose.xlu0.b32.cont [13/16] 0.0, 128
    %4100 = vxpose.xlu0.b32.cont [14/16] 0.0, 128
    %4101 = vxpose.xlu0.b32.cont [15/16] 0.0, 128
    %4102 = vxpose.xlu0.b32.end [16/16] 0.0, 128
    %v4103 = vpop.trf.xlu0
    %v4104 = vpop.trf.xlu0
    %v4105 = vpop.trf.xlu0
    %v4106 = vpop.trf.xlu0
    %v4107 = vpop.trf.xlu0
    %v4108 = vpop.trf.xlu0
    %v4109 = vpop.trf.xlu0
    %v4110 = vpop.trf.xlu0
    %v4111 = vpop.trf.xlu0
    %v4112 = vpop.trf.xlu0
    %v4113 = vpop.trf.xlu0
    %v4114 = vpop.trf.xlu0
    %v4115 = vpop.trf.xlu0
    %v4116 = vpop.trf.xlu0
    %v4117 = vpop.trf.xlu0
    %v4118 = vpop.trf.xlu0
    %4119 = vxpose.xlu0.b32.start [1/16] %v3727, 128
    %4120 = vxpose.xlu0.b32.cont [2/16] %v3732, 128
    %4121 = vxpose.xlu0.b32.cont [3/16] 0.0, 128
    %4122 = vxpose.xlu0.b32.cont [4/16] 0.0, 128
    %4123 = vxpose.xlu0.b32.cont [5/16] 0.0, 128
    %4124 = vxpose.xlu0.b32.cont [6/16] 0.0, 128
    %4125 = vxpose.xlu0.b32.cont [7/16] 0.0, 128
    %4126 = vxpose.xlu0.b32.cont [8/16] 0.0, 128
    %4127 = vxpose.xlu0.b32.cont [9/16] 0.0, 128
    %4128 = vxpose.xlu0.b32.cont [10/16] 0.0, 128
    %4129 = vxpose.xlu0.b32.cont [11/16] 0.0, 128
    %4130 = vxpose.xlu0.b32.cont [12/16] 0.0, 128
    %4131 = vxpose.xlu0.b32.cont [13/16] 0.0, 128
    %4132 = vxpose.xlu0.b32.cont [14/16] 0.0, 128
    %4133 = vxpose.xlu0.b32.cont [15/16] 0.0, 128
    %4134 = vxpose.xlu0.b32.end [16/16] 0.0, 128
    %v4135 = vpop.trf.xlu0
    %v4136 = vpop.trf.xlu0
    %v4137 = vpop.trf.xlu0
    %v4138 = vpop.trf.xlu0
    %v4139 = vpop.trf.xlu0
    %v4140 = vpop.trf.xlu0
    %v4141 = vpop.trf.xlu0
    %v4142 = vpop.trf.xlu0
    %v4143 = vpop.trf.xlu0
    %v4144 = vpop.trf.xlu0
    %v4145 = vpop.trf.xlu0
    %v4146 = vpop.trf.xlu0
    %v4147 = vpop.trf.xlu0
    %v4148 = vpop.trf.xlu0
    %v4149 = vpop.trf.xlu0
    %v4150 = vpop.trf.xlu0
    %v4152 = vsel %vm960, %v3911, 0
    %v4155 = vsel %vm960, %v3912, 0
    %4157 = vmatprep.subr.mxu0 0.0
    %4158 = vmatpush1.msra.mxu0 0.0
    %4159 = vmatprep.subr.mxu0 0.0
    %4160 = vmatpush1.msra.mxu0 0.0
    %4161 = vmatprep.subr.mxu0 0.0
    %4162 = vmatpush1.msra.mxu0 0.0
    %4163 = vmatprep.subr.mxu0 0.0
    %4164 = vmatpush1.msra.mxu0 0.0
    %4165 = vmatprep.subr.mxu0 0.0
    %4166 = vmatpush1.msra.mxu0 0.0
    %4167 = vmatprep.subr.mxu0 0.0
    %4168 = vmatpush1.msra.mxu0 0.0
    %4169 = vmatprep.subr.mxu0 0.0
    %4170 = vmatpush1.msra.mxu0 0.0
    %4171 = vmatprep.subr.mxu0 0.0
    %4172 = vmatpush1.msra.mxu0 0.0
    %4173 = vmatprep.subr.mxu0 0.0
    %4174 = vmatpush1.msra.mxu0 0.0
    %4175 = vmatprep.subr.mxu0 0.0
    %4176 = vmatpush1.msra.mxu0 0.0
    %4177 = vmatprep.subr.mxu0 0.0
    %4178 = vmatpush1.msra.mxu0 0.0
    %4179 = vmatprep.subr.mxu0 0.0
    %4180 = vmatpush1.msra.mxu0 0.0
    %4181 = vmatprep.subr.mxu0 0.0
    %4182 = vmatpush1.msra.mxu0 0.0
    %4183 = vmatprep.subr.mxu0 0.0
    %4184 = vmatpush1.msra.mxu0 0.0
    %4185 = vmatprep.subr.mxu0 0.0
    %4186 = vmatpush1.msra.mxu0 %v3742
    %4187 = vmatprep.subr.mxu0 0.0
    %4188 = vmatpush1.msra.mxu0 %v3737
    %4189 = vmatprep.subr.mxu0 0.0
    %4190 = vmatpush2.msra.mxu0 0.0
    %4191 = vmatprep.subr.mxu0 0.0
    %4192 = vmatpush2.msra.mxu0 0.0
    %4193 = vmatprep.subr.mxu0 0.0
    %4194 = vmatpush2.msra.mxu0 0.0
    %4195 = vmatprep.subr.mxu0 0.0
    %4196 = vmatpush2.msra.mxu0 0.0
    %4197 = vmatprep.subr.mxu0 0.0
    %4198 = vmatpush2.msra.mxu0 0.0
    %4199 = vmatprep.subr.mxu0 0.0
    %4200 = vmatpush2.msra.mxu0 0.0
    %4201 = vmatprep.subr.mxu0 0.0
    %4202 = vmatpush2.msra.mxu0 0.0
    %4203 = vmatprep.subr.mxu0 0.0
    %4204 = vmatpush2.msra.mxu0 0.0
    %4205 = vmatprep.subr.mxu0 0.0
    %4206 = vmatpush2.msra.mxu0 0.0
    %4207 = vmatprep.subr.mxu0 0.0
    %4208 = vmatpush2.msra.mxu0 0.0
    %4209 = vmatprep.subr.mxu0 0.0
    %4210 = vmatpush2.msra.mxu0 0.0
    %4211 = vmatprep.subr.mxu0 0.0
    %4212 = vmatpush2.msra.mxu0 0.0
    %4213 = vmatprep.subr.mxu0 0.0
    %4214 = vmatpush2.msra.mxu0 0.0
    %4215 = vmatprep.subr.mxu0 0.0
    %4216 = vmatpush2.msra.mxu0 0.0
    %4217 = vmatprep.subr.mxu0 0.0
    %4218 = vmatpush2.msra.mxu0 0.0
    %4219 = vmatprep.subr.mxu0 0.0
    %4220 = vmatpush2.msra.mxu0 0.0
    %4221 = vmatprep.mubr.f32.mxu0 0.0
    %4222 = vmatmul.mubr.f32.gmra.mxu0 %v4152
    %v4223 = vpop.f32.mrf.mxu0
    %v4224 = vadd.f32 %v301, %v4223
    %v4225 = vpop.f32.mrf.mxu0
    %4226 = vmatprep.mubr.f32.mxu0 0.0
    %4227 = vmatmul.mubr.f32.gmra.mxu0 %v4155
    %v4228 = vpop.f32.mrf.mxu0
    %v4229 = vadd.f32 %v302, %v4228
    %v4230 = vpop.f32.mrf.mxu0
    %4231 = vdwg.mxu0
    %v4233 = vsel %vm960, %v3943, 0
    %v4236 = vsel %vm960, %v3944, 0
    %4238 = vmatprep.subr.mxu0 0.0
    %4239 = vmatpush1.msra.mxu0 0.0
    %4240 = vmatprep.subr.mxu0 0.0
    %4241 = vmatpush1.msra.mxu0 0.0
    %4242 = vmatprep.subr.mxu0 0.0
    %4243 = vmatpush1.msra.mxu0 0.0
    %4244 = vmatprep.subr.mxu0 0.0
    %4245 = vmatpush1.msra.mxu0 0.0
    %4246 = vmatprep.subr.mxu0 0.0
    %4247 = vmatpush1.msra.mxu0 0.0
    %4248 = vmatprep.subr.mxu0 0.0
    %4249 = vmatpush1.msra.mxu0 0.0
    %4250 = vmatprep.subr.mxu0 0.0
    %4251 = vmatpush1.msra.mxu0 0.0
    %4252 = vmatprep.subr.mxu0 0.0
    %4253 = vmatpush1.msra.mxu0 0.0
    %4254 = vmatprep.subr.mxu0 0.0
    %4255 = vmatpush1.msra.mxu0 0.0
    %4256 = vmatprep.subr.mxu0 0.0
    %4257 = vmatpush1.msra.mxu0 0.0
    %4258 = vmatprep.subr.mxu0 0.0
    %4259 = vmatpush1.msra.mxu0 0.0
    %4260 = vmatprep.subr.mxu0 0.0
    %4261 = vmatpush1.msra.mxu0 0.0
    %4262 = vmatprep.subr.mxu0 0.0
    %4263 = vmatpush1.msra.mxu0 0.0
    %4264 = vmatprep.subr.mxu0 0.0
    %4265 = vmatpush1.msra.mxu0 0.0
    %4266 = vmatprep.subr.mxu0 0.0
    %4267 = vmatpush1.msra.mxu0 %v3752
    %4268 = vmatprep.subr.mxu0 0.0
    %4269 = vmatpush1.msra.mxu0 %v3747
    %4270 = vmatprep.subr.mxu0 0.0
    %4271 = vmatpush2.msra.mxu0 0.0
    %4272 = vmatprep.subr.mxu0 0.0
    %4273 = vmatpush2.msra.mxu0 0.0
    %4274 = vmatprep.subr.mxu0 0.0
    %4275 = vmatpush2.msra.mxu0 0.0
    %4276 = vmatprep.subr.mxu0 0.0
    %4277 = vmatpush2.msra.mxu0 0.0
    %4278 = vmatprep.subr.mxu0 0.0
    %4279 = vmatpush2.msra.mxu0 0.0
    %4280 = vmatprep.subr.mxu0 0.0
    %4281 = vmatpush2.msra.mxu0 0.0
    %4282 = vmatprep.subr.mxu0 0.0
    %4283 = vmatpush2.msra.mxu0 0.0
    %4284 = vmatprep.subr.mxu0 0.0
    %4285 = vmatpush2.msra.mxu0 0.0
    %4286 = vmatprep.subr.mxu0 0.0
    %4287 = vmatpush2.msra.mxu0 0.0
    %4288 = vmatprep.subr.mxu0 0.0
    %4289 = vmatpush2.msra.mxu0 0.0
    %4290 = vmatprep.subr.mxu0 0.0
    %4291 = vmatpush2.msra.mxu0 0.0
    %4292 = vmatprep.subr.mxu0 0.0
    %4293 = vmatpush2.msra.mxu0 0.0
    %4294 = vmatprep.subr.mxu0 0.0
    %4295 = vmatpush2.msra.mxu0 0.0
    %4296 = vmatprep.subr.mxu0 0.0
    %4297 = vmatpush2.msra.mxu0 0.0
    %4298 = vmatprep.subr.mxu0 0.0
    %4299 = vmatpush2.msra.mxu0 0.0
    %4300 = vmatprep.subr.mxu0 0.0
    %4301 = vmatpush2.msra.mxu0 0.0
    %4302 = vmatprep.mubr.f32.mxu0 0.0
    %4303 = vmatmul.mubr.f32.gmra.mxu0 %v4233
    %v4304 = vpop.f32.mrf.mxu0
    %v4305 = vadd.f32 %v301, %v4304
    %v4306 = vpop.f32.mrf.mxu0
    %4307 = vmatprep.mubr.f32.mxu0 0.0
    %4308 = vmatmul.mubr.f32.gmra.mxu0 %v4236
    %v4309 = vpop.f32.mrf.mxu0
    %v4310 = vadd.f32 %v302, %v4309
    %v4311 = vpop.f32.mrf.mxu0
    %4312 = vdwg.mxu0
    %v4314 = vsel %vm960, %v3975, 0
    %v4317 = vsel %vm960, %v3976, 0
    %4319 = vmatprep.subr.mxu0 0.0
    %4320 = vmatpush1.msra.mxu0 0.0
    %4321 = vmatprep.subr.mxu0 0.0
    %4322 = vmatpush1.msra.mxu0 0.0
    %4323 = vmatprep.subr.mxu0 0.0
    %4324 = vmatpush1.msra.mxu0 0.0
    %4325 = vmatprep.subr.mxu0 0.0
    %4326 = vmatpush1.msra.mxu0 0.0
    %4327 = vmatprep.subr.mxu0 0.0
    %4328 = vmatpush1.msra.mxu0 0.0
    %4329 = vmatprep.subr.mxu0 0.0
    %4330 = vmatpush1.msra.mxu0 0.0
    %4331 = vmatprep.subr.mxu0 0.0
    %4332 = vmatpush1.msra.mxu0 0.0
    %4333 = vmatprep.subr.mxu0 0.0
    %4334 = vmatpush1.msra.mxu0 0.0
    %4335 = vmatprep.subr.mxu0 0.0
    %4336 = vmatpush1.msra.mxu0 0.0
    %4337 = vmatprep.subr.mxu0 0.0
    %4338 = vmatpush1.msra.mxu0 0.0
    %4339 = vmatprep.subr.mxu0 0.0
    %4340 = vmatpush1.msra.mxu0 0.0
    %4341 = vmatprep.subr.mxu0 0.0
    %4342 = vmatpush1.msra.mxu0 0.0
    %4343 = vmatprep.subr.mxu0 0.0
    %4344 = vmatpush1.msra.mxu0 0.0
    %4345 = vmatprep.subr.mxu0 0.0
    %4346 = vmatpush1.msra.mxu0 0.0
    %4347 = vmatprep.subr.mxu0 0.0
    %4348 = vmatpush1.msra.mxu0 %v3762
    %4349 = vmatprep.subr.mxu0 0.0
    %4350 = vmatpush1.msra.mxu0 %v3757
    %4351 = vmatprep.subr.mxu0 0.0
    %4352 = vmatpush2.msra.mxu0 0.0
    %4353 = vmatprep.subr.mxu0 0.0
    %4354 = vmatpush2.msra.mxu0 0.0
    %4355 = vmatprep.subr.mxu0 0.0
    %4356 = vmatpush2.msra.mxu0 0.0
    %4357 = vmatprep.subr.mxu0 0.0
    %4358 = vmatpush2.msra.mxu0 0.0
    %4359 = vmatprep.subr.mxu0 0.0
    %4360 = vmatpush2.msra.mxu0 0.0
    %4361 = vmatprep.subr.mxu0 0.0
    %4362 = vmatpush2.msra.mxu0 0.0
    %4363 = vmatprep.subr.mxu0 0.0
    %4364 = vmatpush2.msra.mxu0 0.0
    %4365 = vmatprep.subr.mxu0 0.0
    %4366 = vmatpush2.msra.mxu0 0.0
    %4367 = vmatprep.subr.mxu0 0.0
    %4368 = vmatpush2.msra.mxu0 0.0
    %4369 = vmatprep.subr.mxu0 0.0
    %4370 = vmatpush2.msra.mxu0 0.0
    %4371 = vmatprep.subr.mxu0 0.0
    %4372 = vmatpush2.msra.mxu0 0.0
    %4373 = vmatprep.subr.mxu0 0.0
    %4374 = vmatpush2.msra.mxu0 0.0
    %4375 = vmatprep.subr.mxu0 0.0
    %4376 = vmatpush2.msra.mxu0 0.0
    %4377 = vmatprep.subr.mxu0 0.0
    %4378 = vmatpush2.msra.mxu0 0.0
    %4379 = vmatprep.subr.mxu0 0.0
    %4380 = vmatpush2.msra.mxu0 0.0
    %4381 = vmatprep.subr.mxu0 0.0
    %4382 = vmatpush2.msra.mxu0 0.0
    %4383 = vmatprep.mubr.f32.mxu0 0.0
    %4384 = vmatmul.mubr.f32.gmra.mxu0 %v4314
    %v4385 = vpop.f32.mrf.mxu0
    %v4386 = vadd.f32 %v301, %v4385
    %v4387 = vpop.f32.mrf.mxu0
    %4388 = vmatprep.mubr.f32.mxu0 0.0
    %4389 = vmatmul.mubr.f32.gmra.mxu0 %v4317
    %v4390 = vpop.f32.mrf.mxu0
    %v4391 = vadd.f32 %v302, %v4390
    %v4392 = vpop.f32.mrf.mxu0
    %4393 = vdwg.mxu0
    %v4395 = vsel %vm960, %v4007, 0
    %v4398 = vsel %vm960, %v4008, 0
    %4400 = vmatprep.subr.mxu0 0.0
    %4401 = vmatpush1.msra.mxu0 0.0
    %4402 = vmatprep.subr.mxu0 0.0
    %4403 = vmatpush1.msra.mxu0 0.0
    %4404 = vmatprep.subr.mxu0 0.0
    %4405 = vmatpush1.msra.mxu0 0.0
    %4406 = vmatprep.subr.mxu0 0.0
    %4407 = vmatpush1.msra.mxu0 0.0
    %4408 = vmatprep.subr.mxu0 0.0
    %4409 = vmatpush1.msra.mxu0 0.0
    %4410 = vmatprep.subr.mxu0 0.0
    %4411 = vmatpush1.msra.mxu0 0.0
    %4412 = vmatprep.subr.mxu0 0.0
    %4413 = vmatpush1.msra.mxu0 0.0
    %4414 = vmatprep.subr.mxu0 0.0
    %4415 = vmatpush1.msra.mxu0 0.0
    %4416 = vmatprep.subr.mxu0 0.0
    %4417 = vmatpush1.msra.mxu0 0.0
    %4418 = vmatprep.subr.mxu0 0.0
    %4419 = vmatpush1.msra.mxu0 0.0
    %4420 = vmatprep.subr.mxu0 0.0
    %4421 = vmatpush1.msra.mxu0 0.0
    %4422 = vmatprep.subr.mxu0 0.0
    %4423 = vmatpush1.msra.mxu0 0.0
    %4424 = vmatprep.subr.mxu0 0.0
    %4425 = vmatpush1.msra.mxu0 0.0
    %4426 = vmatprep.subr.mxu0 0.0
    %4427 = vmatpush1.msra.mxu0 0.0
    %4428 = vmatprep.subr.mxu0 0.0
    %4429 = vmatpush1.msra.mxu0 %v3772
    %4430 = vmatprep.subr.mxu0 0.0
    %4431 = vmatpush1.msra.mxu0 %v3767
    %4432 = vmatprep.subr.mxu0 0.0
    %4433 = vmatpush2.msra.mxu0 0.0
    %4434 = vmatprep.subr.mxu0 0.0
    %4435 = vmatpush2.msra.mxu0 0.0
    %4436 = vmatprep.subr.mxu0 0.0
    %4437 = vmatpush2.msra.mxu0 0.0
    %4438 = vmatprep.subr.mxu0 0.0
    %4439 = vmatpush2.msra.mxu0 0.0
    %4440 = vmatprep.subr.mxu0 0.0
    %4441 = vmatpush2.msra.mxu0 0.0
    %4442 = vmatprep.subr.mxu0 0.0
    %4443 = vmatpush2.msra.mxu0 0.0
    %4444 = vmatprep.subr.mxu0 0.0
    %4445 = vmatpush2.msra.mxu0 0.0
    %4446 = vmatprep.subr.mxu0 0.0
    %4447 = vmatpush2.msra.mxu0 0.0
    %4448 = vmatprep.subr.mxu0 0.0
    %4449 = vmatpush2.msra.mxu0 0.0
    %4450 = vmatprep.subr.mxu0 0.0
    %4451 = vmatpush2.msra.mxu0 0.0
    %4452 = vmatprep.subr.mxu0 0.0
    %4453 = vmatpush2.msra.mxu0 0.0
    %4454 = vmatprep.subr.mxu0 0.0
    %4455 = vmatpush2.msra.mxu0 0.0
    %4456 = vmatprep.subr.mxu0 0.0
    %4457 = vmatpush2.msra.mxu0 0.0
    %4458 = vmatprep.subr.mxu0 0.0
    %4459 = vmatpush2.msra.mxu0 0.0
    %4460 = vmatprep.subr.mxu0 0.0
    %4461 = vmatpush2.msra.mxu0 0.0
    %4462 = vmatprep.subr.mxu0 0.0
    %4463 = vmatpush2.msra.mxu0 0.0
    %4464 = vmatprep.mubr.f32.mxu0 0.0
    %4465 = vmatmul.mubr.f32.gmra.mxu0 %v4395
    %v4466 = vpop.f32.mrf.mxu0
    %v4467 = vadd.f32 %v301, %v4466
    %v4468 = vpop.f32.mrf.mxu0
    %4469 = vmatprep.mubr.f32.mxu0 0.0
    %4470 = vmatmul.mubr.f32.gmra.mxu0 %v4398
    %v4471 = vpop.f32.mrf.mxu0
    %v4472 = vadd.f32 %v302, %v4471
    %v4473 = vpop.f32.mrf.mxu0
    %4474 = vdwg.mxu0
    %v4476 = vsel %vm960, %v4039, 0
    %v4479 = vsel %vm960, %v4040, 0
    %4481 = vmatprep.subr.mxu0 0.0
    %4482 = vmatpush1.msra.mxu0 0.0
    %4483 = vmatprep.subr.mxu0 0.0
    %4484 = vmatpush1.msra.mxu0 0.0
    %4485 = vmatprep.subr.mxu0 0.0
    %4486 = vmatpush1.msra.mxu0 0.0
    %4487 = vmatprep.subr.mxu0 0.0
    %4488 = vmatpush1.msra.mxu0 0.0
    %4489 = vmatprep.subr.mxu0 0.0
    %4490 = vmatpush1.msra.mxu0 0.0
    %4491 = vmatprep.subr.mxu0 0.0
    %4492 = vmatpush1.msra.mxu0 0.0
    %4493 = vmatprep.subr.mxu0 0.0
    %4494 = vmatpush1.msra.mxu0 0.0
    %4495 = vmatprep.subr.mxu0 0.0
    %4496 = vmatpush1.msra.mxu0 0.0
    %4497 = vmatprep.subr.mxu0 0.0
    %4498 = vmatpush1.msra.mxu0 0.0
    %4499 = vmatprep.subr.mxu0 0.0
    %4500 = vmatpush1.msra.mxu0 0.0
    %4501 = vmatprep.subr.mxu0 0.0
    %4502 = vmatpush1.msra.mxu0 0.0
    %4503 = vmatprep.subr.mxu0 0.0
    %4504 = vmatpush1.msra.mxu0 0.0
    %4505 = vmatprep.subr.mxu0 0.0
    %4506 = vmatpush1.msra.mxu0 0.0
    %4507 = vmatprep.subr.mxu0 0.0
    %4508 = vmatpush1.msra.mxu0 0.0
    %4509 = vmatprep.subr.mxu0 0.0
    %4510 = vmatpush1.msra.mxu0 %v3782
    %4511 = vmatprep.subr.mxu0 0.0
    %4512 = vmatpush1.msra.mxu0 %v3777
    %4513 = vmatprep.subr.mxu0 0.0
    %4514 = vmatpush2.msra.mxu0 0.0
    %4515 = vmatprep.subr.mxu0 0.0
    %4516 = vmatpush2.msra.mxu0 0.0
    %4517 = vmatprep.subr.mxu0 0.0
    %4518 = vmatpush2.msra.mxu0 0.0
    %4519 = vmatprep.subr.mxu0 0.0
    %4520 = vmatpush2.msra.mxu0 0.0
    %4521 = vmatprep.subr.mxu0 0.0
    %4522 = vmatpush2.msra.mxu0 0.0
    %4523 = vmatprep.subr.mxu0 0.0
    %4524 = vmatpush2.msra.mxu0 0.0
    %4525 = vmatprep.subr.mxu0 0.0
    %4526 = vmatpush2.msra.mxu0 0.0
    %4527 = vmatprep.subr.mxu0 0.0
    %4528 = vmatpush2.msra.mxu0 0.0
    %4529 = vmatprep.subr.mxu0 0.0
    %4530 = vmatpush2.msra.mxu0 0.0
    %4531 = vmatprep.subr.mxu0 0.0
    %4532 = vmatpush2.msra.mxu0 0.0
    %4533 = vmatprep.subr.mxu0 0.0
    %4534 = vmatpush2.msra.mxu0 0.0
    %4535 = vmatprep.subr.mxu0 0.0
    %4536 = vmatpush2.msra.mxu0 0.0
    %4537 = vmatprep.subr.mxu0 0.0
    %4538 = vmatpush2.msra.mxu0 0.0
    %4539 = vmatprep.subr.mxu0 0.0
    %4540 = vmatpush2.msra.mxu0 0.0
    %4541 = vmatprep.subr.mxu0 0.0
    %4542 = vmatpush2.msra.mxu0 0.0
    %4543 = vmatprep.subr.mxu0 0.0
    %4544 = vmatpush2.msra.mxu0 0.0
    %4545 = vmatprep.mubr.f32.mxu0 0.0
    %4546 = vmatmul.mubr.f32.gmra.mxu0 %v4476
    %v4547 = vpop.f32.mrf.mxu0
    %v4548 = vadd.f32 %v301, %v4547
    %v4549 = vpop.f32.mrf.mxu0
    %4550 = vmatprep.mubr.f32.mxu0 0.0
    %4551 = vmatmul.mubr.f32.gmra.mxu0 %v4479
    %v4552 = vpop.f32.mrf.mxu0
    %v4553 = vadd.f32 %v302, %v4552
    %v4554 = vpop.f32.mrf.mxu0
    %4555 = vdwg.mxu0
    %v4557 = vsel %vm960, %v4071, 0
    %v4560 = vsel %vm960, %v4072, 0
    %4562 = vmatprep.subr.mxu0 0.0
    %4563 = vmatpush1.msra.mxu0 0.0
    %4564 = vmatprep.subr.mxu0 0.0
    %4565 = vmatpush1.msra.mxu0 0.0
    %4566 = vmatprep.subr.mxu0 0.0
    %4567 = vmatpush1.msra.mxu0 0.0
    %4568 = vmatprep.subr.mxu0 0.0
    %4569 = vmatpush1.msra.mxu0 0.0
    %4570 = vmatprep.subr.mxu0 0.0
    %4571 = vmatpush1.msra.mxu0 0.0
    %4572 = vmatprep.subr.mxu0 0.0
    %4573 = vmatpush1.msra.mxu0 0.0
    %4574 = vmatprep.subr.mxu0 0.0
    %4575 = vmatpush1.msra.mxu0 0.0
    %4576 = vmatprep.subr.mxu0 0.0
    %4577 = vmatpush1.msra.mxu0 0.0
    %4578 = vmatprep.subr.mxu0 0.0
    %4579 = vmatpush1.msra.mxu0 0.0
    %4580 = vmatprep.subr.mxu0 0.0
    %4581 = vmatpush1.msra.mxu0 0.0
    %4582 = vmatprep.subr.mxu0 0.0
    %4583 = vmatpush1.msra.mxu0 0.0
    %4584 = vmatprep.subr.mxu0 0.0
    %4585 = vmatpush1.msra.mxu0 0.0
    %4586 = vmatprep.subr.mxu0 0.0
    %4587 = vmatpush1.msra.mxu0 0.0
    %4588 = vmatprep.subr.mxu0 0.0
    %4589 = vmatpush1.msra.mxu0 0.0
    %4590 = vmatprep.subr.mxu0 0.0
    %4591 = vmatpush1.msra.mxu0 %v3792
    %4592 = vmatprep.subr.mxu0 0.0
    %4593 = vmatpush1.msra.mxu0 %v3787
    %4594 = vmatprep.subr.mxu0 0.0
    %4595 = vmatpush2.msra.mxu0 0.0
    %4596 = vmatprep.subr.mxu0 0.0
    %4597 = vmatpush2.msra.mxu0 0.0
    %4598 = vmatprep.subr.mxu0 0.0
    %4599 = vmatpush2.msra.mxu0 0.0
    %4600 = vmatprep.subr.mxu0 0.0
    %4601 = vmatpush2.msra.mxu0 0.0
    %4602 = vmatprep.subr.mxu0 0.0
    %4603 = vmatpush2.msra.mxu0 0.0
    %4604 = vmatprep.subr.mxu0 0.0
    %4605 = vmatpush2.msra.mxu0 0.0
    %4606 = vmatprep.subr.mxu0 0.0
    %4607 = vmatpush2.msra.mxu0 0.0
    %4608 = vmatprep.subr.mxu0 0.0
    %4609 = vmatpush2.msra.mxu0 0.0
    %4610 = vmatprep.subr.mxu0 0.0
    %4611 = vmatpush2.msra.mxu0 0.0
    %4612 = vmatprep.subr.mxu0 0.0
    %4613 = vmatpush2.msra.mxu0 0.0
    %4614 = vmatprep.subr.mxu0 0.0
    %4615 = vmatpush2.msra.mxu0 0.0
    %4616 = vmatprep.subr.mxu0 0.0
    %4617 = vmatpush2.msra.mxu0 0.0
    %4618 = vmatprep.subr.mxu0 0.0
    %4619 = vmatpush2.msra.mxu0 0.0
    %4620 = vmatprep.subr.mxu0 0.0
    %4621 = vmatpush2.msra.mxu0 0.0
    %4622 = vmatprep.subr.mxu0 0.0
    %4623 = vmatpush2.msra.mxu0 0.0
    %4624 = vmatprep.subr.mxu0 0.0
    %4625 = vmatpush2.msra.mxu0 0.0
    %4626 = vmatprep.mubr.f32.mxu0 0.0
    %4627 = vmatmul.mubr.f32.gmra.mxu0 %v4557
    %v4628 = vpop.f32.mrf.mxu0
    %v4629 = vadd.f32 %v301, %v4628
    %v4630 = vpop.f32.mrf.mxu0
    %4631 = vmatprep.mubr.f32.mxu0 0.0
    %4632 = vmatmul.mubr.f32.gmra.mxu0 %v4560
    %v4633 = vpop.f32.mrf.mxu0
    %v4634 = vadd.f32 %v302, %v4633
    %v4635 = vpop.f32.mrf.mxu0
    %4636 = vdwg.mxu0
    %v4638 = vsel %vm960, %v4103, 0
    %v4641 = vsel %vm960, %v4104, 0
    %4643 = vmatprep.subr.mxu0 0.0
    %4644 = vmatpush1.msra.mxu0 0.0
    %4645 = vmatprep.subr.mxu0 0.0
    %4646 = vmatpush1.msra.mxu0 0.0
    %4647 = vmatprep.subr.mxu0 0.0
    %4648 = vmatpush1.msra.mxu0 0.0
    %4649 = vmatprep.subr.mxu0 0.0
    %4650 = vmatpush1.msra.mxu0 0.0
    %4651 = vmatprep.subr.mxu0 0.0
    %4652 = vmatpush1.msra.mxu0 0.0
    %4653 = vmatprep.subr.mxu0 0.0
    %4654 = vmatpush1.msra.mxu0 0.0
    %4655 = vmatprep.subr.mxu0 0.0
    %4656 = vmatpush1.msra.mxu0 0.0
    %4657 = vmatprep.subr.mxu0 0.0
    %4658 = vmatpush1.msra.mxu0 0.0
    %4659 = vmatprep.subr.mxu0 0.0
    %4660 = vmatpush1.msra.mxu0 0.0
    %4661 = vmatprep.subr.mxu0 0.0
    %4662 = vmatpush1.msra.mxu0 0.0
    %4663 = vmatprep.subr.mxu0 0.0
    %4664 = vmatpush1.msra.mxu0 0.0
    %4665 = vmatprep.subr.mxu0 0.0
    %4666 = vmatpush1.msra.mxu0 0.0
    %4667 = vmatprep.subr.mxu0 0.0
    %4668 = vmatpush1.msra.mxu0 0.0
    %4669 = vmatprep.subr.mxu0 0.0
    %4670 = vmatpush1.msra.mxu0 0.0
    %4671 = vmatprep.subr.mxu0 0.0
    %4672 = vmatpush1.msra.mxu0 %v3802
    %4673 = vmatprep.subr.mxu0 0.0
    %4674 = vmatpush1.msra.mxu0 %v3797
    %4675 = vmatprep.subr.mxu0 0.0
    %4676 = vmatpush2.msra.mxu0 0.0
    %4677 = vmatprep.subr.mxu0 0.0
    %4678 = vmatpush2.msra.mxu0 0.0
    %4679 = vmatprep.subr.mxu0 0.0
    %4680 = vmatpush2.msra.mxu0 0.0
    %4681 = vmatprep.subr.mxu0 0.0
    %4682 = vmatpush2.msra.mxu0 0.0
    %4683 = vmatprep.subr.mxu0 0.0
    %4684 = vmatpush2.msra.mxu0 0.0
    %4685 = vmatprep.subr.mxu0 0.0
    %4686 = vmatpush2.msra.mxu0 0.0
    %4687 = vmatprep.subr.mxu0 0.0
    %4688 = vmatpush2.msra.mxu0 0.0
    %4689 = vmatprep.subr.mxu0 0.0
    %4690 = vmatpush2.msra.mxu0 0.0
    %4691 = vmatprep.subr.mxu0 0.0
    %4692 = vmatpush2.msra.mxu0 0.0
    %4693 = vmatprep.subr.mxu0 0.0
    %4694 = vmatpush2.msra.mxu0 0.0
    %4695 = vmatprep.subr.mxu0 0.0
    %4696 = vmatpush2.msra.mxu0 0.0
    %4697 = vmatprep.subr.mxu0 0.0
    %4698 = vmatpush2.msra.mxu0 0.0
    %4699 = vmatprep.subr.mxu0 0.0
    %4700 = vmatpush2.msra.mxu0 0.0
    %4701 = vmatprep.subr.mxu0 0.0
    %4702 = vmatpush2.msra.mxu0 0.0
    %4703 = vmatprep.subr.mxu0 0.0
    %4704 = vmatpush2.msra.mxu0 0.0
    %4705 = vmatprep.subr.mxu0 0.0
    %4706 = vmatpush2.msra.mxu0 0.0
    %4707 = vmatprep.mubr.f32.mxu0 0.0
    %4708 = vmatmul.mubr.f32.gmra.mxu0 %v4638
    %v4709 = vpop.f32.mrf.mxu0
    %v4710 = vadd.f32 %v301, %v4709
    %v4711 = vpop.f32.mrf.mxu0
    %4712 = vmatprep.mubr.f32.mxu0 0.0
    %4713 = vmatmul.mubr.f32.gmra.mxu0 %v4641
    %v4714 = vpop.f32.mrf.mxu0
    %v4715 = vadd.f32 %v302, %v4714
    %v4716 = vpop.f32.mrf.mxu0
    %4717 = vdwg.mxu0
    %v4719 = vsel %vm960, %v4135, 0
    %v4722 = vsel %vm960, %v4136, 0
    %4724 = vmatprep.subr.mxu0 0.0
    %4725 = vmatpush1.msra.mxu0 0.0
    %4726 = vmatprep.subr.mxu0 0.0
    %4727 = vmatpush1.msra.mxu0 0.0
    %4728 = vmatprep.subr.mxu0 0.0
    %4729 = vmatpush1.msra.mxu0 0.0
    %4730 = vmatprep.subr.mxu0 0.0
    %4731 = vmatpush1.msra.mxu0 0.0
    %4732 = vmatprep.subr.mxu0 0.0
    %4733 = vmatpush1.msra.mxu0 0.0
    %4734 = vmatprep.subr.mxu0 0.0
    %4735 = vmatpush1.msra.mxu0 0.0
    %4736 = vmatprep.subr.mxu0 0.0
    %4737 = vmatpush1.msra.mxu0 0.0
    %4738 = vmatprep.subr.mxu0 0.0
    %4739 = vmatpush1.msra.mxu0 0.0
    %4740 = vmatprep.subr.mxu0 0.0
    %4741 = vmatpush1.msra.mxu0 0.0
    %4742 = vmatprep.subr.mxu0 0.0
    %4743 = vmatpush1.msra.mxu0 0.0
    %4744 = vmatprep.subr.mxu0 0.0
    %4745 = vmatpush1.msra.mxu0 0.0
    %4746 = vmatprep.subr.mxu0 0.0
    %4747 = vmatpush1.msra.mxu0 0.0
    %4748 = vmatprep.subr.mxu0 0.0
    %4749 = vmatpush1.msra.mxu0 0.0
    %4750 = vmatprep.subr.mxu0 0.0
    %4751 = vmatpush1.msra.mxu0 0.0
    %4752 = vmatprep.subr.mxu0 0.0
    %4753 = vmatpush1.msra.mxu0 %v3812
    %4754 = vmatprep.subr.mxu0 0.0
    %4755 = vmatpush1.msra.mxu0 %v3807
    %4756 = vmatprep.subr.mxu0 0.0
    %4757 = vmatpush2.msra.mxu0 0.0
    %4758 = vmatprep.subr.mxu0 0.0
    %4759 = vmatpush2.msra.mxu0 0.0
    %4760 = vmatprep.subr.mxu0 0.0
    %4761 = vmatpush2.msra.mxu0 0.0
    %4762 = vmatprep.subr.mxu0 0.0
    %4763 = vmatpush2.msra.mxu0 0.0
    %4764 = vmatprep.subr.mxu0 0.0
    %4765 = vmatpush2.msra.mxu0 0.0
    %4766 = vmatprep.subr.mxu0 0.0
    %4767 = vmatpush2.msra.mxu0 0.0
    %4768 = vmatprep.subr.mxu0 0.0
    %4769 = vmatpush2.msra.mxu0 0.0
    %4770 = vmatprep.subr.mxu0 0.0
    %4771 = vmatpush2.msra.mxu0 0.0
    %4772 = vmatprep.subr.mxu0 0.0
    %4773 = vmatpush2.msra.mxu0 0.0
    %4774 = vmatprep.subr.mxu0 0.0
    %4775 = vmatpush2.msra.mxu0 0.0
    %4776 = vmatprep.subr.mxu0 0.0
    %4777 = vmatpush2.msra.mxu0 0.0
    %4778 = vmatprep.subr.mxu0 0.0
    %4779 = vmatpush2.msra.mxu0 0.0
    %4780 = vmatprep.subr.mxu0 0.0
    %4781 = vmatpush2.msra.mxu0 0.0
    %4782 = vmatprep.subr.mxu0 0.0
    %4783 = vmatpush2.msra.mxu0 0.0
    %4784 = vmatprep.subr.mxu0 0.0
    %4785 = vmatpush2.msra.mxu0 0.0
    %4786 = vmatprep.subr.mxu0 0.0
    %4787 = vmatpush2.msra.mxu0 0.0
    %4788 = vmatprep.mubr.f32.mxu0 0.0
    %4789 = vmatmul.mubr.f32.gmra.mxu0 %v4719
    %v4790 = vpop.f32.mrf.mxu0
    %v4791 = vadd.f32 %v301, %v4790
    %v4792 = vpop.f32.mrf.mxu0
    %4793 = vmatprep.mubr.f32.mxu0 0.0
    %4794 = vmatmul.mubr.f32.gmra.mxu0 %v4722
    %v4795 = vpop.f32.mrf.mxu0
    %v4796 = vadd.f32 %v302, %v4795
    %v4797 = vpop.f32.mrf.mxu0
    %4798 = vdwg.mxu0
    %v4799 = vsel %vm960, %v4224, -inf
    %4800 = vmax.xlane.f32.xlu0 %v4799
    %v4801 = vpop.xlane.xlu0 %4800
    %v4802 = vsel %vm960, %v4229, -inf
    %4803 = vmax.xlane.f32.xlu0 %v4802
    %v4804 = vpop.xlane.xlu0 %4803
    %v4805 = vsel %vm960, %v4305, -inf
    %4806 = vmax.xlane.f32.xlu0 %v4805
    %v4807 = vpop.xlane.xlu0 %4806
    %v4808 = vsel %vm960, %v4310, -inf
    %4809 = vmax.xlane.f32.xlu0 %v4808
    %v4810 = vpop.xlane.xlu0 %4809
    %v4811 = vsel %vm960, %v4386, -inf
    %4812 = vmax.xlane.f32.xlu0 %v4811
    %v4813 = vpop.xlane.xlu0 %4812
    %v4814 = vsel %vm960, %v4391, -inf
    %4815 = vmax.xlane.f32.xlu0 %v4814
    %v4816 = vpop.xlane.xlu0 %4815
    %v4817 = vsel %vm960, %v4467, -inf
    %4818 = vmax.xlane.f32.xlu0 %v4817
    %v4819 = vpop.xlane.xlu0 %4818
    %v4820 = vsel %vm960, %v4472, -inf
    %4821 = vmax.xlane.f32.xlu0 %v4820
    %v4822 = vpop.xlane.xlu0 %4821
    %v4823 = vsel %vm960, %v4548, -inf
    %4824 = vmax.xlane.f32.xlu0 %v4823
    %v4825 = vpop.xlane.xlu0 %4824
    %v4826 = vsel %vm960, %v4553, -inf
    %4827 = vmax.xlane.f32.xlu0 %v4826
    %v4828 = vpop.xlane.xlu0 %4827
    %v4829 = vsel %vm960, %v4629, -inf
    %4830 = vmax.xlane.f32.xlu0 %v4829
    %v4831 = vpop.xlane.xlu0 %4830
    %v4832 = vsel %vm960, %v4634, -inf
    %4833 = vmax.xlane.f32.xlu0 %v4832
    %v4834 = vpop.xlane.xlu0 %4833
    %v4835 = vsel %vm960, %v4710, -inf
    %4836 = vmax.xlane.f32.xlu0 %v4835
    %v4837 = vpop.xlane.xlu0 %4836
    %v4838 = vsel %vm960, %v4715, -inf
    %4839 = vmax.xlane.f32.xlu0 %v4838
    %v4840 = vpop.xlane.xlu0 %4839
    %v4841 = vsel %vm960, %v4791, -inf
    %4842 = vmax.xlane.f32.xlu0 %v4841
    %v4843 = vpop.xlane.xlu0 %4842
    %v4844 = vsel %vm960, %v4796, -inf
    %4845 = vmax.xlane.f32.xlu0 %v4844
    %v4846 = vpop.xlane.xlu0 %4845
    %v4847 = vsub.f32 %v4224, %v4801
    %v4848 = vsub.f32 %v4229, %v4804
    %v4849 = vsub.f32 %v4305, %v4807
    %v4850 = vsub.f32 %v4310, %v4810
    %v4851 = vsub.f32 %v4386, %v4813
    %v4852 = vsub.f32 %v4391, %v4816
    %v4853 = vsub.f32 %v4467, %v4819
    %v4854 = vsub.f32 %v4472, %v4822
    %v4855 = vsub.f32 %v4548, %v4825
    %v4856 = vsub.f32 %v4553, %v4828
    %v4857 = vsub.f32 %v4629, %v4831
    %v4858 = vsub.f32 %v4634, %v4834
    %v4859 = vsub.f32 %v4710, %v4837
    %v4860 = vsub.f32 %v4715, %v4840
    %v4861 = vsub.f32 %v4791, %v4843
    %v4862 = vsub.f32 %v4796, %v4846
    %v4863 = vmul.f32 %v4847, 1.442695
    %v4864 = vpow.pop %v4863
    %v4865 = vmul.f32 %v4848, 1.442695
    %v4866 = vpow.pop %v4865
    %v4867 = vmul.f32 %v4849, 1.442695
    %v4868 = vpow.pop %v4867
    %v4869 = vmul.f32 %v4850, 1.442695
    %v4870 = vpow.pop %v4869
    %v4871 = vmul.f32 %v4851, 1.442695
    %v4872 = vpow.pop %v4871
    %v4873 = vmul.f32 %v4852, 1.442695
    %v4874 = vpow.pop %v4873
    %v4875 = vmul.f32 %v4853, 1.442695
    %v4876 = vpow.pop %v4875
    %v4877 = vmul.f32 %v4854, 1.442695
    %v4878 = vpow.pop %v4877
    %v4879 = vmul.f32 %v4855, 1.442695
    %v4880 = vpow.pop %v4879
    %v4881 = vmul.f32 %v4856, 1.442695
    %v4882 = vpow.pop %v4881
    %v4883 = vmul.f32 %v4857, 1.442695
    %v4884 = vpow.pop %v4883
    %v4885 = vmul.f32 %v4858, 1.442695
    %v4886 = vpow.pop %v4885
    %v4887 = vmul.f32 %v4859, 1.442695
    %v4888 = vpow.pop %v4887
    %v4889 = vmul.f32 %v4860, 1.442695
    %v4890 = vpow.pop %v4889
    %v4891 = vmul.f32 %v4861, 1.442695
    %v4892 = vpow.pop %v4891
    %v4893 = vmul.f32 %v4862, 1.442695
    %v4894 = vpow.pop %v4893
    %v4895 = vsel %vm960, %v4864, 0.0
    %4896 = vadd.xlane.f32.xlu0 %v4895
    %v4897 = vpop.xlane.xlu0 %4896
    %v4898 = vsel %vm960, %v4866, 0.0
    %4899 = vadd.xlane.f32.xlu0 %v4898
    %v4900 = vpop.xlane.xlu0 %4899
    %v4901 = vsel %vm960, %v4868, 0.0
    %4902 = vadd.xlane.f32.xlu0 %v4901
    %v4903 = vpop.xlane.xlu0 %4902
    %v4904 = vsel %vm960, %v4870, 0.0
    %4905 = vadd.xlane.f32.xlu0 %v4904
    %v4906 = vpop.xlane.xlu0 %4905
    %v4907 = vsel %vm960, %v4872, 0.0
    %4908 = vadd.xlane.f32.xlu0 %v4907
    %v4909 = vpop.xlane.xlu0 %4908
    %v4910 = vsel %vm960, %v4874, 0.0
    %4911 = vadd.xlane.f32.xlu0 %v4910
    %v4912 = vpop.xlane.xlu0 %4911
    %v4913 = vsel %vm960, %v4876, 0.0
    %4914 = vadd.xlane.f32.xlu0 %v4913
    %v4915 = vpop.xlane.xlu0 %4914
    %v4916 = vsel %vm960, %v4878, 0.0
    %4917 = vadd.xlane.f32.xlu0 %v4916
    %v4918 = vpop.xlane.xlu0 %4917
    %v4919 = vsel %vm960, %v4880, 0.0
    %4920 = vadd.xlane.f32.xlu0 %v4919
    %v4921 = vpop.xlane.xlu0 %4920
    %v4922 = vsel %vm960, %v4882, 0.0
    %4923 = vadd.xlane.f32.xlu0 %v4922
    %v4924 = vpop.xlane.xlu0 %4923
    %v4925 = vsel %vm960, %v4884, 0.0
    %4926 = vadd.xlane.f32.xlu0 %v4925
    %v4927 = vpop.xlane.xlu0 %4926
    %v4928 = vsel %vm960, %v4886, 0.0
    %4929 = vadd.xlane.f32.xlu0 %v4928
    %v4930 = vpop.xlane.xlu0 %4929
    %v4931 = vsel %vm960, %v4888, 0.0
    %4932 = vadd.xlane.f32.xlu0 %v4931
    %v4933 = vpop.xlane.xlu0 %4932
    %v4934 = vsel %vm960, %v4890, 0.0
    %4935 = vadd.xlane.f32.xlu0 %v4934
    %v4936 = vpop.xlane.xlu0 %4935
    %v4937 = vsel %vm960, %v4892, 0.0
    %4938 = vadd.xlane.f32.xlu0 %v4937
    %v4939 = vpop.xlane.xlu0 %4938
    %v4940 = vsel %vm960, %v4894, 0.0
    %4941 = vadd.xlane.f32.xlu0 %v4940
    %v4942 = vpop.xlane.xlu0 %4941
    %v4943 = vrcp.pop %v4897
    %v4944 = vrcp.pop %v4900
    %v4945 = vrcp.pop %v4903
    %v4946 = vrcp.pop %v4906
    %v4947 = vrcp.pop %v4909
    %v4948 = vrcp.pop %v4912
    %v4949 = vrcp.pop %v4915
    %v4950 = vrcp.pop %v4918
    %v4951 = vrcp.pop %v4921
    %v4952 = vrcp.pop %v4924
    %v4953 = vrcp.pop %v4927
    %v4954 = vrcp.pop %v4930
    %v4955 = vrcp.pop %v4933
    %v4956 = vrcp.pop %v4936
    %v4957 = vrcp.pop %v4939
    %v4958 = vrcp.pop %v4942
    %v4959 = vmul.f32 %v4864, %v4943
    %v4960 = vmul.f32 %v4866, %v4944
    %v4961 = vmul.f32 %v4868, %v4945
    %v4962 = vmul.f32 %v4870, %v4946
    %v4963 = vmul.f32 %v4872, %v4947
    %v4964 = vmul.f32 %v4874, %v4948
    %v4965 = vmul.f32 %v4876, %v4949
    %v4966 = vmul.f32 %v4878, %v4950
    %v4967 = vmul.f32 %v4880, %v4951
    %v4968 = vmul.f32 %v4882, %v4952
    %v4969 = vmul.f32 %v4884, %v4953
    %v4970 = vmul.f32 %v4886, %v4954
    %v4971 = vmul.f32 %v4888, %v4955
    %v4972 = vmul.f32 %v4890, %v4956
    %v4973 = vmul.f32 %v4892, %v4957
    %v4974 = vmul.f32 %v4894, %v4958
    %v4976 = vsel %vm960, %v4959, 0
    %v4979 = vsel %vm960, %v4960, 0
    %v4982 = vsel %vm960, %v3817, 0
    %v4985 = vsel %vm960, %v3822, 0
    %4987 = vmatprep.subr.mxu0 0.0
    %4988 = vmatpush1.xpose.msra.mxu0 0.0
    %4989 = vmatprep.subr.mxu0 0.0
    %4990 = vmatpush1.xpose.msra.mxu0 0.0
    %4991 = vmatprep.subr.mxu0 0.0
    %4992 = vmatpush1.xpose.msra.mxu0 0.0
    %4993 = vmatprep.subr.mxu0 0.0
    %4994 = vmatpush1.xpose.msra.mxu0 0.0
    %4995 = vmatprep.subr.mxu0 0.0
    %4996 = vmatpush1.xpose.msra.mxu0 0.0
    %4997 = vmatprep.subr.mxu0 0.0
    %4998 = vmatpush1.xpose.msra.mxu0 0.0
    %4999 = vmatprep.subr.mxu0 0.0
    %5000 = vmatpush1.xpose.msra.mxu0 0.0
    %5001 = vmatprep.subr.mxu0 0.0
    %5002 = vmatpush1.xpose.msra.mxu0 0.0
    %5003 = vmatprep.subr.mxu0 0.0
    %5004 = vmatpush1.xpose.msra.mxu0 0.0
    %5005 = vmatprep.subr.mxu0 0.0
    %5006 = vmatpush1.xpose.msra.mxu0 0.0
    %5007 = vmatprep.subr.mxu0 0.0
    %5008 = vmatpush1.xpose.msra.mxu0 0.0
    %5009 = vmatprep.subr.mxu0 0.0
    %5010 = vmatpush1.xpose.msra.mxu0 0.0
    %5011 = vmatprep.subr.mxu0 0.0
    %5012 = vmatpush1.xpose.msra.mxu0 0.0
    %5013 = vmatprep.subr.mxu0 0.0
    %5014 = vmatpush1.xpose.msra.mxu0 0.0
    %5015 = vmatprep.subr.mxu0 0.0
    %5016 = vmatpush1.xpose.msra.mxu0 %v4985
    %5017 = vmatprep.subr.mxu0 0.0
    %5018 = vmatpush1.xpose.msra.mxu0 %v4982
    %5019 = vmatprep.subr.mxu0 0.0
    %5020 = vmatpush2.xpose.msra.mxu0 0.0
    %5021 = vmatprep.subr.mxu0 0.0
    %5022 = vmatpush2.xpose.msra.mxu0 0.0
    %5023 = vmatprep.subr.mxu0 0.0
    %5024 = vmatpush2.xpose.msra.mxu0 0.0
    %5025 = vmatprep.subr.mxu0 0.0
    %5026 = vmatpush2.xpose.msra.mxu0 0.0
    %5027 = vmatprep.subr.mxu0 0.0
    %5028 = vmatpush2.xpose.msra.mxu0 0.0
    %5029 = vmatprep.subr.mxu0 0.0
    %5030 = vmatpush2.xpose.msra.mxu0 0.0
    %5031 = vmatprep.subr.mxu0 0.0
    %5032 = vmatpush2.xpose.msra.mxu0 0.0
    %5033 = vmatprep.subr.mxu0 0.0
    %5034 = vmatpush2.xpose.msra.mxu0 0.0
    %5035 = vmatprep.subr.mxu0 0.0
    %5036 = vmatpush2.xpose.msra.mxu0 0.0
    %5037 = vmatprep.subr.mxu0 0.0
    %5038 = vmatpush2.xpose.msra.mxu0 0.0
    %5039 = vmatprep.subr.mxu0 0.0
    %5040 = vmatpush2.xpose.msra.mxu0 0.0
    %5041 = vmatprep.subr.mxu0 0.0
    %5042 = vmatpush2.xpose.msra.mxu0 0.0
    %5043 = vmatprep.subr.mxu0 0.0
    %5044 = vmatpush2.xpose.msra.mxu0 0.0
    %5045 = vmatprep.subr.mxu0 0.0
    %5046 = vmatpush2.xpose.msra.mxu0 0.0
    %5047 = vmatprep.subr.mxu0 0.0
    %5048 = vmatpush2.xpose.msra.mxu0 0.0
    %5049 = vmatprep.subr.mxu0 0.0
    %5050 = vmatpush2.xpose.msra.mxu0 0.0
    %5051 = vmatprep.mubr.f32.mxu0 0.0
    %5052 = vmatmul.mubr.f32.gmra.mxu0 %v4976
    %v5053 = vpop.f32.mrf.mxu0
    %v5054 = vadd.f32 0.0, %v5053
    %v5055 = vpop.f32.mrf.mxu0
    %5056 = vmatprep.mubr.f32.mxu0 0.0
    %5057 = vmatmul.mubr.f32.gmra.mxu0 %v4979
    %v5058 = vpop.f32.mrf.mxu0
    %v5059 = vadd.f32 0.0, %v5058
    %v5060 = vpop.f32.mrf.mxu0
    %5061 = vdwg.mxu0
    %v5063 = vsel %vm960, %v4961, 0
    %v5066 = vsel %vm960, %v4962, 0
    %v5069 = vsel %vm960, %v3827, 0
    %v5072 = vsel %vm960, %v3832, 0
    %5074 = vmatprep.subr.mxu0 0.0
    %5075 = vmatpush1.xpose.msra.mxu0 0.0
    %5076 = vmatprep.subr.mxu0 0.0
    %5077 = vmatpush1.xpose.msra.mxu0 0.0
    %5078 = vmatprep.subr.mxu0 0.0
    %5079 = vmatpush1.xpose.msra.mxu0 0.0
    %5080 = vmatprep.subr.mxu0 0.0
    %5081 = vmatpush1.xpose.msra.mxu0 0.0
    %5082 = vmatprep.subr.mxu0 0.0
    %5083 = vmatpush1.xpose.msra.mxu0 0.0
    %5084 = vmatprep.subr.mxu0 0.0
    %5085 = vmatpush1.xpose.msra.mxu0 0.0
    %5086 = vmatprep.subr.mxu0 0.0
    %5087 = vmatpush1.xpose.msra.mxu0 0.0
    %5088 = vmatprep.subr.mxu0 0.0
    %5089 = vmatpush1.xpose.msra.mxu0 0.0
    %5090 = vmatprep.subr.mxu0 0.0
    %5091 = vmatpush1.xpose.msra.mxu0 0.0
    %5092 = vmatprep.subr.mxu0 0.0
    %5093 = vmatpush1.xpose.msra.mxu0 0.0
    %5094 = vmatprep.subr.mxu0 0.0
    %5095 = vmatpush1.xpose.msra.mxu0 0.0
    %5096 = vmatprep.subr.mxu0 0.0
    %5097 = vmatpush1.xpose.msra.mxu0 0.0
    %5098 = vmatprep.subr.mxu0 0.0
    %5099 = vmatpush1.xpose.msra.mxu0 0.0
    %5100 = vmatprep.subr.mxu0 0.0
    %5101 = vmatpush1.xpose.msra.mxu0 0.0
    %5102 = vmatprep.subr.mxu0 0.0
    %5103 = vmatpush1.xpose.msra.mxu0 %v5072
    %5104 = vmatprep.subr.mxu0 0.0
    %5105 = vmatpush1.xpose.msra.mxu0 %v5069
    %5106 = vmatprep.subr.mxu0 0.0
    %5107 = vmatpush2.xpose.msra.mxu0 0.0
    %5108 = vmatprep.subr.mxu0 0.0
    %5109 = vmatpush2.xpose.msra.mxu0 0.0
    %5110 = vmatprep.subr.mxu0 0.0
    %5111 = vmatpush2.xpose.msra.mxu0 0.0
    %5112 = vmatprep.subr.mxu0 0.0
    %5113 = vmatpush2.xpose.msra.mxu0 0.0
    %5114 = vmatprep.subr.mxu0 0.0
    %5115 = vmatpush2.xpose.msra.mxu0 0.0
    %5116 = vmatprep.subr.mxu0 0.0
    %5117 = vmatpush2.xpose.msra.mxu0 0.0
    %5118 = vmatprep.subr.mxu0 0.0
    %5119 = vmatpush2.xpose.msra.mxu0 0.0
    %5120 = vmatprep.subr.mxu0 0.0
    %5121 = vmatpush2.xpose.msra.mxu0 0.0
    %5122 = vmatprep.subr.mxu0 0.0
    %5123 = vmatpush2.xpose.msra.mxu0 0.0
    %5124 = vmatprep.subr.mxu0 0.0
    %5125 = vmatpush2.xpose.msra.mxu0 0.0
    %5126 = vmatprep.subr.mxu0 0.0
    %5127 = vmatpush2.xpose.msra.mxu0 0.0
    %5128 = vmatprep.subr.mxu0 0.0
    %5129 = vmatpush2.xpose.msra.mxu0 0.0
    %5130 = vmatprep.subr.mxu0 0.0
    %5131 = vmatpush2.xpose.msra.mxu0 0.0
    %5132 = vmatprep.subr.mxu0 0.0
    %5133 = vmatpush2.xpose.msra.mxu0 0.0
    %5134 = vmatprep.subr.mxu0 0.0
    %5135 = vmatpush2.xpose.msra.mxu0 0.0
    %5136 = vmatprep.subr.mxu0 0.0
    %5137 = vmatpush2.xpose.msra.mxu0 0.0
    %5138 = vmatprep.mubr.f32.mxu0 0.0
    %5139 = vmatmul.mubr.f32.gmra.mxu0 %v5063
    %v5140 = vpop.f32.mrf.mxu0
    %v5141 = vadd.f32 0.0, %v5140
    %v5142 = vpop.f32.mrf.mxu0
    %5143 = vmatprep.mubr.f32.mxu0 0.0
    %5144 = vmatmul.mubr.f32.gmra.mxu0 %v5066
    %v5145 = vpop.f32.mrf.mxu0
    %v5146 = vadd.f32 0.0, %v5145
    %v5147 = vpop.f32.mrf.mxu0
    %5148 = vdwg.mxu0
    %v5150 = vsel %vm960, %v4963, 0
    %v5153 = vsel %vm960, %v4964, 0
    %v5156 = vsel %vm960, %v3837, 0
    %v5159 = vsel %vm960, %v3842, 0
    %5161 = vmatprep.subr.mxu0 0.0
    %5162 = vmatpush1.xpose.msra.mxu0 0.0
    %5163 = vmatprep.subr.mxu0 0.0
    %5164 = vmatpush1.xpose.msra.mxu0 0.0
    %5165 = vmatprep.subr.mxu0 0.0
    %5166 = vmatpush1.xpose.msra.mxu0 0.0
    %5167 = vmatprep.subr.mxu0 0.0
    %5168 = vmatpush1.xpose.msra.mxu0 0.0
    %5169 = vmatprep.subr.mxu0 0.0
    %5170 = vmatpush1.xpose.msra.mxu0 0.0
    %5171 = vmatprep.subr.mxu0 0.0
    %5172 = vmatpush1.xpose.msra.mxu0 0.0
    %5173 = vmatprep.subr.mxu0 0.0
    %5174 = vmatpush1.xpose.msra.mxu0 0.0
    %5175 = vmatprep.subr.mxu0 0.0
    %5176 = vmatpush1.xpose.msra.mxu0 0.0
    %5177 = vmatprep.subr.mxu0 0.0
    %5178 = vmatpush1.xpose.msra.mxu0 0.0
    %5179 = vmatprep.subr.mxu0 0.0
    %5180 = vmatpush1.xpose.msra.mxu0 0.0
    %5181 = vmatprep.subr.mxu0 0.0
    %5182 = vmatpush1.xpose.msra.mxu0 0.0
    %5183 = vmatprep.subr.mxu0 0.0
    %5184 = vmatpush1.xpose.msra.mxu0 0.0
    %5185 = vmatprep.subr.mxu0 0.0
    %5186 = vmatpush1.xpose.msra.mxu0 0.0
    %5187 = vmatprep.subr.mxu0 0.0
    %5188 = vmatpush1.xpose.msra.mxu0 0.0
    %5189 = vmatprep.subr.mxu0 0.0
    %5190 = vmatpush1.xpose.msra.mxu0 %v5159
    %5191 = vmatprep.subr.mxu0 0.0
    %5192 = vmatpush1.xpose.msra.mxu0 %v5156
    %5193 = vmatprep.subr.mxu0 0.0
    %5194 = vmatpush2.xpose.msra.mxu0 0.0
    %5195 = vmatprep.subr.mxu0 0.0
    %5196 = vmatpush2.xpose.msra.mxu0 0.0
    %5197 = vmatprep.subr.mxu0 0.0
    %5198 = vmatpush2.xpose.msra.mxu0 0.0
    %5199 = vmatprep.subr.mxu0 0.0
    %5200 = vmatpush2.xpose.msra.mxu0 0.0
    %5201 = vmatprep.subr.mxu0 0.0
    %5202 = vmatpush2.xpose.msra.mxu0 0.0
    %5203 = vmatprep.subr.mxu0 0.0
    %5204 = vmatpush2.xpose.msra.mxu0 0.0
    %5205 = vmatprep.subr.mxu0 0.0
    %5206 = vmatpush2.xpose.msra.mxu0 0.0
    %5207 = vmatprep.subr.mxu0 0.0
    %5208 = vmatpush2.xpose.msra.mxu0 0.0
    %5209 = vmatprep.subr.mxu0 0.0
    %5210 = vmatpush2.xpose.msra.mxu0 0.0
    %5211 = vmatprep.subr.mxu0 0.0
    %5212 = vmatpush2.xpose.msra.mxu0 0.0
    %5213 = vmatprep.subr.mxu0 0.0
    %5214 = vmatpush2.xpose.msra.mxu0 0.0
    %5215 = vmatprep.subr.mxu0 0.0
    %5216 = vmatpush2.xpose.msra.mxu0 0.0
    %5217 = vmatprep.subr.mxu0 0.0
    %5218 = vmatpush2.xpose.msra.mxu0 0.0
    %5219 = vmatprep.subr.mxu0 0.0
    %5220 = vmatpush2.xpose.msra.mxu0 0.0
    %5221 = vmatprep.subr.mxu0 0.0
    %5222 = vmatpush2.xpose.msra.mxu0 0.0
    %5223 = vmatprep.subr.mxu0 0.0
    %5224 = vmatpush2.xpose.msra.mxu0 0.0
    %5225 = vmatprep.mubr.f32.mxu0 0.0
    %5226 = vmatmul.mubr.f32.gmra.mxu0 %v5150
    %v5227 = vpop.f32.mrf.mxu0
    %v5228 = vadd.f32 0.0, %v5227
    %v5229 = vpop.f32.mrf.mxu0
    %5230 = vmatprep.mubr.f32.mxu0 0.0
    %5231 = vmatmul.mubr.f32.gmra.mxu0 %v5153
    %v5232 = vpop.f32.mrf.mxu0
    %v5233 = vadd.f32 0.0, %v5232
    %v5234 = vpop.f32.mrf.mxu0
    %5235 = vdwg.mxu0
    %v5237 = vsel %vm960, %v4965, 0
    %v5240 = vsel %vm960, %v4966, 0
    %v5243 = vsel %vm960, %v3847, 0
    %v5246 = vsel %vm960, %v3852, 0
    %5248 = vmatprep.subr.mxu0 0.0
    %5249 = vmatpush1.xpose.msra.mxu0 0.0
    %5250 = vmatprep.subr.mxu0 0.0
    %5251 = vmatpush1.xpose.msra.mxu0 0.0
    %5252 = vmatprep.subr.mxu0 0.0
    %5253 = vmatpush1.xpose.msra.mxu0 0.0
    %5254 = vmatprep.subr.mxu0 0.0
    %5255 = vmatpush1.xpose.msra.mxu0 0.0
    %5256 = vmatprep.subr.mxu0 0.0
    %5257 = vmatpush1.xpose.msra.mxu0 0.0
    %5258 = vmatprep.subr.mxu0 0.0
    %5259 = vmatpush1.xpose.msra.mxu0 0.0
    %5260 = vmatprep.subr.mxu0 0.0
    %5261 = vmatpush1.xpose.msra.mxu0 0.0
    %5262 = vmatprep.subr.mxu0 0.0
    %5263 = vmatpush1.xpose.msra.mxu0 0.0
    %5264 = vmatprep.subr.mxu0 0.0
    %5265 = vmatpush1.xpose.msra.mxu0 0.0
    %5266 = vmatprep.subr.mxu0 0.0
    %5267 = vmatpush1.xpose.msra.mxu0 0.0
    %5268 = vmatprep.subr.mxu0 0.0
    %5269 = vmatpush1.xpose.msra.mxu0 0.0
    %5270 = vmatprep.subr.mxu0 0.0
    %5271 = vmatpush1.xpose.msra.mxu0 0.0
    %5272 = vmatprep.subr.mxu0 0.0
    %5273 = vmatpush1.xpose.msra.mxu0 0.0
    %5274 = vmatprep.subr.mxu0 0.0
    %5275 = vmatpush1.xpose.msra.mxu0 0.0
    %5276 = vmatprep.subr.mxu0 0.0
    %5277 = vmatpush1.xpose.msra.mxu0 %v5246
    %5278 = vmatprep.subr.mxu0 0.0
    %5279 = vmatpush1.xpose.msra.mxu0 %v5243
    %5280 = vmatprep.subr.mxu0 0.0
    %5281 = vmatpush2.xpose.msra.mxu0 0.0
    %5282 = vmatprep.subr.mxu0 0.0
    %5283 = vmatpush2.xpose.msra.mxu0 0.0
    %5284 = vmatprep.subr.mxu0 0.0
    %5285 = vmatpush2.xpose.msra.mxu0 0.0
    %5286 = vmatprep.subr.mxu0 0.0
    %5287 = vmatpush2.xpose.msra.mxu0 0.0
    %5288 = vmatprep.subr.mxu0 0.0
    %5289 = vmatpush2.xpose.msra.mxu0 0.0
    %5290 = vmatprep.subr.mxu0 0.0
    %5291 = vmatpush2.xpose.msra.mxu0 0.0
    %5292 = vmatprep.subr.mxu0 0.0
    %5293 = vmatpush2.xpose.msra.mxu0 0.0
    %5294 = vmatprep.subr.mxu0 0.0
    %5295 = vmatpush2.xpose.msra.mxu0 0.0
    %5296 = vmatprep.subr.mxu0 0.0
    %5297 = vmatpush2.xpose.msra.mxu0 0.0
    %5298 = vmatprep.subr.mxu0 0.0
    %5299 = vmatpush2.xpose.msra.mxu0 0.0
    %5300 = vmatprep.subr.mxu0 0.0
    %5301 = vmatpush2.xpose.msra.mxu0 0.0
    %5302 = vmatprep.subr.mxu0 0.0
    %5303 = vmatpush2.xpose.msra.mxu0 0.0
    %5304 = vmatprep.subr.mxu0 0.0
    %5305 = vmatpush2.xpose.msra.mxu0 0.0
    %5306 = vmatprep.subr.mxu0 0.0
    %5307 = vmatpush2.xpose.msra.mxu0 0.0
    %5308 = vmatprep.subr.mxu0 0.0
    %5309 = vmatpush2.xpose.msra.mxu0 0.0
    %5310 = vmatprep.subr.mxu0 0.0
    %5311 = vmatpush2.xpose.msra.mxu0 0.0
    %5312 = vmatprep.mubr.f32.mxu0 0.0
    %5313 = vmatmul.mubr.f32.gmra.mxu0 %v5237
    %v5314 = vpop.f32.mrf.mxu0
    %v5315 = vadd.f32 0.0, %v5314
    %v5316 = vpop.f32.mrf.mxu0
    %5317 = vmatprep.mubr.f32.mxu0 0.0
    %5318 = vmatmul.mubr.f32.gmra.mxu0 %v5240
    %v5319 = vpop.f32.mrf.mxu0
    %v5320 = vadd.f32 0.0, %v5319
    %v5321 = vpop.f32.mrf.mxu0
    %5322 = vdwg.mxu0
    %v5324 = vsel %vm960, %v4967, 0
    %v5327 = vsel %vm960, %v4968, 0
    %v5330 = vsel %vm960, %v3857, 0
    %v5333 = vsel %vm960, %v3862, 0
    %5335 = vmatprep.subr.mxu0 0.0
    %5336 = vmatpush1.xpose.msra.mxu0 0.0
    %5337 = vmatprep.subr.mxu0 0.0
    %5338 = vmatpush1.xpose.msra.mxu0 0.0
    %5339 = vmatprep.subr.mxu0 0.0
    %5340 = vmatpush1.xpose.msra.mxu0 0.0
    %5341 = vmatprep.subr.mxu0 0.0
    %5342 = vmatpush1.xpose.msra.mxu0 0.0
    %5343 = vmatprep.subr.mxu0 0.0
    %5344 = vmatpush1.xpose.msra.mxu0 0.0
    %5345 = vmatprep.subr.mxu0 0.0
    %5346 = vmatpush1.xpose.msra.mxu0 0.0
    %5347 = vmatprep.subr.mxu0 0.0
    %5348 = vmatpush1.xpose.msra.mxu0 0.0
    %5349 = vmatprep.subr.mxu0 0.0
    %5350 = vmatpush1.xpose.msra.mxu0 0.0
    %5351 = vmatprep.subr.mxu0 0.0
    %5352 = vmatpush1.xpose.msra.mxu0 0.0
    %5353 = vmatprep.subr.mxu0 0.0
    %5354 = vmatpush1.xpose.msra.mxu0 0.0
    %5355 = vmatprep.subr.mxu0 0.0
    %5356 = vmatpush1.xpose.msra.mxu0 0.0
    %5357 = vmatprep.subr.mxu0 0.0
    %5358 = vmatpush1.xpose.msra.mxu0 0.0
    %5359 = vmatprep.subr.mxu0 0.0
    %5360 = vmatpush1.xpose.msra.mxu0 0.0
    %5361 = vmatprep.subr.mxu0 0.0
    %5362 = vmatpush1.xpose.msra.mxu0 0.0
    %5363 = vmatprep.subr.mxu0 0.0
    %5364 = vmatpush1.xpose.msra.mxu0 %v5333
    %5365 = vmatprep.subr.mxu0 0.0
    %5366 = vmatpush1.xpose.msra.mxu0 %v5330
    %5367 = vmatprep.subr.mxu0 0.0
    %5368 = vmatpush2.xpose.msra.mxu0 0.0
    %5369 = vmatprep.subr.mxu0 0.0
    %5370 = vmatpush2.xpose.msra.mxu0 0.0
    %5371 = vmatprep.subr.mxu0 0.0
    %5372 = vmatpush2.xpose.msra.mxu0 0.0
    %5373 = vmatprep.subr.mxu0 0.0
    %5374 = vmatpush2.xpose.msra.mxu0 0.0
    %5375 = vmatprep.subr.mxu0 0.0
    %5376 = vmatpush2.xpose.msra.mxu0 0.0
    %5377 = vmatprep.subr.mxu0 0.0
    %5378 = vmatpush2.xpose.msra.mxu0 0.0
    %5379 = vmatprep.subr.mxu0 0.0
    %5380 = vmatpush2.xpose.msra.mxu0 0.0
    %5381 = vmatprep.subr.mxu0 0.0
    %5382 = vmatpush2.xpose.msra.mxu0 0.0
    %5383 = vmatprep.subr.mxu0 0.0
    %5384 = vmatpush2.xpose.msra.mxu0 0.0
    %5385 = vmatprep.subr.mxu0 0.0
    %5386 = vmatpush2.xpose.msra.mxu0 0.0
    %5387 = vmatprep.subr.mxu0 0.0
    %5388 = vmatpush2.xpose.msra.mxu0 0.0
    %5389 = vmatprep.subr.mxu0 0.0
    %5390 = vmatpush2.xpose.msra.mxu0 0.0
    %5391 = vmatprep.subr.mxu0 0.0
    %5392 = vmatpush2.xpose.msra.mxu0 0.0
    %5393 = vmatprep.subr.mxu0 0.0
    %5394 = vmatpush2.xpose.msra.mxu0 0.0
    %5395 = vmatprep.subr.mxu0 0.0
    %5396 = vmatpush2.xpose.msra.mxu0 0.0
    %5397 = vmatprep.subr.mxu0 0.0
    %5398 = vmatpush2.xpose.msra.mxu0 0.0
    %5399 = vmatprep.mubr.f32.mxu0 0.0
    %5400 = vmatmul.mubr.f32.gmra.mxu0 %v5324
    %v5401 = vpop.f32.mrf.mxu0
    %v5402 = vadd.f32 0.0, %v5401
    %v5403 = vpop.f32.mrf.mxu0
    %5404 = vmatprep.mubr.f32.mxu0 0.0
    %5405 = vmatmul.mubr.f32.gmra.mxu0 %v5327
    %v5406 = vpop.f32.mrf.mxu0
    %v5407 = vadd.f32 0.0, %v5406
    %v5408 = vpop.f32.mrf.mxu0
    %5409 = vdwg.mxu0
    %v5411 = vsel %vm960, %v4969, 0
    %v5414 = vsel %vm960, %v4970, 0
    %v5417 = vsel %vm960, %v3867, 0
    %v5420 = vsel %vm960, %v3872, 0
    %5422 = vmatprep.subr.mxu0 0.0
    %5423 = vmatpush1.xpose.msra.mxu0 0.0
    %5424 = vmatprep.subr.mxu0 0.0
    %5425 = vmatpush1.xpose.msra.mxu0 0.0
    %5426 = vmatprep.subr.mxu0 0.0
    %5427 = vmatpush1.xpose.msra.mxu0 0.0
    %5428 = vmatprep.subr.mxu0 0.0
    %5429 = vmatpush1.xpose.msra.mxu0 0.0
    %5430 = vmatprep.subr.mxu0 0.0
    %5431 = vmatpush1.xpose.msra.mxu0 0.0
    %5432 = vmatprep.subr.mxu0 0.0
    %5433 = vmatpush1.xpose.msra.mxu0 0.0
    %5434 = vmatprep.subr.mxu0 0.0
    %5435 = vmatpush1.xpose.msra.mxu0 0.0
    %5436 = vmatprep.subr.mxu0 0.0
    %5437 = vmatpush1.xpose.msra.mxu0 0.0
    %5438 = vmatprep.subr.mxu0 0.0
    %5439 = vmatpush1.xpose.msra.mxu0 0.0
    %5440 = vmatprep.subr.mxu0 0.0
    %5441 = vmatpush1.xpose.msra.mxu0 0.0
    %5442 = vmatprep.subr.mxu0 0.0
    %5443 = vmatpush1.xpose.msra.mxu0 0.0
    %5444 = vmatprep.subr.mxu0 0.0
    %5445 = vmatpush1.xpose.msra.mxu0 0.0
    %5446 = vmatprep.subr.mxu0 0.0
    %5447 = vmatpush1.xpose.msra.mxu0 0.0
    %5448 = vmatprep.subr.mxu0 0.0
    %5449 = vmatpush1.xpose.msra.mxu0 0.0
    %5450 = vmatprep.subr.mxu0 0.0
    %5451 = vmatpush1.xpose.msra.mxu0 %v5420
    %5452 = vmatprep.subr.mxu0 0.0
    %5453 = vmatpush1.xpose.msra.mxu0 %v5417
    %5454 = vmatprep.subr.mxu0 0.0
    %5455 = vmatpush2.xpose.msra.mxu0 0.0
    %5456 = vmatprep.subr.mxu0 0.0
    %5457 = vmatpush2.xpose.msra.mxu0 0.0
    %5458 = vmatprep.subr.mxu0 0.0
    %5459 = vmatpush2.xpose.msra.mxu0 0.0
    %5460 = vmatprep.subr.mxu0 0.0
    %5461 = vmatpush2.xpose.msra.mxu0 0.0
    %5462 = vmatprep.subr.mxu0 0.0
    %5463 = vmatpush2.xpose.msra.mxu0 0.0
    %5464 = vmatprep.subr.mxu0 0.0
    %5465 = vmatpush2.xpose.msra.mxu0 0.0
    %5466 = vmatprep.subr.mxu0 0.0
    %5467 = vmatpush2.xpose.msra.mxu0 0.0
    %5468 = vmatprep.subr.mxu0 0.0
    %5469 = vmatpush2.xpose.msra.mxu0 0.0
    %5470 = vmatprep.subr.mxu0 0.0
    %5471 = vmatpush2.xpose.msra.mxu0 0.0
    %5472 = vmatprep.subr.mxu0 0.0
    %5473 = vmatpush2.xpose.msra.mxu0 0.0
    %5474 = vmatprep.subr.mxu0 0.0
    %5475 = vmatpush2.xpose.msra.mxu0 0.0
    %5476 = vmatprep.subr.mxu0 0.0
    %5477 = vmatpush2.xpose.msra.mxu0 0.0
    %5478 = vmatprep.subr.mxu0 0.0
    %5479 = vmatpush2.xpose.msra.mxu0 0.0
    %5480 = vmatprep.subr.mxu0 0.0
    %5481 = vmatpush2.xpose.msra.mxu0 0.0
    %5482 = vmatprep.subr.mxu0 0.0
    %5483 = vmatpush2.xpose.msra.mxu0 0.0
    %5484 = vmatprep.subr.mxu0 0.0
    %5485 = vmatpush2.xpose.msra.mxu0 0.0
    %5486 = vmatprep.mubr.f32.mxu0 0.0
    %5487 = vmatmul.mubr.f32.gmra.mxu0 %v5411
    %v5488 = vpop.f32.mrf.mxu0
    %v5489 = vadd.f32 0.0, %v5488
    %v5490 = vpop.f32.mrf.mxu0
    %5491 = vmatprep.mubr.f32.mxu0 0.0
    %5492 = vmatmul.mubr.f32.gmra.mxu0 %v5414
    %v5493 = vpop.f32.mrf.mxu0
    %v5494 = vadd.f32 0.0, %v5493
    %v5495 = vpop.f32.mrf.mxu0
    %5496 = vdwg.mxu0
    %v5498 = vsel %vm960, %v4971, 0
    %v5501 = vsel %vm960, %v4972, 0
    %v5504 = vsel %vm960, %v3877, 0
    %v5507 = vsel %vm960, %v3882, 0
    %5509 = vmatprep.subr.mxu0 0.0
    %5510 = vmatpush1.xpose.msra.mxu0 0.0
    %5511 = vmatprep.subr.mxu0 0.0
    %5512 = vmatpush1.xpose.msra.mxu0 0.0
    %5513 = vmatprep.subr.mxu0 0.0
    %5514 = vmatpush1.xpose.msra.mxu0 0.0
    %5515 = vmatprep.subr.mxu0 0.0
    %5516 = vmatpush1.xpose.msra.mxu0 0.0
    %5517 = vmatprep.subr.mxu0 0.0
    %5518 = vmatpush1.xpose.msra.mxu0 0.0
    %5519 = vmatprep.subr.mxu0 0.0
    %5520 = vmatpush1.xpose.msra.mxu0 0.0
    %5521 = vmatprep.subr.mxu0 0.0
    %5522 = vmatpush1.xpose.msra.mxu0 0.0
    %5523 = vmatprep.subr.mxu0 0.0
    %5524 = vmatpush1.xpose.msra.mxu0 0.0
    %5525 = vmatprep.subr.mxu0 0.0
    %5526 = vmatpush1.xpose.msra.mxu0 0.0
    %5527 = vmatprep.subr.mxu0 0.0
    %5528 = vmatpush1.xpose.msra.mxu0 0.0
    %5529 = vmatprep.subr.mxu0 0.0
    %5530 = vmatpush1.xpose.msra.mxu0 0.0
    %5531 = vmatprep.subr.mxu0 0.0
    %5532 = vmatpush1.xpose.msra.mxu0 0.0
    %5533 = vmatprep.subr.mxu0 0.0
    %5534 = vmatpush1.xpose.msra.mxu0 0.0
    %5535 = vmatprep.subr.mxu0 0.0
    %5536 = vmatpush1.xpose.msra.mxu0 0.0
    %5537 = vmatprep.subr.mxu0 0.0
    %5538 = vmatpush1.xpose.msra.mxu0 %v5507
    %5539 = vmatprep.subr.mxu0 0.0
    %5540 = vmatpush1.xpose.msra.mxu0 %v5504
    %5541 = vmatprep.subr.mxu0 0.0
    %5542 = vmatpush2.xpose.msra.mxu0 0.0
    %5543 = vmatprep.subr.mxu0 0.0
    %5544 = vmatpush2.xpose.msra.mxu0 0.0
    %5545 = vmatprep.subr.mxu0 0.0
    %5546 = vmatpush2.xpose.msra.mxu0 0.0
    %5547 = vmatprep.subr.mxu0 0.0
    %5548 = vmatpush2.xpose.msra.mxu0 0.0
    %5549 = vmatprep.subr.mxu0 0.0
    %5550 = vmatpush2.xpose.msra.mxu0 0.0
    %5551 = vmatprep.subr.mxu0 0.0
    %5552 = vmatpush2.xpose.msra.mxu0 0.0
    %5553 = vmatprep.subr.mxu0 0.0
    %5554 = vmatpush2.xpose.msra.mxu0 0.0
    %5555 = vmatprep.subr.mxu0 0.0
    %5556 = vmatpush2.xpose.msra.mxu0 0.0
    %5557 = vmatprep.subr.mxu0 0.0
    %5558 = vmatpush2.xpose.msra.mxu0 0.0
    %5559 = vmatprep.subr.mxu0 0.0
    %5560 = vmatpush2.xpose.msra.mxu0 0.0
    %5561 = vmatprep.subr.mxu0 0.0
    %5562 = vmatpush2.xpose.msra.mxu0 0.0
    %5563 = vmatprep.subr.mxu0 0.0
    %5564 = vmatpush2.xpose.msra.mxu0 0.0
    %5565 = vmatprep.subr.mxu0 0.0
    %5566 = vmatpush2.xpose.msra.mxu0 0.0
    %5567 = vmatprep.subr.mxu0 0.0
    %5568 = vmatpush2.xpose.msra.mxu0 0.0
    %5569 = vmatprep.subr.mxu0 0.0
    %5570 = vmatpush2.xpose.msra.mxu0 0.0
    %5571 = vmatprep.subr.mxu0 0.0
    %5572 = vmatpush2.xpose.msra.mxu0 0.0
    %5573 = vmatprep.mubr.f32.mxu0 0.0
    %5574 = vmatmul.mubr.f32.gmra.mxu0 %v5498
    %v5575 = vpop.f32.mrf.mxu0
    %v5576 = vadd.f32 0.0, %v5575
    %v5577 = vpop.f32.mrf.mxu0
    %5578 = vmatprep.mubr.f32.mxu0 0.0
    %5579 = vmatmul.mubr.f32.gmra.mxu0 %v5501
    %v5580 = vpop.f32.mrf.mxu0
    %v5581 = vadd.f32 0.0, %v5580
    %v5582 = vpop.f32.mrf.mxu0
    %5583 = vdwg.mxu0
    %v5585 = vsel %vm960, %v4973, 0
    %v5588 = vsel %vm960, %v4974, 0
    %v5591 = vsel %vm960, %v3887, 0
    %v5594 = vsel %vm960, %v3892, 0
    %5596 = vmatprep.subr.mxu0 0.0
    %5597 = vmatpush1.xpose.msra.mxu0 0.0
    %5598 = vmatprep.subr.mxu0 0.0
    %5599 = vmatpush1.xpose.msra.mxu0 0.0
    %5600 = vmatprep.subr.mxu0 0.0
    %5601 = vmatpush1.xpose.msra.mxu0 0.0
    %5602 = vmatprep.subr.mxu0 0.0
    %5603 = vmatpush1.xpose.msra.mxu0 0.0
    %5604 = vmatprep.subr.mxu0 0.0
    %5605 = vmatpush1.xpose.msra.mxu0 0.0
    %5606 = vmatprep.subr.mxu0 0.0
    %5607 = vmatpush1.xpose.msra.mxu0 0.0
    %5608 = vmatprep.subr.mxu0 0.0
    %5609 = vmatpush1.xpose.msra.mxu0 0.0
    %5610 = vmatprep.subr.mxu0 0.0
    %5611 = vmatpush1.xpose.msra.mxu0 0.0
    %5612 = vmatprep.subr.mxu0 0.0
    %5613 = vmatpush1.xpose.msra.mxu0 0.0
    %5614 = vmatprep.subr.mxu0 0.0
    %5615 = vmatpush1.xpose.msra.mxu0 0.0
    %5616 = vmatprep.subr.mxu0 0.0
    %5617 = vmatpush1.xpose.msra.mxu0 0.0
    %5618 = vmatprep.subr.mxu0 0.0
    %5619 = vmatpush1.xpose.msra.mxu0 0.0
    %5620 = vmatprep.subr.mxu0 0.0
    %5621 = vmatpush1.xpose.msra.mxu0 0.0
    %5622 = vmatprep.subr.mxu0 0.0
    %5623 = vmatpush1.xpose.msra.mxu0 0.0
    %5624 = vmatprep.subr.mxu0 0.0
    %5625 = vmatpush1.xpose.msra.mxu0 %v5594
    %5626 = vmatprep.subr.mxu0 0.0
    %5627 = vmatpush1.xpose.msra.mxu0 %v5591
    %5628 = vmatprep.subr.mxu0 0.0
    %5629 = vmatpush2.xpose.msra.mxu0 0.0
    %5630 = vmatprep.subr.mxu0 0.0
    %5631 = vmatpush2.xpose.msra.mxu0 0.0
    %5632 = vmatprep.subr.mxu0 0.0
    %5633 = vmatpush2.xpose.msra.mxu0 0.0
    %5634 = vmatprep.subr.mxu0 0.0
    %5635 = vmatpush2.xpose.msra.mxu0 0.0
    %5636 = vmatprep.subr.mxu0 0.0
    %5637 = vmatpush2.xpose.msra.mxu0 0.0
    %5638 = vmatprep.subr.mxu0 0.0
    %5639 = vmatpush2.xpose.msra.mxu0 0.0
    %5640 = vmatprep.subr.mxu0 0.0
    %5641 = vmatpush2.xpose.msra.mxu0 0.0
    %5642 = vmatprep.subr.mxu0 0.0
    %5643 = vmatpush2.xpose.msra.mxu0 0.0
    %5644 = vmatprep.subr.mxu0 0.0
    %5645 = vmatpush2.xpose.msra.mxu0 0.0
    %5646 = vmatprep.subr.mxu0 0.0
    %5647 = vmatpush2.xpose.msra.mxu0 0.0
    %5648 = vmatprep.subr.mxu0 0.0
    %5649 = vmatpush2.xpose.msra.mxu0 0.0
    %5650 = vmatprep.subr.mxu0 0.0
    %5651 = vmatpush2.xpose.msra.mxu0 0.0
    %5652 = vmatprep.subr.mxu0 0.0
    %5653 = vmatpush2.xpose.msra.mxu0 0.0
    %5654 = vmatprep.subr.mxu0 0.0
    %5655 = vmatpush2.xpose.msra.mxu0 0.0
    %5656 = vmatprep.subr.mxu0 0.0
    %5657 = vmatpush2.xpose.msra.mxu0 0.0
    %5658 = vmatprep.subr.mxu0 0.0
    %5659 = vmatpush2.xpose.msra.mxu0 0.0
    %5660 = vmatprep.mubr.f32.mxu0 0.0
    %5661 = vmatmul.mubr.f32.gmra.mxu0 %v5585
    %v5662 = vpop.f32.mrf.mxu0
    %v5663 = vadd.f32 0.0, %v5662
    %v5664 = vpop.f32.mrf.mxu0
    %5665 = vmatprep.mubr.f32.mxu0 0.0
    %5666 = vmatmul.mubr.f32.gmra.mxu0 %v5588
    %v5667 = vpop.f32.mrf.mxu0
    %v5668 = vadd.f32 0.0, %v5667
    %v5669 = vpop.f32.mrf.mxu0
    %5670 = vdwg.mxu0
    %s5671 = scalar_lea.vmem [#allocation5], 128
    %v5672 = vld [vmem:[%s5671] sm:$0xff]
    %v5673 = vld [vmem:[%s5671 + $0x8] sm:$0xff]
    %v5674 = vld [vmem:[%s5671 + $0x10] sm:$0xff]
    %v5675 = vld [vmem:[%s5671 + $0x18] sm:$0xff]
    %v5676 = vld [vmem:[%s5671 + $0x20] sm:$0xff]
    %v5677 = vld [vmem:[%s5671 + $0x28] sm:$0xff]
    %v5678 = vld [vmem:[%s5671 + $0x30] sm:$0xff]
    %v5679 = vld [vmem:[%s5671 + $0x38] sm:$0xff]
    %v5680 = vld [vmem:[%s5671 + $0x40] sm:$0xff]
    %v5681 = vld [vmem:[%s5671 + $0x48] sm:$0xff]
    %v5682 = vld [vmem:[%s5671 + $0x50] sm:$0xff]
    %v5683 = vld [vmem:[%s5671 + $0x58] sm:$0xff]
    %v5684 = vld [vmem:[%s5671 + $0x60] sm:$0xff]
    %v5685 = vld [vmem:[%s5671 + $0x68] sm:$0xff]
    %v5686 = vld [vmem:[%s5671 + $0x70] sm:$0xff]
    %v5687 = vld [vmem:[%s5671 + $0x78] sm:$0xff]
    %v5689 = vsel %vm960, %v5054, 0
    %v5692 = vsel %vm960, %v5059, 0
    %5694 = vmatprep.subr.mxu0 0.0
    %5695 = vmatpush1.msra.mxu0 0.0
    %5696 = vmatprep.subr.mxu0 0.0
    %5697 = vmatpush1.msra.mxu0 0.0
    %5698 = vmatprep.subr.mxu0 0.0
    %5699 = vmatpush1.msra.mxu0 0.0
    %5700 = vmatprep.subr.mxu0 0.0
    %5701 = vmatpush1.msra.mxu0 0.0
    %5702 = vmatprep.subr.mxu0 0.0
    %5703 = vmatpush1.msra.mxu0 0.0
    %5704 = vmatprep.subr.mxu0 0.0
    %5705 = vmatpush1.msra.mxu0 0.0
    %5706 = vmatprep.subr.mxu0 0.0
    %5707 = vmatpush1.msra.mxu0 0.0
    %5708 = vmatprep.subr.mxu0 0.0
    %5709 = vmatpush1.msra.mxu0 0.0
    %5710 = vmatprep.subr.mxu0 0.0
    %5711 = vmatpush1.msra.mxu0 0.0
    %5712 = vmatprep.subr.mxu0 0.0
    %5713 = vmatpush1.msra.mxu0 0.0
    %5714 = vmatprep.subr.mxu0 0.0
    %5715 = vmatpush1.msra.mxu0 0.0
    %5716 = vmatprep.subr.mxu0 0.0
    %5717 = vmatpush1.msra.mxu0 0.0
    %5718 = vmatprep.subr.mxu0 0.0
    %5719 = vmatpush1.msra.mxu0 0.0
    %5720 = vmatprep.subr.mxu0 0.0
    %5721 = vmatpush1.msra.mxu0 0.0
    %5722 = vmatprep.subr.mxu0 0.0
    %5723 = vmatpush1.msra.mxu0 %v5673
    %5724 = vmatprep.subr.mxu0 0.0
    %5725 = vmatpush1.msra.mxu0 %v5672
    %5726 = vmatprep.subr.mxu0 0.0
    %5727 = vmatpush2.msra.mxu0 0.0
    %5728 = vmatprep.subr.mxu0 0.0
    %5729 = vmatpush2.msra.mxu0 0.0
    %5730 = vmatprep.subr.mxu0 0.0
    %5731 = vmatpush2.msra.mxu0 0.0
    %5732 = vmatprep.subr.mxu0 0.0
    %5733 = vmatpush2.msra.mxu0 0.0
    %5734 = vmatprep.subr.mxu0 0.0
    %5735 = vmatpush2.msra.mxu0 0.0
    %5736 = vmatprep.subr.mxu0 0.0
    %5737 = vmatpush2.msra.mxu0 0.0
    %5738 = vmatprep.subr.mxu0 0.0
    %5739 = vmatpush2.msra.mxu0 0.0
    %5740 = vmatprep.subr.mxu0 0.0
    %5741 = vmatpush2.msra.mxu0 0.0
    %5742 = vmatprep.subr.mxu0 0.0
    %5743 = vmatpush2.msra.mxu0 0.0
    %5744 = vmatprep.subr.mxu0 0.0
    %5745 = vmatpush2.msra.mxu0 0.0
    %5746 = vmatprep.subr.mxu0 0.0
    %5747 = vmatpush2.msra.mxu0 0.0
    %5748 = vmatprep.subr.mxu0 0.0
    %5749 = vmatpush2.msra.mxu0 0.0
    %5750 = vmatprep.subr.mxu0 0.0
    %5751 = vmatpush2.msra.mxu0 0.0
    %5752 = vmatprep.subr.mxu0 0.0
    %5753 = vmatpush2.msra.mxu0 0.0
    %5754 = vmatprep.subr.mxu0 0.0
    %5755 = vmatpush2.msra.mxu0 0.0
    %5756 = vmatprep.subr.mxu0 0.0
    %5757 = vmatpush2.msra.mxu0 0.0
    %5758 = vmatprep.mubr.f32.mxu0 0.0
    %5759 = vmatmul.mubr.f32.gmra.mxu0 %v5689
    %v5760 = vpop.f32.mrf.mxu0
    %v5761 = vadd.f32 0.0, %v5760
    %v5762 = vpop.f32.mrf.mxu0
    %5763 = vmatprep.mubr.f32.mxu0 0.0
    %5764 = vmatmul.mubr.f32.gmra.mxu0 %v5692
    %v5765 = vpop.f32.mrf.mxu0
    %v5766 = vadd.f32 0.0, %v5765
    %v5767 = vpop.f32.mrf.mxu0
    %5768 = vdwg.mxu0
    %v5770 = vsel %vm960, %v5141, 0
    %v5773 = vsel %vm960, %v5146, 0
    %5775 = vmatprep.subr.mxu0 0.0
    %5776 = vmatpush1.msra.mxu0 0.0
    %5777 = vmatprep.subr.mxu0 0.0
    %5778 = vmatpush1.msra.mxu0 0.0
    %5779 = vmatprep.subr.mxu0 0.0
    %5780 = vmatpush1.msra.mxu0 0.0
    %5781 = vmatprep.subr.mxu0 0.0
    %5782 = vmatpush1.msra.mxu0 0.0
    %5783 = vmatprep.subr.mxu0 0.0
    %5784 = vmatpush1.msra.mxu0 0.0
    %5785 = vmatprep.subr.mxu0 0.0
    %5786 = vmatpush1.msra.mxu0 0.0
    %5787 = vmatprep.subr.mxu0 0.0
    %5788 = vmatpush1.msra.mxu0 0.0
    %5789 = vmatprep.subr.mxu0 0.0
    %5790 = vmatpush1.msra.mxu0 0.0
    %5791 = vmatprep.subr.mxu0 0.0
    %5792 = vmatpush1.msra.mxu0 0.0
    %5793 = vmatprep.subr.mxu0 0.0
    %5794 = vmatpush1.msra.mxu0 0.0
    %5795 = vmatprep.subr.mxu0 0.0
    %5796 = vmatpush1.msra.mxu0 0.0
    %5797 = vmatprep.subr.mxu0 0.0
    %5798 = vmatpush1.msra.mxu0 0.0
    %5799 = vmatprep.subr.mxu0 0.0
    %5800 = vmatpush1.msra.mxu0 0.0
    %5801 = vmatprep.subr.mxu0 0.0
    %5802 = vmatpush1.msra.mxu0 0.0
    %5803 = vmatprep.subr.mxu0 0.0
    %5804 = vmatpush1.msra.mxu0 %v5675
    %5805 = vmatprep.subr.mxu0 0.0
    %5806 = vmatpush1.msra.mxu0 %v5674
    %5807 = vmatprep.subr.mxu0 0.0
    %5808 = vmatpush2.msra.mxu0 0.0
    %5809 = vmatprep.subr.mxu0 0.0
    %5810 = vmatpush2.msra.mxu0 0.0
    %5811 = vmatprep.subr.mxu0 0.0
    %5812 = vmatpush2.msra.mxu0 0.0
    %5813 = vmatprep.subr.mxu0 0.0
    %5814 = vmatpush2.msra.mxu0 0.0
    %5815 = vmatprep.subr.mxu0 0.0
    %5816 = vmatpush2.msra.mxu0 0.0
    %5817 = vmatprep.subr.mxu0 0.0
    %5818 = vmatpush2.msra.mxu0 0.0
    %5819 = vmatprep.subr.mxu0 0.0
    %5820 = vmatpush2.msra.mxu0 0.0
    %5821 = vmatprep.subr.mxu0 0.0
    %5822 = vmatpush2.msra.mxu0 0.0
    %5823 = vmatprep.subr.mxu0 0.0
    %5824 = vmatpush2.msra.mxu0 0.0
    %5825 = vmatprep.subr.mxu0 0.0
    %5826 = vmatpush2.msra.mxu0 0.0
    %5827 = vmatprep.subr.mxu0 0.0
    %5828 = vmatpush2.msra.mxu0 0.0
    %5829 = vmatprep.subr.mxu0 0.0
    %5830 = vmatpush2.msra.mxu0 0.0
    %5831 = vmatprep.subr.mxu0 0.0
    %5832 = vmatpush2.msra.mxu0 0.0
    %5833 = vmatprep.subr.mxu0 0.0
    %5834 = vmatpush2.msra.mxu0 0.0
    %5835 = vmatprep.subr.mxu0 0.0
    %5836 = vmatpush2.msra.mxu0 0.0
    %5837 = vmatprep.subr.mxu0 0.0
    %5838 = vmatpush2.msra.mxu0 0.0
    %5839 = vmatprep.mubr.f32.mxu0 0.0
    %5840 = vmatmul.mubr.f32.gmra.mxu0 %v5770
    %v5841 = vpop.f32.mrf.mxu0
    %v5842 = vadd.f32 0.0, %v5841
    %v5843 = vpop.f32.mrf.mxu0
    %5844 = vmatprep.mubr.f32.mxu0 0.0
    %5845 = vmatmul.mubr.f32.gmra.mxu0 %v5773
    %v5846 = vpop.f32.mrf.mxu0
    %v5847 = vadd.f32 0.0, %v5846
    %v5848 = vpop.f32.mrf.mxu0
    %5849 = vdwg.mxu0
    %v5851 = vsel %vm960, %v5228, 0
    %v5854 = vsel %vm960, %v5233, 0
    %5856 = vmatprep.subr.mxu0 0.0
    %5857 = vmatpush1.msra.mxu0 0.0
    %5858 = vmatprep.subr.mxu0 0.0
    %5859 = vmatpush1.msra.mxu0 0.0
    %5860 = vmatprep.subr.mxu0 0.0
    %5861 = vmatpush1.msra.mxu0 0.0
    %5862 = vmatprep.subr.mxu0 0.0
    %5863 = vmatpush1.msra.mxu0 0.0
    %5864 = vmatprep.subr.mxu0 0.0
    %5865 = vmatpush1.msra.mxu0 0.0
    %5866 = vmatprep.subr.mxu0 0.0
    %5867 = vmatpush1.msra.mxu0 0.0
    %5868 = vmatprep.subr.mxu0 0.0
    %5869 = vmatpush1.msra.mxu0 0.0
    %5870 = vmatprep.subr.mxu0 0.0
    %5871 = vmatpush1.msra.mxu0 0.0
    %5872 = vmatprep.subr.mxu0 0.0
    %5873 = vmatpush1.msra.mxu0 0.0
    %5874 = vmatprep.subr.mxu0 0.0
    %5875 = vmatpush1.msra.mxu0 0.0
    %5876 = vmatprep.subr.mxu0 0.0
    %5877 = vmatpush1.msra.mxu0 0.0
    %5878 = vmatprep.subr.mxu0 0.0
    %5879 = vmatpush1.msra.mxu0 0.0
    %5880 = vmatprep.subr.mxu0 0.0
    %5881 = vmatpush1.msra.mxu0 0.0
    %5882 = vmatprep.subr.mxu0 0.0
    %5883 = vmatpush1.msra.mxu0 0.0
    %5884 = vmatprep.subr.mxu0 0.0
    %5885 = vmatpush1.msra.mxu0 %v5677
    %5886 = vmatprep.subr.mxu0 0.0
    %5887 = vmatpush1.msra.mxu0 %v5676
    %5888 = vmatprep.subr.mxu0 0.0
    %5889 = vmatpush2.msra.mxu0 0.0
    %5890 = vmatprep.subr.mxu0 0.0
    %5891 = vmatpush2.msra.mxu0 0.0
    %5892 = vmatprep.subr.mxu0 0.0
    %5893 = vmatpush2.msra.mxu0 0.0
    %5894 = vmatprep.subr.mxu0 0.0
    %5895 = vmatpush2.msra.mxu0 0.0
    %5896 = vmatprep.subr.mxu0 0.0
    %5897 = vmatpush2.msra.mxu0 0.0
    %5898 = vmatprep.subr.mxu0 0.0
    %5899 = vmatpush2.msra.mxu0 0.0
    %5900 = vmatprep.subr.mxu0 0.0
    %5901 = vmatpush2.msra.mxu0 0.0
    %5902 = vmatprep.subr.mxu0 0.0
    %5903 = vmatpush2.msra.mxu0 0.0
    %5904 = vmatprep.subr.mxu0 0.0
    %5905 = vmatpush2.msra.mxu0 0.0
    %5906 = vmatprep.subr.mxu0 0.0
    %5907 = vmatpush2.msra.mxu0 0.0
    %5908 = vmatprep.subr.mxu0 0.0
    %5909 = vmatpush2.msra.mxu0 0.0
    %5910 = vmatprep.subr.mxu0 0.0
    %5911 = vmatpush2.msra.mxu0 0.0
    %5912 = vmatprep.subr.mxu0 0.0
    %5913 = vmatpush2.msra.mxu0 0.0
    %5914 = vmatprep.subr.mxu0 0.0
    %5915 = vmatpush2.msra.mxu0 0.0
    %5916 = vmatprep.subr.mxu0 0.0
    %5917 = vmatpush2.msra.mxu0 0.0
    %5918 = vmatprep.subr.mxu0 0.0
    %5919 = vmatpush2.msra.mxu0 0.0
    %5920 = vmatprep.mubr.f32.mxu0 0.0
    %5921 = vmatmul.mubr.f32.gmra.mxu0 %v5851
    %v5922 = vpop.f32.mrf.mxu0
    %v5923 = vadd.f32 0.0, %v5922
    %v5924 = vpop.f32.mrf.mxu0
    %5925 = vmatprep.mubr.f32.mxu0 0.0
    %5926 = vmatmul.mubr.f32.gmra.mxu0 %v5854
    %v5927 = vpop.f32.mrf.mxu0
    %v5928 = vadd.f32 0.0, %v5927
    %v5929 = vpop.f32.mrf.mxu0
    %5930 = vdwg.mxu0
    %v5932 = vsel %vm960, %v5315, 0
    %v5935 = vsel %vm960, %v5320, 0
    %5937 = vmatprep.subr.mxu0 0.0
    %5938 = vmatpush1.msra.mxu0 0.0
    %5939 = vmatprep.subr.mxu0 0.0
    %5940 = vmatpush1.msra.mxu0 0.0
    %5941 = vmatprep.subr.mxu0 0.0
    %5942 = vmatpush1.msra.mxu0 0.0
    %5943 = vmatprep.subr.mxu0 0.0
    %5944 = vmatpush1.msra.mxu0 0.0
    %5945 = vmatprep.subr.mxu0 0.0
    %5946 = vmatpush1.msra.mxu0 0.0
    %5947 = vmatprep.subr.mxu0 0.0
    %5948 = vmatpush1.msra.mxu0 0.0
    %5949 = vmatprep.subr.mxu0 0.0
    %5950 = vmatpush1.msra.mxu0 0.0
    %5951 = vmatprep.subr.mxu0 0.0
    %5952 = vmatpush1.msra.mxu0 0.0
    %5953 = vmatprep.subr.mxu0 0.0
    %5954 = vmatpush1.msra.mxu0 0.0
    %5955 = vmatprep.subr.mxu0 0.0
    %5956 = vmatpush1.msra.mxu0 0.0
    %5957 = vmatprep.subr.mxu0 0.0
    %5958 = vmatpush1.msra.mxu0 0.0
    %5959 = vmatprep.subr.mxu0 0.0
    %5960 = vmatpush1.msra.mxu0 0.0
    %5961 = vmatprep.subr.mxu0 0.0
    %5962 = vmatpush1.msra.mxu0 0.0
    %5963 = vmatprep.subr.mxu0 0.0
    %5964 = vmatpush1.msra.mxu0 0.0
    %5965 = vmatprep.subr.mxu0 0.0
    %5966 = vmatpush1.msra.mxu0 %v5679
    %5967 = vmatprep.subr.mxu0 0.0
    %5968 = vmatpush1.msra.mxu0 %v5678
    %5969 = vmatprep.subr.mxu0 0.0
    %5970 = vmatpush2.msra.mxu0 0.0
    %5971 = vmatprep.subr.mxu0 0.0
    %5972 = vmatpush2.msra.mxu0 0.0
    %5973 = vmatprep.subr.mxu0 0.0
    %5974 = vmatpush2.msra.mxu0 0.0
    %5975 = vmatprep.subr.mxu0 0.0
    %5976 = vmatpush2.msra.mxu0 0.0
    %5977 = vmatprep.subr.mxu0 0.0
    %5978 = vmatpush2.msra.mxu0 0.0
    %5979 = vmatprep.subr.mxu0 0.0
    %5980 = vmatpush2.msra.mxu0 0.0
    %5981 = vmatprep.subr.mxu0 0.0
    %5982 = vmatpush2.msra.mxu0 0.0
    %5983 = vmatprep.subr.mxu0 0.0
    %5984 = vmatpush2.msra.mxu0 0.0
    %5985 = vmatprep.subr.mxu0 0.0
    %5986 = vmatpush2.msra.mxu0 0.0
    %5987 = vmatprep.subr.mxu0 0.0
    %5988 = vmatpush2.msra.mxu0 0.0
    %5989 = vmatprep.subr.mxu0 0.0
    %5990 = vmatpush2.msra.mxu0 0.0
    %5991 = vmatprep.subr.mxu0 0.0
    %5992 = vmatpush2.msra.mxu0 0.0
    %5993 = vmatprep.subr.mxu0 0.0
    %5994 = vmatpush2.msra.mxu0 0.0
    %5995 = vmatprep.subr.mxu0 0.0
    %5996 = vmatpush2.msra.mxu0 0.0
    %5997 = vmatprep.subr.mxu0 0.0
    %5998 = vmatpush2.msra.mxu0 0.0
    %5999 = vmatprep.subr.mxu0 0.0
    %6000 = vmatpush2.msra.mxu0 0.0
    %6001 = vmatprep.mubr.f32.mxu0 0.0
    %6002 = vmatmul.mubr.f32.gmra.mxu0 %v5932
    %v6003 = vpop.f32.mrf.mxu0
    %v6004 = vadd.f32 0.0, %v6003
    %v6005 = vpop.f32.mrf.mxu0
    %6006 = vmatprep.mubr.f32.mxu0 0.0
    %6007 = vmatmul.mubr.f32.gmra.mxu0 %v5935
    %v6008 = vpop.f32.mrf.mxu0
    %v6009 = vadd.f32 0.0, %v6008
    %v6010 = vpop.f32.mrf.mxu0
    %6011 = vdwg.mxu0
    %v6013 = vsel %vm960, %v5402, 0
    %v6016 = vsel %vm960, %v5407, 0
    %6018 = vmatprep.subr.mxu0 0.0
    %6019 = vmatpush1.msra.mxu0 0.0
    %6020 = vmatprep.subr.mxu0 0.0
    %6021 = vmatpush1.msra.mxu0 0.0
    %6022 = vmatprep.subr.mxu0 0.0
    %6023 = vmatpush1.msra.mxu0 0.0
    %6024 = vmatprep.subr.mxu0 0.0
    %6025 = vmatpush1.msra.mxu0 0.0
    %6026 = vmatprep.subr.mxu0 0.0
    %6027 = vmatpush1.msra.mxu0 0.0
    %6028 = vmatprep.subr.mxu0 0.0
    %6029 = vmatpush1.msra.mxu0 0.0
    %6030 = vmatprep.subr.mxu0 0.0
    %6031 = vmatpush1.msra.mxu0 0.0
    %6032 = vmatprep.subr.mxu0 0.0
    %6033 = vmatpush1.msra.mxu0 0.0
    %6034 = vmatprep.subr.mxu0 0.0
    %6035 = vmatpush1.msra.mxu0 0.0
    %6036 = vmatprep.subr.mxu0 0.0
    %6037 = vmatpush1.msra.mxu0 0.0
    %6038 = vmatprep.subr.mxu0 0.0
    %6039 = vmatpush1.msra.mxu0 0.0
    %6040 = vmatprep.subr.mxu0 0.0
    %6041 = vmatpush1.msra.mxu0 0.0
    %6042 = vmatprep.subr.mxu0 0.0
    %6043 = vmatpush1.msra.mxu0 0.0
    %6044 = vmatprep.subr.mxu0 0.0
    %6045 = vmatpush1.msra.mxu0 0.0
    %6046 = vmatprep.subr.mxu0 0.0
    %6047 = vmatpush1.msra.mxu0 %v5681
    %6048 = vmatprep.subr.mxu0 0.0
    %6049 = vmatpush1.msra.mxu0 %v5680
    %6050 = vmatprep.subr.mxu0 0.0
    %6051 = vmatpush2.msra.mxu0 0.0
    %6052 = vmatprep.subr.mxu0 0.0
    %6053 = vmatpush2.msra.mxu0 0.0
    %6054 = vmatprep.subr.mxu0 0.0
    %6055 = vmatpush2.msra.mxu0 0.0
    %6056 = vmatprep.subr.mxu0 0.0
    %6057 = vmatpush2.msra.mxu0 0.0
    %6058 = vmatprep.subr.mxu0 0.0
    %6059 = vmatpush2.msra.mxu0 0.0
    %6060 = vmatprep.subr.mxu0 0.0
    %6061 = vmatpush2.msra.mxu0 0.0
    %6062 = vmatprep.subr.mxu0 0.0
    %6063 = vmatpush2.msra.mxu0 0.0
    %6064 = vmatprep.subr.mxu0 0.0
    %6065 = vmatpush2.msra.mxu0 0.0
    %6066 = vmatprep.subr.mxu0 0.0
    %6067 = vmatpush2.msra.mxu0 0.0
    %6068 = vmatprep.subr.mxu0 0.0
    %6069 = vmatpush2.msra.mxu0 0.0
    %6070 = vmatprep.subr.mxu0 0.0
    %6071 = vmatpush2.msra.mxu0 0.0
    %6072 = vmatprep.subr.mxu0 0.0
    %6073 = vmatpush2.msra.mxu0 0.0
    %6074 = vmatprep.subr.mxu0 0.0
    %6075 = vmatpush2.msra.mxu0 0.0
    %6076 = vmatprep.subr.mxu0 0.0
    %6077 = vmatpush2.msra.mxu0 0.0
    %6078 = vmatprep.subr.mxu0 0.0
    %6079 = vmatpush2.msra.mxu0 0.0
    %6080 = vmatprep.subr.mxu0 0.0
    %6081 = vmatpush2.msra.mxu0 0.0
    %6082 = vmatprep.mubr.f32.mxu0 0.0
    %6083 = vmatmul.mubr.f32.gmra.mxu0 %v6013
    %v6084 = vpop.f32.mrf.mxu0
    %v6085 = vadd.f32 0.0, %v6084
    %v6086 = vpop.f32.mrf.mxu0
    %6087 = vmatprep.mubr.f32.mxu0 0.0
    %6088 = vmatmul.mubr.f32.gmra.mxu0 %v6016
    %v6089 = vpop.f32.mrf.mxu0
    %v6090 = vadd.f32 0.0, %v6089
    %v6091 = vpop.f32.mrf.mxu0
    %6092 = vdwg.mxu0
    %v6094 = vsel %vm960, %v5489, 0
    %v6097 = vsel %vm960, %v5494, 0
    %6099 = vmatprep.subr.mxu0 0.0
    %6100 = vmatpush1.msra.mxu0 0.0
    %6101 = vmatprep.subr.mxu0 0.0
    %6102 = vmatpush1.msra.mxu0 0.0
    %6103 = vmatprep.subr.mxu0 0.0
    %6104 = vmatpush1.msra.mxu0 0.0
    %6105 = vmatprep.subr.mxu0 0.0
    %6106 = vmatpush1.msra.mxu0 0.0
    %6107 = vmatprep.subr.mxu0 0.0
    %6108 = vmatpush1.msra.mxu0 0.0
    %6109 = vmatprep.subr.mxu0 0.0
    %6110 = vmatpush1.msra.mxu0 0.0
    %6111 = vmatprep.subr.mxu0 0.0
    %6112 = vmatpush1.msra.mxu0 0.0
    %6113 = vmatprep.subr.mxu0 0.0
    %6114 = vmatpush1.msra.mxu0 0.0
    %6115 = vmatprep.subr.mxu0 0.0
    %6116 = vmatpush1.msra.mxu0 0.0
    %6117 = vmatprep.subr.mxu0 0.0
    %6118 = vmatpush1.msra.mxu0 0.0
    %6119 = vmatprep.subr.mxu0 0.0
    %6120 = vmatpush1.msra.mxu0 0.0
    %6121 = vmatprep.subr.mxu0 0.0
    %6122 = vmatpush1.msra.mxu0 0.0
    %6123 = vmatprep.subr.mxu0 0.0
    %6124 = vmatpush1.msra.mxu0 0.0
    %6125 = vmatprep.subr.mxu0 0.0
    %6126 = vmatpush1.msra.mxu0 0.0
    %6127 = vmatprep.subr.mxu0 0.0
    %6128 = vmatpush1.msra.mxu0 %v5683
    %6129 = vmatprep.subr.mxu0 0.0
    %6130 = vmatpush1.msra.mxu0 %v5682
    %6131 = vmatprep.subr.mxu0 0.0
    %6132 = vmatpush2.msra.mxu0 0.0
    %6133 = vmatprep.subr.mxu0 0.0
    %6134 = vmatpush2.msra.mxu0 0.0
    %6135 = vmatprep.subr.mxu0 0.0
    %6136 = vmatpush2.msra.mxu0 0.0
    %6137 = vmatprep.subr.mxu0 0.0
    %6138 = vmatpush2.msra.mxu0 0.0
    %6139 = vmatprep.subr.mxu0 0.0
    %6140 = vmatpush2.msra.mxu0 0.0
    %6141 = vmatprep.subr.mxu0 0.0
    %6142 = vmatpush2.msra.mxu0 0.0
    %6143 = vmatprep.subr.mxu0 0.0
    %6144 = vmatpush2.msra.mxu0 0.0
    %6145 = vmatprep.subr.mxu0 0.0
    %6146 = vmatpush2.msra.mxu0 0.0
    %6147 = vmatprep.subr.mxu0 0.0
    %6148 = vmatpush2.msra.mxu0 0.0
    %6149 = vmatprep.subr.mxu0 0.0
    %6150 = vmatpush2.msra.mxu0 0.0
    %6151 = vmatprep.subr.mxu0 0.0
    %6152 = vmatpush2.msra.mxu0 0.0
    %6153 = vmatprep.subr.mxu0 0.0
    %6154 = vmatpush2.msra.mxu0 0.0
    %6155 = vmatprep.subr.mxu0 0.0
    %6156 = vmatpush2.msra.mxu0 0.0
    %6157 = vmatprep.subr.mxu0 0.0
    %6158 = vmatpush2.msra.mxu0 0.0
    %6159 = vmatprep.subr.mxu0 0.0
    %6160 = vmatpush2.msra.mxu0 0.0
    %6161 = vmatprep.subr.mxu0 0.0
    %6162 = vmatpush2.msra.mxu0 0.0
    %6163 = vmatprep.mubr.f32.mxu0 0.0
    %6164 = vmatmul.mubr.f32.gmra.mxu0 %v6094
    %v6165 = vpop.f32.mrf.mxu0
    %v6166 = vadd.f32 0.0, %v6165
    %v6167 = vpop.f32.mrf.mxu0
    %6168 = vmatprep.mubr.f32.mxu0 0.0
    %6169 = vmatmul.mubr.f32.gmra.mxu0 %v6097
    %v6170 = vpop.f32.mrf.mxu0
    %v6171 = vadd.f32 0.0, %v6170
    %v6172 = vpop.f32.mrf.mxu0
    %6173 = vdwg.mxu0
    %v6175 = vsel %vm960, %v5576, 0
    %v6178 = vsel %vm960, %v5581, 0
    %6180 = vmatprep.subr.mxu0 0.0
    %6181 = vmatpush1.msra.mxu0 0.0
    %6182 = vmatprep.subr.mxu0 0.0
    %6183 = vmatpush1.msra.mxu0 0.0
    %6184 = vmatprep.subr.mxu0 0.0
    %6185 = vmatpush1.msra.mxu0 0.0
    %6186 = vmatprep.subr.mxu0 0.0
    %6187 = vmatpush1.msra.mxu0 0.0
    %6188 = vmatprep.subr.mxu0 0.0
    %6189 = vmatpush1.msra.mxu0 0.0
    %6190 = vmatprep.subr.mxu0 0.0
    %6191 = vmatpush1.msra.mxu0 0.0
    %6192 = vmatprep.subr.mxu0 0.0
    %6193 = vmatpush1.msra.mxu0 0.0
    %6194 = vmatprep.subr.mxu0 0.0
    %6195 = vmatpush1.msra.mxu0 0.0
    %6196 = vmatprep.subr.mxu0 0.0
    %6197 = vmatpush1.msra.mxu0 0.0
    %6198 = vmatprep.subr.mxu0 0.0
    %6199 = vmatpush1.msra.mxu0 0.0
    %6200 = vmatprep.subr.mxu0 0.0
    %6201 = vmatpush1.msra.mxu0 0.0
    %6202 = vmatprep.subr.mxu0 0.0
    %6203 = vmatpush1.msra.mxu0 0.0
    %6204 = vmatprep.subr.mxu0 0.0
    %6205 = vmatpush1.msra.mxu0 0.0
    %6206 = vmatprep.subr.mxu0 0.0
    %6207 = vmatpush1.msra.mxu0 0.0
    %6208 = vmatprep.subr.mxu0 0.0
    %6209 = vmatpush1.msra.mxu0 %v5685
    %6210 = vmatprep.subr.mxu0 0.0
    %6211 = vmatpush1.msra.mxu0 %v5684
    %6212 = vmatprep.subr.mxu0 0.0
    %6213 = vmatpush2.msra.mxu0 0.0
    %6214 = vmatprep.subr.mxu0 0.0
    %6215 = vmatpush2.msra.mxu0 0.0
    %6216 = vmatprep.subr.mxu0 0.0
    %6217 = vmatpush2.msra.mxu0 0.0
    %6218 = vmatprep.subr.mxu0 0.0
    %6219 = vmatpush2.msra.mxu0 0.0
    %6220 = vmatprep.subr.mxu0 0.0
    %6221 = vmatpush2.msra.mxu0 0.0
    %6222 = vmatprep.subr.mxu0 0.0
    %6223 = vmatpush2.msra.mxu0 0.0
    %6224 = vmatprep.subr.mxu0 0.0
    %6225 = vmatpush2.msra.mxu0 0.0
    %6226 = vmatprep.subr.mxu0 0.0
    %6227 = vmatpush2.msra.mxu0 0.0
    %6228 = vmatprep.subr.mxu0 0.0
    %6229 = vmatpush2.msra.mxu0 0.0
    %6230 = vmatprep.subr.mxu0 0.0
    %6231 = vmatpush2.msra.mxu0 0.0
    %6232 = vmatprep.subr.mxu0 0.0
    %6233 = vmatpush2.msra.mxu0 0.0
    %6234 = vmatprep.subr.mxu0 0.0
    %6235 = vmatpush2.msra.mxu0 0.0
    %6236 = vmatprep.subr.mxu0 0.0
    %6237 = vmatpush2.msra.mxu0 0.0
    %6238 = vmatprep.subr.mxu0 0.0
    %6239 = vmatpush2.msra.mxu0 0.0
    %6240 = vmatprep.subr.mxu0 0.0
    %6241 = vmatpush2.msra.mxu0 0.0
    %6242 = vmatprep.subr.mxu0 0.0
    %6243 = vmatpush2.msra.mxu0 0.0
    %6244 = vmatprep.mubr.f32.mxu0 0.0
    %6245 = vmatmul.mubr.f32.gmra.mxu0 %v6175
    %v6246 = vpop.f32.mrf.mxu0
    %v6247 = vadd.f32 0.0, %v6246
    %v6248 = vpop.f32.mrf.mxu0
    %6249 = vmatprep.mubr.f32.mxu0 0.0
    %6250 = vmatmul.mubr.f32.gmra.mxu0 %v6178
    %v6251 = vpop.f32.mrf.mxu0
    %v6252 = vadd.f32 0.0, %v6251
    %v6253 = vpop.f32.mrf.mxu0
    %6254 = vdwg.mxu0
    %v6256 = vsel %vm960, %v5663, 0
    %v6259 = vsel %vm960, %v5668, 0
    %6261 = vmatprep.subr.mxu0 0.0
    %6262 = vmatpush1.msra.mxu0 0.0
    %6263 = vmatprep.subr.mxu0 0.0
    %6264 = vmatpush1.msra.mxu0 0.0
    %6265 = vmatprep.subr.mxu0 0.0
    %6266 = vmatpush1.msra.mxu0 0.0
    %6267 = vmatprep.subr.mxu0 0.0
    %6268 = vmatpush1.msra.mxu0 0.0
    %6269 = vmatprep.subr.mxu0 0.0
    %6270 = vmatpush1.msra.mxu0 0.0
    %6271 = vmatprep.subr.mxu0 0.0
    %6272 = vmatpush1.msra.mxu0 0.0
    %6273 = vmatprep.subr.mxu0 0.0
    %6274 = vmatpush1.msra.mxu0 0.0
    %6275 = vmatprep.subr.mxu0 0.0
    %6276 = vmatpush1.msra.mxu0 0.0
    %6277 = vmatprep.subr.mxu0 0.0
    %6278 = vmatpush1.msra.mxu0 0.0
    %6279 = vmatprep.subr.mxu0 0.0
    %6280 = vmatpush1.msra.mxu0 0.0
    %6281 = vmatprep.subr.mxu0 0.0
    %6282 = vmatpush1.msra.mxu0 0.0
    %6283 = vmatprep.subr.mxu0 0.0
    %6284 = vmatpush1.msra.mxu0 0.0
    %6285 = vmatprep.subr.mxu0 0.0
    %6286 = vmatpush1.msra.mxu0 0.0
    %6287 = vmatprep.subr.mxu0 0.0
    %6288 = vmatpush1.msra.mxu0 0.0
    %6289 = vmatprep.subr.mxu0 0.0
    %6290 = vmatpush1.msra.mxu0 %v5687
    %6291 = vmatprep.subr.mxu0 0.0
    %6292 = vmatpush1.msra.mxu0 %v5686
    %6293 = vmatprep.subr.mxu0 0.0
    %6294 = vmatpush2.msra.mxu0 0.0
    %6295 = vmatprep.subr.mxu0 0.0
    %6296 = vmatpush2.msra.mxu0 0.0
    %6297 = vmatprep.subr.mxu0 0.0
    %6298 = vmatpush2.msra.mxu0 0.0
    %6299 = vmatprep.subr.mxu0 0.0
    %6300 = vmatpush2.msra.mxu0 0.0
    %6301 = vmatprep.subr.mxu0 0.0
    %6302 = vmatpush2.msra.mxu0 0.0
    %6303 = vmatprep.subr.mxu0 0.0
    %6304 = vmatpush2.msra.mxu0 0.0
    %6305 = vmatprep.subr.mxu0 0.0
    %6306 = vmatpush2.msra.mxu0 0.0
    %6307 = vmatprep.subr.mxu0 0.0
    %6308 = vmatpush2.msra.mxu0 0.0
    %6309 = vmatprep.subr.mxu0 0.0
    %6310 = vmatpush2.msra.mxu0 0.0
    %6311 = vmatprep.subr.mxu0 0.0
    %6312 = vmatpush2.msra.mxu0 0.0
    %6313 = vmatprep.subr.mxu0 0.0
    %6314 = vmatpush2.msra.mxu0 0.0
    %6315 = vmatprep.subr.mxu0 0.0
    %6316 = vmatpush2.msra.mxu0 0.0
    %6317 = vmatprep.subr.mxu0 0.0
    %6318 = vmatpush2.msra.mxu0 0.0
    %6319 = vmatprep.subr.mxu0 0.0
    %6320 = vmatpush2.msra.mxu0 0.0
    %6321 = vmatprep.subr.mxu0 0.0
    %6322 = vmatpush2.msra.mxu0 0.0
    %6323 = vmatprep.subr.mxu0 0.0
    %6324 = vmatpush2.msra.mxu0 0.0
    %6325 = vmatprep.mubr.f32.mxu0 0.0
    %6326 = vmatmul.mubr.f32.gmra.mxu0 %v6256
    %v6327 = vpop.f32.mrf.mxu0
    %v6328 = vadd.f32 0.0, %v6327
    %v6329 = vpop.f32.mrf.mxu0
    %6330 = vmatprep.mubr.f32.mxu0 0.0
    %6331 = vmatmul.mubr.f32.gmra.mxu0 %v6259
    %v6332 = vpop.f32.mrf.mxu0
    %v6333 = vadd.f32 0.0, %v6332
    %v6334 = vpop.f32.mrf.mxu0
    %6335 = vdwg.mxu0
    %v6336 = vadd.f32 %v5761, %v5842
    %v6337 = vadd.f32 %v6336, %v5923
    %v6338 = vadd.f32 %v6337, %v6004
    %v6339 = vadd.f32 %v6338, %v6085
    %v6340 = vadd.f32 %v6339, %v6166
    %v6341 = vadd.f32 %v6340, %v6247
    %v6342 = vadd.f32 %v6341, %v6328
    %v6343 = vadd.f32 %v5766, %v5847
    %v6344 = vadd.f32 %v6343, %v5928
    %v6345 = vadd.f32 %v6344, %v6009
    %v6346 = vadd.f32 %v6345, %v6090
    %v6347 = vadd.f32 %v6346, %v6171
    %v6348 = vadd.f32 %v6347, %v6252
    %v6349 = vadd.f32 %v6348, %v6333
    %s6350 = scalar_lea.vmem [#allocation7], 1
    %v6351 = vld [vmem:[%s6350] sm:$0x1]
    %v6353 = vlaneseq
    %v6354 = vshrl.u32 %v6353, 7
    %v6355 = vsub.s32 0, %v6354
    %v6356 = vrot.slane %v6351, %v6355
    %v6358 = vadd.f32 %v6342, %v6356
    %v6359 = vadd.f32 %v6349, %v6356
    %v6360 = vadd.f32 %v3490, %v6358
    %v6361 = vadd.f32 %v3491, %v6359
    %s6362 = scalar_lea.vmem [#allocation8], 1
    %v6363 = vld [vmem:[%s6362] sm:$0x1]
    %s6364 = scalar_lea.vmem [#allocation10], 1
    %v6365 = vld [vmem:[%s6364] sm:$0x1]
    %6366 = vadd.xlane.f32.xlu0 %v6360
    %v6367 = vpop.xlane.xlu0 %6366
    %6368 = vadd.xlane.f32.xlu0 %v6361
    %v6369 = vpop.xlane.xlu0 %6368
    %v6370 = vmul.f32 %v6367, %v3176
    %v6371 = vmul.f32 %v6369, %v3176
    %v6372 = vsub.f32 %v6360, %v6370
    %v6373 = vsub.f32 %v6361, %v6371
    %v6374 = vmul.f32 %v6372, %v6372
    %v6375 = vmul.f32 %v6373, %v6373
    %6376 = vadd.xlane.f32.xlu0 %v6374
    %v6377 = vpop.xlane.xlu0 %6376
    %6378 = vadd.xlane.f32.xlu0 %v6375
    %v6379 = vpop.xlane.xlu0 %6378
    %v6380 = vmul.f32 %v6377, %v3176
    %v6381 = vmul.f32 %v6379, %v3176
    %v6382 = vadd.f32 %v6380, 1e-05
    %v6383 = vadd.f32 %v6381, 1e-05
    %v6384 = vrsqrt.pop %v6382
    %v6385 = vrsqrt.pop %v6383
    %v6386 = vmul.f32 %v6372, %v6384
    %v6387 = vmul.f32 %v6373, %v6385
    %v6389 = vlaneseq
    %v6390 = vshrl.u32 %v6389, 7
    %v6391 = vsub.s32 0, %v6390
    %v6392 = vrot.slane %v6363, %v6391
    %v6394 = vmul.f32 %v6386, %v6392
    %v6395 = vmul.f32 %v6387, %v6392
    %v6397 = vlaneseq
    %v6398 = vshrl.u32 %v6397, 7
    %v6399 = vsub.s32 0, %v6398
    %v6400 = vrot.slane %v6365, %v6399
    %v6402 = vadd.f32 %v6394, %v6400
    %v6403 = vadd.f32 %v6395, %v6400
    %s6404 = scalar_lea.vmem [#allocation11], 256
    %v6405 = vld [vmem:[%s6404] sm:$0xff]
    %v6406 = vld [vmem:[%s6404 + $0x8] sm:$0xff]
    %v6407 = vld [vmem:[%s6404 + $0x10] sm:$0xff]
    %v6408 = vld [vmem:[%s6404 + $0x18] sm:$0xff]
    %v6409 = vld [vmem:[%s6404 + $0x20] sm:$0xff]
    %v6410 = vld [vmem:[%s6404 + $0x28] sm:$0xff]
    %v6411 = vld [vmem:[%s6404 + $0x30] sm:$0xff]
    %v6412 = vld [vmem:[%s6404 + $0x38] sm:$0xff]
    %v6413 = vld [vmem:[%s6404 + $0x40] sm:$0xff]
    %v6414 = vld [vmem:[%s6404 + $0x48] sm:$0xff]
    %v6415 = vld [vmem:[%s6404 + $0x50] sm:$0xff]
    %v6416 = vld [vmem:[%s6404 + $0x58] sm:$0xff]
    %v6417 = vld [vmem:[%s6404 + $0x60] sm:$0xff]
    %v6418 = vld [vmem:[%s6404 + $0x68] sm:$0xff]
    %v6419 = vld [vmem:[%s6404 + $0x70] sm:$0xff]
    %v6420 = vld [vmem:[%s6404 + $0x78] sm:$0xff]
    %v6421 = vld [vmem:[%s6404 + $0x80] sm:$0xff]
    %v6422 = vld [vmem:[%s6404 + $0x88] sm:$0xff]
    %v6423 = vld [vmem:[%s6404 + $0x90] sm:$0xff]
    %v6424 = vld [vmem:[%s6404 + $0x98] sm:$0xff]
    %v6425 = vld [vmem:[%s6404 + $0xa0] sm:$0xff]
    %v6426 = vld [vmem:[%s6404 + $0xa8] sm:$0xff]
    %v6427 = vld [vmem:[%s6404 + $0xb0] sm:$0xff]
    %v6428 = vld [vmem:[%s6404 + $0xb8] sm:$0xff]
    %v6429 = vld [vmem:[%s6404 + $0xc0] sm:$0xff]
    %v6430 = vld [vmem:[%s6404 + $0xc8] sm:$0xff]
    %v6431 = vld [vmem:[%s6404 + $0xd0] sm:$0xff]
    %v6432 = vld [vmem:[%s6404 + $0xd8] sm:$0xff]
    %v6433 = vld [vmem:[%s6404 + $0xe0] sm:$0xff]
    %v6434 = vld [vmem:[%s6404 + $0xe8] sm:$0xff]
    %v6435 = vld [vmem:[%s6404 + $0xf0] sm:$0xff]
    %v6436 = vld [vmem:[%s6404 + $0xf8] sm:$0xff]
    %s6437 = scalar_lea.vmem %s12, 2
    %v6438 = vld [vmem:[%s6437] sm:$0x3]
    %v6440 = vlaneseq
    %v6441 = vshrl.u32 %v6440, 7
    %v6442 = vsub.s32 0, %v6441
    %v6443 = vrot.slane %v6438, %v6442
    %v6444 = vlaneseq
    %v6445 = vshrl.u32 %v6444, 7
    %v6446 = vsub.s32 1, %v6445
    %v6447 = vrot.slane %v6438, %v6446
    %6450 = vmatprep.subr.mxu0 %v6436
    %6451 = vmatpush1.msra.mxu0 %v6435
    %6452 = vmatprep.subr.mxu0 %v6434
    %6453 = vmatpush1.msra.mxu0 %v6433
    %6454 = vmatprep.subr.mxu0 %v6432
    %6455 = vmatpush1.msra.mxu0 %v6431
    %6456 = vmatprep.subr.mxu0 %v6430
    %6457 = vmatpush1.msra.mxu0 %v6429
    %6458 = vmatprep.subr.mxu0 %v6428
    %6459 = vmatpush1.msra.mxu0 %v6427
    %6460 = vmatprep.subr.mxu0 %v6426
    %6461 = vmatpush1.msra.mxu0 %v6425
    %6462 = vmatprep.subr.mxu0 %v6424
    %6463 = vmatpush1.msra.mxu0 %v6423
    %6464 = vmatprep.subr.mxu0 %v6422
    %6465 = vmatpush1.msra.mxu0 %v6421
    %6466 = vmatprep.subr.mxu0 %v6420
    %6467 = vmatpush1.msra.mxu0 %v6419
    %6468 = vmatprep.subr.mxu0 %v6418
    %6469 = vmatpush1.msra.mxu0 %v6417
    %6470 = vmatprep.subr.mxu0 %v6416
    %6471 = vmatpush1.msra.mxu0 %v6415
    %6472 = vmatprep.subr.mxu0 %v6414
    %6473 = vmatpush1.msra.mxu0 %v6413
    %6474 = vmatprep.subr.mxu0 %v6412
    %6475 = vmatpush1.msra.mxu0 %v6411
    %6476 = vmatprep.subr.mxu0 %v6410
    %6477 = vmatpush1.msra.mxu0 %v6409
    %6478 = vmatprep.subr.mxu0 %v6408
    %6479 = vmatpush1.msra.mxu0 %v6407
    %6480 = vmatprep.subr.mxu0 %v6406
    %6481 = vmatpush1.msra.mxu0 %v6405
    %6482 = vmatprep.subr.mxu0 0.0
    %6483 = vmatpush2.msra.mxu0 0.0
    %6484 = vmatprep.subr.mxu0 0.0
    %6485 = vmatpush2.msra.mxu0 0.0
    %6486 = vmatprep.subr.mxu0 0.0
    %6487 = vmatpush2.msra.mxu0 0.0
    %6488 = vmatprep.subr.mxu0 0.0
    %6489 = vmatpush2.msra.mxu0 0.0
    %6490 = vmatprep.subr.mxu0 0.0
    %6491 = vmatpush2.msra.mxu0 0.0
    %6492 = vmatprep.subr.mxu0 0.0
    %6493 = vmatpush2.msra.mxu0 0.0
    %6494 = vmatprep.subr.mxu0 0.0
    %6495 = vmatpush2.msra.mxu0 0.0
    %6496 = vmatprep.subr.mxu0 0.0
    %6497 = vmatpush2.msra.mxu0 0.0
    %6498 = vmatprep.subr.mxu0 0.0
    %6499 = vmatpush2.msra.mxu0 0.0
    %6500 = vmatprep.subr.mxu0 0.0
    %6501 = vmatpush2.msra.mxu0 0.0
    %6502 = vmatprep.subr.mxu0 0.0
    %6503 = vmatpush2.msra.mxu0 0.0
    %6504 = vmatprep.subr.mxu0 0.0
    %6505 = vmatpush2.msra.mxu0 0.0
    %6506 = vmatprep.subr.mxu0 0.0
    %6507 = vmatpush2.msra.mxu0 0.0
    %6508 = vmatprep.subr.mxu0 0.0
    %6509 = vmatpush2.msra.mxu0 0.0
    %6510 = vmatprep.subr.mxu0 0.0
    %6511 = vmatpush2.msra.mxu0 0.0
    %6512 = vmatprep.subr.mxu0 0.0
    %6513 = vmatpush2.msra.mxu0 0.0
    %6514 = vmatprep.mubr.f32.mxu0 0.0
    %6515 = vmatmul.mubr.f32.gmra.mxu0 %v6402
    %v6516 = vpop.f32.mrf.mxu0
    %v6517 = vadd.f32 %v6443, %v6516
    %v6518 = vpop.f32.mrf.mxu0
    %v6519 = vadd.f32 %v6447, %v6518
    %6520 = vmatprep.mubr.f32.mxu0 0.0
    %6521 = vmatmul.mubr.f32.gmra.mxu0 %v6403
    %v6522 = vpop.f32.mrf.mxu0
    %v6523 = vadd.f32 %v6443, %v6522
    %v6524 = vpop.f32.mrf.mxu0
    %v6525 = vadd.f32 %v6447, %v6524
    %6526 = vdwg.mxu0
    %v6527 = vmax.f32 %v6517, 0.0
    %v6528 = vmax.f32 %v6519, 0.0
    %v6529 = vmax.f32 %v6523, 0.0
    %v6530 = vmax.f32 %v6525, 0.0
    %s6531 = scalar_lea.vmem [#allocation13], 256
    %v6532 = vld [vmem:[%s6531] sm:$0xff]
    %v6533 = vld [vmem:[%s6531 + $0x8] sm:$0xff]
    %v6534 = vld [vmem:[%s6531 + $0x10] sm:$0xff]
    %v6535 = vld [vmem:[%s6531 + $0x18] sm:$0xff]
    %v6536 = vld [vmem:[%s6531 + $0x20] sm:$0xff]
    %v6537 = vld [vmem:[%s6531 + $0x28] sm:$0xff]
    %v6538 = vld [vmem:[%s6531 + $0x30] sm:$0xff]
    %v6539 = vld [vmem:[%s6531 + $0x38] sm:$0xff]
    %v6540 = vld [vmem:[%s6531 + $0x40] sm:$0xff]
    %v6541 = vld [vmem:[%s6531 + $0x48] sm:$0xff]
    %v6542 = vld [vmem:[%s6531 + $0x50] sm:$0xff]
    %v6543 = vld [vmem:[%s6531 + $0x58] sm:$0xff]
    %v6544 = vld [vmem:[%s6531 + $0x60] sm:$0xff]
    %v6545 = vld [vmem:[%s6531 + $0x68] sm:$0xff]
    %v6546 = vld [vmem:[%s6531 + $0x70] sm:$0xff]
    %v6547 = vld [vmem:[%s6531 + $0x78] sm:$0xff]
    %v6548 = vld [vmem:[%s6531 + $0x80] sm:$0xff]
    %v6549 = vld [vmem:[%s6531 + $0x88] sm:$0xff]
    %v6550 = vld [vmem:[%s6531 + $0x90] sm:$0xff]
    %v6551 = vld [vmem:[%s6531 + $0x98] sm:$0xff]
    %v6552 = vld [vmem:[%s6531 + $0xa0] sm:$0xff]
    %v6553 = vld [vmem:[%s6531 + $0xa8] sm:$0xff]
    %v6554 = vld [vmem:[%s6531 + $0xb0] sm:$0xff]
    %v6555 = vld [vmem:[%s6531 + $0xb8] sm:$0xff]
    %v6556 = vld [vmem:[%s6531 + $0xc0] sm:$0xff]
    %v6557 = vld [vmem:[%s6531 + $0xc8] sm:$0xff]
    %v6558 = vld [vmem:[%s6531 + $0xd0] sm:$0xff]
    %v6559 = vld [vmem:[%s6531 + $0xd8] sm:$0xff]
    %v6560 = vld [vmem:[%s6531 + $0xe0] sm:$0xff]
    %v6561 = vld [vmem:[%s6531 + $0xe8] sm:$0xff]
    %v6562 = vld [vmem:[%s6531 + $0xf0] sm:$0xff]
    %v6563 = vld [vmem:[%s6531 + $0xf8] sm:$0xff]
    %s6564 = scalar_lea.vmem [#allocation14], 1
    %v6565 = vld [vmem:[%s6564] sm:$0x1]
    %v6567 = vlaneseq
    %v6568 = vshrl.u32 %v6567, 7
    %v6569 = vsub.s32 0, %v6568
    %v6570 = vrot.slane %v6565, %v6569
    %6572 = vmatprep.subr.mxu0 0.0
    %6573 = vmatpush1.msra.mxu0 %v6547
    %6574 = vmatprep.subr.mxu0 0.0
    %6575 = vmatpush1.msra.mxu0 %v6546
    %6576 = vmatprep.subr.mxu0 0.0
    %6577 = vmatpush1.msra.mxu0 %v6545
    %6578 = vmatprep.subr.mxu0 0.0
    %6579 = vmatpush1.msra.mxu0 %v6544
    %6580 = vmatprep.subr.mxu0 0.0
    %6581 = vmatpush1.msra.mxu0 %v6543
    %6582 = vmatprep.subr.mxu0 0.0
    %6583 = vmatpush1.msra.mxu0 %v6542
    %6584 = vmatprep.subr.mxu0 0.0
    %6585 = vmatpush1.msra.mxu0 %v6541
    %6586 = vmatprep.subr.mxu0 0.0
    %6587 = vmatpush1.msra.mxu0 %v6540
    %6588 = vmatprep.subr.mxu0 0.0
    %6589 = vmatpush1.msra.mxu0 %v6539
    %6590 = vmatprep.subr.mxu0 0.0
    %6591 = vmatpush1.msra.mxu0 %v6538
    %6592 = vmatprep.subr.mxu0 0.0
    %6593 = vmatpush1.msra.mxu0 %v6537
    %6594 = vmatprep.subr.mxu0 0.0
    %6595 = vmatpush1.msra.mxu0 %v6536
    %6596 = vmatprep.subr.mxu0 0.0
    %6597 = vmatpush1.msra.mxu0 %v6535
    %6598 = vmatprep.subr.mxu0 0.0
    %6599 = vmatpush1.msra.mxu0 %v6534
    %6600 = vmatprep.subr.mxu0 0.0
    %6601 = vmatpush1.msra.mxu0 %v6533
    %6602 = vmatprep.subr.mxu0 0.0
    %6603 = vmatpush1.msra.mxu0 %v6532
    %6604 = vmatprep.subr.mxu0 0.0
    %6605 = vmatpush2.msra.mxu0 %v6563
    %6606 = vmatprep.subr.mxu0 0.0
    %6607 = vmatpush2.msra.mxu0 %v6562
    %6608 = vmatprep.subr.mxu0 0.0
    %6609 = vmatpush2.msra.mxu0 %v6561
    %6610 = vmatprep.subr.mxu0 0.0
    %6611 = vmatpush2.msra.mxu0 %v6560
    %6612 = vmatprep.subr.mxu0 0.0
    %6613 = vmatpush2.msra.mxu0 %v6559
    %6614 = vmatprep.subr.mxu0 0.0
    %6615 = vmatpush2.msra.mxu0 %v6558
    %6616 = vmatprep.subr.mxu0 0.0
    %6617 = vmatpush2.msra.mxu0 %v6557
    %6618 = vmatprep.subr.mxu0 0.0
    %6619 = vmatpush2.msra.mxu0 %v6556
    %6620 = vmatprep.subr.mxu0 0.0
    %6621 = vmatpush2.msra.mxu0 %v6555
    %6622 = vmatprep.subr.mxu0 0.0
    %6623 = vmatpush2.msra.mxu0 %v6554
    %6624 = vmatprep.subr.mxu0 0.0
    %6625 = vmatpush2.msra.mxu0 %v6553
    %6626 = vmatprep.subr.mxu0 0.0
    %6627 = vmatpush2.msra.mxu0 %v6552
    %6628 = vmatprep.subr.mxu0 0.0
    %6629 = vmatpush2.msra.mxu0 %v6551
    %6630 = vmatprep.subr.mxu0 0.0
    %6631 = vmatpush2.msra.mxu0 %v6550
    %6632 = vmatprep.subr.mxu0 0.0
    %6633 = vmatpush2.msra.mxu0 %v6549
    %6634 = vmatprep.subr.mxu0 0.0
    %6635 = vmatpush2.msra.mxu0 %v6548
    %6636 = vmatprep.mubr.f32.mxu0 %v6528
    %6637 = vmatmul.mubr.f32.gmra.mxu0 %v6527
    %v6638 = vpop.f32.mrf.mxu0
    %v6639 = vadd.f32 %v6570, %v6638
    %v6640 = vpop.f32.mrf.mxu0
    %6641 = vmatprep.mubr.f32.mxu0 %v6530
    %6642 = vmatmul.mubr.f32.gmra.mxu0 %v6529
    %v6643 = vpop.f32.mrf.mxu0
    %v6644 = vadd.f32 %v6570, %v6643
    %v6645 = vpop.f32.mrf.mxu0
    %6646 = vdwg.mxu0
    %v6647 = vadd.f32 %v6402, %v6639
    %v6648 = vadd.f32 %v6403, %v6644
    %s6649 = scalar_lea.vmem [#allocation16], 1
    %v6650 = vld [vmem:[%s6649] sm:$0x1]
    %s6651 = scalar_lea.vmem [#allocation17], 1
    %v6652 = vld [vmem:[%s6651] sm:$0x1]
    %6653 = vadd.xlane.f32.xlu0 %v6647
    %v6654 = vpop.xlane.xlu0 %6653
    %6655 = vadd.xlane.f32.xlu0 %v6648
    %v6656 = vpop.xlane.xlu0 %6655
    %v6657 = vmul.f32 %v6654, %v3176
    %v6658 = vmul.f32 %v6656, %v3176
    %v6659 = vsub.f32 %v6647, %v6657
    %v6660 = vsub.f32 %v6648, %v6658
    %v6661 = vmul.f32 %v6659, %v6659
    %v6662 = vmul.f32 %v6660, %v6660
    %6663 = vadd.xlane.f32.xlu0 %v6661
    %v6664 = vpop.xlane.xlu0 %6663
    %6665 = vadd.xlane.f32.xlu0 %v6662
    %v6666 = vpop.xlane.xlu0 %6665
    %v6667 = vmul.f32 %v6664, %v3176
    %v6668 = vmul.f32 %v6666, %v3176
    %v6669 = vadd.f32 %v6667, 1e-05
    %v6670 = vadd.f32 %v6668, 1e-05
    %v6671 = vrsqrt.pop %v6669
    %v6672 = vrsqrt.pop %v6670
    %v6673 = vmul.f32 %v6659, %v6671
    %v6674 = vmul.f32 %v6660, %v6672
    %v6676 = vlaneseq
    %v6677 = vshrl.u32 %v6676, 7
    %v6678 = vsub.s32 0, %v6677
    %v6679 = vrot.slane %v6650, %v6678
    %v6681 = vmul.f32 %v6673, %v6679
    %v6682 = vmul.f32 %v6674, %v6679
    %v6684 = vlaneseq
    %v6685 = vshrl.u32 %v6684, 7
    %v6686 = vsub.s32 0, %v6685
    %v6687 = vrot.slane %v6652, %v6686
    %v6689 = vadd.f32 %v6681, %v6687
    %v6690 = vadd.f32 %v6682, %v6687
    %v6691 = vld [vmem:[%s3] sm:$0x3]
    %v6693 = vsel %vm960, %v6691, 0
    %6695 = vmatprep.subr.mxu0 0.0
    %6696 = vmatpush1.msra.mxu0 0.0
    %6697 = vmatprep.subr.mxu0 0.0
    %6698 = vmatpush1.msra.mxu0 0.0
    %6699 = vmatprep.subr.mxu0 0.0
    %6700 = vmatpush1.msra.mxu0 0.0
    %6701 = vmatprep.subr.mxu0 0.0
    %6702 = vmatpush1.msra.mxu0 0.0
    %6703 = vmatprep.subr.mxu0 0.0
    %6704 = vmatpush1.msra.mxu0 0.0
    %6705 = vmatprep.subr.mxu0 0.0
    %6706 = vmatpush1.msra.mxu0 0.0
    %6707 = vmatprep.subr.mxu0 0.0
    %6708 = vmatpush1.msra.mxu0 0.0
    %6709 = vmatprep.subr.mxu0 0.0
    %6710 = vmatpush1.msra.mxu0 0.0
    %6711 = vmatprep.subr.mxu0 0.0
    %6712 = vmatpush1.msra.mxu0 0.0
    %6713 = vmatprep.subr.mxu0 0.0
    %6714 = vmatpush1.msra.mxu0 0.0
    %6715 = vmatprep.subr.mxu0 0.0
    %6716 = vmatpush1.msra.mxu0 0.0
    %6717 = vmatprep.subr.mxu0 0.0
    %6718 = vmatpush1.msra.mxu0 0.0
    %6719 = vmatprep.subr.mxu0 0.0
    %6720 = vmatpush1.msra.mxu0 0.0
    %6721 = vmatprep.subr.mxu0 0.0
    %6722 = vmatpush1.msra.mxu0 0.0
    %6723 = vmatprep.subr.mxu0 0.0
    %6724 = vmatpush1.msra.mxu0 %v6690
    %6725 = vmatprep.subr.mxu0 0.0
    %6726 = vmatpush1.msra.mxu0 %v6689
    %6727 = vmatprep.subr.mxu0 0.0
    %6728 = vmatpush2.msra.mxu0 0.0
    %6729 = vmatprep.subr.mxu0 0.0
    %6730 = vmatpush2.msra.mxu0 0.0
    %6731 = vmatprep.subr.mxu0 0.0
    %6732 = vmatpush2.msra.mxu0 0.0
    %6733 = vmatprep.subr.mxu0 0.0
    %6734 = vmatpush2.msra.mxu0 0.0
    %6735 = vmatprep.subr.mxu0 0.0
    %6736 = vmatpush2.msra.mxu0 0.0
    %6737 = vmatprep.subr.mxu0 0.0
    %6738 = vmatpush2.msra.mxu0 0.0
    %6739 = vmatprep.subr.mxu0 0.0
    %6740 = vmatpush2.msra.mxu0 0.0
    %6741 = vmatprep.subr.mxu0 0.0
    %6742 = vmatpush2.msra.mxu0 0.0
    %6743 = vmatprep.subr.mxu0 0.0
    %6744 = vmatpush2.msra.mxu0 0.0
    %6745 = vmatprep.subr.mxu0 0.0
    %6746 = vmatpush2.msra.mxu0 0.0
    %6747 = vmatprep.subr.mxu0 0.0
    %6748 = vmatpush2.msra.mxu0 0.0
    %6749 = vmatprep.subr.mxu0 0.0
    %6750 = vmatpush2.msra.mxu0 0.0
    %6751 = vmatprep.subr.mxu0 0.0
    %6752 = vmatpush2.msra.mxu0 0.0
    %6753 = vmatprep.subr.mxu0 0.0
    %6754 = vmatpush2.msra.mxu0 0.0
    %6755 = vmatprep.subr.mxu0 0.0
    %6756 = vmatpush2.msra.mxu0 0.0
    %6757 = vmatprep.subr.mxu0 0.0
    %6758 = vmatpush2.msra.mxu0 0.0
    %6759 = vmatprep.mubr.f32.mxu0 0.0
    %6760 = vmatmul.mubr.f32.gmra.mxu0 %v6693
    %v6761 = vpop.f32.mrf.mxu0
    %v6762 = vadd.f32 0.0, %v6761
    %v6763 = vpop.f32.mrf.mxu0
    %6764 = vdwg.mxu0
    %v6765 = vld [vmem:[%s17] sm:$0xff]
    %v6766 = vld [vmem:[%s17 + $0x8] sm:$0xff]
    %v6767 = vld [vmem:[%s17 + $0x10] sm:$0xff]
    %v6768 = vld [vmem:[%s17 + $0x18] sm:$0xff]
    %v6769 = vld [vmem:[%s17 + $0x20] sm:$0xff]
    %v6770 = vld [vmem:[%s17 + $0x28] sm:$0xff]
    %v6771 = vld [vmem:[%s17 + $0x30] sm:$0xff]
    %v6772 = vld [vmem:[%s17 + $0x38] sm:$0xff]
    %v6773 = vld [vmem:[%s17 + $0x40] sm:$0xff]
    %v6774 = vld [vmem:[%s17 + $0x48] sm:$0xff]
    %v6775 = vld [vmem:[%s17 + $0x50] sm:$0xff]
    %v6776 = vld [vmem:[%s17 + $0x58] sm:$0xff]
    %v6777 = vld [vmem:[%s17 + $0x60] sm:$0xff]
    %v6778 = vld [vmem:[%s17 + $0x68] sm:$0xff]
    %v6779 = vld [vmem:[%s17 + $0x70] sm:$0xff]
    %v6780 = vld [vmem:[%s17 + $0x78] sm:$0xff]
    %v6781 = vld [vmem:[#allocation19] sm:$0x1]
    %v6783 = vlaneseq
    %v6784 = vshrl.u32 %v6783, 7
    %v6785 = vsub.s32 0, %v6784
    %v6786 = vrot.slane %v6781, %v6785
    %6788 = vmatprep.subr.mxu0 0.0
    %6789 = vmatpush1.msra.mxu0 %v6780
    %6790 = vmatprep.subr.mxu0 0.0
    %6791 = vmatpush1.msra.mxu0 %v6779
    %6792 = vmatprep.subr.mxu0 0.0
    %6793 = vmatpush1.msra.mxu0 %v6778
    %6794 = vmatprep.subr.mxu0 0.0
    %6795 = vmatpush1.msra.mxu0 %v6777
    %6796 = vmatprep.subr.mxu0 0.0
    %6797 = vmatpush1.msra.mxu0 %v6776
    %6798 = vmatprep.subr.mxu0 0.0
    %6799 = vmatpush1.msra.mxu0 %v6775
    %6800 = vmatprep.subr.mxu0 0.0
    %6801 = vmatpush1.msra.mxu0 %v6774
    %6802 = vmatprep.subr.mxu0 0.0
    %6803 = vmatpush1.msra.mxu0 %v6773
    %6804 = vmatprep.subr.mxu0 0.0
    %6805 = vmatpush1.msra.mxu0 %v6772
    %6806 = vmatprep.subr.mxu0 0.0
    %6807 = vmatpush1.msra.mxu0 %v6771
    %6808 = vmatprep.subr.mxu0 0.0
    %6809 = vmatpush1.msra.mxu0 %v6770
    %6810 = vmatprep.subr.mxu0 0.0
    %6811 = vmatpush1.msra.mxu0 %v6769
    %6812 = vmatprep.subr.mxu0 0.0
    %6813 = vmatpush1.msra.mxu0 %v6768
    %6814 = vmatprep.subr.mxu0 0.0
    %6815 = vmatpush1.msra.mxu0 %v6767
    %6816 = vmatprep.subr.mxu0 0.0
    %6817 = vmatpush1.msra.mxu0 %v6766
    %6818 = vmatprep.subr.mxu0 0.0
    %6819 = vmatpush1.msra.mxu0 %v6765
    %6820 = vmatprep.subr.mxu0 0.0
    %6821 = vmatpush2.msra.mxu0 0.0
    %6822 = vmatprep.subr.mxu0 0.0
    %6823 = vmatpush2.msra.mxu0 0.0
    %6824 = vmatprep.subr.mxu0 0.0
    %6825 = vmatpush2.msra.mxu0 0.0
    %6826 = vmatprep.subr.mxu0 0.0
    %6827 = vmatpush2.msra.mxu0 0.0
    %6828 = vmatprep.subr.mxu0 0.0
    %6829 = vmatpush2.msra.mxu0 0.0
    %6830 = vmatprep.subr.mxu0 0.0
    %6831 = vmatpush2.msra.mxu0 0.0
    %6832 = vmatprep.subr.mxu0 0.0
    %6833 = vmatpush2.msra.mxu0 0.0
    %6834 = vmatprep.subr.mxu0 0.0
    %6835 = vmatpush2.msra.mxu0 0.0
    %6836 = vmatprep.subr.mxu0 0.0
    %6837 = vmatpush2.msra.mxu0 0.0
    %6838 = vmatprep.subr.mxu0 0.0
    %6839 = vmatpush2.msra.mxu0 0.0
    %6840 = vmatprep.subr.mxu0 0.0
    %6841 = vmatpush2.msra.mxu0 0.0
    %6842 = vmatprep.subr.mxu0 0.0
    %6843 = vmatpush2.msra.mxu0 0.0
    %6844 = vmatprep.subr.mxu0 0.0
    %6845 = vmatpush2.msra.mxu0 0.0
    %6846 = vmatprep.subr.mxu0 0.0
    %6847 = vmatpush2.msra.mxu0 0.0
    %6848 = vmatprep.subr.mxu0 0.0
    %6849 = vmatpush2.msra.mxu0 0.0
    %6850 = vmatprep.subr.mxu0 0.0
    %6851 = vmatpush2.msra.mxu0 0.0
    %6852 = vmatprep.mubr.f32.mxu0 0.0
    %6853 = vmatmul.mubr.f32.gmra.mxu0 %v6762
    %v6854 = vpop.f32.mrf.mxu0
    %v6855 = vadd.f32 %v6786, %v6854
    %v6856 = vpop.f32.mrf.mxu0
    %6857 = vdwg.mxu0
    %6858 = vst [vmem:[#allocation20] sm:$0x3] %v6855
    // Predicated region
    $region122: #{transformer_forward.1} parent=1 // pred_check
      _
    $region123: #{transformer_forward.1} parent=1 // pred_check_branch
      %6860 = sbr.rel (0) target = $region125
    $region124: #{transformer_forward.1} parent=1 // pred_region
      %s6862 = ssub.s32 32, 32
      %6863 = vsyncadd [#allocation4], %s6862
      %s6865 = sshll.u32 [#allocation20], 4
      %s6866 = int_to_ptr.vmem [resolvable:$true] %s6865
      %6868 = dma.vmem_to_hbm [thread:$0]  %s6866, 32, %s19, [#allocation4]
    $region125: #{transformer_forward.1} parent=1 // pred_fallthru
      _
    // Predicated region
    $region126: #{transformer_forward.1} parent=1 // pred_check
      _
    $region127: #{transformer_forward.1} parent=1 // pred_check_branch
      %6870 = sbr.rel (0) target = $region129
    $region128: #{transformer_forward.1} parent=1 // pred_region
      %6871 = dma.done [#allocation4], 32
    $region129: #{transformer_forward.1} parent=1 // pred_fallthru
      _
    %6872 = vsyncpa [#allocation3], 1
    %6873 = vsyncpa [#allocation6], 1
    %6874 = vsyncpa [#allocation9], 1
    %6875 = vsyncpa [#allocation12], 1
    %6876 = vsyncpa [#allocation15], 1
    %6877 = vsyncpa [#allocation18], 1
    %6878 = vsyncpa [#allocation4], 1

</llo_original>
